<compile_context>
chip_gen: v7x
topology: tpu7x:2x2x1
jax: 0.10.0
libtpu: 0.0.40
codegen_flags: <defaults>
</compile_context>

<pallas_src>
import functools

import jax
import jax.numpy as jnp
from jax.experimental import pallas as pl
from jax.experimental.pallas import tpu as pltpu


def _round_up(x, m):
    return ((x + m - 1) // m) * m


def _vmem_capacity_bytes():
    """Physical VMEM per core; conservative 64 MiB (v7x) if the query is unavailable."""
    try:
        info = pltpu.get_tpu_info()
        cap = getattr(info, "vmem_capacity_bytes", None)
        if cap:
            return int(cap)
    except Exception:
        pass
    return 64 << 20


def _pick_tiles(ho, wo_pad, kh, kw, dh, dw, cin_p, cout_p, csz, osz, vmem_cap):
    """Pick (cout_t, rb, w_in_pad, working_set_bytes).

    cout_t preference: full cout_p (n_co == 1, inputs DMA'd once), then multiples of 256
    (matches the 2x256 MXU on v6e/v7x), then multiples of 128 — always the largest whose
    single-buffered-weight working set fits the chip's VMEM with headroom.
    """
    budget = int(0.55 * vmem_cap)
    w_in_pad = _round_up(wo_pad + dw * (kw - 1), 16)
    divisors = [t for t in range(128, cout_p + 1, 128) if cout_p % t == 0]
    divisors.sort(key=lambda t: (t != cout_p, t % 256 != 0, -t))
    rb_cands = [r for r in (64, 32, 24, 16, 8, 4, 2, 1) if r <= ho] or [1]

    def working_set(cout_t, rb):
        rows_in = rb + dh * (kh - 1)
        m = rb * wo_pad
        in_b = rows_in * w_in_pad * cin_p * csz       # double-buffered input block
        w_b = kh * kw * cin_p * cout_t * csz          # single-buffered weight slab
        out_b = m * cout_t * osz                      # double-buffered output block
        epi_b = 2 * m * cout_t * 4                    # f32 accumulator + epilogue temp
        cp_b = m * cin_p * csz                        # relayout copy of one shifted tap
        return 2 * in_b + w_b + 2 * out_b + epi_b + cp_b

    for cout_t in divisors:
        for rb in rb_cands:
            ws = working_set(cout_t, rb)
            if ws <= budget:
                return cout_t, rb, w_in_pad, ws
    cout_t, rb = divisors[-1], rb_cands[-1]
    return cout_t, rb, w_in_pad, working_set(cout_t, rb)


def _conv_bn_relu_kernel(x_ref, w_ref, shift_ref, o_ref, *, kh, kw, dh, dw, rb, wo_pad):
    """One grid step: one (batch*row-block, cout-block) output tile.

    x_ref     : (rows_in, w_in_pad, cin_p)   bf16  spatially padded input rows (+ kh halo)
    w_ref     : (kh, kw, cin_p, cout_t)      bf16  conv weights with the BN scale folded in
    shift_ref : (1, cout_t)                  f32   folded BN shift = beta - mean * scale
    o_ref     : (rb, wo_pad, cout_t)               output tile
    """
    cin_p = x_ref.shape[-1]
    cout_t = o_ref.shape[-1]
    m = rb * wo_pad

    # kh*kw matmuls with K = cin_p; accumulate as a *value* so partials stay in the MXU
    # result path (MRB in-place accumulate on v7x) instead of a VMEM read-modify-write.
    acc = None
    for i in range(kh):
        for j in range(kw):
            xi = x_ref[i * dh:i * dh + rb, j * dw:j * dw + wo_pad, :].reshape(m, cin_p)
            p = jnp.dot(xi, w_ref[i, j], preferred_element_type=jnp.float32)
            acc = p if acc is None else acc + p

    # BN scale already folded into the weights: epilogue is add-shift + ReLU + dense store.
    y = jnp.maximum(acc + shift_ref[...], 0.0)
    o_ref[...] = y.reshape(rb, wo_pad, cout_t).astype(o_ref.dtype)


def data2vec_vision_conv_module(x_nchw, w_oihw, gamma, beta, running_mean,
                                running_var, conv_bias=None, *, padding=0,
                                dilation=1, eps=1e-5,
                                compute_dtype=jnp.bfloat16, out_dtype=None):
    """Forward pass equivalent of Data2VecVisionConvModule (eval-mode BN)."""
    assert not isinstance(padding, str), "string padding not supported"
    if isinstance(padding, int):
        padding = (padding, padding)
    if isinstance(dilation, int):
        dilation = (dilation, dilation)

    n, cin, h, w = x_nchw.shape
    cout, cin_w, kh, kw = w_oihw.shape
    assert cin_w == cin
    ph, pw = padding
    dh, dw = dilation
    out_dtype = x_nchw.dtype if out_dtype is None else out_dtype

    ho = h + 2 * ph - dh * (kh - 1)
    wo = w + 2 * pw - dw * (kw - 1)
    assert ho > 0 and wo > 0

    # Lane/sublane friendly padded sizes and VMEM-capacity-driven tile choices.
    wo_pad = _round_up(wo, 16)                  # bf16 sublane-dense W
    cin_p = _round_up(cin, 128)                 # lane-dense contraction dim
    cout_p = _round_up(cout, 128)               # lane-dense output channels
    csz = jnp.dtype(compute_dtype).itemsize
    osz = jnp.dtype(out_dtype).itemsize
    vmem_cap = _vmem_capacity_bytes()
    cout_t, rb, w_in_pad, ws = _pick_tiles(ho, wo_pad, kh, kw, dh, dw,
                                           cin_p, cout_p, csz, osz, vmem_cap)
    n_hb = -(-ho // rb)                         # ceil-div: row blocks
    rows_in = rb + dh * (kh - 1)                # input rows incl. halo
    n_co = cout_p // cout_t
    nb = n * n_hb

    # ---------------- host-side layout glue (plain XLA ops) ----------------
    x_nhwc = jnp.transpose(x_nchw, (0, 2, 3, 1)).astype(compute_dtype)   # NCHW -> NHWC bf16
    h_need = n_hb * rb + dh * (kh - 1)
    x_sp = jnp.pad(x_nhwc, ((0, 0),
                            (ph, h_need - h - ph),
                            (pw, w_in_pad - w - pw),
                            (0, cin_p - cin)))
    # Row blocks with only the (kh-1)*dh halo duplicated host-side (~1.1x); the kw taps are
    # folded inside the kernel, so there is NO host-side im2col inflation of the activations.
    x_chunks = jnp.stack(
        [x_sp[:, hb * rb:hb * rb + rows_in] for hb in range(n_hb)], axis=1)
    x_chunks = x_chunks.reshape(nb, rows_in, w_in_pad, cin_p)

    # Weights: OIHW -> (kh, kw, cin, cout), BN scale folded in (f32), padded, bf16.
    inv = (gamma / jnp.sqrt(running_var + eps)).astype(jnp.float32)
    w_f = jnp.transpose(w_oihw, (2, 3, 1, 0)).astype(jnp.float32) * inv
    w_k = jnp.pad(w_f, ((0, 0), (0, 0), (0, cin_p - cin),
                        (0, cout_p - cout))).astype(compute_dtype)
    shift_v = (beta - running_mean * inv).astype(jnp.float32)
    if conv_bias is not None:
        shift_v = shift_v + conv_bias.astype(jnp.float32) * inv
    shift = jnp.pad(shift_v, (0, cout_p - cout)).reshape(1, cout_p)

    # Clamp the VMEM request to the real chip capacity (64 MiB on v7x) with headroom.
    vmem_limit = int(min(int(0.9 * vmem_cap), max(ws + (8 << 20), 32 << 20)))

    kernel = functools.partial(_conv_bn_relu_kernel, kh=kh, kw=kw, dh=dh, dw=dw,
                               rb=rb, wo_pad=wo_pad)

    def _run(single_buffer_resident):
        def spec(shape, index_map, resident):
            if resident and single_buffer_resident:
                # Weight/shift block index changes only on the outermost axis (often size 1);
                # double-buffering them would just double their VMEM footprint.
                return pl.BlockSpec(shape, index_map, pipeline_mode=pl.Buffered(1))
            return pl.BlockSpec(shape, index_map)

        return pl.pallas_call(
            kernel,
            out_shape=jax.ShapeDtypeStruct((nb, rb, wo_pad, cout_p), out_dtype),
            grid_spec=pltpu.PrefetchScalarGridSpec(
                num_scalar_prefetch=0,
                # cout axis outermost -> the weight slab stays VMEM-resident across nb steps.
                grid=(n_co, nb),
                in_specs=[
                    spec((None, rows_in, w_in_pad, cin_p),
                         lambda co, b: (b, 0, 0, 0), resident=False),
                    spec((kh, kw, cin_p, cout_t),
                         lambda co, b: (0, 0, 0, co), resident=True),
                    spec((1, cout_t), lambda co, b: (0, co), resident=True),
                ],
                out_specs=pl.BlockSpec((None, rb, wo_pad, cout_t),
                                       lambda co, b: (b, 0, 0, co)),
            ),
            compiler_params=pltpu.CompilerParams(
                dimension_semantics=("parallel", "parallel"),
                vmem_limit_bytes=vmem_limit),
        )(x_chunks, w_k, shift)

    try:
        out_full = _run(True)
    except Exception:
        # pl.Buffered / pipeline_mode unsupported on this jax build -> default double buffering.
        out_full = _run(False)

    # Trim padded rows / cols / channels and return NCHW.
    out = out_full.reshape(n, n_hb * rb, wo_pad, cout_p)[:, :ho, :wo, :cout]
    return jnp.transpose(out, (0, 3, 1, 2))


def _reference(x_nchw, w_oihw, gamma, beta, running_mean, running_var,
               *, padding=0, dilation=1, eps=1e-5, compute_dtype=jnp.bfloat16):
    if isinstance(padding, int):
        padding = (padding, padding)
    if isinstance(dilation, int):
        dilation = (dilation, dilation)
    conv = jax.lax.conv_general_dilated(
        x_nchw.astype(compute_dtype), w_oihw.astype(compute_dtype),
        window_strides=(1, 1),
        padding=[(padding[0], padding[0]), (padding[1], padding[1])],
        rhs_dilation=dilation,
        dimension_numbers=("NCHW", "OIHW", "NCHW"),
        preferred_element_type=jnp.float32)
    inv = gamma / jnp.sqrt(running_var + eps)
    scale = inv.reshape(1, -1, 1, 1)
    shift = (beta - running_mean * inv).reshape(1, -1, 1, 1)
    return jnp.maximum(conv * scale + shift, 0.0)


if __name__ == "__main__":
    key = jax.random.PRNGKey(0)
    k_x, k_w, k_g, k_b, k_m, k_v = jax.random.split(key, 6)

    # Small shapes consistent with the module's forward (NCHW conv input).
    N, C_IN, H, W = 2, 4, 16, 16
    C_OUT, K, PADDING, DILATION = 8, 3, 1, 1

    x = jax.random.normal(k_x, (N, C_IN, H, W), jnp.float32)
    w = jax.random.normal(k_w, (C_OUT, C_IN, K, K), jnp.float32) * 0.1
    gamma = 1.0 + 0.1 * jax.random.normal(k_g, (C_OUT,), jnp.float32)
    beta = 0.1 * jax.random.normal(k_b, (C_OUT,), jnp.float32)
    running_mean = 0.05 * jax.random.normal(k_m, (C_OUT,), jnp.float32)
    running_var = 1.0 + 0.1 * jnp.abs(jax.random.normal(k_v, (C_OUT,), jnp.float32))

    out = data2vec_vision_conv_module(
        x, w, gamma, beta, running_mean, running_var,
        padding=PADDING, dilation=DILATION)
    out = jax.block_until_ready(out)

    ref = _reference(
        x, w, gamma, beta, running_mean, running_var,
        padding=PADDING, dilation=DILATION)

    assert out.shape == (N, C_OUT, H, W), out.shape
    max_err = float(jnp.max(jnp.abs(out.astype(jnp.float32) - ref)))
    assert jnp.allclose(out.astype(jnp.float32), ref, rtol=2e-2, atol=2e-2), max_err

    print("KERNEL_OK")
</pallas_src>

<mosaic_0001>
module attributes {stable_mosaic.version = 11 : i64} {
  func.func @_conv_bn_relu_kernel(%arg0: i32, %arg1: i32, %arg2: memref<1x18x32x128xbf16, #tpu.memory_space<vmem>>, %arg3: memref<3x3x128x128xbf16, #tpu.memory_space<vmem>>, %arg4: memref<1x128xf32, #tpu.memory_space<vmem>>, %arg5: memref<1x16x16x128xf32, #tpu.memory_space<vmem>>) attributes {dimension_semantics = [#tpu.dimension_semantics<parallel>, #tpu.dimension_semantics<parallel>], iteration_bounds = array<i64: 1, 2>, scalar_prefetch = 0 : i64, scratch_operands = 0 : i64, tpu.core_type = #tpu.core_type<tc>, window_params = [{transform_indices = @transform_0, window_bounds = array<i64: 1, 18, 32, 128>}, {pipeline_mode = #tpu.pipeline_mode<synchronous>, transform_indices = @transform_1, window_bounds = array<i64: 3, 3, 128, 128>}, {pipeline_mode = #tpu.pipeline_mode<synchronous>, transform_indices = @transform_2, window_bounds = array<i64: 1, 128>}, {transform_indices = @transform_3, window_bounds = array<i64: 1, 16, 16, 128>}]} {
    %c0 = arith.constant 0 : index
    %c0_0 = arith.constant 0 : index
    %c0_1 = arith.constant 0 : index
    %c0_2 = arith.constant 0 : index
    %0 = vector.load %arg2[%c0, %c0_0, %c0_1, %c0_2] : memref<1x18x32x128xbf16, #tpu.memory_space<vmem>>, vector<1x16x16x128xbf16>
    %1 = vector.shape_cast %0 : vector<1x16x16x128xbf16> to vector<16x16x128xbf16>
    %2 = vector.shape_cast %1 : vector<16x16x128xbf16> to vector<256x128xbf16>
    %c0_3 = arith.constant 0 : index
    %c0_4 = arith.constant 0 : index
    %c0_5 = arith.constant 0 : index
    %c0_6 = arith.constant 0 : index
    %3 = vector.load %arg3[%c0_3, %c0_4, %c0_5, %c0_6] : memref<3x3x128x128xbf16, #tpu.memory_space<vmem>>, vector<1x1x128x128xbf16>
    %4 = vector.shape_cast %3 : vector<1x1x128x128xbf16> to vector<128x128xbf16>
    %cst = arith.constant dense<0.000000e+00> : vector<256x128xf32>
    %5 = tpu.matmul %2, %4, %cst {dimension_numbers = #tpu.dot_dimension_numbers<[1], [0], [0], [1], [0, 0, 1, 1], [], []>} : vector<256x128xbf16>, vector<128x128xbf16>, vector<256x128xf32> -> vector<256x128xf32>
    %c0_7 = arith.constant 0 : index
    %c0_8 = arith.constant 0 : index
    %c1 = arith.constant 1 : index
    %c0_9 = arith.constant 0 : index
    %6 = vector.load %arg2[%c0_7, %c0_8, %c1, %c0_9] : memref<1x18x32x128xbf16, #tpu.memory_space<vmem>>, vector<1x16x16x128xbf16>
    %7 = vector.shape_cast %6 : vector<1x16x16x128xbf16> to vector<16x16x128xbf16>
    %8 = vector.shape_cast %7 : vector<16x16x128xbf16> to vector<256x128xbf16>
    %c0_10 = arith.constant 0 : index
    %c1_11 = arith.constant 1 : index
    %c0_12 = arith.constant 0 : index
    %c0_13 = arith.constant 0 : index
    %9 = vector.load %arg3[%c0_10, %c1_11, %c0_12, %c0_13] : memref<3x3x128x128xbf16, #tpu.memory_space<vmem>>, vector<1x1x128x128xbf16>
    %10 = vector.shape_cast %9 : vector<1x1x128x128xbf16> to vector<128x128xbf16>
    %cst_14 = arith.constant dense<0.000000e+00> : vector<256x128xf32>
    %11 = tpu.matmul %8, %10, %cst_14 {dimension_numbers = #tpu.dot_dimension_numbers<[1], [0], [0], [1], [0, 0, 1, 1], [], []>} : vector<256x128xbf16>, vector<128x128xbf16>, vector<256x128xf32> -> vector<256x128xf32>
    %12 = arith.addf %5, %11 : vector<256x128xf32>
    %c0_15 = arith.constant 0 : index
    %c0_16 = arith.constant 0 : index
    %c2 = arith.constant 2 : index
    %c0_17 = arith.constant 0 : index
    %13 = vector.load %arg2[%c0_15, %c0_16, %c2, %c0_17] : memref<1x18x32x128xbf16, #tpu.memory_space<vmem>>, vector<1x16x16x128xbf16>
    %14 = vector.shape_cast %13 : vector<1x16x16x128xbf16> to vector<16x16x128xbf16>
    %15 = vector.shape_cast %14 : vector<16x16x128xbf16> to vector<256x128xbf16>
    %c0_18 = arith.constant 0 : index
    %c2_19 = arith.constant 2 : index
    %c0_20 = arith.constant 0 : index
    %c0_21 = arith.constant 0 : index
    %16 = vector.load %arg3[%c0_18, %c2_19, %c0_20, %c0_21] : memref<3x3x128x128xbf16, #tpu.memory_space<vmem>>, vector<1x1x128x128xbf16>
    %17 = vector.shape_cast %16 : vector<1x1x128x128xbf16> to vector<128x128xbf16>
    %cst_22 = arith.constant dense<0.000000e+00> : vector<256x128xf32>
    %18 = tpu.matmul %15, %17, %cst_22 {dimension_numbers = #tpu.dot_dimension_numbers<[1], [0], [0], [1], [0, 0, 1, 1], [], []>} : vector<256x128xbf16>, vector<128x128xbf16>, vector<256x128xf32> -> vector<256x128xf32>
    %19 = arith.addf %12, %18 : vector<256x128xf32>
    %c0_23 = arith.constant 0 : index
    %c1_24 = arith.constant 1 : index
    %c0_25 = arith.constant 0 : index
    %c0_26 = arith.constant 0 : index
    %20 = vector.load %arg2[%c0_23, %c1_24, %c0_25, %c0_26] : memref<1x18x32x128xbf16, #tpu.memory_space<vmem>>, vector<1x16x16x128xbf16>
    %21 = vector.shape_cast %20 : vector<1x16x16x128xbf16> to vector<16x16x128xbf16>
    %22 = vector.shape_cast %21 : vector<16x16x128xbf16> to vector<256x128xbf16>
    %c1_27 = arith.constant 1 : index
    %c0_28 = arith.constant 0 : index
    %c0_29 = arith.constant 0 : index
    %c0_30 = arith.constant 0 : index
    %23 = vector.load %arg3[%c1_27, %c0_28, %c0_29, %c0_30] : memref<3x3x128x128xbf16, #tpu.memory_space<vmem>>, vector<1x1x128x128xbf16>
    %24 = vector.shape_cast %23 : vector<1x1x128x128xbf16> to vector<128x128xbf16>
    %cst_31 = arith.constant dense<0.000000e+00> : vector<256x128xf32>
    %25 = tpu.matmul %22, %24, %cst_31 {dimension_numbers = #tpu.dot_dimension_numbers<[1], [0], [0], [1], [0, 0, 1, 1], [], []>} : vector<256x128xbf16>, vector<128x128xbf16>, vector<256x128xf32> -> vector<256x128xf32>
    %26 = arith.addf %19, %25 : vector<256x128xf32>
    %c0_32 = arith.constant 0 : index
    %c1_33 = arith.constant 1 : index
    %c1_34 = arith.constant 1 : index
    %c0_35 = arith.constant 0 : index
    %27 = vector.load %arg2[%c0_32, %c1_33, %c1_34, %c0_35] : memref<1x18x32x128xbf16, #tpu.memory_space<vmem>>, vector<1x16x16x128xbf16>
    %28 = vector.shape_cast %27 : vector<1x16x16x128xbf16> to vector<16x16x128xbf16>
    %29 = vector.shape_cast %28 : vector<16x16x128xbf16> to vector<256x128xbf16>
    %c1_36 = arith.constant 1 : index
    %c1_37 = arith.constant 1 : index
    %c0_38 = arith.constant 0 : index
    %c0_39 = arith.constant 0 : index
    %30 = vector.load %arg3[%c1_36, %c1_37, %c0_38, %c0_39] : memref<3x3x128x128xbf16, #tpu.memory_space<vmem>>, vector<1x1x128x128xbf16>
    %31 = vector.shape_cast %30 : vector<1x1x128x128xbf16> to vector<128x128xbf16>
    %cst_40 = arith.constant dense<0.000000e+00> : vector<256x128xf32>
    %32 = tpu.matmul %29, %31, %cst_40 {dimension_numbers = #tpu.dot_dimension_numbers<[1], [0], [0], [1], [0, 0, 1, 1], [], []>} : vector<256x128xbf16>, vector<128x128xbf16>, vector<256x128xf32> -> vector<256x128xf32>
    %33 = arith.addf %26, %32 : vector<256x128xf32>
    %c0_41 = arith.constant 0 : index
    %c1_42 = arith.constant 1 : index
    %c2_43 = arith.constant 2 : index
    %c0_44 = arith.constant 0 : index
    %34 = vector.load %arg2[%c0_41, %c1_42, %c2_43, %c0_44] : memref<1x18x32x128xbf16, #tpu.memory_space<vmem>>, vector<1x16x16x128xbf16>
    %35 = vector.shape_cast %34 : vector<1x16x16x128xbf16> to vector<16x16x128xbf16>
    %36 = vector.shape_cast %35 : vector<16x16x128xbf16> to vector<256x128xbf16>
    %c1_45 = arith.constant 1 : index
    %c2_46 = arith.constant 2 : index
    %c0_47 = arith.constant 0 : index
    %c0_48 = arith.constant 0 : index
    %37 = vector.load %arg3[%c1_45, %c2_46, %c0_47, %c0_48] : memref<3x3x128x128xbf16, #tpu.memory_space<vmem>>, vector<1x1x128x128xbf16>
    %38 = vector.shape_cast %37 : vector<1x1x128x128xbf16> to vector<128x128xbf16>
    %cst_49 = arith.constant dense<0.000000e+00> : vector<256x128xf32>
    %39 = tpu.matmul %36, %38, %cst_49 {dimension_numbers = #tpu.dot_dimension_numbers<[1], [0], [0], [1], [0, 0, 1, 1], [], []>} : vector<256x128xbf16>, vector<128x128xbf16>, vector<256x128xf32> -> vector<256x128xf32>
    %40 = arith.addf %33, %39 : vector<256x128xf32>
    %c0_50 = arith.constant 0 : index
    %c2_51 = arith.constant 2 : index
    %c0_52 = arith.constant 0 : index
    %c0_53 = arith.constant 0 : index
    %41 = vector.load %arg2[%c0_50, %c2_51, %c0_52, %c0_53] : memref<1x18x32x128xbf16, #tpu.memory_space<vmem>>, vector<1x16x16x128xbf16>
    %42 = vector.shape_cast %41 : vector<1x16x16x128xbf16> to vector<16x16x128xbf16>
    %43 = vector.shape_cast %42 : vector<16x16x128xbf16> to vector<256x128xbf16>
    %c2_54 = arith.constant 2 : index
    %c0_55 = arith.constant 0 : index
    %c0_56 = arith.constant 0 : index
    %c0_57 = arith.constant 0 : index
    %44 = vector.load %arg3[%c2_54, %c0_55, %c0_56, %c0_57] : memref<3x3x128x128xbf16, #tpu.memory_space<vmem>>, vector<1x1x128x128xbf16>
    %45 = vector.shape_cast %44 : vector<1x1x128x128xbf16> to vector<128x128xbf16>
    %cst_58 = arith.constant dense<0.000000e+00> : vector<256x128xf32>
    %46 = tpu.matmul %43, %45, %cst_58 {dimension_numbers = #tpu.dot_dimension_numbers<[1], [0], [0], [1], [0, 0, 1, 1], [], []>} : vector<256x128xbf16>, vector<128x128xbf16>, vector<256x128xf32> -> vector<256x128xf32>
    %47 = arith.addf %40, %46 : vector<256x128xf32>
    %c0_59 = arith.constant 0 : index
    %c2_60 = arith.constant 2 : index
    %c1_61 = arith.constant 1 : index
    %c0_62 = arith.constant 0 : index
    %48 = vector.load %arg2[%c0_59, %c2_60, %c1_61, %c0_62] : memref<1x18x32x128xbf16, #tpu.memory_space<vmem>>, vector<1x16x16x128xbf16>
    %49 = vector.shape_cast %48 : vector<1x16x16x128xbf16> to vector<16x16x128xbf16>
    %50 = vector.shape_cast %49 : vector<16x16x128xbf16> to vector<256x128xbf16>
    %c2_63 = arith.constant 2 : index
    %c1_64 = arith.constant 1 : index
    %c0_65 = arith.constant 0 : index
    %c0_66 = arith.constant 0 : index
    %51 = vector.load %arg3[%c2_63, %c1_64, %c0_65, %c0_66] : memref<3x3x128x128xbf16, #tpu.memory_space<vmem>>, vector<1x1x128x128xbf16>
    %52 = vector.shape_cast %51 : vector<1x1x128x128xbf16> to vector<128x128xbf16>
    %cst_67 = arith.constant dense<0.000000e+00> : vector<256x128xf32>
    %53 = tpu.matmul %50, %52, %cst_67 {dimension_numbers = #tpu.dot_dimension_numbers<[1], [0], [0], [1], [0, 0, 1, 1], [], []>} : vector<256x128xbf16>, vector<128x128xbf16>, vector<256x128xf32> -> vector<256x128xf32>
    %54 = arith.addf %47, %53 : vector<256x128xf32>
    %c0_68 = arith.constant 0 : index
    %c2_69 = arith.constant 2 : index
    %c2_70 = arith.constant 2 : index
    %c0_71 = arith.constant 0 : index
    %55 = vector.load %arg2[%c0_68, %c2_69, %c2_70, %c0_71] : memref<1x18x32x128xbf16, #tpu.memory_space<vmem>>, vector<1x16x16x128xbf16>
    %56 = vector.shape_cast %55 : vector<1x16x16x128xbf16> to vector<16x16x128xbf16>
    %57 = vector.shape_cast %56 : vector<16x16x128xbf16> to vector<256x128xbf16>
    %c2_72 = arith.constant 2 : index
    %c2_73 = arith.constant 2 : index
    %c0_74 = arith.constant 0 : index
    %c0_75 = arith.constant 0 : index
    %58 = vector.load %arg3[%c2_72, %c2_73, %c0_74, %c0_75] : memref<3x3x128x128xbf16, #tpu.memory_space<vmem>>, vector<1x1x128x128xbf16>
    %59 = vector.shape_cast %58 : vector<1x1x128x128xbf16> to vector<128x128xbf16>
    %cst_76 = arith.constant dense<0.000000e+00> : vector<256x128xf32>
    %60 = tpu.matmul %57, %59, %cst_76 {dimension_numbers = #tpu.dot_dimension_numbers<[1], [0], [0], [1], [0, 0, 1, 1], [], []>} : vector<256x128xbf16>, vector<128x128xbf16>, vector<256x128xf32> -> vector<256x128xf32>
    %61 = arith.addf %54, %60 : vector<256x128xf32>
    %c0_77 = arith.constant 0 : index
    %c0_78 = arith.constant 0 : index
    %62 = vector.load %arg4[%c0_77, %c0_78] : memref<1x128xf32, #tpu.memory_space<vmem>>, vector<1x128xf32>
    %63 = vector.broadcast %62 : vector<1x128xf32> to vector<256x128xf32>
    %64 = arith.addf %61, %63 : vector<256x128xf32>
    %cst_79 = arith.constant 0.000000e+00 : f32
    %65 = vector.broadcast %cst_79 : f32 to vector<256x128xf32>
    %66 = arith.maximumf %64, %65 : vector<256x128xf32>
    %67 = vector.shape_cast %66 : vector<256x128xf32> to vector<16x16x128xf32>
    %c0_80 = arith.constant 0 : index
    %c0_81 = arith.constant 0 : index
    %c0_82 = arith.constant 0 : index
    %c0_83 = arith.constant 0 : index
    %68 = vector.load %arg5[%c0_80, %c0_81, %c0_82, %c0_83] : memref<1x16x16x128xf32, #tpu.memory_space<vmem>>, vector<1x16x16x128xf32>
    %69 = vector.shape_cast %68 : vector<1x16x16x128xf32> to vector<16x16x128xf32>
    %70 = vector.shape_cast %67 : vector<16x16x128xf32> to vector<1x16x16x128xf32>
    tpu.vector_store %arg5[%c0_80, %c0_81, %c0_82, %c0_83], %70 {strides = array<i32>} : memref<1x16x16x128xf32, #tpu.memory_space<vmem>>, vector<1x16x16x128xf32>,
    return
  }
  func.func @transform_0(%arg0: i32, %arg1: i32) -> (i32, i32, i32, i32) {
    %c0_i32 = arith.constant 0 : i32
    %c0_i32_0 = arith.constant 0 : i32
    %c0_i32_1 = arith.constant 0 : i32
    %c0_i32_2 = arith.constant 0 : i32
    return %arg1, %c0_i32, %c0_i32_0, %c0_i32_1 : i32, i32, i32, i32
  }
  func.func @transform_1(%arg0: i32, %arg1: i32) -> (i32, i32, i32, i32) {
    %c0_i32 = arith.constant 0 : i32
    %c0_i32_0 = arith.constant 0 : i32
    %c0_i32_1 = arith.constant 0 : i32
    %c0_i32_2 = arith.constant 0 : i32
    return %c0_i32, %c0_i32_0, %c0_i32_1, %arg0 : i32, i32, i32, i32
  }
  func.func @transform_2(%arg0: i32, %arg1: i32) -> (i32, i32) {
    %c0_i32 = arith.constant 0 : i32
    %c0_i32_0 = arith.constant 0 : i32
    return %c0_i32, %arg0 : i32, i32
  }
  func.func @transform_3(%arg0: i32, %arg1: i32) -> (i32, i32, i32, i32) {
    %c0_i32 = arith.constant 0 : i32
    %c0_i32_0 = arith.constant 0 : i32
    %c0_i32_1 = arith.constant 0 : i32
    return %arg1, %c0_i32, %c0_i32_0, %arg0 : i32, i32, i32, i32
  }
}

module attributes {stable_mosaic.version = 11 : i64} {
  func.func @_conv_bn_relu_kernel(%arg0: i32, %arg1: i32, %arg2: memref<1x18x32x128xbf16, #tpu.memory_space<vmem>>, %arg3: memref<3x3x128x128xbf16, #tpu.memory_space<vmem>>, %arg4: memref<1x128xf32, #tpu.memory_space<vmem>>, %arg5: memref<1x16x16x128xf32, #tpu.memory_space<vmem>>) attributes {dimension_semantics = [#tpu.dimension_semantics<parallel>, #tpu.dimension_semantics<parallel>], iteration_bounds = array<i64: 1, 2>, scalar_prefetch = 0 : i64, scratch_operands = 0 : i64, tpu.core_type = #tpu.core_type<tc>, window_params = [{transform_indices = @transform_0, window_bounds = array<i64: 1, 18, 32, 128>}, {transform_indices = @transform_1, window_bounds = array<i64: 3, 3, 128, 128>}, {transform_indices = @transform_2, window_bounds = array<i64: 1, 128>}, {transform_indices = @transform_3, window_bounds = array<i64: 1, 16, 16, 128>}]} {
    %c0 = arith.constant 0 : index
    %c0_0 = arith.constant 0 : index
    %c0_1 = arith.constant 0 : index
    %c0_2 = arith.constant 0 : index
    %0 = vector.load %arg2[%c0, %c0_0, %c0_1, %c0_2] : memref<1x18x32x128xbf16, #tpu.memory_space<vmem>>, vector<1x16x16x128xbf16>
    %1 = vector.shape_cast %0 : vector<1x16x16x128xbf16> to vector<16x16x128xbf16>
    %2 = vector.shape_cast %1 : vector<16x16x128xbf16> to vector<256x128xbf16>
    %c0_3 = arith.constant 0 : index
    %c0_4 = arith.constant 0 : index
    %c0_5 = arith.constant 0 : index
    %c0_6 = arith.constant 0 : index
    %3 = vector.load %arg3[%c0_3, %c0_4, %c0_5, %c0_6] : memref<3x3x128x128xbf16, #tpu.memory_space<vmem>>, vector<1x1x128x128xbf16>
    %4 = vector.shape_cast %3 : vector<1x1x128x128xbf16> to vector<128x128xbf16>
    %cst = arith.constant dense<0.000000e+00> : vector<256x128xf32>
    %5 = tpu.matmul %2, %4, %cst {dimension_numbers = #tpu.dot_dimension_numbers<[1], [0], [0], [1], [0, 0, 1, 1], [], []>} : vector<256x128xbf16>, vector<128x128xbf16>, vector<256x128xf32> -> vector<256x128xf32>
    %c0_7 = arith.constant 0 : index
    %c0_8 = arith.constant 0 : index
    %c1 = arith.constant 1 : index
    %c0_9 = arith.constant 0 : index
    %6 = vector.load %arg2[%c0_7, %c0_8, %c1, %c0_9] : memref<1x18x32x128xbf16, #tpu.memory_space<vmem>>, vector<1x16x16x128xbf16>
    %7 = vector.shape_cast %6 : vector<1x16x16x128xbf16> to vector<16x16x128xbf16>
    %8 = vector.shape_cast %7 : vector<16x16x128xbf16> to vector<256x128xbf16>
    %c0_10 = arith.constant 0 : index
    %c1_11 = arith.constant 1 : index
    %c0_12 = arith.constant 0 : index
    %c0_13 = arith.constant 0 : index
    %9 = vector.load %arg3[%c0_10, %c1_11, %c0_12, %c0_13] : memref<3x3x128x128xbf16, #tpu.memory_space<vmem>>, vector<1x1x128x128xbf16>
    %10 = vector.shape_cast %9 : vector<1x1x128x128xbf16> to vector<128x128xbf16>
    %cst_14 = arith.constant dense<0.000000e+00> : vector<256x128xf32>
    %11 = tpu.matmul %8, %10, %cst_14 {dimension_numbers = #tpu.dot_dimension_numbers<[1], [0], [0], [1], [0, 0, 1, 1], [], []>} : vector<256x128xbf16>, vector<128x128xbf16>, vector<256x128xf32> -> vector<256x128xf32>
    %12 = arith.addf %5, %11 : vector<256x128xf32>
    %c0_15 = arith.constant 0 : index
    %c0_16 = arith.constant 0 : index
    %c2 = arith.constant 2 : index
    %c0_17 = arith.constant 0 : index
    %13 = vector.load %arg2[%c0_15, %c0_16, %c2, %c0_17] : memref<1x18x32x128xbf16, #tpu.memory_space<vmem>>, vector<1x16x16x128xbf16>
    %14 = vector.shape_cast %13 : vector<1x16x16x128xbf16> to vector<16x16x128xbf16>
    %15 = vector.shape_cast %14 : vector<16x16x128xbf16> to vector<256x128xbf16>
    %c0_18 = arith.constant 0 : index
    %c2_19 = arith.constant 2 : index
    %c0_20 = arith.constant 0 : index
    %c0_21 = arith.constant 0 : index
    %16 = vector.load %arg3[%c0_18, %c2_19, %c0_20, %c0_21] : memref<3x3x128x128xbf16, #tpu.memory_space<vmem>>, vector<1x1x128x128xbf16>
    %17 = vector.shape_cast %16 : vector<1x1x128x128xbf16> to vector<128x128xbf16>
    %cst_22 = arith.constant dense<0.000000e+00> : vector<256x128xf32>
    %18 = tpu.matmul %15, %17, %cst_22 {dimension_numbers = #tpu.dot_dimension_numbers<[1], [0], [0], [1], [0, 0, 1, 1], [], []>} : vector<256x128xbf16>, vector<128x128xbf16>, vector<256x128xf32> -> vector<256x128xf32>
    %19 = arith.addf %12, %18 : vector<256x128xf32>
    %c0_23 = arith.constant 0 : index
    %c1_24 = arith.constant 1 : index
    %c0_25 = arith.constant 0 : index
    %c0_26 = arith.constant 0 : index
    %20 = vector.load %arg2[%c0_23, %c1_24, %c0_25, %c0_26] : memref<1x18x32x128xbf16, #tpu.memory_space<vmem>>, vector<1x16x16x128xbf16>
    %21 = vector.shape_cast %20 : vector<1x16x16x128xbf16> to vector<16x16x128xbf16>
    %22 = vector.shape_cast %21 : vector<16x16x128xbf16> to vector<256x128xbf16>
    %c1_27 = arith.constant 1 : index
    %c0_28 = arith.constant 0 : index
    %c0_29 = arith.constant 0 : index
    %c0_30 = arith.constant 0 : index
    %23 = vector.load %arg3[%c1_27, %c0_28, %c0_29, %c0_30] : memref<3x3x128x128xbf16, #tpu.memory_space<vmem>>, vector<1x1x128x128xbf16>
    %24 = vector.shape_cast %23 : vector<1x1x128x128xbf16> to vector<128x128xbf16>
    %cst_31 = arith.constant dense<0.000000e+00> : vector<256x128xf32>
    %25 = tpu.matmul %22, %24, %cst_31 {dimension_numbers = #tpu.dot_dimension_numbers<[1], [0], [0], [1], [0, 0, 1, 1], [], []>} : vector<256x128xbf16>, vector<128x128xbf16>, vector<256x128xf32> -> vector<256x128xf32>
    %26 = arith.addf %19, %25 : vector<256x128xf32>
    %c0_32 = arith.constant 0 : index
    %c1_33 = arith.constant 1 : index
    %c1_34 = arith.constant 1 : index
    %c0_35 = arith.constant 0 : index
    %27 = vector.load %arg2[%c0_32, %c1_33, %c1_34, %c0_35] : memref<1x18x32x128xbf16, #tpu.memory_space<vmem>>, vector<1x16x16x128xbf16>
    %28 = vector.shape_cast %27 : vector<1x16x16x128xbf16> to vector<16x16x128xbf16>
    %29 = vector.shape_cast %28 : vector<16x16x128xbf16> to vector<256x128xbf16>
    %c1_36 = arith.constant 1 : index
    %c1_37 = arith.constant 1 : index
    %c0_38 = arith.constant 0 : index
    %c0_39 = arith.constant 0 : index
    %30 = vector.load %arg3[%c1_36, %c1_37, %c0_38, %c0_39] : memref<3x3x128x128xbf16, #tpu.memory_space<vmem>>, vector<1x1x128x128xbf16>
    %31 = vector.shape_cast %30 : vector<1x1x128x128xbf16> to vector<128x128xbf16>
    %cst_40 = arith.constant dense<0.000000e+00> : vector<256x128xf32>
    %32 = tpu.matmul %29, %31, %cst_40 {dimension_numbers = #tpu.dot_dimension_numbers<[1], [0], [0], [1], [0, 0, 1, 1], [], []>} : vector<256x128xbf16>, vector<128x128xbf16>, vector<256x128xf32> -> vector<256x128xf32>
    %33 = arith.addf %26, %32 : vector<256x128xf32>
    %c0_41 = arith.constant 0 : index
    %c1_42 = arith.constant 1 : index
    %c2_43 = arith.constant 2 : index
    %c0_44 = arith.constant 0 : index
    %34 = vector.load %arg2[%c0_41, %c1_42, %c2_43, %c0_44] : memref<1x18x32x128xbf16, #tpu.memory_space<vmem>>, vector<1x16x16x128xbf16>
    %35 = vector.shape_cast %34 : vector<1x16x16x128xbf16> to vector<16x16x128xbf16>
    %36 = vector.shape_cast %35 : vector<16x16x128xbf16> to vector<256x128xbf16>
    %c1_45 = arith.constant 1 : index
    %c2_46 = arith.constant 2 : index
    %c0_47 = arith.constant 0 : index
    %c0_48 = arith.constant 0 : index
    %37 = vector.load %arg3[%c1_45, %c2_46, %c0_47, %c0_48] : memref<3x3x128x128xbf16, #tpu.memory_space<vmem>>, vector<1x1x128x128xbf16>
    %38 = vector.shape_cast %37 : vector<1x1x128x128xbf16> to vector<128x128xbf16>
    %cst_49 = arith.constant dense<0.000000e+00> : vector<256x128xf32>
    %39 = tpu.matmul %36, %38, %cst_49 {dimension_numbers = #tpu.dot_dimension_numbers<[1], [0], [0], [1], [0, 0, 1, 1], [], []>} : vector<256x128xbf16>, vector<128x128xbf16>, vector<256x128xf32> -> vector<256x128xf32>
    %40 = arith.addf %33, %39 : vector<256x128xf32>
    %c0_50 = arith.constant 0 : index
    %c2_51 = arith.constant 2 : index
    %c0_52 = arith.constant 0 : index
    %c0_53 = arith.constant 0 : index
    %41 = vector.load %arg2[%c0_50, %c2_51, %c0_52, %c0_53] : memref<1x18x32x128xbf16, #tpu.memory_space<vmem>>, vector<1x16x16x128xbf16>
    %42 = vector.shape_cast %41 : vector<1x16x16x128xbf16> to vector<16x16x128xbf16>
    %43 = vector.shape_cast %42 : vector<16x16x128xbf16> to vector<256x128xbf16>
    %c2_54 = arith.constant 2 : index
    %c0_55 = arith.constant 0 : index
    %c0_56 = arith.constant 0 : index
    %c0_57 = arith.constant 0 : index
    %44 = vector.load %arg3[%c2_54, %c0_55, %c0_56, %c0_57] : memref<3x3x128x128xbf16, #tpu.memory_space<vmem>>, vector<1x1x128x128xbf16>
    %45 = vector.shape_cast %44 : vector<1x1x128x128xbf16> to vector<128x128xbf16>
    %cst_58 = arith.constant dense<0.000000e+00> : vector<256x128xf32>
    %46 = tpu.matmul %43, %45, %cst_58 {dimension_numbers = #tpu.dot_dimension_numbers<[1], [0], [0], [1], [0, 0, 1, 1], [], []>} : vector<256x128xbf16>, vector<128x128xbf16>, vector<256x128xf32> -> vector<256x128xf32>
    %47 = arith.addf %40, %46 : vector<256x128xf32>
    %c0_59 = arith.constant 0 : index
    %c2_60 = arith.constant 2 : index
    %c1_61 = arith.constant 1 : index
    %c0_62 = arith.constant 0 : index
    %48 = vector.load %arg2[%c0_59, %c2_60, %c1_61, %c0_62] : memref<1x18x32x128xbf16, #tpu.memory_space<vmem>>, vector<1x16x16x128xbf16>
    %49 = vector.shape_cast %48 : vector<1x16x16x128xbf16> to vector<16x16x128xbf16>
    %50 = vector.shape_cast %49 : vector<16x16x128xbf16> to vector<256x128xbf16>
    %c2_63 = arith.constant 2 : index
    %c1_64 = arith.constant 1 : index
    %c0_65 = arith.constant 0 : index
    %c0_66 = arith.constant 0 : index
    %51 = vector.load %arg3[%c2_63, %c1_64, %c0_65, %c0_66] : memref<3x3x128x128xbf16, #tpu.memory_space<vmem>>, vector<1x1x128x128xbf16>
    %52 = vector.shape_cast %51 : vector<1x1x128x128xbf16> to vector<128x128xbf16>
    %cst_67 = arith.constant dense<0.000000e+00> : vector<256x128xf32>
    %53 = tpu.matmul %50, %52, %cst_67 {dimension_numbers = #tpu.dot_dimension_numbers<[1], [0], [0], [1], [0, 0, 1, 1], [], []>} : vector<256x128xbf16>, vector<128x128xbf16>, vector<256x128xf32> -> vector<256x128xf32>
    %54 = arith.addf %47, %53 : vector<256x128xf32>
    %c0_68 = arith.constant 0 : index
    %c2_69 = arith.constant 2 : index
    %c2_70 = arith.constant 2 : index
    %c0_71 = arith.constant 0 : index
    %55 = vector.load %arg2[%c0_68, %c2_69, %c2_70, %c0_71] : memref<1x18x32x128xbf16, #tpu.memory_space<vmem>>, vector<1x16x16x128xbf16>
    %56 = vector.shape_cast %55 : vector<1x16x16x128xbf16> to vector<16x16x128xbf16>
    %57 = vector.shape_cast %56 : vector<16x16x128xbf16> to vector<256x128xbf16>
    %c2_72 = arith.constant 2 : index
    %c2_73 = arith.constant 2 : index
    %c0_74 = arith.constant 0 : index
    %c0_75 = arith.constant 0 : index
    %58 = vector.load %arg3[%c2_72, %c2_73, %c0_74, %c0_75] : memref<3x3x128x128xbf16, #tpu.memory_space<vmem>>, vector<1x1x128x128xbf16>
    %59 = vector.shape_cast %58 : vector<1x1x128x128xbf16> to vector<128x128xbf16>
    %cst_76 = arith.constant dense<0.000000e+00> : vector<256x128xf32>
    %60 = tpu.matmul %57, %59, %cst_76 {dimension_numbers = #tpu.dot_dimension_numbers<[1], [0], [0], [1], [0, 0, 1, 1], [], []>} : vector<256x128xbf16>, vector<128x128xbf16>, vector<256x128xf32> -> vector<256x128xf32>
    %61 = arith.addf %54, %60 : vector<256x128xf32>
    %c0_77 = arith.constant 0 : index
    %c0_78 = arith.constant 0 : index
    %62 = vector.load %arg4[%c0_77, %c0_78] : memref<1x128xf32, #tpu.memory_space<vmem>>, vector<1x128xf32>
    %63 = vector.broadcast %62 : vector<1x128xf32> to vector<256x128xf32>
    %64 = arith.addf %61, %63 : vector<256x128xf32>
    %cst_79 = arith.constant 0.000000e+00 : f32
    %65 = vector.broadcast %cst_79 : f32 to vector<256x128xf32>
    %66 = arith.maximumf %64, %65 : vector<256x128xf32>
    %67 = vector.shape_cast %66 : vector<256x128xf32> to vector<16x16x128xf32>
    %c0_80 = arith.constant 0 : index
    %c0_81 = arith.constant 0 : index
    %c0_82 = arith.constant 0 : index
    %c0_83 = arith.constant 0 : index
    %68 = vector.load %arg5[%c0_80, %c0_81, %c0_82, %c0_83] : memref<1x16x16x128xf32, #tpu.memory_space<vmem>>, vector<1x16x16x128xf32>
    %69 = vector.shape_cast %68 : vector<1x16x16x128xf32> to vector<16x16x128xf32>
    %70 = vector.shape_cast %67 : vector<16x16x128xf32> to vector<1x16x16x128xf32>
    tpu.vector_store %arg5[%c0_80, %c0_81, %c0_82, %c0_83], %70 {strides = array<i32>} : memref<1x16x16x128xf32, #tpu.memory_space<vmem>>, vector<1x16x16x128xf32>,
    return
  }
  func.func @transform_0(%arg0: i32, %arg1: i32) -> (i32, i32, i32, i32) {
    %c0_i32 = arith.constant 0 : i32
    %c0_i32_0 = arith.constant 0 : i32
    %c0_i32_1 = arith.constant 0 : i32
    %c0_i32_2 = arith.constant 0 : i32
    return %arg1, %c0_i32, %c0_i32_0, %c0_i32_1 : i32, i32, i32, i32
  }
  func.func @transform_1(%arg0: i32, %arg1: i32) -> (i32, i32, i32, i32) {
    %c0_i32 = arith.constant 0 : i32
    %c0_i32_0 = arith.constant 0 : i32
    %c0_i32_1 = arith.constant 0 : i32
    %c0_i32_2 = arith.constant 0 : i32
    return %c0_i32, %c0_i32_0, %c0_i32_1, %arg0 : i32, i32, i32, i32
  }
  func.func @transform_2(%arg0: i32, %arg1: i32) -> (i32, i32) {
    %c0_i32 = arith.constant 0 : i32
    %c0_i32_0 = arith.constant 0 : i32
    return %c0_i32, %arg0 : i32, i32
  }
  func.func @transform_3(%arg0: i32, %arg1: i32) -> (i32, i32, i32, i32) {
    %c0_i32 = arith.constant 0 : i32
    %c0_i32_0 = arith.constant 0 : i32
    %c0_i32_1 = arith.constant 0 : i32
    return %arg1, %c0_i32, %c0_i32_0, %arg0 : i32, i32, i32, i32
  }
}

</mosaic_0001>

<llo_original>
// kernel: tpu_custom_call.1
$region0: #{tpu_custom_call.1}
  #allocation0 [shape = 'u32[]', space=smem, size = 0x4, offset = 0x4, fixed_abs, tag = 'smem constant byte address 0x4 - core index']
  #allocation1 [shape = 'u32[144,128]{1,0:T(1,128)}', space=vmem, size = 0x12000, scoped, tag = 'internal scratch']
  %s0 = inlined_call_operand.hbm [shape: bf16[2,18,32,128], index: 0, kind: input, shape index: {}]
  %s1 = inlined_call_operand.hbm [shape: bf16[3,3,128,128], index: 1, kind: input, shape index: {}]
  %s2 = inlined_call_operand.vmem [shape: f32[1,128], index: 2, kind: input, shape index: {}]
  %s3 = inlined_call_operand.hbm [shape: f32[2,16,16,128], index: 3, kind: output, shape index: {}]
  %s4 = sld [smem:[#allocation0]]
  $region53: #{tpu_custom_call.1} parent=0
    _
  %s6 = ssub.s32 1, %s4
  %s7 = scalar_select 0, %s6, %s4
  $region1: #{tpu_custom_call.1} parent=0
    #allocation2 [shape = 'u8[294912]{0}', space=vmem, size = 0x48000, scoped, tag = 'input window, operand 0']
    #allocation3 [shape = 's32[2]{0}', space=sflag, size = 0x8, scoped, tag = 'scoped memory for tpu_custom_call.1']
    #allocation4 [shape = 's32[2]{0}', space=sflag, size = 0x8, scoped, tag = 'scoped memory for tpu_custom_call.1']
    #allocation5 [shape = 'u8[294912]{0}', space=vmem, size = 0x48000, scoped, tag = 'input window, operand 1, single buffered']
    #allocation6 [shape = 's32[1]{0}', space=sflag, size = 0x4, scoped, tag = 'scoped memory for tpu_custom_call.1']
    #allocation7 [shape = 'u8[262144]{0}', space=vmem, size = 0x40000, scoped, tag = 'output window, operand 0']
    %8 = vsyncpa [#allocation3], 0
    %s9 = scalar_lea.sflag [#allocation3], 1
    %10 = vsyncpa %s9, 0
    %11 = vsyncpa [#allocation6], 0
    %12 = vsyncpa [#allocation4], 0
    %s13 = scalar_lea.sflag [#allocation4], 1
    %14 = vsyncpa %s13, 0
    loop: start=0, step=1, limit=4
    $region2: #{tpu_custom_call.1} parent=1 // loop_pre_header
      _
    $region3: #{tpu_custom_call.1} parent=1 // loop_header
      %s16 = sphi 0, %s20
      %p17 = scmp.ge.s32.totalorder %s16, 4
      %s23 = sphi 0, %s35
      %s24 = sphi 0, %s31
      %s25 = sphi 0, %s23
      %s26 = sphi 0, %s24
      %s27 = sphi 0, %s25
      %s28 = sphi 0, %s26
      %s38 = sphi 0, %s40
      %s41 = sphi 0, %s38
      %s42 = sphi 0, %s41
      %s58 = sphi 0, %s42
      %s64 = sphi 0, %s66
      %s67 = sphi 0, %s64
      %s68 = sphi 0, %s67
      %s84 = sphi 0, %s68
      %s90 = sphi 0, %s92
      %s93 = sphi 0, %s90
      %s94 = sphi 0, %s93
      %s110 = sphi 0, %s94
      %s118 = sphi 0, %s120
      %s121 = sphi 0, %s118
      %s122 = sphi 0, %s121
      %s138 = sphi 0, %s122
    $region4: #{tpu_custom_call.1} parent=1 // loop_header_branch
      %19 = sbr.rel (%p17) target = $region8
    $region5: #{tpu_custom_call.1} parent=1 // loop_body
      %s21 = ssub.s32 %s16, 1
      %s22 = ssub.s32 %s16, 2
      %s29 = sadd.s32 1, %s24
      %p30 = scmp.ge.s32.totalorder %s29, 2
      %s31 = scalar_select %p30, 0, %s29
      %s32 = sadd.s32 1, %s23
      %s33 = scalar_select %p30, %s32, %s23
      %p34 = scmp.ge.s32.totalorder %s33, 1
      %s35 = scalar_select %p34, 0, %s33
      %s36 = ssub.s32 %s24, %s31
      %p37 = scmp.eq.s32.totalorder %s36, 0
      %s39 = sadd.s32 %s38, 1
      %s40 = scalar_select %p37, %s38, %s39
      %p43 = pneg %p37
      %p44 = scmp.eq.s32.totalorder %s16, 1
      %p45 = por %p43, %p44
      %p46 = scmp.ne.s32.totalorder %s38, %s41
      %p47 = scmp.eq.s32.totalorder %s16, 0
      %p48 = por %p46, %p47
      %p49 = scmp.ne.s32.totalorder %s38, %s41
      %p50 = scmp.eq.s32.totalorder %s21, 1
      %p51 = por %p49, %p50
      %p52 = scmp.ne.s32.totalorder %s41, %s42
      %p53 = scmp.eq.s32.totalorder %s21, 0
      %p54 = por %p52, %p53
      %p55 = scmp.ne.s32.totalorder %s41, %s42
      %p56 = scmp.eq.s32.totalorder %s22, 1
      %p57 = por %p55, %p56
      %p59 = scmp.ne.s32.totalorder %s42, %s58
      %p60 = scmp.eq.s32.totalorder %s22, 0
      %p61 = por %p59, %p60
      %s62 = ssub.s32 %s23, %s35
      %p63 = scmp.eq.s32.totalorder %s62, 0
      %s65 = sadd.s32 %s64, 1
      %s66 = scalar_select %p63, %s64, %s65
      %p69 = pneg %p63
      %p70 = scmp.eq.s32.totalorder %s16, 1
      %p71 = por %p69, %p70
      %p72 = scmp.ne.s32.totalorder %s64, %s67
      %p73 = scmp.eq.s32.totalorder %s16, 0
      %p74 = por %p72, %p73
      %p75 = scmp.ne.s32.totalorder %s64, %s67
      %p76 = scmp.eq.s32.totalorder %s21, 1
      %p77 = por %p75, %p76
      %p78 = scmp.ne.s32.totalorder %s67, %s68
      %p79 = scmp.eq.s32.totalorder %s21, 0
      %p80 = por %p78, %p79
      %p81 = scmp.ne.s32.totalorder %s67, %s68
      %p82 = scmp.eq.s32.totalorder %s22, 1
      %p83 = por %p81, %p82
      %p85 = scmp.ne.s32.totalorder %s68, %s84
      %p86 = scmp.eq.s32.totalorder %s22, 0
      %p87 = por %p85, %p86
      %s88 = ssub.s32 %s23, %s35
      %p89 = scmp.eq.s32.totalorder %s88, 0
      %s91 = sadd.s32 %s90, 1
      %s92 = scalar_select %p89, %s90, %s91
      %p95 = pneg %p89
      %p96 = scmp.eq.s32.totalorder %s16, 1
      %p97 = por %p95, %p96
      %p98 = scmp.ne.s32.totalorder %s90, %s93
      %p99 = scmp.eq.s32.totalorder %s16, 0
      %p100 = por %p98, %p99
      %p101 = scmp.ne.s32.totalorder %s90, %s93
      %p102 = scmp.eq.s32.totalorder %s21, 1
      %p103 = por %p101, %p102
      %p104 = scmp.ne.s32.totalorder %s93, %s94
      %p105 = scmp.eq.s32.totalorder %s21, 0
      %p106 = por %p104, %p105
      %p107 = scmp.ne.s32.totalorder %s93, %s94
      %p108 = scmp.eq.s32.totalorder %s22, 1
      %p109 = por %p107, %p108
      %p111 = scmp.ne.s32.totalorder %s94, %s110
      %p112 = scmp.eq.s32.totalorder %s22, 0
      %p113 = por %p111, %p112
      %s114 = ssub.s32 %s24, %s31
      %s115 = ssub.s32 %s23, %s35
      %s116 = sor.u32 %s114, %s115
      %p117 = scmp.eq.s32.totalorder %s116, 0
      %s119 = sadd.s32 %s118, 1
      %s120 = scalar_select %p117, %s118, %s119
      %p123 = pneg %p117
      %p124 = scmp.eq.s32.totalorder %s16, 1
      %p125 = por %p123, %p124
      %p126 = scmp.ne.s32.totalorder %s118, %s121
      %p127 = scmp.eq.s32.totalorder %s16, 0
      %p128 = por %p126, %p127
      %p129 = scmp.ne.s32.totalorder %s118, %s121
      %p130 = scmp.eq.s32.totalorder %s21, 1
      %p131 = por %p129, %p130
      %p132 = scmp.ne.s32.totalorder %s121, %s122
      %p133 = scmp.eq.s32.totalorder %s21, 0
      %p134 = por %p132, %p133
      %p135 = scmp.ne.s32.totalorder %s121, %s122
      %p136 = scmp.eq.s32.totalorder %s22, 1
      %p137 = por %p135, %p136
      %p139 = scmp.ne.s32.totalorder %s122, %s138
      %p140 = scmp.eq.s32.totalorder %s22, 0
      %p141 = por %p139, %p140
      %p142 = scmp.le.s32.totalorder 1, %s16
      %p143 = scmp.lt.s32.totalorder %s16, 3
      %p144 = pnand %p142, %p143
      %p145 = pneg %p144
      // Predicated region
      $region9: #{tpu_custom_call.1} parent=5 // pred_check
        _
      $region10: #{tpu_custom_call.1} parent=5 // pred_check_branch
        %147 = sbr.rel (%p144) target = $region12
      $region11: #{tpu_custom_call.1} parent=5 // pred_region
        %s148 = ssub.s32 %s16, 1
        // Predicated region
        $region13: #{tpu_custom_call.1} parent=11 // pred_check
          %p149 = pneg %p80
        $region14: #{tpu_custom_call.1} parent=11 // pred_check_branch
          %151 = sbr.rel (%p149) target = $region16
        $region15: #{tpu_custom_call.1} parent=11 // pred_region
          %s153 = ssub.s32 9216, 9216
          %154 = vsyncadd [#allocation6], %s153
          %s155 = smul.addr %s25, 64
          %s156 = scalar_lea.hbm %s1, %s155
          %s157 = sshll.u32 [#allocation5], 4
          %s158 = int_to_ptr.vmem [resolvable:$true] %s157
          %163 = dma.hbm_to_vmem [thread:$0]  %s156, 9216, %s158, [#allocation6], 64, 64, 4
        $region16: #{tpu_custom_call.1} parent=11 // pred_fallthru
          _
        // Predicated region
        $region17: #{tpu_custom_call.1} parent=11 // pred_check
          %p164 = pneg %p106
        $region18: #{tpu_custom_call.1} parent=11 // pred_check_branch
          %166 = sbr.rel (%p164) target = $region20
        $region19: #{tpu_custom_call.1} parent=11 // pred_region
          %p167 = scmp.lt.s32.totalorder %s25, 0
          %s168 = scalar_select %p167, %s25, 0
          %s169 = scalar_lea.vmem %s2, %s168
        $region20: #{tpu_custom_call.1} parent=11 // pred_fallthru
          _
      $region12: #{tpu_custom_call.1} parent=5 // pred_fallthru
        _
      %p170 = scmp.lt.s32.totalorder %s16, 2
      // Predicated region
      $region21: #{tpu_custom_call.1} parent=5 // pred_check
        %p171 = pneg %p170
      $region22: #{tpu_custom_call.1} parent=5 // pred_check_branch
        %173 = sbr.rel (%p171) target = $region24
      $region23: #{tpu_custom_call.1} parent=5 // pred_region
        // Predicated region
        $region25: #{tpu_custom_call.1} parent=23 // pred_check
          %p174 = pneg %p48
        $region26: #{tpu_custom_call.1} parent=23 // pred_check_branch
          %176 = sbr.rel (%p174) target = $region28
        $region27: #{tpu_custom_call.1} parent=23 // pred_region
          %s177 = sand.u32 %s38, 1
          %s178 = scalar_lea.sflag [#allocation3], %s177
          %s179 = sand.u32 %s38, 1
          %s180 = smul.addr %s179, 288
          %s181 = scalar_lea.vmem [#allocation2], %s180
          %s183 = ssub.s32 4608, 4608
          %184 = vsyncadd %s178, %s183
          %s185 = smul.addr %s24, 72
          %s186 = smul.addr %s185, 64
          %s187 = scalar_lea.hbm %s0, %s186
          %s188 = sshll.u32 %s181, 4
          %s189 = int_to_ptr.vmem [resolvable:$true] %s188
          %194 = dma.hbm_to_vmem [thread:$0]  %s187, 4608, %s189, %s178, 64, 64, 4
        $region28: #{tpu_custom_call.1} parent=23 // pred_fallthru
          _
      $region24: #{tpu_custom_call.1} parent=5 // pred_fallthru
        _
      %p195 = scmp.le.s32.totalorder 1, %s16
      %p196 = scmp.lt.s32.totalorder %s16, 3
      %p197 = pnand %p195, %p196
      %p198 = pneg %p197
      // Predicated region
      $region29: #{tpu_custom_call.1} parent=5 // pred_check
        _
      $region30: #{tpu_custom_call.1} parent=5 // pred_check_branch
        %200 = sbr.rel (%p197) target = $region32
      $region31: #{tpu_custom_call.1} parent=5 // pred_region
        %s201 = ssub.s32 %s16, 1
        %s202 = sand.u32 %s41, 1
        %s203 = scalar_lea.sflag [#allocation3], %s202
        %s204 = sand.u32 %s41, 1
        %s205 = smul.addr %s204, 288
        %s206 = scalar_lea.vmem [#allocation2], %s205
        // Predicated region
        $region33: #{tpu_custom_call.1} parent=31 // pred_check
          %p207 = pneg %p54
        $region34: #{tpu_custom_call.1} parent=31 // pred_check_branch
          %209 = sbr.rel (%p207) target = $region36
        $region35: #{tpu_custom_call.1} parent=31 // pred_region
          %210 = dma.done %s203, 4608
        $region36: #{tpu_custom_call.1} parent=31 // pred_fallthru
          _
        // Predicated region
        $region37: #{tpu_custom_call.1} parent=31 // pred_check
          %p211 = pneg %p80
        $region38: #{tpu_custom_call.1} parent=31 // pred_check_branch
          %213 = sbr.rel (%p211) target = $region40
        $region39: #{tpu_custom_call.1} parent=31 // pred_region
          %214 = dma.done [#allocation6], 9216
        $region40: #{tpu_custom_call.1} parent=31 // pred_fallthru
          _
        %s215 = sand.u32 %s41, 1
        %s216 = scalar_lea.sflag [#allocation3], %s215
        %s217 = sand.u32 %s41, 1
        %s218 = smul.addr %s217, 288
        %s219 = scalar_lea.vmem [#allocation2], %s218
        %p220 = pneg %p54
        %p221 = pneg %p51
        %p222 = pneg %p80
        %p223 = pneg %p77
        %p224 = scmp.lt.s32.totalorder %s25, 0
        %s225 = scalar_select %p224, %s25, 0
        %s226 = scalar_lea.vmem %s2, %s225
        %p227 = pneg %p106
        %p228 = pneg %p103
        %p229 = pneg %p134
        %p230 = pneg %p131
        %s231 = sand.u32 %s121, 1
        %s232 = scalar_lea.sflag [#allocation4], %s231
        %s233 = sand.u32 %s121, 1
        %s234 = smul.addr %s233, 256
        %s235 = scalar_lea.vmem [#allocation7], %s234
        %p236 = scmp.lt.s32.totalorder %s25, 0
        %s237 = scalar_select %p236, %s25, 0
        %s238 = scalar_lea.vmem %s2, %s237
        %v240 = vld [vmem:[%s206] sm:$0xf]
        %v241 = vld [vmem:[%s206 + $0x4] sm:$0xf]
        %v242 = vld [vmem:[%s206 + $0x10] sm:$0xf]
        %v243 = vld [vmem:[%s206 + $0x14] sm:$0xf]
        %v244 = vld [vmem:[%s206 + $0x20] sm:$0xf]
        %v245 = vld [vmem:[%s206 + $0x24] sm:$0xf]
        %v246 = vld [vmem:[%s206 + $0x30] sm:$0xf]
        %v247 = vld [vmem:[%s206 + $0x34] sm:$0xf]
        %v248 = vld [vmem:[%s206 + $0x40] sm:$0xf]
        %v249 = vld [vmem:[%s206 + $0x44] sm:$0xf]
        %v250 = vld [vmem:[%s206 + $0x50] sm:$0xf]
        %v251 = vld [vmem:[%s206 + $0x54] sm:$0xf]
        %v252 = vld [vmem:[%s206 + $0x60] sm:$0xf]
        %v253 = vld [vmem:[%s206 + $0x64] sm:$0xf]
        %v254 = vld [vmem:[%s206 + $0x70] sm:$0xf]
        %v255 = vld [vmem:[%s206 + $0x74] sm:$0xf]
        %v256 = vld [vmem:[%s206 + $0x80] sm:$0xf]
        %v257 = vld [vmem:[%s206 + $0x84] sm:$0xf]
        %v258 = vld [vmem:[%s206 + $0x90] sm:$0xf]
        %v259 = vld [vmem:[%s206 + $0x94] sm:$0xf]
        %v260 = vld [vmem:[%s206 + $0xa0] sm:$0xf]
        %v261 = vld [vmem:[%s206 + $0xa4] sm:$0xf]
        %v262 = vld [vmem:[%s206 + $0xb0] sm:$0xf]
        %v263 = vld [vmem:[%s206 + $0xb4] sm:$0xf]
        %v264 = vld [vmem:[%s206 + $0xc0] sm:$0xf]
        %v265 = vld [vmem:[%s206 + $0xc4] sm:$0xf]
        %v266 = vld [vmem:[%s206 + $0xd0] sm:$0xf]
        %v267 = vld [vmem:[%s206 + $0xd4] sm:$0xf]
        %v268 = vld [vmem:[%s206 + $0xe0] sm:$0xf]
        %v269 = vld [vmem:[%s206 + $0xe4] sm:$0xf]
        %v270 = vld [vmem:[%s206 + $0xf0] sm:$0xf]
        %v271 = vld [vmem:[%s206 + $0xf4] sm:$0xf]
        %v272 = vld [vmem:[#allocation5] sm:$0xf]
        %v273 = vld [vmem:[#allocation5 + $0x4] sm:$0xf]
        %v274 = vld [vmem:[#allocation5 + $0x8] sm:$0xf]
        %v275 = vld [vmem:[#allocation5 + $0xc] sm:$0xf]
        %v276 = vld [vmem:[#allocation5 + $0x10] sm:$0xf]
        %v277 = vld [vmem:[#allocation5 + $0x14] sm:$0xf]
        %v278 = vld [vmem:[#allocation5 + $0x18] sm:$0xf]
        %v279 = vld [vmem:[#allocation5 + $0x1c] sm:$0xf]
        %v280 = vld [vmem:[#allocation5 + $0x20] sm:$0xf]
        %v281 = vld [vmem:[#allocation5 + $0x24] sm:$0xf]
        %v282 = vld [vmem:[#allocation5 + $0x28] sm:$0xf]
        %v283 = vld [vmem:[#allocation5 + $0x2c] sm:$0xf]
        %v284 = vld [vmem:[#allocation5 + $0x30] sm:$0xf]
        %v285 = vld [vmem:[#allocation5 + $0x34] sm:$0xf]
        %v286 = vld [vmem:[#allocation5 + $0x38] sm:$0xf]
        %v287 = vld [vmem:[#allocation5 + $0x3c] sm:$0xf]
        %v288 = vld [vmem:[%s206 + $0x8] sm:$0x1]
        %v289 = vld [vmem:[%s206 + $0x18] sm:$0x1]
        %v290 = vld [vmem:[%s206 + $0x28] sm:$0x1]
        %v291 = vld [vmem:[%s206 + $0x38] sm:$0x1]
        %v292 = vld [vmem:[%s206 + $0x48] sm:$0x1]
        %v293 = vld [vmem:[%s206 + $0x58] sm:$0x1]
        %v294 = vld [vmem:[%s206 + $0x68] sm:$0x1]
        %v295 = vld [vmem:[%s206 + $0x78] sm:$0x1]
        %v296 = vld [vmem:[%s206 + $0x88] sm:$0x1]
        %v297 = vld [vmem:[%s206 + $0x98] sm:$0x1]
        %v298 = vld [vmem:[%s206 + $0xa8] sm:$0x1]
        %v299 = vld [vmem:[%s206 + $0xb8] sm:$0x1]
        %v300 = vld [vmem:[%s206 + $0xc8] sm:$0x1]
        %v301 = vld [vmem:[%s206 + $0xd8] sm:$0x1]
        %v302 = vld [vmem:[%s206 + $0xe8] sm:$0x1]
        %v303 = vld [vmem:[%s206 + $0xf8] sm:$0x1]
        %vm304 = vsmask.f32 3328
        %vm305 = vsmask.f32 7440
        %vm306 = vmor %vm304, %vm305
        %v308 = vshrl.u32 %v240, 16
        %v310 = vrot.slane %v308, 4
        %v311 = vshll.u32 %v240, 16
        %v313 = vrot.slane %v311, 5
        %v314 = vor.u32 %v310, %v313
        %v315 = vrot.slane %v314, 4
        %v317 = vshll.u32 %v241, 16
        %v319 = vrot.slane %v317, 5
        %v320 = vsel %vm306, %v315, %v319
        %v321 = vshrl.u32 %v241, 16
        %v323 = vrot.slane %v321, 4
        %v324 = vor.u32 %v323, %v319
        %v325 = vrot.slane %v324, 4
        %v327 = vshll.u32 %v288, 16
        %v329 = vrot.slane %v327, 5
        %v330 = vsel %vm306, %v325, %v329
        %v332 = vshrl.u32 %v242, 16
        %v334 = vrot.slane %v332, 4
        %v335 = vshll.u32 %v242, 16
        %v337 = vrot.slane %v335, 5
        %v338 = vor.u32 %v334, %v337
        %v339 = vrot.slane %v338, 4
        %v341 = vshll.u32 %v243, 16
        %v343 = vrot.slane %v341, 5
        %v344 = vsel %vm306, %v339, %v343
        %v345 = vshrl.u32 %v243, 16
        %v347 = vrot.slane %v345, 4
        %v348 = vor.u32 %v347, %v343
        %v349 = vrot.slane %v348, 4
        %v351 = vshll.u32 %v289, 16
        %v353 = vrot.slane %v351, 5
        %v354 = vsel %vm306, %v349, %v353
        %v356 = vshrl.u32 %v244, 16
        %v358 = vrot.slane %v356, 4
        %v359 = vshll.u32 %v244, 16
        %v361 = vrot.slane %v359, 5
        %v362 = vor.u32 %v358, %v361
        %v363 = vrot.slane %v362, 4
        %v365 = vshll.u32 %v245, 16
        %v367 = vrot.slane %v365, 5
        %v368 = vsel %vm306, %v363, %v367
        %v369 = vshrl.u32 %v245, 16
        %v371 = vrot.slane %v369, 4
        %v372 = vor.u32 %v371, %v367
        %v373 = vrot.slane %v372, 4
        %v375 = vshll.u32 %v290, 16
        %v377 = vrot.slane %v375, 5
        %v378 = vsel %vm306, %v373, %v377
        %v380 = vshrl.u32 %v246, 16
        %v382 = vrot.slane %v380, 4
        %v383 = vshll.u32 %v246, 16
        %v385 = vrot.slane %v383, 5
        %v386 = vor.u32 %v382, %v385
        %v387 = vrot.slane %v386, 4
        %v389 = vshll.u32 %v247, 16
        %v391 = vrot.slane %v389, 5
        %v392 = vsel %vm306, %v387, %v391
        %v393 = vshrl.u32 %v247, 16
        %v395 = vrot.slane %v393, 4
        %v396 = vor.u32 %v395, %v391
        %v397 = vrot.slane %v396, 4
        %v399 = vshll.u32 %v291, 16
        %v401 = vrot.slane %v399, 5
        %v402 = vsel %vm306, %v397, %v401
        %v404 = vshrl.u32 %v248, 16
        %v406 = vrot.slane %v404, 4
        %v407 = vshll.u32 %v248, 16
        %v409 = vrot.slane %v407, 5
        %v410 = vor.u32 %v406, %v409
        %v411 = vrot.slane %v410, 4
        %v413 = vshll.u32 %v249, 16
        %v415 = vrot.slane %v413, 5
        %v416 = vsel %vm306, %v411, %v415
        %v417 = vshrl.u32 %v249, 16
        %v419 = vrot.slane %v417, 4
        %v420 = vor.u32 %v419, %v415
        %v421 = vrot.slane %v420, 4
        %v423 = vshll.u32 %v292, 16
        %v425 = vrot.slane %v423, 5
        %v426 = vsel %vm306, %v421, %v425
        %v428 = vshrl.u32 %v250, 16
        %v430 = vrot.slane %v428, 4
        %v431 = vshll.u32 %v250, 16
        %v433 = vrot.slane %v431, 5
        %v434 = vor.u32 %v430, %v433
        %v435 = vrot.slane %v434, 4
        %v437 = vshll.u32 %v251, 16
        %v439 = vrot.slane %v437, 5
        %v440 = vsel %vm306, %v435, %v439
        %v441 = vshrl.u32 %v251, 16
        %v443 = vrot.slane %v441, 4
        %v444 = vor.u32 %v443, %v439
        %v445 = vrot.slane %v444, 4
        %v447 = vshll.u32 %v293, 16
        %v449 = vrot.slane %v447, 5
        %v450 = vsel %vm306, %v445, %v449
        %v452 = vshrl.u32 %v252, 16
        %v454 = vrot.slane %v452, 4
        %v455 = vshll.u32 %v252, 16
        %v457 = vrot.slane %v455, 5
        %v458 = vor.u32 %v454, %v457
        %v459 = vrot.slane %v458, 4
        %v461 = vshll.u32 %v253, 16
        %v463 = vrot.slane %v461, 5
        %v464 = vsel %vm306, %v459, %v463
        %v465 = vshrl.u32 %v253, 16
        %v467 = vrot.slane %v465, 4
        %v468 = vor.u32 %v467, %v463
        %v469 = vrot.slane %v468, 4
        %v471 = vshll.u32 %v294, 16
        %v473 = vrot.slane %v471, 5
        %v474 = vsel %vm306, %v469, %v473
        %v476 = vshrl.u32 %v254, 16
        %v478 = vrot.slane %v476, 4
        %v479 = vshll.u32 %v254, 16
        %v481 = vrot.slane %v479, 5
        %v482 = vor.u32 %v478, %v481
        %v483 = vrot.slane %v482, 4
        %v485 = vshll.u32 %v255, 16
        %v487 = vrot.slane %v485, 5
        %v488 = vsel %vm306, %v483, %v487
        %v489 = vshrl.u32 %v255, 16
        %v491 = vrot.slane %v489, 4
        %v492 = vor.u32 %v491, %v487
        %v493 = vrot.slane %v492, 4
        %v495 = vshll.u32 %v295, 16
        %v497 = vrot.slane %v495, 5
        %v498 = vsel %vm306, %v493, %v497
        %v500 = vshrl.u32 %v256, 16
        %v502 = vrot.slane %v500, 4
        %v503 = vshll.u32 %v256, 16
        %v505 = vrot.slane %v503, 5
        %v506 = vor.u32 %v502, %v505
        %v507 = vrot.slane %v506, 4
        %v509 = vshll.u32 %v257, 16
        %v511 = vrot.slane %v509, 5
        %v512 = vsel %vm306, %v507, %v511
        %v513 = vshrl.u32 %v257, 16
        %v515 = vrot.slane %v513, 4
        %v516 = vor.u32 %v515, %v511
        %v517 = vrot.slane %v516, 4
        %v519 = vshll.u32 %v296, 16
        %v521 = vrot.slane %v519, 5
        %v522 = vsel %vm306, %v517, %v521
        %v524 = vshrl.u32 %v258, 16
        %v526 = vrot.slane %v524, 4
        %v527 = vshll.u32 %v258, 16
        %v529 = vrot.slane %v527, 5
        %v530 = vor.u32 %v526, %v529
        %v531 = vrot.slane %v530, 4
        %v533 = vshll.u32 %v259, 16
        %v535 = vrot.slane %v533, 5
        %v536 = vsel %vm306, %v531, %v535
        %v537 = vshrl.u32 %v259, 16
        %v539 = vrot.slane %v537, 4
        %v540 = vor.u32 %v539, %v535
        %v541 = vrot.slane %v540, 4
        %v543 = vshll.u32 %v297, 16
        %v545 = vrot.slane %v543, 5
        %v546 = vsel %vm306, %v541, %v545
        %v548 = vshrl.u32 %v260, 16
        %v550 = vrot.slane %v548, 4
        %v551 = vshll.u32 %v260, 16
        %v553 = vrot.slane %v551, 5
        %v554 = vor.u32 %v550, %v553
        %v555 = vrot.slane %v554, 4
        %v557 = vshll.u32 %v261, 16
        %v559 = vrot.slane %v557, 5
        %v560 = vsel %vm306, %v555, %v559
        %v561 = vshrl.u32 %v261, 16
        %v563 = vrot.slane %v561, 4
        %v564 = vor.u32 %v563, %v559
        %v565 = vrot.slane %v564, 4
        %v567 = vshll.u32 %v298, 16
        %v569 = vrot.slane %v567, 5
        %v570 = vsel %vm306, %v565, %v569
        %v572 = vshrl.u32 %v262, 16
        %v574 = vrot.slane %v572, 4
        %v575 = vshll.u32 %v262, 16
        %v577 = vrot.slane %v575, 5
        %v578 = vor.u32 %v574, %v577
        %v579 = vrot.slane %v578, 4
        %v581 = vshll.u32 %v263, 16
        %v583 = vrot.slane %v581, 5
        %v584 = vsel %vm306, %v579, %v583
        %v585 = vshrl.u32 %v263, 16
        %v587 = vrot.slane %v585, 4
        %v588 = vor.u32 %v587, %v583
        %v589 = vrot.slane %v588, 4
        %v591 = vshll.u32 %v299, 16
        %v593 = vrot.slane %v591, 5
        %v594 = vsel %vm306, %v589, %v593
        %v596 = vshrl.u32 %v264, 16
        %v598 = vrot.slane %v596, 4
        %v599 = vshll.u32 %v264, 16
        %v601 = vrot.slane %v599, 5
        %v602 = vor.u32 %v598, %v601
        %v603 = vrot.slane %v602, 4
        %v605 = vshll.u32 %v265, 16
        %v607 = vrot.slane %v605, 5
        %v608 = vsel %vm306, %v603, %v607
        %v609 = vshrl.u32 %v265, 16
        %v611 = vrot.slane %v609, 4
        %v612 = vor.u32 %v611, %v607
        %v613 = vrot.slane %v612, 4
        %v615 = vshll.u32 %v300, 16
        %v617 = vrot.slane %v615, 5
        %v618 = vsel %vm306, %v613, %v617
        %v620 = vshrl.u32 %v266, 16
        %v622 = vrot.slane %v620, 4
        %v623 = vshll.u32 %v266, 16
        %v625 = vrot.slane %v623, 5
        %v626 = vor.u32 %v622, %v625
        %v627 = vrot.slane %v626, 4
        %v629 = vshll.u32 %v267, 16
        %v631 = vrot.slane %v629, 5
        %v632 = vsel %vm306, %v627, %v631
        %v633 = vshrl.u32 %v267, 16
        %v635 = vrot.slane %v633, 4
        %v636 = vor.u32 %v635, %v631
        %v637 = vrot.slane %v636, 4
        %v639 = vshll.u32 %v301, 16
        %v641 = vrot.slane %v639, 5
        %v642 = vsel %vm306, %v637, %v641
        %v644 = vshrl.u32 %v268, 16
        %v646 = vrot.slane %v644, 4
        %v647 = vshll.u32 %v268, 16
        %v649 = vrot.slane %v647, 5
        %v650 = vor.u32 %v646, %v649
        %v651 = vrot.slane %v650, 4
        %v653 = vshll.u32 %v269, 16
        %v655 = vrot.slane %v653, 5
        %v656 = vsel %vm306, %v651, %v655
        %v657 = vshrl.u32 %v269, 16
        %v659 = vrot.slane %v657, 4
        %v660 = vor.u32 %v659, %v655
        %v661 = vrot.slane %v660, 4
        %v663 = vshll.u32 %v302, 16
        %v665 = vrot.slane %v663, 5
        %v666 = vsel %vm306, %v661, %v665
        %v668 = vshrl.u32 %v270, 16
        %v670 = vrot.slane %v668, 4
        %v671 = vshll.u32 %v270, 16
        %v673 = vrot.slane %v671, 5
        %v674 = vor.u32 %v670, %v673
        %v675 = vrot.slane %v674, 4
        %v677 = vshll.u32 %v271, 16
        %v679 = vrot.slane %v677, 5
        %v680 = vsel %vm306, %v675, %v679
        %v681 = vshrl.u32 %v271, 16
        %v683 = vrot.slane %v681, 4
        %v684 = vor.u32 %v683, %v679
        %v685 = vrot.slane %v684, 4
        %v687 = vshll.u32 %v303, 16
        %v689 = vrot.slane %v687, 5
        %v690 = vsel %vm306, %v685, %v689
        %s691 = scalar_lea.vmem [#allocation5], 64
        %v692 = vld [vmem:[%s691] sm:$0xf]
        %v693 = vld [vmem:[%s691 + $0x4] sm:$0xf]
        %v694 = vld [vmem:[%s691 + $0x8] sm:$0xf]
        %v695 = vld [vmem:[%s691 + $0xc] sm:$0xf]
        %v696 = vld [vmem:[%s691 + $0x10] sm:$0xf]
        %v697 = vld [vmem:[%s691 + $0x14] sm:$0xf]
        %v698 = vld [vmem:[%s691 + $0x18] sm:$0xf]
        %v699 = vld [vmem:[%s691 + $0x1c] sm:$0xf]
        %v700 = vld [vmem:[%s691 + $0x20] sm:$0xf]
        %v701 = vld [vmem:[%s691 + $0x24] sm:$0xf]
        %v702 = vld [vmem:[%s691 + $0x28] sm:$0xf]
        %v703 = vld [vmem:[%s691 + $0x2c] sm:$0xf]
        %v704 = vld [vmem:[%s691 + $0x30] sm:$0xf]
        %v705 = vld [vmem:[%s691 + $0x34] sm:$0xf]
        %v706 = vld [vmem:[%s691 + $0x38] sm:$0xf]
        %v707 = vld [vmem:[%s691 + $0x3c] sm:$0xf]
        %v708 = vunpack.c.l.b16 %v320
        %v709 = vunpack.c.l.b16 %v330
        %v710 = vunpack.c.l.b16 %v344
        %v711 = vunpack.c.l.b16 %v354
        %v712 = vunpack.c.l.b16 %v368
        %v713 = vunpack.c.l.b16 %v378
        %v714 = vunpack.c.l.b16 %v392
        %v715 = vunpack.c.l.b16 %v402
        %v716 = vunpack.c.l.b16 %v416
        %v717 = vunpack.c.l.b16 %v426
        %v718 = vunpack.c.l.b16 %v440
        %v719 = vunpack.c.l.b16 %v450
        %v720 = vunpack.c.l.b16 %v464
        %v721 = vunpack.c.l.b16 %v474
        %v722 = vunpack.c.l.b16 %v488
        %v723 = vunpack.c.l.b16 %v498
        %v724 = vunpack.c.l.b16 %v512
        %v725 = vunpack.c.l.b16 %v522
        %v726 = vunpack.c.l.b16 %v536
        %v727 = vunpack.c.l.b16 %v546
        %v728 = vunpack.c.l.b16 %v560
        %v729 = vunpack.c.l.b16 %v570
        %v730 = vunpack.c.l.b16 %v584
        %v731 = vunpack.c.l.b16 %v594
        %v732 = vunpack.c.l.b16 %v608
        %v733 = vunpack.c.l.b16 %v618
        %v734 = vunpack.c.l.b16 %v632
        %v735 = vunpack.c.l.b16 %v642
        %v736 = vunpack.c.l.b16 %v656
        %v737 = vunpack.c.l.b16 %v666
        %v738 = vunpack.c.l.b16 %v680
        %v739 = vunpack.c.l.b16 %v690
        %v740 = vpack.c.b16 %v709, %v708
        %v741 = vpack.c.b16 %v711, %v710
        %v742 = vpack.c.b16 %v713, %v712
        %v743 = vpack.c.b16 %v715, %v714
        %v744 = vpack.c.b16 %v717, %v716
        %v745 = vpack.c.b16 %v719, %v718
        %v746 = vpack.c.b16 %v721, %v720
        %v747 = vpack.c.b16 %v723, %v722
        %v748 = vpack.c.b16 %v725, %v724
        %v749 = vpack.c.b16 %v727, %v726
        %v750 = vpack.c.b16 %v729, %v728
        %v751 = vpack.c.b16 %v731, %v730
        %v752 = vpack.c.b16 %v733, %v732
        %v753 = vpack.c.b16 %v735, %v734
        %v754 = vpack.c.b16 %v737, %v736
        %v755 = vpack.c.b16 %v739, %v738
        %v788 = vunpack.c.l.b16 %v692
        %v789 = vunpack.c.l.b16 %v693
        %v790 = vunpack.c.l.b16 %v694
        %v791 = vunpack.c.l.b16 %v695
        %v792 = vunpack.c.l.b16 %v696
        %v793 = vunpack.c.l.b16 %v697
        %v794 = vunpack.c.l.b16 %v698
        %v795 = vunpack.c.l.b16 %v699
        %v796 = vunpack.c.l.b16 %v700
        %v797 = vunpack.c.l.b16 %v701
        %v798 = vunpack.c.l.b16 %v702
        %v799 = vunpack.c.l.b16 %v703
        %v800 = vunpack.c.l.b16 %v704
        %v801 = vunpack.c.l.b16 %v705
        %v802 = vunpack.c.l.b16 %v706
        %v803 = vunpack.c.l.b16 %v707
        %v804 = vpack.c.b16 %v789, %v788
        %v805 = vpack.c.b16 %v791, %v790
        %v806 = vpack.c.b16 %v793, %v792
        %v807 = vpack.c.b16 %v795, %v794
        %v808 = vpack.c.b16 %v797, %v796
        %v809 = vpack.c.b16 %v799, %v798
        %v810 = vpack.c.b16 %v801, %v800
        %v811 = vpack.c.b16 %v803, %v802
        %820 = vmatprep.subr.bf16.mxu0 0
        %821 = vmatpush1.bf16.msra.mxu0 %v804
        %822 = vmatprep.subr.bf16.mxu0 0
        %823 = vmatpush1.bf16.msra.mxu0 %v805
        %824 = vmatprep.subr.bf16.mxu0 0
        %825 = vmatpush1.bf16.msra.mxu0 %v806
        %826 = vmatprep.subr.bf16.mxu0 0
        %827 = vmatpush1.bf16.msra.mxu0 %v807
        %828 = vmatprep.subr.bf16.mxu0 0
        %829 = vmatpush1.bf16.msra.mxu0 %v808
        %830 = vmatprep.subr.bf16.mxu0 0
        %831 = vmatpush1.bf16.msra.mxu0 %v809
        %832 = vmatprep.subr.bf16.mxu0 0
        %833 = vmatpush1.bf16.msra.mxu0 %v810
        %834 = vmatprep.subr.bf16.mxu0 0
        %835 = vmatpush1.bf16.msra.mxu0 %v811
        %836 = vmatprep.subr.bf16.mxu0 0
        %837 = vmatpush1.bf16.msra.mxu0 0
        %838 = vmatprep.subr.bf16.mxu0 0
        %839 = vmatpush1.bf16.msra.mxu0 0
        %840 = vmatprep.subr.bf16.mxu0 0
        %841 = vmatpush1.bf16.msra.mxu0 0
        %842 = vmatprep.subr.bf16.mxu0 0
        %843 = vmatpush1.bf16.msra.mxu0 0
        %844 = vmatprep.subr.bf16.mxu0 0
        %845 = vmatpush1.bf16.msra.mxu0 0
        %846 = vmatprep.subr.bf16.mxu0 0
        %847 = vmatpush1.bf16.msra.mxu0 0
        %848 = vmatprep.subr.bf16.mxu0 0
        %849 = vmatpush1.bf16.msra.mxu0 0
        %850 = vmatprep.subr.bf16.mxu0 0
        %851 = vmatpush1.bf16.msra.mxu0 0
        %852 = vmatprep.mubr.bf16.mxu0 0
        %853 = vmatmul.mubr.bf16.gmra.mrb[0].mxu0 %v740
        %v854 = vpop.f32.mrb[0].mxu0
        %v855 = vadd.f32 0.0, %v854
        %v856 = vpop.f32.mrb[0].mxu0
        %v857 = vpop.f32.mrb[0].mxu0
        %v858 = vadd.f32 0.0, %v857
        %v859 = vpop.f32.mrb[0].mxu0
        %860 = vmatprep.mubr.bf16.mxu0 0
        %861 = vmatmul.mubr.bf16.gmra.mrb[0].mxu0 %v741
        %v862 = vpop.f32.mrb[0].mxu0
        %v863 = vadd.f32 0.0, %v862
        %v864 = vpop.f32.mrb[0].mxu0
        %v865 = vpop.f32.mrb[0].mxu0
        %v866 = vadd.f32 0.0, %v865
        %v867 = vpop.f32.mrb[0].mxu0
        %868 = vmatprep.mubr.bf16.mxu0 0
        %869 = vmatmul.mubr.bf16.gmra.mrb[0].mxu0 %v742
        %v870 = vpop.f32.mrb[0].mxu0
        %v871 = vadd.f32 0.0, %v870
        %v872 = vpop.f32.mrb[0].mxu0
        %v873 = vpop.f32.mrb[0].mxu0
        %v874 = vadd.f32 0.0, %v873
        %v875 = vpop.f32.mrb[0].mxu0
        %876 = vmatprep.mubr.bf16.mxu0 0
        %877 = vmatmul.mubr.bf16.gmra.mrb[0].mxu0 %v743
        %v878 = vpop.f32.mrb[0].mxu0
        %v879 = vadd.f32 0.0, %v878
        %v880 = vpop.f32.mrb[0].mxu0
        %v881 = vpop.f32.mrb[0].mxu0
        %v882 = vadd.f32 0.0, %v881
        %v883 = vpop.f32.mrb[0].mxu0
        %884 = vmatprep.mubr.bf16.mxu0 0
        %885 = vmatmul.mubr.bf16.gmra.mrb[0].mxu0 %v744
        %v886 = vpop.f32.mrb[0].mxu0
        %v887 = vadd.f32 0.0, %v886
        %v888 = vpop.f32.mrb[0].mxu0
        %v889 = vpop.f32.mrb[0].mxu0
        %v890 = vadd.f32 0.0, %v889
        %v891 = vpop.f32.mrb[0].mxu0
        %892 = vmatprep.mubr.bf16.mxu0 0
        %893 = vmatmul.mubr.bf16.gmra.mrb[0].mxu0 %v745
        %v894 = vpop.f32.mrb[0].mxu0
        %v895 = vadd.f32 0.0, %v894
        %v896 = vpop.f32.mrb[0].mxu0
        %v897 = vpop.f32.mrb[0].mxu0
        %v898 = vadd.f32 0.0, %v897
        %v899 = vpop.f32.mrb[0].mxu0
        %900 = vmatprep.mubr.bf16.mxu0 0
        %901 = vmatmul.mubr.bf16.gmra.mrb[0].mxu0 %v746
        %v902 = vpop.f32.mrb[0].mxu0
        %v903 = vadd.f32 0.0, %v902
        %v904 = vpop.f32.mrb[0].mxu0
        %v905 = vpop.f32.mrb[0].mxu0
        %v906 = vadd.f32 0.0, %v905
        %v907 = vpop.f32.mrb[0].mxu0
        %908 = vmatprep.mubr.bf16.mxu0 0
        %909 = vmatmul.mubr.bf16.gmra.mrb[0].mxu0 %v747
        %v910 = vpop.f32.mrb[0].mxu0
        %v911 = vadd.f32 0.0, %v910
        %v912 = vpop.f32.mrb[0].mxu0
        %v913 = vpop.f32.mrb[0].mxu0
        %v914 = vadd.f32 0.0, %v913
        %v915 = vpop.f32.mrb[0].mxu0
        %916 = vmatprep.mubr.bf16.mxu0 0
        %917 = vmatmul.mubr.bf16.gmra.mrb[0].mxu0 %v748
        %v918 = vpop.f32.mrb[0].mxu0
        %v919 = vadd.f32 0.0, %v918
        %v920 = vpop.f32.mrb[0].mxu0
        %v921 = vpop.f32.mrb[0].mxu0
        %v922 = vadd.f32 0.0, %v921
        %v923 = vpop.f32.mrb[0].mxu0
        %924 = vmatprep.mubr.bf16.mxu0 0
        %925 = vmatmul.mubr.bf16.gmra.mrb[0].mxu0 %v749
        %v926 = vpop.f32.mrb[0].mxu0
        %v927 = vadd.f32 0.0, %v926
        %v928 = vpop.f32.mrb[0].mxu0
        %v929 = vpop.f32.mrb[0].mxu0
        %v930 = vadd.f32 0.0, %v929
        %v931 = vpop.f32.mrb[0].mxu0
        %932 = vmatprep.mubr.bf16.mxu0 0
        %933 = vmatmul.mubr.bf16.gmra.mrb[0].mxu0 %v750
        %v934 = vpop.f32.mrb[0].mxu0
        %v935 = vadd.f32 0.0, %v934
        %v936 = vpop.f32.mrb[0].mxu0
        %v937 = vpop.f32.mrb[0].mxu0
        %v938 = vadd.f32 0.0, %v937
        %v939 = vpop.f32.mrb[0].mxu0
        %940 = vmatprep.mubr.bf16.mxu0 0
        %941 = vmatmul.mubr.bf16.gmra.mrb[0].mxu0 %v751
        %v942 = vpop.f32.mrb[0].mxu0
        %v943 = vadd.f32 0.0, %v942
        %v944 = vpop.f32.mrb[0].mxu0
        %v945 = vpop.f32.mrb[0].mxu0
        %v946 = vadd.f32 0.0, %v945
        %v947 = vpop.f32.mrb[0].mxu0
        %948 = vmatprep.mubr.bf16.mxu0 0
        %949 = vmatmul.mubr.bf16.gmra.mrb[0].mxu0 %v752
        %v950 = vpop.f32.mrb[0].mxu0
        %v951 = vadd.f32 0.0, %v950
        %v952 = vpop.f32.mrb[0].mxu0
        %v953 = vpop.f32.mrb[0].mxu0
        %v954 = vadd.f32 0.0, %v953
        %v955 = vpop.f32.mrb[0].mxu0
        %956 = vmatprep.mubr.bf16.mxu0 0
        %957 = vmatmul.mubr.bf16.gmra.mrb[0].mxu0 %v753
        %v958 = vpop.f32.mrb[0].mxu0
        %v959 = vadd.f32 0.0, %v958
        %v960 = vpop.f32.mrb[0].mxu0
        %v961 = vpop.f32.mrb[0].mxu0
        %v962 = vadd.f32 0.0, %v961
        %v963 = vpop.f32.mrb[0].mxu0
        %964 = vmatprep.mubr.bf16.mxu0 0
        %965 = vmatmul.mubr.bf16.gmra.mrb[0].mxu0 %v754
        %v966 = vpop.f32.mrb[0].mxu0
        %v967 = vadd.f32 0.0, %v966
        %v968 = vpop.f32.mrb[0].mxu0
        %v969 = vpop.f32.mrb[0].mxu0
        %v970 = vadd.f32 0.0, %v969
        %v971 = vpop.f32.mrb[0].mxu0
        %972 = vmatprep.mubr.bf16.mxu0 0
        %973 = vmatmul.mubr.bf16.gmra.mrb[0].mxu0 %v755
        %v974 = vpop.f32.mrb[0].mxu0
        %v975 = vadd.f32 0.0, %v974
        %v976 = vpop.f32.mrb[0].mxu0
        %v977 = vpop.f32.mrb[0].mxu0
        %v978 = vadd.f32 0.0, %v977
        %v979 = vpop.f32.mrb[0].mxu0
        %980 = vdwg.mxu0
        %v1013 = vunpack.c.l.b16 %v240
        %v1014 = vunpack.c.l.b16 %v241
        %v1015 = vunpack.c.l.b16 %v242
        %v1016 = vunpack.c.l.b16 %v243
        %v1017 = vunpack.c.l.b16 %v244
        %v1018 = vunpack.c.l.b16 %v245
        %v1019 = vunpack.c.l.b16 %v246
        %v1020 = vunpack.c.l.b16 %v247
        %v1021 = vunpack.c.l.b16 %v248
        %v1022 = vunpack.c.l.b16 %v249
        %v1023 = vunpack.c.l.b16 %v250
        %v1024 = vunpack.c.l.b16 %v251
        %v1025 = vunpack.c.l.b16 %v252
        %v1026 = vunpack.c.l.b16 %v253
        %v1027 = vunpack.c.l.b16 %v254
        %v1028 = vunpack.c.l.b16 %v255
        %v1029 = vunpack.c.l.b16 %v256
        %v1030 = vunpack.c.l.b16 %v257
        %v1031 = vunpack.c.l.b16 %v258
        %v1032 = vunpack.c.l.b16 %v259
        %v1033 = vunpack.c.l.b16 %v260
        %v1034 = vunpack.c.l.b16 %v261
        %v1035 = vunpack.c.l.b16 %v262
        %v1036 = vunpack.c.l.b16 %v263
        %v1037 = vunpack.c.l.b16 %v264
        %v1038 = vunpack.c.l.b16 %v265
        %v1039 = vunpack.c.l.b16 %v266
        %v1040 = vunpack.c.l.b16 %v267
        %v1041 = vunpack.c.l.b16 %v268
        %v1042 = vunpack.c.l.b16 %v269
        %v1043 = vunpack.c.l.b16 %v270
        %v1044 = vunpack.c.l.b16 %v271
        %v1045 = vpack.c.b16 %v1014, %v1013
        %v1046 = vpack.c.b16 %v1016, %v1015
        %v1047 = vpack.c.b16 %v1018, %v1017
        %v1048 = vpack.c.b16 %v1020, %v1019
        %v1049 = vpack.c.b16 %v1022, %v1021
        %v1050 = vpack.c.b16 %v1024, %v1023
        %v1051 = vpack.c.b16 %v1026, %v1025
        %v1052 = vpack.c.b16 %v1028, %v1027
        %v1053 = vpack.c.b16 %v1030, %v1029
        %v1054 = vpack.c.b16 %v1032, %v1031
        %v1055 = vpack.c.b16 %v1034, %v1033
        %v1056 = vpack.c.b16 %v1036, %v1035
        %v1057 = vpack.c.b16 %v1038, %v1037
        %v1058 = vpack.c.b16 %v1040, %v1039
        %v1059 = vpack.c.b16 %v1042, %v1041
        %v1060 = vpack.c.b16 %v1044, %v1043
        %v1093 = vunpack.c.l.b16 %v272
        %v1094 = vunpack.c.l.b16 %v273
        %v1095 = vunpack.c.l.b16 %v274
        %v1096 = vunpack.c.l.b16 %v275
        %v1097 = vunpack.c.l.b16 %v276
        %v1098 = vunpack.c.l.b16 %v277
        %v1099 = vunpack.c.l.b16 %v278
        %v1100 = vunpack.c.l.b16 %v279
        %v1101 = vunpack.c.l.b16 %v280
        %v1102 = vunpack.c.l.b16 %v281
        %v1103 = vunpack.c.l.b16 %v282
        %v1104 = vunpack.c.l.b16 %v283
        %v1105 = vunpack.c.l.b16 %v284
        %v1106 = vunpack.c.l.b16 %v285
        %v1107 = vunpack.c.l.b16 %v286
        %v1108 = vunpack.c.l.b16 %v287
        %v1109 = vpack.c.b16 %v1094, %v1093
        %v1110 = vpack.c.b16 %v1096, %v1095
        %v1111 = vpack.c.b16 %v1098, %v1097
        %v1112 = vpack.c.b16 %v1100, %v1099
        %v1113 = vpack.c.b16 %v1102, %v1101
        %v1114 = vpack.c.b16 %v1104, %v1103
        %v1115 = vpack.c.b16 %v1106, %v1105
        %v1116 = vpack.c.b16 %v1108, %v1107
        %1125 = vmatprep.subr.bf16.mxu0 0
        %1126 = vmatpush1.bf16.msra.mxu0 %v1109
        %1127 = vmatprep.subr.bf16.mxu0 0
        %1128 = vmatpush1.bf16.msra.mxu0 %v1110
        %1129 = vmatprep.subr.bf16.mxu0 0
        %1130 = vmatpush1.bf16.msra.mxu0 %v1111
        %1131 = vmatprep.subr.bf16.mxu0 0
        %1132 = vmatpush1.bf16.msra.mxu0 %v1112
        %1133 = vmatprep.subr.bf16.mxu0 0
        %1134 = vmatpush1.bf16.msra.mxu0 %v1113
        %1135 = vmatprep.subr.bf16.mxu0 0
        %1136 = vmatpush1.bf16.msra.mxu0 %v1114
        %1137 = vmatprep.subr.bf16.mxu0 0
        %1138 = vmatpush1.bf16.msra.mxu0 %v1115
        %1139 = vmatprep.subr.bf16.mxu0 0
        %1140 = vmatpush1.bf16.msra.mxu0 %v1116
        %1141 = vmatprep.subr.bf16.mxu0 0
        %1142 = vmatpush1.bf16.msra.mxu0 0
        %1143 = vmatprep.subr.bf16.mxu0 0
        %1144 = vmatpush1.bf16.msra.mxu0 0
        %1145 = vmatprep.subr.bf16.mxu0 0
        %1146 = vmatpush1.bf16.msra.mxu0 0
        %1147 = vmatprep.subr.bf16.mxu0 0
        %1148 = vmatpush1.bf16.msra.mxu0 0
        %1149 = vmatprep.subr.bf16.mxu0 0
        %1150 = vmatpush1.bf16.msra.mxu0 0
        %1151 = vmatprep.subr.bf16.mxu0 0
        %1152 = vmatpush1.bf16.msra.mxu0 0
        %1153 = vmatprep.subr.bf16.mxu0 0
        %1154 = vmatpush1.bf16.msra.mxu0 0
        %1155 = vmatprep.subr.bf16.mxu0 0
        %1156 = vmatpush1.bf16.msra.mxu0 0
        %1157 = vmatprep.mubr.bf16.mxu0 0
        %1158 = vmatmul.mubr.bf16.gmra.mrb[0].mxu0 %v1045
        %v1159 = vpop.f32.mrb[0].mxu0
        %v1160 = vadd.f32 %v855, %v1159
        %v1161 = vpop.f32.mrb[0].mxu0
        %v1162 = vpop.f32.mrb[0].mxu0
        %v1163 = vadd.f32 %v858, %v1162
        %v1164 = vpop.f32.mrb[0].mxu0
        %1165 = vmatprep.mubr.bf16.mxu0 0
        %1166 = vmatmul.mubr.bf16.gmra.mrb[0].mxu0 %v1046
        %v1167 = vpop.f32.mrb[0].mxu0
        %v1168 = vadd.f32 %v863, %v1167
        %v1169 = vpop.f32.mrb[0].mxu0
        %v1170 = vpop.f32.mrb[0].mxu0
        %v1171 = vadd.f32 %v866, %v1170
        %v1172 = vpop.f32.mrb[0].mxu0
        %1173 = vmatprep.mubr.bf16.mxu0 0
        %1174 = vmatmul.mubr.bf16.gmra.mrb[0].mxu0 %v1047
        %v1175 = vpop.f32.mrb[0].mxu0
        %v1176 = vadd.f32 %v871, %v1175
        %v1177 = vpop.f32.mrb[0].mxu0
        %v1178 = vpop.f32.mrb[0].mxu0
        %v1179 = vadd.f32 %v874, %v1178
        %v1180 = vpop.f32.mrb[0].mxu0
        %1181 = vmatprep.mubr.bf16.mxu0 0
        %1182 = vmatmul.mubr.bf16.gmra.mrb[0].mxu0 %v1048
        %v1183 = vpop.f32.mrb[0].mxu0
        %v1184 = vadd.f32 %v879, %v1183
        %v1185 = vpop.f32.mrb[0].mxu0
        %v1186 = vpop.f32.mrb[0].mxu0
        %v1187 = vadd.f32 %v882, %v1186
        %v1188 = vpop.f32.mrb[0].mxu0
        %1189 = vmatprep.mubr.bf16.mxu0 0
        %1190 = vmatmul.mubr.bf16.gmra.mrb[0].mxu0 %v1049
        %v1191 = vpop.f32.mrb[0].mxu0
        %v1192 = vadd.f32 %v887, %v1191
        %v1193 = vpop.f32.mrb[0].mxu0
        %v1194 = vpop.f32.mrb[0].mxu0
        %v1195 = vadd.f32 %v890, %v1194
        %v1196 = vpop.f32.mrb[0].mxu0
        %1197 = vmatprep.mubr.bf16.mxu0 0
        %1198 = vmatmul.mubr.bf16.gmra.mrb[0].mxu0 %v1050
        %v1199 = vpop.f32.mrb[0].mxu0
        %v1200 = vadd.f32 %v895, %v1199
        %v1201 = vpop.f32.mrb[0].mxu0
        %v1202 = vpop.f32.mrb[0].mxu0
        %v1203 = vadd.f32 %v898, %v1202
        %v1204 = vpop.f32.mrb[0].mxu0
        %1205 = vmatprep.mubr.bf16.mxu0 0
        %1206 = vmatmul.mubr.bf16.gmra.mrb[0].mxu0 %v1051
        %v1207 = vpop.f32.mrb[0].mxu0
        %v1208 = vadd.f32 %v903, %v1207
        %v1209 = vpop.f32.mrb[0].mxu0
        %v1210 = vpop.f32.mrb[0].mxu0
        %v1211 = vadd.f32 %v906, %v1210
        %v1212 = vpop.f32.mrb[0].mxu0
        %1213 = vmatprep.mubr.bf16.mxu0 0
        %1214 = vmatmul.mubr.bf16.gmra.mrb[0].mxu0 %v1052
        %v1215 = vpop.f32.mrb[0].mxu0
        %v1216 = vadd.f32 %v911, %v1215
        %v1217 = vpop.f32.mrb[0].mxu0
        %v1218 = vpop.f32.mrb[0].mxu0
        %v1219 = vadd.f32 %v914, %v1218
        %v1220 = vpop.f32.mrb[0].mxu0
        %1221 = vmatprep.mubr.bf16.mxu0 0
        %1222 = vmatmul.mubr.bf16.gmra.mrb[0].mxu0 %v1053
        %v1223 = vpop.f32.mrb[0].mxu0
        %v1224 = vadd.f32 %v919, %v1223
        %v1225 = vpop.f32.mrb[0].mxu0
        %v1226 = vpop.f32.mrb[0].mxu0
        %v1227 = vadd.f32 %v922, %v1226
        %v1228 = vpop.f32.mrb[0].mxu0
        %1229 = vmatprep.mubr.bf16.mxu0 0
        %1230 = vmatmul.mubr.bf16.gmra.mrb[0].mxu0 %v1054
        %v1231 = vpop.f32.mrb[0].mxu0
        %v1232 = vadd.f32 %v927, %v1231
        %v1233 = vpop.f32.mrb[0].mxu0
        %v1234 = vpop.f32.mrb[0].mxu0
        %v1235 = vadd.f32 %v930, %v1234
        %v1236 = vpop.f32.mrb[0].mxu0
        %1237 = vmatprep.mubr.bf16.mxu0 0
        %1238 = vmatmul.mubr.bf16.gmra.mrb[0].mxu0 %v1055
        %v1239 = vpop.f32.mrb[0].mxu0
        %v1240 = vadd.f32 %v935, %v1239
        %v1241 = vpop.f32.mrb[0].mxu0
        %v1242 = vpop.f32.mrb[0].mxu0
        %v1243 = vadd.f32 %v938, %v1242
        %v1244 = vpop.f32.mrb[0].mxu0
        %1245 = vmatprep.mubr.bf16.mxu0 0
        %1246 = vmatmul.mubr.bf16.gmra.mrb[0].mxu0 %v1056
        %v1247 = vpop.f32.mrb[0].mxu0
        %v1248 = vadd.f32 %v943, %v1247
        %v1249 = vpop.f32.mrb[0].mxu0
        %v1250 = vpop.f32.mrb[0].mxu0
        %v1251 = vadd.f32 %v946, %v1250
        %v1252 = vpop.f32.mrb[0].mxu0
        %1253 = vmatprep.mubr.bf16.mxu0 0
        %1254 = vmatmul.mubr.bf16.gmra.mrb[0].mxu0 %v1057
        %v1255 = vpop.f32.mrb[0].mxu0
        %v1256 = vadd.f32 %v951, %v1255
        %v1257 = vpop.f32.mrb[0].mxu0
        %v1258 = vpop.f32.mrb[0].mxu0
        %v1259 = vadd.f32 %v954, %v1258
        %v1260 = vpop.f32.mrb[0].mxu0
        %1261 = vmatprep.mubr.bf16.mxu0 0
        %1262 = vmatmul.mubr.bf16.gmra.mrb[0].mxu0 %v1058
        %v1263 = vpop.f32.mrb[0].mxu0
        %v1264 = vadd.f32 %v959, %v1263
        %v1265 = vpop.f32.mrb[0].mxu0
        %v1266 = vpop.f32.mrb[0].mxu0
        %v1267 = vadd.f32 %v962, %v1266
        %v1268 = vpop.f32.mrb[0].mxu0
        %1269 = vmatprep.mubr.bf16.mxu0 0
        %1270 = vmatmul.mubr.bf16.gmra.mrb[0].mxu0 %v1059
        %v1271 = vpop.f32.mrb[0].mxu0
        %v1272 = vadd.f32 %v967, %v1271
        %v1273 = vpop.f32.mrb[0].mxu0
        %v1274 = vpop.f32.mrb[0].mxu0
        %v1275 = vadd.f32 %v970, %v1274
        %v1276 = vpop.f32.mrb[0].mxu0
        %1277 = vmatprep.mubr.bf16.mxu0 0
        %1278 = vmatmul.mubr.bf16.gmra.mrb[0].mxu0 %v1060
        %v1279 = vpop.f32.mrb[0].mxu0
        %v1280 = vadd.f32 %v975, %v1279
        %v1281 = vpop.f32.mrb[0].mxu0
        %v1282 = vpop.f32.mrb[0].mxu0
        %v1283 = vadd.f32 %v978, %v1282
        %v1284 = vpop.f32.mrb[0].mxu0
        %1285 = vdwg.mxu0
        %v1286 = vld [vmem:[%s206] sm:$0xe]
        %v1287 = vld [vmem:[%s206 + $0x10] sm:$0xe]
        %v1288 = vld [vmem:[%s206 + $0x20] sm:$0xe]
        %v1289 = vld [vmem:[%s206 + $0x30] sm:$0xe]
        %v1290 = vld [vmem:[%s206 + $0x40] sm:$0xe]
        %v1291 = vld [vmem:[%s206 + $0x50] sm:$0xe]
        %v1292 = vld [vmem:[%s206 + $0x60] sm:$0xe]
        %v1293 = vld [vmem:[%s206 + $0x70] sm:$0xe]
        %v1294 = vld [vmem:[%s206 + $0x80] sm:$0xe]
        %v1295 = vld [vmem:[%s206 + $0x90] sm:$0xe]
        %v1296 = vld [vmem:[%s206 + $0xa0] sm:$0xe]
        %v1297 = vld [vmem:[%s206 + $0xb0] sm:$0xe]
        %v1298 = vld [vmem:[%s206 + $0xc0] sm:$0xe]
        %v1299 = vld [vmem:[%s206 + $0xd0] sm:$0xe]
        %v1300 = vld [vmem:[%s206 + $0xe0] sm:$0xe]
        %v1301 = vld [vmem:[%s206 + $0xf0] sm:$0xe]
        %vm1334 = vcmask 1042432
        %vm1335 = vcmask 1046532
        %vm1336 = vmor %vm1334, %vm1335
        %v1337 = vrot.slane %v1286, 5
        %v1338 = vrot.slane %v1337, 4
        %v1339 = vrot.slane %v241, 5
        %v1340 = vsel %vm1336, %v1338, %v1339
        %v1341 = vrot.slane %v1339, 4
        %v1342 = vrot.slane %v288, 5
        %v1343 = vsel %vm1336, %v1341, %v1342
        %v1344 = vrot.slane %v1287, 5
        %v1345 = vrot.slane %v1344, 4
        %v1346 = vrot.slane %v243, 5
        %v1347 = vsel %vm1336, %v1345, %v1346
        %v1348 = vrot.slane %v1346, 4
        %v1349 = vrot.slane %v289, 5
        %v1350 = vsel %vm1336, %v1348, %v1349
        %v1351 = vrot.slane %v1288, 5
        %v1352 = vrot.slane %v1351, 4
        %v1353 = vrot.slane %v245, 5
        %v1354 = vsel %vm1336, %v1352, %v1353
        %v1355 = vrot.slane %v1353, 4
        %v1356 = vrot.slane %v290, 5
        %v1357 = vsel %vm1336, %v1355, %v1356
        %v1358 = vrot.slane %v1289, 5
        %v1359 = vrot.slane %v1358, 4
        %v1360 = vrot.slane %v247, 5
        %v1361 = vsel %vm1336, %v1359, %v1360
        %v1362 = vrot.slane %v1360, 4
        %v1363 = vrot.slane %v291, 5
        %v1364 = vsel %vm1336, %v1362, %v1363
        %v1365 = vrot.slane %v1290, 5
        %v1366 = vrot.slane %v1365, 4
        %v1367 = vrot.slane %v249, 5
        %v1368 = vsel %vm1336, %v1366, %v1367
        %v1369 = vrot.slane %v1367, 4
        %v1370 = vrot.slane %v292, 5
        %v1371 = vsel %vm1336, %v1369, %v1370
        %v1372 = vrot.slane %v1291, 5
        %v1373 = vrot.slane %v1372, 4
        %v1374 = vrot.slane %v251, 5
        %v1375 = vsel %vm1336, %v1373, %v1374
        %v1376 = vrot.slane %v1374, 4
        %v1377 = vrot.slane %v293, 5
        %v1378 = vsel %vm1336, %v1376, %v1377
        %v1379 = vrot.slane %v1292, 5
        %v1380 = vrot.slane %v1379, 4
        %v1381 = vrot.slane %v253, 5
        %v1382 = vsel %vm1336, %v1380, %v1381
        %v1383 = vrot.slane %v1381, 4
        %v1384 = vrot.slane %v294, 5
        %v1385 = vsel %vm1336, %v1383, %v1384
        %v1386 = vrot.slane %v1293, 5
        %v1387 = vrot.slane %v1386, 4
        %v1388 = vrot.slane %v255, 5
        %v1389 = vsel %vm1336, %v1387, %v1388
        %v1390 = vrot.slane %v1388, 4
        %v1391 = vrot.slane %v295, 5
        %v1392 = vsel %vm1336, %v1390, %v1391
        %v1393 = vrot.slane %v1294, 5
        %v1394 = vrot.slane %v1393, 4
        %v1395 = vrot.slane %v257, 5
        %v1396 = vsel %vm1336, %v1394, %v1395
        %v1397 = vrot.slane %v1395, 4
        %v1398 = vrot.slane %v296, 5
        %v1399 = vsel %vm1336, %v1397, %v1398
        %v1400 = vrot.slane %v1295, 5
        %v1401 = vrot.slane %v1400, 4
        %v1402 = vrot.slane %v259, 5
        %v1403 = vsel %vm1336, %v1401, %v1402
        %v1404 = vrot.slane %v1402, 4
        %v1405 = vrot.slane %v297, 5
        %v1406 = vsel %vm1336, %v1404, %v1405
        %v1407 = vrot.slane %v1296, 5
        %v1408 = vrot.slane %v1407, 4
        %v1409 = vrot.slane %v261, 5
        %v1410 = vsel %vm1336, %v1408, %v1409
        %v1411 = vrot.slane %v1409, 4
        %v1412 = vrot.slane %v298, 5
        %v1413 = vsel %vm1336, %v1411, %v1412
        %v1414 = vrot.slane %v1297, 5
        %v1415 = vrot.slane %v1414, 4
        %v1416 = vrot.slane %v263, 5
        %v1417 = vsel %vm1336, %v1415, %v1416
        %v1418 = vrot.slane %v1416, 4
        %v1419 = vrot.slane %v299, 5
        %v1420 = vsel %vm1336, %v1418, %v1419
        %v1421 = vrot.slane %v1298, 5
        %v1422 = vrot.slane %v1421, 4
        %v1423 = vrot.slane %v265, 5
        %v1424 = vsel %vm1336, %v1422, %v1423
        %v1425 = vrot.slane %v1423, 4
        %v1426 = vrot.slane %v300, 5
        %v1427 = vsel %vm1336, %v1425, %v1426
        %v1428 = vrot.slane %v1299, 5
        %v1429 = vrot.slane %v1428, 4
        %v1430 = vrot.slane %v267, 5
        %v1431 = vsel %vm1336, %v1429, %v1430
        %v1432 = vrot.slane %v1430, 4
        %v1433 = vrot.slane %v301, 5
        %v1434 = vsel %vm1336, %v1432, %v1433
        %v1435 = vrot.slane %v1300, 5
        %v1436 = vrot.slane %v1435, 4
        %v1437 = vrot.slane %v269, 5
        %v1438 = vsel %vm1336, %v1436, %v1437
        %v1439 = vrot.slane %v1437, 4
        %v1440 = vrot.slane %v302, 5
        %v1441 = vsel %vm1336, %v1439, %v1440
        %v1442 = vrot.slane %v1301, 5
        %v1443 = vrot.slane %v1442, 4
        %v1444 = vrot.slane %v271, 5
        %v1445 = vsel %vm1336, %v1443, %v1444
        %v1446 = vrot.slane %v1444, 4
        %v1447 = vrot.slane %v303, 5
        %v1448 = vsel %vm1336, %v1446, %v1447
        %s1449 = scalar_lea.vmem [#allocation5], 128
        %v1450 = vld [vmem:[%s1449] sm:$0xf]
        %v1451 = vld [vmem:[%s1449 + $0x4] sm:$0xf]
        %v1452 = vld [vmem:[%s1449 + $0x8] sm:$0xf]
        %v1453 = vld [vmem:[%s1449 + $0xc] sm:$0xf]
        %v1454 = vld [vmem:[%s1449 + $0x10] sm:$0xf]
        %v1455 = vld [vmem:[%s1449 + $0x14] sm:$0xf]
        %v1456 = vld [vmem:[%s1449 + $0x18] sm:$0xf]
        %v1457 = vld [vmem:[%s1449 + $0x1c] sm:$0xf]
        %v1458 = vld [vmem:[%s1449 + $0x20] sm:$0xf]
        %v1459 = vld [vmem:[%s1449 + $0x24] sm:$0xf]
        %v1460 = vld [vmem:[%s1449 + $0x28] sm:$0xf]
        %v1461 = vld [vmem:[%s1449 + $0x2c] sm:$0xf]
        %v1462 = vld [vmem:[%s1449 + $0x30] sm:$0xf]
        %v1463 = vld [vmem:[%s1449 + $0x34] sm:$0xf]
        %v1464 = vld [vmem:[%s1449 + $0x38] sm:$0xf]
        %v1465 = vld [vmem:[%s1449 + $0x3c] sm:$0xf]
        %v1466 = vunpack.c.l.b16 %v1340
        %v1467 = vunpack.c.l.b16 %v1343
        %v1468 = vunpack.c.l.b16 %v1347
        %v1469 = vunpack.c.l.b16 %v1350
        %v1470 = vunpack.c.l.b16 %v1354
        %v1471 = vunpack.c.l.b16 %v1357
        %v1472 = vunpack.c.l.b16 %v1361
        %v1473 = vunpack.c.l.b16 %v1364
        %v1474 = vunpack.c.l.b16 %v1368
        %v1475 = vunpack.c.l.b16 %v1371
        %v1476 = vunpack.c.l.b16 %v1375
        %v1477 = vunpack.c.l.b16 %v1378
        %v1478 = vunpack.c.l.b16 %v1382
        %v1479 = vunpack.c.l.b16 %v1385
        %v1480 = vunpack.c.l.b16 %v1389
        %v1481 = vunpack.c.l.b16 %v1392
        %v1482 = vunpack.c.l.b16 %v1396
        %v1483 = vunpack.c.l.b16 %v1399
        %v1484 = vunpack.c.l.b16 %v1403
        %v1485 = vunpack.c.l.b16 %v1406
        %v1486 = vunpack.c.l.b16 %v1410
        %v1487 = vunpack.c.l.b16 %v1413
        %v1488 = vunpack.c.l.b16 %v1417
        %v1489 = vunpack.c.l.b16 %v1420
        %v1490 = vunpack.c.l.b16 %v1424
        %v1491 = vunpack.c.l.b16 %v1427
        %v1492 = vunpack.c.l.b16 %v1431
        %v1493 = vunpack.c.l.b16 %v1434
        %v1494 = vunpack.c.l.b16 %v1438
        %v1495 = vunpack.c.l.b16 %v1441
        %v1496 = vunpack.c.l.b16 %v1445
        %v1497 = vunpack.c.l.b16 %v1448
        %v1498 = vpack.c.b16 %v1467, %v1466
        %v1499 = vpack.c.b16 %v1469, %v1468
        %v1500 = vpack.c.b16 %v1471, %v1470
        %v1501 = vpack.c.b16 %v1473, %v1472
        %v1502 = vpack.c.b16 %v1475, %v1474
        %v1503 = vpack.c.b16 %v1477, %v1476
        %v1504 = vpack.c.b16 %v1479, %v1478
        %v1505 = vpack.c.b16 %v1481, %v1480
        %v1506 = vpack.c.b16 %v1483, %v1482
        %v1507 = vpack.c.b16 %v1485, %v1484
        %v1508 = vpack.c.b16 %v1487, %v1486
        %v1509 = vpack.c.b16 %v1489, %v1488
        %v1510 = vpack.c.b16 %v1491, %v1490
        %v1511 = vpack.c.b16 %v1493, %v1492
        %v1512 = vpack.c.b16 %v1495, %v1494
        %v1513 = vpack.c.b16 %v1497, %v1496
        %v1546 = vunpack.c.l.b16 %v1450
        %v1547 = vunpack.c.l.b16 %v1451
        %v1548 = vunpack.c.l.b16 %v1452
        %v1549 = vunpack.c.l.b16 %v1453
        %v1550 = vunpack.c.l.b16 %v1454
        %v1551 = vunpack.c.l.b16 %v1455
        %v1552 = vunpack.c.l.b16 %v1456
        %v1553 = vunpack.c.l.b16 %v1457
        %v1554 = vunpack.c.l.b16 %v1458
        %v1555 = vunpack.c.l.b16 %v1459
        %v1556 = vunpack.c.l.b16 %v1460
        %v1557 = vunpack.c.l.b16 %v1461
        %v1558 = vunpack.c.l.b16 %v1462
        %v1559 = vunpack.c.l.b16 %v1463
        %v1560 = vunpack.c.l.b16 %v1464
        %v1561 = vunpack.c.l.b16 %v1465
        %v1562 = vpack.c.b16 %v1547, %v1546
        %v1563 = vpack.c.b16 %v1549, %v1548
        %v1564 = vpack.c.b16 %v1551, %v1550
        %v1565 = vpack.c.b16 %v1553, %v1552
        %v1566 = vpack.c.b16 %v1555, %v1554
        %v1567 = vpack.c.b16 %v1557, %v1556
        %v1568 = vpack.c.b16 %v1559, %v1558
        %v1569 = vpack.c.b16 %v1561, %v1560
        %1578 = vmatprep.subr.bf16.mxu0 0
        %1579 = vmatpush1.bf16.msra.mxu0 %v1562
        %1580 = vmatprep.subr.bf16.mxu0 0
        %1581 = vmatpush1.bf16.msra.mxu0 %v1563
        %1582 = vmatprep.subr.bf16.mxu0 0
        %1583 = vmatpush1.bf16.msra.mxu0 %v1564
        %1584 = vmatprep.subr.bf16.mxu0 0
        %1585 = vmatpush1.bf16.msra.mxu0 %v1565
        %1586 = vmatprep.subr.bf16.mxu0 0
        %1587 = vmatpush1.bf16.msra.mxu0 %v1566
        %1588 = vmatprep.subr.bf16.mxu0 0
        %1589 = vmatpush1.bf16.msra.mxu0 %v1567
        %1590 = vmatprep.subr.bf16.mxu0 0
        %1591 = vmatpush1.bf16.msra.mxu0 %v1568
        %1592 = vmatprep.subr.bf16.mxu0 0
        %1593 = vmatpush1.bf16.msra.mxu0 %v1569
        %1594 = vmatprep.subr.bf16.mxu0 0
        %1595 = vmatpush1.bf16.msra.mxu0 0
        %1596 = vmatprep.subr.bf16.mxu0 0
        %1597 = vmatpush1.bf16.msra.mxu0 0
        %1598 = vmatprep.subr.bf16.mxu0 0
        %1599 = vmatpush1.bf16.msra.mxu0 0
        %1600 = vmatprep.subr.bf16.mxu0 0
        %1601 = vmatpush1.bf16.msra.mxu0 0
        %1602 = vmatprep.subr.bf16.mxu0 0
        %1603 = vmatpush1.bf16.msra.mxu0 0
        %1604 = vmatprep.subr.bf16.mxu0 0
        %1605 = vmatpush1.bf16.msra.mxu0 0
        %1606 = vmatprep.subr.bf16.mxu0 0
        %1607 = vmatpush1.bf16.msra.mxu0 0
        %1608 = vmatprep.subr.bf16.mxu0 0
        %1609 = vmatpush1.bf16.msra.mxu0 0
        %1610 = vmatprep.mubr.bf16.mxu0 0
        %1611 = vmatmul.mubr.bf16.gmra.mrb[0].mxu0 %v1498
        %v1612 = vpop.f32.mrb[0].mxu0
        %v1613 = vadd.f32 0.0, %v1612
        %v1614 = vpop.f32.mrb[0].mxu0
        %v1615 = vpop.f32.mrb[0].mxu0
        %v1616 = vadd.f32 0.0, %v1615
        %v1617 = vpop.f32.mrb[0].mxu0
        %1618 = vmatprep.mubr.bf16.mxu0 0
        %1619 = vmatmul.mubr.bf16.gmra.mrb[0].mxu0 %v1499
        %v1620 = vpop.f32.mrb[0].mxu0
        %v1621 = vadd.f32 0.0, %v1620
        %v1622 = vpop.f32.mrb[0].mxu0
        %v1623 = vpop.f32.mrb[0].mxu0
        %v1624 = vadd.f32 0.0, %v1623
        %v1625 = vpop.f32.mrb[0].mxu0
        %1626 = vmatprep.mubr.bf16.mxu0 0
        %1627 = vmatmul.mubr.bf16.gmra.mrb[0].mxu0 %v1500
        %v1628 = vpop.f32.mrb[0].mxu0
        %v1629 = vadd.f32 0.0, %v1628
        %v1630 = vpop.f32.mrb[0].mxu0
        %v1631 = vpop.f32.mrb[0].mxu0
        %v1632 = vadd.f32 0.0, %v1631
        %v1633 = vpop.f32.mrb[0].mxu0
        %1634 = vmatprep.mubr.bf16.mxu0 0
        %1635 = vmatmul.mubr.bf16.gmra.mrb[0].mxu0 %v1501
        %v1636 = vpop.f32.mrb[0].mxu0
        %v1637 = vadd.f32 0.0, %v1636
        %v1638 = vpop.f32.mrb[0].mxu0
        %v1639 = vpop.f32.mrb[0].mxu0
        %v1640 = vadd.f32 0.0, %v1639
        %v1641 = vpop.f32.mrb[0].mxu0
        %1642 = vmatprep.mubr.bf16.mxu0 0
        %1643 = vmatmul.mubr.bf16.gmra.mrb[0].mxu0 %v1502
        %v1644 = vpop.f32.mrb[0].mxu0
        %v1645 = vadd.f32 0.0, %v1644
        %v1646 = vpop.f32.mrb[0].mxu0
        %v1647 = vpop.f32.mrb[0].mxu0
        %v1648 = vadd.f32 0.0, %v1647
        %v1649 = vpop.f32.mrb[0].mxu0
        %1650 = vmatprep.mubr.bf16.mxu0 0
        %1651 = vmatmul.mubr.bf16.gmra.mrb[0].mxu0 %v1503
        %v1652 = vpop.f32.mrb[0].mxu0
        %v1653 = vadd.f32 0.0, %v1652
        %v1654 = vpop.f32.mrb[0].mxu0
        %v1655 = vpop.f32.mrb[0].mxu0
        %v1656 = vadd.f32 0.0, %v1655
        %v1657 = vpop.f32.mrb[0].mxu0
        %1658 = vmatprep.mubr.bf16.mxu0 0
        %1659 = vmatmul.mubr.bf16.gmra.mrb[0].mxu0 %v1504
        %v1660 = vpop.f32.mrb[0].mxu0
        %v1661 = vadd.f32 0.0, %v1660
        %v1662 = vpop.f32.mrb[0].mxu0
        %v1663 = vpop.f32.mrb[0].mxu0
        %v1664 = vadd.f32 0.0, %v1663
        %v1665 = vpop.f32.mrb[0].mxu0
        %1666 = vmatprep.mubr.bf16.mxu0 0
        %1667 = vmatmul.mubr.bf16.gmra.mrb[0].mxu0 %v1505
        %v1668 = vpop.f32.mrb[0].mxu0
        %v1669 = vadd.f32 0.0, %v1668
        %v1670 = vpop.f32.mrb[0].mxu0
        %v1671 = vpop.f32.mrb[0].mxu0
        %v1672 = vadd.f32 0.0, %v1671
        %v1673 = vpop.f32.mrb[0].mxu0
        %1674 = vmatprep.mubr.bf16.mxu0 0
        %1675 = vmatmul.mubr.bf16.gmra.mrb[0].mxu0 %v1506
        %v1676 = vpop.f32.mrb[0].mxu0
        %v1677 = vadd.f32 0.0, %v1676
        %v1678 = vpop.f32.mrb[0].mxu0
        %v1679 = vpop.f32.mrb[0].mxu0
        %v1680 = vadd.f32 0.0, %v1679
        %v1681 = vpop.f32.mrb[0].mxu0
        %1682 = vmatprep.mubr.bf16.mxu0 0
        %1683 = vmatmul.mubr.bf16.gmra.mrb[0].mxu0 %v1507
        %v1684 = vpop.f32.mrb[0].mxu0
        %v1685 = vadd.f32 0.0, %v1684
        %v1686 = vpop.f32.mrb[0].mxu0
        %v1687 = vpop.f32.mrb[0].mxu0
        %v1688 = vadd.f32 0.0, %v1687
        %v1689 = vpop.f32.mrb[0].mxu0
        %1690 = vmatprep.mubr.bf16.mxu0 0
        %1691 = vmatmul.mubr.bf16.gmra.mrb[0].mxu0 %v1508
        %v1692 = vpop.f32.mrb[0].mxu0
        %v1693 = vadd.f32 0.0, %v1692
        %v1694 = vpop.f32.mrb[0].mxu0
        %v1695 = vpop.f32.mrb[0].mxu0
        %v1696 = vadd.f32 0.0, %v1695
        %v1697 = vpop.f32.mrb[0].mxu0
        %1698 = vmatprep.mubr.bf16.mxu0 0
        %1699 = vmatmul.mubr.bf16.gmra.mrb[0].mxu0 %v1509
        %v1700 = vpop.f32.mrb[0].mxu0
        %v1701 = vadd.f32 0.0, %v1700
        %v1702 = vpop.f32.mrb[0].mxu0
        %v1703 = vpop.f32.mrb[0].mxu0
        %v1704 = vadd.f32 0.0, %v1703
        %v1705 = vpop.f32.mrb[0].mxu0
        %1706 = vmatprep.mubr.bf16.mxu0 0
        %1707 = vmatmul.mubr.bf16.gmra.mrb[0].mxu0 %v1510
        %v1708 = vpop.f32.mrb[0].mxu0
        %v1709 = vadd.f32 0.0, %v1708
        %v1710 = vpop.f32.mrb[0].mxu0
        %v1711 = vpop.f32.mrb[0].mxu0
        %v1712 = vadd.f32 0.0, %v1711
        %v1713 = vpop.f32.mrb[0].mxu0
        %1714 = vmatprep.mubr.bf16.mxu0 0
        %1715 = vmatmul.mubr.bf16.gmra.mrb[0].mxu0 %v1511
        %v1716 = vpop.f32.mrb[0].mxu0
        %v1717 = vadd.f32 0.0, %v1716
        %v1718 = vpop.f32.mrb[0].mxu0
        %v1719 = vpop.f32.mrb[0].mxu0
        %v1720 = vadd.f32 0.0, %v1719
        %v1721 = vpop.f32.mrb[0].mxu0
        %1722 = vmatprep.mubr.bf16.mxu0 0
        %1723 = vmatmul.mubr.bf16.gmra.mrb[0].mxu0 %v1512
        %v1724 = vpop.f32.mrb[0].mxu0
        %v1725 = vadd.f32 0.0, %v1724
        %v1726 = vpop.f32.mrb[0].mxu0
        %v1727 = vpop.f32.mrb[0].mxu0
        %v1728 = vadd.f32 0.0, %v1727
        %v1729 = vpop.f32.mrb[0].mxu0
        %1730 = vmatprep.mubr.bf16.mxu0 0
        %1731 = vmatmul.mubr.bf16.gmra.mrb[0].mxu0 %v1513
        %v1732 = vpop.f32.mrb[0].mxu0
        %v1733 = vadd.f32 0.0, %v1732
        %v1734 = vpop.f32.mrb[0].mxu0
        %v1735 = vpop.f32.mrb[0].mxu0
        %v1736 = vadd.f32 0.0, %v1735
        %v1737 = vpop.f32.mrb[0].mxu0
        %1738 = vdwg.mxu0
        %v1739 = vadd.f32 %v1160, %v1613
        %v1740 = vadd.f32 %v1163, %v1616
        %v1741 = vadd.f32 %v1168, %v1621
        %v1742 = vadd.f32 %v1171, %v1624
        %v1743 = vadd.f32 %v1176, %v1629
        %v1744 = vadd.f32 %v1179, %v1632
        %v1745 = vadd.f32 %v1184, %v1637
        %v1746 = vadd.f32 %v1187, %v1640
        %v1747 = vadd.f32 %v1192, %v1645
        %v1748 = vadd.f32 %v1195, %v1648
        %v1749 = vadd.f32 %v1200, %v1653
        %v1750 = vadd.f32 %v1203, %v1656
        %v1751 = vadd.f32 %v1208, %v1661
        %v1752 = vadd.f32 %v1211, %v1664
        %v1753 = vadd.f32 %v1216, %v1669
        %v1754 = vadd.f32 %v1219, %v1672
        %v1755 = vadd.f32 %v1224, %v1677
        %v1756 = vadd.f32 %v1227, %v1680
        %v1757 = vadd.f32 %v1232, %v1685
        %v1758 = vadd.f32 %v1235, %v1688
        %v1759 = vadd.f32 %v1240, %v1693
        %v1760 = vadd.f32 %v1243, %v1696
        %v1761 = vadd.f32 %v1248, %v1701
        %v1762 = vadd.f32 %v1251, %v1704
        %v1763 = vadd.f32 %v1256, %v1709
        %v1764 = vadd.f32 %v1259, %v1712
        %v1765 = vadd.f32 %v1264, %v1717
        %v1766 = vadd.f32 %v1267, %v1720
        %v1767 = vadd.f32 %v1272, %v1725
        %v1768 = vadd.f32 %v1275, %v1728
        %v1769 = vadd.f32 %v1280, %v1733
        %v1770 = vadd.f32 %v1283, %v1736
        %s1771 = scalar_lea.vmem %s206, 16 [#allocation2]
        %v1772 = vld [vmem:[%s1771] sm:$0xf]
        %v1773 = vld [vmem:[%s1771 + $0x4] sm:$0xf]
        %v1774 = vld [vmem:[%s1771 + $0x10] sm:$0xf]
        %v1775 = vld [vmem:[%s1771 + $0x14] sm:$0xf]
        %v1776 = vld [vmem:[%s1771 + $0x20] sm:$0xf]
        %v1777 = vld [vmem:[%s1771 + $0x24] sm:$0xf]
        %v1778 = vld [vmem:[%s1771 + $0x30] sm:$0xf]
        %v1779 = vld [vmem:[%s1771 + $0x34] sm:$0xf]
        %v1780 = vld [vmem:[%s1771 + $0x40] sm:$0xf]
        %v1781 = vld [vmem:[%s1771 + $0x44] sm:$0xf]
        %v1782 = vld [vmem:[%s1771 + $0x50] sm:$0xf]
        %v1783 = vld [vmem:[%s1771 + $0x54] sm:$0xf]
        %v1784 = vld [vmem:[%s1771 + $0x60] sm:$0xf]
        %v1785 = vld [vmem:[%s1771 + $0x64] sm:$0xf]
        %v1786 = vld [vmem:[%s1771 + $0x70] sm:$0xf]
        %v1787 = vld [vmem:[%s1771 + $0x74] sm:$0xf]
        %v1788 = vld [vmem:[%s1771 + $0x80] sm:$0xf]
        %v1789 = vld [vmem:[%s1771 + $0x84] sm:$0xf]
        %v1790 = vld [vmem:[%s1771 + $0x90] sm:$0xf]
        %v1791 = vld [vmem:[%s1771 + $0x94] sm:$0xf]
        %v1792 = vld [vmem:[%s1771 + $0xa0] sm:$0xf]
        %v1793 = vld [vmem:[%s1771 + $0xa4] sm:$0xf]
        %v1794 = vld [vmem:[%s1771 + $0xb0] sm:$0xf]
        %v1795 = vld [vmem:[%s1771 + $0xb4] sm:$0xf]
        %v1796 = vld [vmem:[%s1771 + $0xc0] sm:$0xf]
        %v1797 = vld [vmem:[%s1771 + $0xc4] sm:$0xf]
        %v1798 = vld [vmem:[%s1771 + $0xd0] sm:$0xf]
        %v1799 = vld [vmem:[%s1771 + $0xd4] sm:$0xf]
        %v1800 = vld [vmem:[%s1771 + $0xe0] sm:$0xf]
        %v1801 = vld [vmem:[%s1771 + $0xe4] sm:$0xf]
        %v1802 = vld [vmem:[%s1771 + $0xf0] sm:$0xf]
        %v1803 = vld [vmem:[%s1771 + $0xf4] sm:$0xf]
        %s1804 = scalar_lea.vmem [#allocation5], 192
        %v1805 = vld [vmem:[%s1804] sm:$0xf]
        %v1806 = vld [vmem:[%s1804 + $0x4] sm:$0xf]
        %v1807 = vld [vmem:[%s1804 + $0x8] sm:$0xf]
        %v1808 = vld [vmem:[%s1804 + $0xc] sm:$0xf]
        %v1809 = vld [vmem:[%s1804 + $0x10] sm:$0xf]
        %v1810 = vld [vmem:[%s1804 + $0x14] sm:$0xf]
        %v1811 = vld [vmem:[%s1804 + $0x18] sm:$0xf]
        %v1812 = vld [vmem:[%s1804 + $0x1c] sm:$0xf]
        %v1813 = vld [vmem:[%s1804 + $0x20] sm:$0xf]
        %v1814 = vld [vmem:[%s1804 + $0x24] sm:$0xf]
        %v1815 = vld [vmem:[%s1804 + $0x28] sm:$0xf]
        %v1816 = vld [vmem:[%s1804 + $0x2c] sm:$0xf]
        %v1817 = vld [vmem:[%s1804 + $0x30] sm:$0xf]
        %v1818 = vld [vmem:[%s1804 + $0x34] sm:$0xf]
        %v1819 = vld [vmem:[%s1804 + $0x38] sm:$0xf]
        %v1820 = vld [vmem:[%s1804 + $0x3c] sm:$0xf]
        %v1853 = vunpack.c.l.b16 %v1772
        %v1854 = vunpack.c.l.b16 %v1773
        %v1855 = vunpack.c.l.b16 %v1774
        %v1856 = vunpack.c.l.b16 %v1775
        %v1857 = vunpack.c.l.b16 %v1776
        %v1858 = vunpack.c.l.b16 %v1777
        %v1859 = vunpack.c.l.b16 %v1778
        %v1860 = vunpack.c.l.b16 %v1779
        %v1861 = vunpack.c.l.b16 %v1780
        %v1862 = vunpack.c.l.b16 %v1781
        %v1863 = vunpack.c.l.b16 %v1782
        %v1864 = vunpack.c.l.b16 %v1783
        %v1865 = vunpack.c.l.b16 %v1784
        %v1866 = vunpack.c.l.b16 %v1785
        %v1867 = vunpack.c.l.b16 %v1786
        %v1868 = vunpack.c.l.b16 %v1787
        %v1869 = vunpack.c.l.b16 %v1788
        %v1870 = vunpack.c.l.b16 %v1789
        %v1871 = vunpack.c.l.b16 %v1790
        %v1872 = vunpack.c.l.b16 %v1791
        %v1873 = vunpack.c.l.b16 %v1792
        %v1874 = vunpack.c.l.b16 %v1793
        %v1875 = vunpack.c.l.b16 %v1794
        %v1876 = vunpack.c.l.b16 %v1795
        %v1877 = vunpack.c.l.b16 %v1796
        %v1878 = vunpack.c.l.b16 %v1797
        %v1879 = vunpack.c.l.b16 %v1798
        %v1880 = vunpack.c.l.b16 %v1799
        %v1881 = vunpack.c.l.b16 %v1800
        %v1882 = vunpack.c.l.b16 %v1801
        %v1883 = vunpack.c.l.b16 %v1802
        %v1884 = vunpack.c.l.b16 %v1803
        %v1885 = vpack.c.b16 %v1854, %v1853
        %v1886 = vpack.c.b16 %v1856, %v1855
        %v1887 = vpack.c.b16 %v1858, %v1857
        %v1888 = vpack.c.b16 %v1860, %v1859
        %v1889 = vpack.c.b16 %v1862, %v1861
        %v1890 = vpack.c.b16 %v1864, %v1863
        %v1891 = vpack.c.b16 %v1866, %v1865
        %v1892 = vpack.c.b16 %v1868, %v1867
        %v1893 = vpack.c.b16 %v1870, %v1869
        %v1894 = vpack.c.b16 %v1872, %v1871
        %v1895 = vpack.c.b16 %v1874, %v1873
        %v1896 = vpack.c.b16 %v1876, %v1875
        %v1897 = vpack.c.b16 %v1878, %v1877
        %v1898 = vpack.c.b16 %v1880, %v1879
        %v1899 = vpack.c.b16 %v1882, %v1881
        %v1900 = vpack.c.b16 %v1884, %v1883
        %v1933 = vunpack.c.l.b16 %v1805
        %v1934 = vunpack.c.l.b16 %v1806
        %v1935 = vunpack.c.l.b16 %v1807
        %v1936 = vunpack.c.l.b16 %v1808
        %v1937 = vunpack.c.l.b16 %v1809
        %v1938 = vunpack.c.l.b16 %v1810
        %v1939 = vunpack.c.l.b16 %v1811
        %v1940 = vunpack.c.l.b16 %v1812
        %v1941 = vunpack.c.l.b16 %v1813
        %v1942 = vunpack.c.l.b16 %v1814
        %v1943 = vunpack.c.l.b16 %v1815
        %v1944 = vunpack.c.l.b16 %v1816
        %v1945 = vunpack.c.l.b16 %v1817
        %v1946 = vunpack.c.l.b16 %v1818
        %v1947 = vunpack.c.l.b16 %v1819
        %v1948 = vunpack.c.l.b16 %v1820
        %v1949 = vpack.c.b16 %v1934, %v1933
        %v1950 = vpack.c.b16 %v1936, %v1935
        %v1951 = vpack.c.b16 %v1938, %v1937
        %v1952 = vpack.c.b16 %v1940, %v1939
        %v1953 = vpack.c.b16 %v1942, %v1941
        %v1954 = vpack.c.b16 %v1944, %v1943
        %v1955 = vpack.c.b16 %v1946, %v1945
        %v1956 = vpack.c.b16 %v1948, %v1947
        %1965 = vmatprep.subr.bf16.mxu0 0
        %1966 = vmatpush1.bf16.msra.mxu0 %v1949
        %1967 = vmatprep.subr.bf16.mxu0 0
        %1968 = vmatpush1.bf16.msra.mxu0 %v1950
        %1969 = vmatprep.subr.bf16.mxu0 0
        %1970 = vmatpush1.bf16.msra.mxu0 %v1951
        %1971 = vmatprep.subr.bf16.mxu0 0
        %1972 = vmatpush1.bf16.msra.mxu0 %v1952
        %1973 = vmatprep.subr.bf16.mxu0 0
        %1974 = vmatpush1.bf16.msra.mxu0 %v1953
        %1975 = vmatprep.subr.bf16.mxu0 0
        %1976 = vmatpush1.bf16.msra.mxu0 %v1954
        %1977 = vmatprep.subr.bf16.mxu0 0
        %1978 = vmatpush1.bf16.msra.mxu0 %v1955
        %1979 = vmatprep.subr.bf16.mxu0 0
        %1980 = vmatpush1.bf16.msra.mxu0 %v1956
        %1981 = vmatprep.subr.bf16.mxu0 0
        %1982 = vmatpush1.bf16.msra.mxu0 0
        %1983 = vmatprep.subr.bf16.mxu0 0
        %1984 = vmatpush1.bf16.msra.mxu0 0
        %1985 = vmatprep.subr.bf16.mxu0 0
        %1986 = vmatpush1.bf16.msra.mxu0 0
        %1987 = vmatprep.subr.bf16.mxu0 0
        %1988 = vmatpush1.bf16.msra.mxu0 0
        %1989 = vmatprep.subr.bf16.mxu0 0
        %1990 = vmatpush1.bf16.msra.mxu0 0
        %1991 = vmatprep.subr.bf16.mxu0 0
        %1992 = vmatpush1.bf16.msra.mxu0 0
        %1993 = vmatprep.subr.bf16.mxu0 0
        %1994 = vmatpush1.bf16.msra.mxu0 0
        %1995 = vmatprep.subr.bf16.mxu0 0
        %1996 = vmatpush1.bf16.msra.mxu0 0
        %1997 = vmatprep.mubr.bf16.mxu0 0
        %1998 = vmatmul.mubr.bf16.gmra.mrb[0].mxu0 %v1885
        %v1999 = vpop.f32.mrb[0].mxu0
        %v2000 = vadd.f32 0.0, %v1999
        %v2001 = vpop.f32.mrb[0].mxu0
        %v2002 = vpop.f32.mrb[0].mxu0
        %v2003 = vadd.f32 0.0, %v2002
        %v2004 = vpop.f32.mrb[0].mxu0
        %2005 = vmatprep.mubr.bf16.mxu0 0
        %2006 = vmatmul.mubr.bf16.gmra.mrb[0].mxu0 %v1886
        %v2007 = vpop.f32.mrb[0].mxu0
        %v2008 = vadd.f32 0.0, %v2007
        %v2009 = vpop.f32.mrb[0].mxu0
        %v2010 = vpop.f32.mrb[0].mxu0
        %v2011 = vadd.f32 0.0, %v2010
        %v2012 = vpop.f32.mrb[0].mxu0
        %2013 = vmatprep.mubr.bf16.mxu0 0
        %2014 = vmatmul.mubr.bf16.gmra.mrb[0].mxu0 %v1887
        %v2015 = vpop.f32.mrb[0].mxu0
        %v2016 = vadd.f32 0.0, %v2015
        %v2017 = vpop.f32.mrb[0].mxu0
        %v2018 = vpop.f32.mrb[0].mxu0
        %v2019 = vadd.f32 0.0, %v2018
        %v2020 = vpop.f32.mrb[0].mxu0
        %2021 = vmatprep.mubr.bf16.mxu0 0
        %2022 = vmatmul.mubr.bf16.gmra.mrb[0].mxu0 %v1888
        %v2023 = vpop.f32.mrb[0].mxu0
        %v2024 = vadd.f32 0.0, %v2023
        %v2025 = vpop.f32.mrb[0].mxu0
        %v2026 = vpop.f32.mrb[0].mxu0
        %v2027 = vadd.f32 0.0, %v2026
        %v2028 = vpop.f32.mrb[0].mxu0
        %2029 = vmatprep.mubr.bf16.mxu0 0
        %2030 = vmatmul.mubr.bf16.gmra.mrb[0].mxu0 %v1889
        %v2031 = vpop.f32.mrb[0].mxu0
        %v2032 = vadd.f32 0.0, %v2031
        %v2033 = vpop.f32.mrb[0].mxu0
        %v2034 = vpop.f32.mrb[0].mxu0
        %v2035 = vadd.f32 0.0, %v2034
        %v2036 = vpop.f32.mrb[0].mxu0
        %2037 = vmatprep.mubr.bf16.mxu0 0
        %2038 = vmatmul.mubr.bf16.gmra.mrb[0].mxu0 %v1890
        %v2039 = vpop.f32.mrb[0].mxu0
        %v2040 = vadd.f32 0.0, %v2039
        %v2041 = vpop.f32.mrb[0].mxu0
        %v2042 = vpop.f32.mrb[0].mxu0
        %v2043 = vadd.f32 0.0, %v2042
        %v2044 = vpop.f32.mrb[0].mxu0
        %2045 = vmatprep.mubr.bf16.mxu0 0
        %2046 = vmatmul.mubr.bf16.gmra.mrb[0].mxu0 %v1891
        %v2047 = vpop.f32.mrb[0].mxu0
        %v2048 = vadd.f32 0.0, %v2047
        %v2049 = vpop.f32.mrb[0].mxu0
        %v2050 = vpop.f32.mrb[0].mxu0
        %v2051 = vadd.f32 0.0, %v2050
        %v2052 = vpop.f32.mrb[0].mxu0
        %2053 = vmatprep.mubr.bf16.mxu0 0
        %2054 = vmatmul.mubr.bf16.gmra.mrb[0].mxu0 %v1892
        %v2055 = vpop.f32.mrb[0].mxu0
        %v2056 = vadd.f32 0.0, %v2055
        %v2057 = vpop.f32.mrb[0].mxu0
        %v2058 = vpop.f32.mrb[0].mxu0
        %v2059 = vadd.f32 0.0, %v2058
        %v2060 = vpop.f32.mrb[0].mxu0
        %2061 = vmatprep.mubr.bf16.mxu0 0
        %2062 = vmatmul.mubr.bf16.gmra.mrb[0].mxu0 %v1893
        %v2063 = vpop.f32.mrb[0].mxu0
        %v2064 = vadd.f32 0.0, %v2063
        %v2065 = vpop.f32.mrb[0].mxu0
        %v2066 = vpop.f32.mrb[0].mxu0
        %v2067 = vadd.f32 0.0, %v2066
        %v2068 = vpop.f32.mrb[0].mxu0
        %2069 = vmatprep.mubr.bf16.mxu0 0
        %2070 = vmatmul.mubr.bf16.gmra.mrb[0].mxu0 %v1894
        %v2071 = vpop.f32.mrb[0].mxu0
        %v2072 = vadd.f32 0.0, %v2071
        %v2073 = vpop.f32.mrb[0].mxu0
        %v2074 = vpop.f32.mrb[0].mxu0
        %v2075 = vadd.f32 0.0, %v2074
        %v2076 = vpop.f32.mrb[0].mxu0
        %2077 = vmatprep.mubr.bf16.mxu0 0
        %2078 = vmatmul.mubr.bf16.gmra.mrb[0].mxu0 %v1895
        %v2079 = vpop.f32.mrb[0].mxu0
        %v2080 = vadd.f32 0.0, %v2079
        %v2081 = vpop.f32.mrb[0].mxu0
        %v2082 = vpop.f32.mrb[0].mxu0
        %v2083 = vadd.f32 0.0, %v2082
        %v2084 = vpop.f32.mrb[0].mxu0
        %2085 = vmatprep.mubr.bf16.mxu0 0
        %2086 = vmatmul.mubr.bf16.gmra.mrb[0].mxu0 %v1896
        %v2087 = vpop.f32.mrb[0].mxu0
        %v2088 = vadd.f32 0.0, %v2087
        %v2089 = vpop.f32.mrb[0].mxu0
        %v2090 = vpop.f32.mrb[0].mxu0
        %v2091 = vadd.f32 0.0, %v2090
        %v2092 = vpop.f32.mrb[0].mxu0
        %2093 = vmatprep.mubr.bf16.mxu0 0
        %2094 = vmatmul.mubr.bf16.gmra.mrb[0].mxu0 %v1897
        %v2095 = vpop.f32.mrb[0].mxu0
        %v2096 = vadd.f32 0.0, %v2095
        %v2097 = vpop.f32.mrb[0].mxu0
        %v2098 = vpop.f32.mrb[0].mxu0
        %v2099 = vadd.f32 0.0, %v2098
        %v2100 = vpop.f32.mrb[0].mxu0
        %2101 = vmatprep.mubr.bf16.mxu0 0
        %2102 = vmatmul.mubr.bf16.gmra.mrb[0].mxu0 %v1898
        %v2103 = vpop.f32.mrb[0].mxu0
        %v2104 = vadd.f32 0.0, %v2103
        %v2105 = vpop.f32.mrb[0].mxu0
        %v2106 = vpop.f32.mrb[0].mxu0
        %v2107 = vadd.f32 0.0, %v2106
        %v2108 = vpop.f32.mrb[0].mxu0
        %2109 = vmatprep.mubr.bf16.mxu0 0
        %2110 = vmatmul.mubr.bf16.gmra.mrb[0].mxu0 %v1899
        %v2111 = vpop.f32.mrb[0].mxu0
        %v2112 = vadd.f32 0.0, %v2111
        %v2113 = vpop.f32.mrb[0].mxu0
        %v2114 = vpop.f32.mrb[0].mxu0
        %v2115 = vadd.f32 0.0, %v2114
        %v2116 = vpop.f32.mrb[0].mxu0
        %2117 = vmatprep.mubr.bf16.mxu0 0
        %2118 = vmatmul.mubr.bf16.gmra.mrb[0].mxu0 %v1900
        %v2119 = vpop.f32.mrb[0].mxu0
        %v2120 = vadd.f32 0.0, %v2119
        %v2121 = vpop.f32.mrb[0].mxu0
        %v2122 = vpop.f32.mrb[0].mxu0
        %v2123 = vadd.f32 0.0, %v2122
        %v2124 = vpop.f32.mrb[0].mxu0
        %2125 = vdwg.mxu0
        %v2126 = vadd.f32 %v1739, %v2000
        %v2127 = vadd.f32 %v1740, %v2003
        %v2128 = vadd.f32 %v1741, %v2008
        %v2129 = vadd.f32 %v1742, %v2011
        %v2130 = vadd.f32 %v1743, %v2016
        %v2131 = vadd.f32 %v1744, %v2019
        %v2132 = vadd.f32 %v1745, %v2024
        %v2133 = vadd.f32 %v1746, %v2027
        %v2134 = vadd.f32 %v1747, %v2032
        %v2135 = vadd.f32 %v1748, %v2035
        %v2136 = vadd.f32 %v1749, %v2040
        %v2137 = vadd.f32 %v1750, %v2043
        %v2138 = vadd.f32 %v1751, %v2048
        %v2139 = vadd.f32 %v1752, %v2051
        %v2140 = vadd.f32 %v1753, %v2056
        %v2141 = vadd.f32 %v1754, %v2059
        %v2142 = vadd.f32 %v1755, %v2064
        %v2143 = vadd.f32 %v1756, %v2067
        %v2144 = vadd.f32 %v1757, %v2072
        %v2145 = vadd.f32 %v1758, %v2075
        %v2146 = vadd.f32 %v1759, %v2080
        %v2147 = vadd.f32 %v1760, %v2083
        %v2148 = vadd.f32 %v1761, %v2088
        %v2149 = vadd.f32 %v1762, %v2091
        %v2150 = vadd.f32 %v1763, %v2096
        %v2151 = vadd.f32 %v1764, %v2099
        %v2152 = vadd.f32 %v1765, %v2104
        %v2153 = vadd.f32 %v1766, %v2107
        %v2154 = vadd.f32 %v1767, %v2112
        %v2155 = vadd.f32 %v1768, %v2115
        %v2156 = vadd.f32 %v1769, %v2120
        %v2157 = vadd.f32 %v1770, %v2123
        %v2158 = vld [vmem:[%s1771] sm:$0xf]
        %v2159 = vld [vmem:[%s1771 + $0x4] sm:$0xf]
        %v2160 = vld [vmem:[%s1771 + $0x8] sm:$0x1]
        %v2161 = vld [vmem:[%s1771 + $0x10] sm:$0xf]
        %v2162 = vld [vmem:[%s1771 + $0x14] sm:$0xf]
        %v2163 = vld [vmem:[%s1771 + $0x18] sm:$0x1]
        %v2164 = vld [vmem:[%s1771 + $0x20] sm:$0xf]
        %v2165 = vld [vmem:[%s1771 + $0x24] sm:$0xf]
        %v2166 = vld [vmem:[%s1771 + $0x28] sm:$0x1]
        %v2167 = vld [vmem:[%s1771 + $0x30] sm:$0xf]
        %v2168 = vld [vmem:[%s1771 + $0x34] sm:$0xf]
        %v2169 = vld [vmem:[%s1771 + $0x38] sm:$0x1]
        %v2170 = vld [vmem:[%s1771 + $0x40] sm:$0xf]
        %v2171 = vld [vmem:[%s1771 + $0x44] sm:$0xf]
        %v2172 = vld [vmem:[%s1771 + $0x48] sm:$0x1]
        %v2173 = vld [vmem:[%s1771 + $0x50] sm:$0xf]
        %v2174 = vld [vmem:[%s1771 + $0x54] sm:$0xf]
        %v2175 = vld [vmem:[%s1771 + $0x58] sm:$0x1]
        %v2176 = vld [vmem:[%s1771 + $0x60] sm:$0xf]
        %v2177 = vld [vmem:[%s1771 + $0x64] sm:$0xf]
        %v2178 = vld [vmem:[%s1771 + $0x68] sm:$0x1]
        %v2179 = vld [vmem:[%s1771 + $0x70] sm:$0xf]
        %v2180 = vld [vmem:[%s1771 + $0x74] sm:$0xf]
        %v2181 = vld [vmem:[%s1771 + $0x78] sm:$0x1]
        %v2182 = vld [vmem:[%s1771 + $0x80] sm:$0xf]
        %v2183 = vld [vmem:[%s1771 + $0x84] sm:$0xf]
        %v2184 = vld [vmem:[%s1771 + $0x88] sm:$0x1]
        %v2185 = vld [vmem:[%s1771 + $0x90] sm:$0xf]
        %v2186 = vld [vmem:[%s1771 + $0x94] sm:$0xf]
        %v2187 = vld [vmem:[%s1771 + $0x98] sm:$0x1]
        %v2188 = vld [vmem:[%s1771 + $0xa0] sm:$0xf]
        %v2189 = vld [vmem:[%s1771 + $0xa4] sm:$0xf]
        %v2190 = vld [vmem:[%s1771 + $0xa8] sm:$0x1]
        %v2191 = vld [vmem:[%s1771 + $0xb0] sm:$0xf]
        %v2192 = vld [vmem:[%s1771 + $0xb4] sm:$0xf]
        %v2193 = vld [vmem:[%s1771 + $0xb8] sm:$0x1]
        %v2194 = vld [vmem:[%s1771 + $0xc0] sm:$0xf]
        %v2195 = vld [vmem:[%s1771 + $0xc4] sm:$0xf]
        %v2196 = vld [vmem:[%s1771 + $0xc8] sm:$0x1]
        %v2197 = vld [vmem:[%s1771 + $0xd0] sm:$0xf]
        %v2198 = vld [vmem:[%s1771 + $0xd4] sm:$0xf]
        %v2199 = vld [vmem:[%s1771 + $0xd8] sm:$0x1]
        %v2200 = vld [vmem:[%s1771 + $0xe0] sm:$0xf]
        %v2201 = vld [vmem:[%s1771 + $0xe4] sm:$0xf]
        %v2202 = vld [vmem:[%s1771 + $0xe8] sm:$0x1]
        %v2203 = vld [vmem:[%s1771 + $0xf0] sm:$0xf]
        %v2204 = vld [vmem:[%s1771 + $0xf4] sm:$0xf]
        %v2205 = vld [vmem:[%s1771 + $0xf8] sm:$0x1]
        %v2207 = vshrl.u32 %v2158, 16
        %v2209 = vrot.slane %v2207, 4
        %v2210 = vshll.u32 %v2158, 16
        %v2212 = vrot.slane %v2210, 5
        %v2213 = vor.u32 %v2209, %v2212
        %v2214 = vrot.slane %v2213, 4
        %v2216 = vshll.u32 %v2159, 16
        %v2218 = vrot.slane %v2216, 5
        %v2219 = vsel %vm306, %v2214, %v2218
        %v2220 = vshrl.u32 %v2159, 16
        %v2222 = vrot.slane %v2220, 4
        %v2223 = vor.u32 %v2222, %v2218
        %v2224 = vrot.slane %v2223, 4
        %v2226 = vshll.u32 %v2160, 16
        %v2228 = vrot.slane %v2226, 5
        %v2229 = vsel %vm306, %v2224, %v2228
        %v2231 = vshrl.u32 %v2161, 16
        %v2233 = vrot.slane %v2231, 4
        %v2234 = vshll.u32 %v2161, 16
        %v2236 = vrot.slane %v2234, 5
        %v2237 = vor.u32 %v2233, %v2236
        %v2238 = vrot.slane %v2237, 4
        %v2240 = vshll.u32 %v2162, 16
        %v2242 = vrot.slane %v2240, 5
        %v2243 = vsel %vm306, %v2238, %v2242
        %v2244 = vshrl.u32 %v2162, 16
        %v2246 = vrot.slane %v2244, 4
        %v2247 = vor.u32 %v2246, %v2242
        %v2248 = vrot.slane %v2247, 4
        %v2250 = vshll.u32 %v2163, 16
        %v2252 = vrot.slane %v2250, 5
        %v2253 = vsel %vm306, %v2248, %v2252
        %v2255 = vshrl.u32 %v2164, 16
        %v2257 = vrot.slane %v2255, 4
        %v2258 = vshll.u32 %v2164, 16
        %v2260 = vrot.slane %v2258, 5
        %v2261 = vor.u32 %v2257, %v2260
        %v2262 = vrot.slane %v2261, 4
        %v2264 = vshll.u32 %v2165, 16
        %v2266 = vrot.slane %v2264, 5
        %v2267 = vsel %vm306, %v2262, %v2266
        %v2268 = vshrl.u32 %v2165, 16
        %v2270 = vrot.slane %v2268, 4
        %v2271 = vor.u32 %v2270, %v2266
        %v2272 = vrot.slane %v2271, 4
        %v2274 = vshll.u32 %v2166, 16
        %v2276 = vrot.slane %v2274, 5
        %v2277 = vsel %vm306, %v2272, %v2276
        %v2279 = vshrl.u32 %v2167, 16
        %v2281 = vrot.slane %v2279, 4
        %v2282 = vshll.u32 %v2167, 16
        %v2284 = vrot.slane %v2282, 5
        %v2285 = vor.u32 %v2281, %v2284
        %v2286 = vrot.slane %v2285, 4
        %v2288 = vshll.u32 %v2168, 16
        %v2290 = vrot.slane %v2288, 5
        %v2291 = vsel %vm306, %v2286, %v2290
        %v2292 = vshrl.u32 %v2168, 16
        %v2294 = vrot.slane %v2292, 4
        %v2295 = vor.u32 %v2294, %v2290
        %v2296 = vrot.slane %v2295, 4
        %v2298 = vshll.u32 %v2169, 16
        %v2300 = vrot.slane %v2298, 5
        %v2301 = vsel %vm306, %v2296, %v2300
        %v2303 = vshrl.u32 %v2170, 16
        %v2305 = vrot.slane %v2303, 4
        %v2306 = vshll.u32 %v2170, 16
        %v2308 = vrot.slane %v2306, 5
        %v2309 = vor.u32 %v2305, %v2308
        %v2310 = vrot.slane %v2309, 4
        %v2312 = vshll.u32 %v2171, 16
        %v2314 = vrot.slane %v2312, 5
        %v2315 = vsel %vm306, %v2310, %v2314
        %v2316 = vshrl.u32 %v2171, 16
        %v2318 = vrot.slane %v2316, 4
        %v2319 = vor.u32 %v2318, %v2314
        %v2320 = vrot.slane %v2319, 4
        %v2322 = vshll.u32 %v2172, 16
        %v2324 = vrot.slane %v2322, 5
        %v2325 = vsel %vm306, %v2320, %v2324
        %v2327 = vshrl.u32 %v2173, 16
        %v2329 = vrot.slane %v2327, 4
        %v2330 = vshll.u32 %v2173, 16
        %v2332 = vrot.slane %v2330, 5
        %v2333 = vor.u32 %v2329, %v2332
        %v2334 = vrot.slane %v2333, 4
        %v2336 = vshll.u32 %v2174, 16
        %v2338 = vrot.slane %v2336, 5
        %v2339 = vsel %vm306, %v2334, %v2338
        %v2340 = vshrl.u32 %v2174, 16
        %v2342 = vrot.slane %v2340, 4
        %v2343 = vor.u32 %v2342, %v2338
        %v2344 = vrot.slane %v2343, 4
        %v2346 = vshll.u32 %v2175, 16
        %v2348 = vrot.slane %v2346, 5
        %v2349 = vsel %vm306, %v2344, %v2348
        %v2351 = vshrl.u32 %v2176, 16
        %v2353 = vrot.slane %v2351, 4
        %v2354 = vshll.u32 %v2176, 16
        %v2356 = vrot.slane %v2354, 5
        %v2357 = vor.u32 %v2353, %v2356
        %v2358 = vrot.slane %v2357, 4
        %v2360 = vshll.u32 %v2177, 16
        %v2362 = vrot.slane %v2360, 5
        %v2363 = vsel %vm306, %v2358, %v2362
        %v2364 = vshrl.u32 %v2177, 16
        %v2366 = vrot.slane %v2364, 4
        %v2367 = vor.u32 %v2366, %v2362
        %v2368 = vrot.slane %v2367, 4
        %v2370 = vshll.u32 %v2178, 16
        %v2372 = vrot.slane %v2370, 5
        %v2373 = vsel %vm306, %v2368, %v2372
        %v2375 = vshrl.u32 %v2179, 16
        %v2377 = vrot.slane %v2375, 4
        %v2378 = vshll.u32 %v2179, 16
        %v2380 = vrot.slane %v2378, 5
        %v2381 = vor.u32 %v2377, %v2380
        %v2382 = vrot.slane %v2381, 4
        %v2384 = vshll.u32 %v2180, 16
        %v2386 = vrot.slane %v2384, 5
        %v2387 = vsel %vm306, %v2382, %v2386
        %v2388 = vshrl.u32 %v2180, 16
        %v2390 = vrot.slane %v2388, 4
        %v2391 = vor.u32 %v2390, %v2386
        %v2392 = vrot.slane %v2391, 4
        %v2394 = vshll.u32 %v2181, 16
        %v2396 = vrot.slane %v2394, 5
        %v2397 = vsel %vm306, %v2392, %v2396
        %v2399 = vshrl.u32 %v2182, 16
        %v2401 = vrot.slane %v2399, 4
        %v2402 = vshll.u32 %v2182, 16
        %v2404 = vrot.slane %v2402, 5
        %v2405 = vor.u32 %v2401, %v2404
        %v2406 = vrot.slane %v2405, 4
        %v2408 = vshll.u32 %v2183, 16
        %v2410 = vrot.slane %v2408, 5
        %v2411 = vsel %vm306, %v2406, %v2410
        %v2412 = vshrl.u32 %v2183, 16
        %v2414 = vrot.slane %v2412, 4
        %v2415 = vor.u32 %v2414, %v2410
        %v2416 = vrot.slane %v2415, 4
        %v2418 = vshll.u32 %v2184, 16
        %v2420 = vrot.slane %v2418, 5
        %v2421 = vsel %vm306, %v2416, %v2420
        %v2423 = vshrl.u32 %v2185, 16
        %v2425 = vrot.slane %v2423, 4
        %v2426 = vshll.u32 %v2185, 16
        %v2428 = vrot.slane %v2426, 5
        %v2429 = vor.u32 %v2425, %v2428
        %v2430 = vrot.slane %v2429, 4
        %v2432 = vshll.u32 %v2186, 16
        %v2434 = vrot.slane %v2432, 5
        %v2435 = vsel %vm306, %v2430, %v2434
        %v2436 = vshrl.u32 %v2186, 16
        %v2438 = vrot.slane %v2436, 4
        %v2439 = vor.u32 %v2438, %v2434
        %v2440 = vrot.slane %v2439, 4
        %v2442 = vshll.u32 %v2187, 16
        %v2444 = vrot.slane %v2442, 5
        %v2445 = vsel %vm306, %v2440, %v2444
        %v2447 = vshrl.u32 %v2188, 16
        %v2449 = vrot.slane %v2447, 4
        %v2450 = vshll.u32 %v2188, 16
        %v2452 = vrot.slane %v2450, 5
        %v2453 = vor.u32 %v2449, %v2452
        %v2454 = vrot.slane %v2453, 4
        %v2456 = vshll.u32 %v2189, 16
        %v2458 = vrot.slane %v2456, 5
        %v2459 = vsel %vm306, %v2454, %v2458
        %v2460 = vshrl.u32 %v2189, 16
        %v2462 = vrot.slane %v2460, 4
        %v2463 = vor.u32 %v2462, %v2458
        %v2464 = vrot.slane %v2463, 4
        %v2466 = vshll.u32 %v2190, 16
        %v2468 = vrot.slane %v2466, 5
        %v2469 = vsel %vm306, %v2464, %v2468
        %v2471 = vshrl.u32 %v2191, 16
        %v2473 = vrot.slane %v2471, 4
        %v2474 = vshll.u32 %v2191, 16
        %v2476 = vrot.slane %v2474, 5
        %v2477 = vor.u32 %v2473, %v2476
        %v2478 = vrot.slane %v2477, 4
        %v2480 = vshll.u32 %v2192, 16
        %v2482 = vrot.slane %v2480, 5
        %v2483 = vsel %vm306, %v2478, %v2482
        %v2484 = vshrl.u32 %v2192, 16
        %v2486 = vrot.slane %v2484, 4
        %v2487 = vor.u32 %v2486, %v2482
        %v2488 = vrot.slane %v2487, 4
        %v2490 = vshll.u32 %v2193, 16
        %v2492 = vrot.slane %v2490, 5
        %v2493 = vsel %vm306, %v2488, %v2492
        %v2495 = vshrl.u32 %v2194, 16
        %v2497 = vrot.slane %v2495, 4
        %v2498 = vshll.u32 %v2194, 16
        %v2500 = vrot.slane %v2498, 5
        %v2501 = vor.u32 %v2497, %v2500
        %v2502 = vrot.slane %v2501, 4
        %v2504 = vshll.u32 %v2195, 16
        %v2506 = vrot.slane %v2504, 5
        %v2507 = vsel %vm306, %v2502, %v2506
        %v2508 = vshrl.u32 %v2195, 16
        %v2510 = vrot.slane %v2508, 4
        %v2511 = vor.u32 %v2510, %v2506
        %v2512 = vrot.slane %v2511, 4
        %v2514 = vshll.u32 %v2196, 16
        %v2516 = vrot.slane %v2514, 5
        %v2517 = vsel %vm306, %v2512, %v2516
        %v2519 = vshrl.u32 %v2197, 16
        %v2521 = vrot.slane %v2519, 4
        %v2522 = vshll.u32 %v2197, 16
        %v2524 = vrot.slane %v2522, 5
        %v2525 = vor.u32 %v2521, %v2524
        %v2526 = vrot.slane %v2525, 4
        %v2528 = vshll.u32 %v2198, 16
        %v2530 = vrot.slane %v2528, 5
        %v2531 = vsel %vm306, %v2526, %v2530
        %v2532 = vshrl.u32 %v2198, 16
        %v2534 = vrot.slane %v2532, 4
        %v2535 = vor.u32 %v2534, %v2530
        %v2536 = vrot.slane %v2535, 4
        %v2538 = vshll.u32 %v2199, 16
        %v2540 = vrot.slane %v2538, 5
        %v2541 = vsel %vm306, %v2536, %v2540
        %v2543 = vshrl.u32 %v2200, 16
        %v2545 = vrot.slane %v2543, 4
        %v2546 = vshll.u32 %v2200, 16
        %v2548 = vrot.slane %v2546, 5
        %v2549 = vor.u32 %v2545, %v2548
        %v2550 = vrot.slane %v2549, 4
        %v2552 = vshll.u32 %v2201, 16
        %v2554 = vrot.slane %v2552, 5
        %v2555 = vsel %vm306, %v2550, %v2554
        %v2556 = vshrl.u32 %v2201, 16
        %v2558 = vrot.slane %v2556, 4
        %v2559 = vor.u32 %v2558, %v2554
        %v2560 = vrot.slane %v2559, 4
        %v2562 = vshll.u32 %v2202, 16
        %v2564 = vrot.slane %v2562, 5
        %v2565 = vsel %vm306, %v2560, %v2564
        %v2567 = vshrl.u32 %v2203, 16
        %v2569 = vrot.slane %v2567, 4
        %v2570 = vshll.u32 %v2203, 16
        %v2572 = vrot.slane %v2570, 5
        %v2573 = vor.u32 %v2569, %v2572
        %v2574 = vrot.slane %v2573, 4
        %v2576 = vshll.u32 %v2204, 16
        %v2578 = vrot.slane %v2576, 5
        %v2579 = vsel %vm306, %v2574, %v2578
        %v2580 = vshrl.u32 %v2204, 16
        %v2582 = vrot.slane %v2580, 4
        %v2583 = vor.u32 %v2582, %v2578
        %v2584 = vrot.slane %v2583, 4
        %v2586 = vshll.u32 %v2205, 16
        %v2588 = vrot.slane %v2586, 5
        %v2589 = vsel %vm306, %v2584, %v2588
        %s2590 = scalar_lea.vmem [#allocation5], 256
        %v2591 = vld [vmem:[%s2590] sm:$0xf]
        %v2592 = vld [vmem:[%s2590 + $0x4] sm:$0xf]
        %v2593 = vld [vmem:[%s2590 + $0x8] sm:$0xf]
        %v2594 = vld [vmem:[%s2590 + $0xc] sm:$0xf]
        %v2595 = vld [vmem:[%s2590 + $0x10] sm:$0xf]
        %v2596 = vld [vmem:[%s2590 + $0x14] sm:$0xf]
        %v2597 = vld [vmem:[%s2590 + $0x18] sm:$0xf]
        %v2598 = vld [vmem:[%s2590 + $0x1c] sm:$0xf]
        %v2599 = vld [vmem:[%s2590 + $0x20] sm:$0xf]
        %v2600 = vld [vmem:[%s2590 + $0x24] sm:$0xf]
        %v2601 = vld [vmem:[%s2590 + $0x28] sm:$0xf]
        %v2602 = vld [vmem:[%s2590 + $0x2c] sm:$0xf]
        %v2603 = vld [vmem:[%s2590 + $0x30] sm:$0xf]
        %v2604 = vld [vmem:[%s2590 + $0x34] sm:$0xf]
        %v2605 = vld [vmem:[%s2590 + $0x38] sm:$0xf]
        %v2606 = vld [vmem:[%s2590 + $0x3c] sm:$0xf]
        %v2607 = vunpack.c.l.b16 %v2219
        %v2608 = vunpack.c.l.b16 %v2229
        %v2609 = vunpack.c.l.b16 %v2243
        %v2610 = vunpack.c.l.b16 %v2253
        %v2611 = vunpack.c.l.b16 %v2267
        %v2612 = vunpack.c.l.b16 %v2277
        %v2613 = vunpack.c.l.b16 %v2291
        %v2614 = vunpack.c.l.b16 %v2301
        %v2615 = vunpack.c.l.b16 %v2315
        %v2616 = vunpack.c.l.b16 %v2325
        %v2617 = vunpack.c.l.b16 %v2339
        %v2618 = vunpack.c.l.b16 %v2349
        %v2619 = vunpack.c.l.b16 %v2363
        %v2620 = vunpack.c.l.b16 %v2373
        %v2621 = vunpack.c.l.b16 %v2387
        %v2622 = vunpack.c.l.b16 %v2397
        %v2623 = vunpack.c.l.b16 %v2411
        %v2624 = vunpack.c.l.b16 %v2421
        %v2625 = vunpack.c.l.b16 %v2435
        %v2626 = vunpack.c.l.b16 %v2445
        %v2627 = vunpack.c.l.b16 %v2459
        %v2628 = vunpack.c.l.b16 %v2469
        %v2629 = vunpack.c.l.b16 %v2483
        %v2630 = vunpack.c.l.b16 %v2493
        %v2631 = vunpack.c.l.b16 %v2507
        %v2632 = vunpack.c.l.b16 %v2517
        %v2633 = vunpack.c.l.b16 %v2531
        %v2634 = vunpack.c.l.b16 %v2541
        %v2635 = vunpack.c.l.b16 %v2555
        %v2636 = vunpack.c.l.b16 %v2565
        %v2637 = vunpack.c.l.b16 %v2579
        %v2638 = vunpack.c.l.b16 %v2589
        %v2639 = vpack.c.b16 %v2608, %v2607
        %v2640 = vpack.c.b16 %v2610, %v2609
        %v2641 = vpack.c.b16 %v2612, %v2611
        %v2642 = vpack.c.b16 %v2614, %v2613
        %v2643 = vpack.c.b16 %v2616, %v2615
        %v2644 = vpack.c.b16 %v2618, %v2617
        %v2645 = vpack.c.b16 %v2620, %v2619
        %v2646 = vpack.c.b16 %v2622, %v2621
        %v2647 = vpack.c.b16 %v2624, %v2623
        %v2648 = vpack.c.b16 %v2626, %v2625
        %v2649 = vpack.c.b16 %v2628, %v2627
        %v2650 = vpack.c.b16 %v2630, %v2629
        %v2651 = vpack.c.b16 %v2632, %v2631
        %v2652 = vpack.c.b16 %v2634, %v2633
        %v2653 = vpack.c.b16 %v2636, %v2635
        %v2654 = vpack.c.b16 %v2638, %v2637
        %v2687 = vunpack.c.l.b16 %v2591
        %v2688 = vunpack.c.l.b16 %v2592
        %v2689 = vunpack.c.l.b16 %v2593
        %v2690 = vunpack.c.l.b16 %v2594
        %v2691 = vunpack.c.l.b16 %v2595
        %v2692 = vunpack.c.l.b16 %v2596
        %v2693 = vunpack.c.l.b16 %v2597
        %v2694 = vunpack.c.l.b16 %v2598
        %v2695 = vunpack.c.l.b16 %v2599
        %v2696 = vunpack.c.l.b16 %v2600
        %v2697 = vunpack.c.l.b16 %v2601
        %v2698 = vunpack.c.l.b16 %v2602
        %v2699 = vunpack.c.l.b16 %v2603
        %v2700 = vunpack.c.l.b16 %v2604
        %v2701 = vunpack.c.l.b16 %v2605
        %v2702 = vunpack.c.l.b16 %v2606
        %v2703 = vpack.c.b16 %v2688, %v2687
        %v2704 = vpack.c.b16 %v2690, %v2689
        %v2705 = vpack.c.b16 %v2692, %v2691
        %v2706 = vpack.c.b16 %v2694, %v2693
        %v2707 = vpack.c.b16 %v2696, %v2695
        %v2708 = vpack.c.b16 %v2698, %v2697
        %v2709 = vpack.c.b16 %v2700, %v2699
        %v2710 = vpack.c.b16 %v2702, %v2701
        %2719 = vmatprep.subr.bf16.mxu0 0
        %2720 = vmatpush1.bf16.msra.mxu0 %v2703
        %2721 = vmatprep.subr.bf16.mxu0 0
        %2722 = vmatpush1.bf16.msra.mxu0 %v2704
        %2723 = vmatprep.subr.bf16.mxu0 0
        %2724 = vmatpush1.bf16.msra.mxu0 %v2705
        %2725 = vmatprep.subr.bf16.mxu0 0
        %2726 = vmatpush1.bf16.msra.mxu0 %v2706
        %2727 = vmatprep.subr.bf16.mxu0 0
        %2728 = vmatpush1.bf16.msra.mxu0 %v2707
        %2729 = vmatprep.subr.bf16.mxu0 0
        %2730 = vmatpush1.bf16.msra.mxu0 %v2708
        %2731 = vmatprep.subr.bf16.mxu0 0
        %2732 = vmatpush1.bf16.msra.mxu0 %v2709
        %2733 = vmatprep.subr.bf16.mxu0 0
        %2734 = vmatpush1.bf16.msra.mxu0 %v2710
        %2735 = vmatprep.subr.bf16.mxu0 0
        %2736 = vmatpush1.bf16.msra.mxu0 0
        %2737 = vmatprep.subr.bf16.mxu0 0
        %2738 = vmatpush1.bf16.msra.mxu0 0
        %2739 = vmatprep.subr.bf16.mxu0 0
        %2740 = vmatpush1.bf16.msra.mxu0 0
        %2741 = vmatprep.subr.bf16.mxu0 0
        %2742 = vmatpush1.bf16.msra.mxu0 0
        %2743 = vmatprep.subr.bf16.mxu0 0
        %2744 = vmatpush1.bf16.msra.mxu0 0
        %2745 = vmatprep.subr.bf16.mxu0 0
        %2746 = vmatpush1.bf16.msra.mxu0 0
        %2747 = vmatprep.subr.bf16.mxu0 0
        %2748 = vmatpush1.bf16.msra.mxu0 0
        %2749 = vmatprep.subr.bf16.mxu0 0
        %2750 = vmatpush1.bf16.msra.mxu0 0
        %2751 = vmatprep.mubr.bf16.mxu0 0
        %2752 = vmatmul.mubr.bf16.gmra.mrb[0].mxu0 %v2639
        %v2753 = vpop.f32.mrb[0].mxu0
        %v2754 = vadd.f32 0.0, %v2753
        %v2755 = vpop.f32.mrb[0].mxu0
        %v2756 = vpop.f32.mrb[0].mxu0
        %v2757 = vadd.f32 0.0, %v2756
        %v2758 = vpop.f32.mrb[0].mxu0
        %2759 = vmatprep.mubr.bf16.mxu0 0
        %2760 = vmatmul.mubr.bf16.gmra.mrb[0].mxu0 %v2640
        %v2761 = vpop.f32.mrb[0].mxu0
        %v2762 = vadd.f32 0.0, %v2761
        %v2763 = vpop.f32.mrb[0].mxu0
        %v2764 = vpop.f32.mrb[0].mxu0
        %v2765 = vadd.f32 0.0, %v2764
        %v2766 = vpop.f32.mrb[0].mxu0
        %2767 = vmatprep.mubr.bf16.mxu0 0
        %2768 = vmatmul.mubr.bf16.gmra.mrb[0].mxu0 %v2641
        %v2769 = vpop.f32.mrb[0].mxu0
        %v2770 = vadd.f32 0.0, %v2769
        %v2771 = vpop.f32.mrb[0].mxu0
        %v2772 = vpop.f32.mrb[0].mxu0
        %v2773 = vadd.f32 0.0, %v2772
        %v2774 = vpop.f32.mrb[0].mxu0
        %2775 = vmatprep.mubr.bf16.mxu0 0
        %2776 = vmatmul.mubr.bf16.gmra.mrb[0].mxu0 %v2642
        %v2777 = vpop.f32.mrb[0].mxu0
        %v2778 = vadd.f32 0.0, %v2777
        %v2779 = vpop.f32.mrb[0].mxu0
        %v2780 = vpop.f32.mrb[0].mxu0
        %v2781 = vadd.f32 0.0, %v2780
        %v2782 = vpop.f32.mrb[0].mxu0
        %2783 = vmatprep.mubr.bf16.mxu0 0
        %2784 = vmatmul.mubr.bf16.gmra.mrb[0].mxu0 %v2643
        %v2785 = vpop.f32.mrb[0].mxu0
        %v2786 = vadd.f32 0.0, %v2785
        %v2787 = vpop.f32.mrb[0].mxu0
        %v2788 = vpop.f32.mrb[0].mxu0
        %v2789 = vadd.f32 0.0, %v2788
        %v2790 = vpop.f32.mrb[0].mxu0
        %2791 = vmatprep.mubr.bf16.mxu0 0
        %2792 = vmatmul.mubr.bf16.gmra.mrb[0].mxu0 %v2644
        %v2793 = vpop.f32.mrb[0].mxu0
        %v2794 = vadd.f32 0.0, %v2793
        %v2795 = vpop.f32.mrb[0].mxu0
        %v2796 = vpop.f32.mrb[0].mxu0
        %v2797 = vadd.f32 0.0, %v2796
        %v2798 = vpop.f32.mrb[0].mxu0
        %2799 = vmatprep.mubr.bf16.mxu0 0
        %2800 = vmatmul.mubr.bf16.gmra.mrb[0].mxu0 %v2645
        %v2801 = vpop.f32.mrb[0].mxu0
        %v2802 = vadd.f32 0.0, %v2801
        %v2803 = vpop.f32.mrb[0].mxu0
        %v2804 = vpop.f32.mrb[0].mxu0
        %v2805 = vadd.f32 0.0, %v2804
        %v2806 = vpop.f32.mrb[0].mxu0
        %2807 = vmatprep.mubr.bf16.mxu0 0
        %2808 = vmatmul.mubr.bf16.gmra.mrb[0].mxu0 %v2646
        %v2809 = vpop.f32.mrb[0].mxu0
        %v2810 = vadd.f32 0.0, %v2809
        %v2811 = vpop.f32.mrb[0].mxu0
        %v2812 = vpop.f32.mrb[0].mxu0
        %v2813 = vadd.f32 0.0, %v2812
        %v2814 = vpop.f32.mrb[0].mxu0
        %2815 = vmatprep.mubr.bf16.mxu0 0
        %2816 = vmatmul.mubr.bf16.gmra.mrb[0].mxu0 %v2647
        %v2817 = vpop.f32.mrb[0].mxu0
        %v2818 = vadd.f32 0.0, %v2817
        %v2819 = vpop.f32.mrb[0].mxu0
        %v2820 = vpop.f32.mrb[0].mxu0
        %v2821 = vadd.f32 0.0, %v2820
        %v2822 = vpop.f32.mrb[0].mxu0
        %2823 = vmatprep.mubr.bf16.mxu0 0
        %2824 = vmatmul.mubr.bf16.gmra.mrb[0].mxu0 %v2648
        %v2825 = vpop.f32.mrb[0].mxu0
        %v2826 = vadd.f32 0.0, %v2825
        %v2827 = vpop.f32.mrb[0].mxu0
        %v2828 = vpop.f32.mrb[0].mxu0
        %v2829 = vadd.f32 0.0, %v2828
        %v2830 = vpop.f32.mrb[0].mxu0
        %2831 = vmatprep.mubr.bf16.mxu0 0
        %2832 = vmatmul.mubr.bf16.gmra.mrb[0].mxu0 %v2649
        %v2833 = vpop.f32.mrb[0].mxu0
        %v2834 = vadd.f32 0.0, %v2833
        %v2835 = vpop.f32.mrb[0].mxu0
        %v2836 = vpop.f32.mrb[0].mxu0
        %v2837 = vadd.f32 0.0, %v2836
        %v2838 = vpop.f32.mrb[0].mxu0
        %2839 = vmatprep.mubr.bf16.mxu0 0
        %2840 = vmatmul.mubr.bf16.gmra.mrb[0].mxu0 %v2650
        %v2841 = vpop.f32.mrb[0].mxu0
        %v2842 = vadd.f32 0.0, %v2841
        %v2843 = vpop.f32.mrb[0].mxu0
        %v2844 = vpop.f32.mrb[0].mxu0
        %v2845 = vadd.f32 0.0, %v2844
        %v2846 = vpop.f32.mrb[0].mxu0
        %2847 = vmatprep.mubr.bf16.mxu0 0
        %2848 = vmatmul.mubr.bf16.gmra.mrb[0].mxu0 %v2651
        %v2849 = vpop.f32.mrb[0].mxu0
        %v2850 = vadd.f32 0.0, %v2849
        %v2851 = vpop.f32.mrb[0].mxu0
        %v2852 = vpop.f32.mrb[0].mxu0
        %v2853 = vadd.f32 0.0, %v2852
        %v2854 = vpop.f32.mrb[0].mxu0
        %2855 = vmatprep.mubr.bf16.mxu0 0
        %2856 = vmatmul.mubr.bf16.gmra.mrb[0].mxu0 %v2652
        %v2857 = vpop.f32.mrb[0].mxu0
        %v2858 = vadd.f32 0.0, %v2857
        %v2859 = vpop.f32.mrb[0].mxu0
        %v2860 = vpop.f32.mrb[0].mxu0
        %v2861 = vadd.f32 0.0, %v2860
        %v2862 = vpop.f32.mrb[0].mxu0
        %2863 = vmatprep.mubr.bf16.mxu0 0
        %2864 = vmatmul.mubr.bf16.gmra.mrb[0].mxu0 %v2653
        %v2865 = vpop.f32.mrb[0].mxu0
        %v2866 = vadd.f32 0.0, %v2865
        %v2867 = vpop.f32.mrb[0].mxu0
        %v2868 = vpop.f32.mrb[0].mxu0
        %v2869 = vadd.f32 0.0, %v2868
        %v2870 = vpop.f32.mrb[0].mxu0
        %2871 = vmatprep.mubr.bf16.mxu0 0
        %2872 = vmatmul.mubr.bf16.gmra.mrb[0].mxu0 %v2654
        %v2873 = vpop.f32.mrb[0].mxu0
        %v2874 = vadd.f32 0.0, %v2873
        %v2875 = vpop.f32.mrb[0].mxu0
        %v2876 = vpop.f32.mrb[0].mxu0
        %v2877 = vadd.f32 0.0, %v2876
        %v2878 = vpop.f32.mrb[0].mxu0
        %2879 = vdwg.mxu0
        %v2880 = vadd.f32 %v2126, %v2754
        %v2881 = vadd.f32 %v2127, %v2757
        %v2882 = vadd.f32 %v2128, %v2762
        %v2883 = vadd.f32 %v2129, %v2765
        %v2884 = vadd.f32 %v2130, %v2770
        %v2885 = vadd.f32 %v2131, %v2773
        %v2886 = vadd.f32 %v2132, %v2778
        %v2887 = vadd.f32 %v2133, %v2781
        %v2888 = vadd.f32 %v2134, %v2786
        %v2889 = vadd.f32 %v2135, %v2789
        %v2890 = vadd.f32 %v2136, %v2794
        %v2891 = vadd.f32 %v2137, %v2797
        %v2892 = vadd.f32 %v2138, %v2802
        %v2893 = vadd.f32 %v2139, %v2805
        %v2894 = vadd.f32 %v2140, %v2810
        %v2895 = vadd.f32 %v2141, %v2813
        %v2896 = vadd.f32 %v2142, %v2818
        %v2897 = vadd.f32 %v2143, %v2821
        %v2898 = vadd.f32 %v2144, %v2826
        %v2899 = vadd.f32 %v2145, %v2829
        %v2900 = vadd.f32 %v2146, %v2834
        %v2901 = vadd.f32 %v2147, %v2837
        %v2902 = vadd.f32 %v2148, %v2842
        %v2903 = vadd.f32 %v2149, %v2845
        %v2904 = vadd.f32 %v2150, %v2850
        %v2905 = vadd.f32 %v2151, %v2853
        %v2906 = vadd.f32 %v2152, %v2858
        %v2907 = vadd.f32 %v2153, %v2861
        %v2908 = vadd.f32 %v2154, %v2866
        %v2909 = vadd.f32 %v2155, %v2869
        %v2910 = vadd.f32 %v2156, %v2874
        %v2911 = vadd.f32 %v2157, %v2877
        %v2912 = vld [vmem:[%s1771] sm:$0xe]
        %v2913 = vld [vmem:[%s1771 + $0x10] sm:$0xe]
        %v2914 = vld [vmem:[%s1771 + $0x20] sm:$0xe]
        %v2915 = vld [vmem:[%s1771 + $0x30] sm:$0xe]
        %v2916 = vld [vmem:[%s1771 + $0x40] sm:$0xe]
        %v2917 = vld [vmem:[%s1771 + $0x50] sm:$0xe]
        %v2918 = vld [vmem:[%s1771 + $0x60] sm:$0xe]
        %v2919 = vld [vmem:[%s1771 + $0x70] sm:$0xe]
        %v2920 = vld [vmem:[%s1771 + $0x80] sm:$0xe]
        %v2921 = vld [vmem:[%s1771 + $0x90] sm:$0xe]
        %v2922 = vld [vmem:[%s1771 + $0xa0] sm:$0xe]
        %v2923 = vld [vmem:[%s1771 + $0xb0] sm:$0xe]
        %v2924 = vld [vmem:[%s1771 + $0xc0] sm:$0xe]
        %v2925 = vld [vmem:[%s1771 + $0xd0] sm:$0xe]
        %v2926 = vld [vmem:[%s1771 + $0xe0] sm:$0xe]
        %v2927 = vld [vmem:[%s1771 + $0xf0] sm:$0xe]
        %v2976 = vrot.slane %v2912, 5
        %v2977 = vrot.slane %v2976, 4
        %v2978 = vrot.slane %v2159, 5
        %v2979 = vsel %vm1336, %v2977, %v2978
        %v2980 = vrot.slane %v2978, 4
        %v2981 = vrot.slane %v2160, 5
        %v2982 = vsel %vm1336, %v2980, %v2981
        %v2983 = vrot.slane %v2913, 5
        %v2984 = vrot.slane %v2983, 4
        %v2985 = vrot.slane %v2162, 5
        %v2986 = vsel %vm1336, %v2984, %v2985
        %v2987 = vrot.slane %v2985, 4
        %v2988 = vrot.slane %v2163, 5
        %v2989 = vsel %vm1336, %v2987, %v2988
        %v2990 = vrot.slane %v2914, 5
        %v2991 = vrot.slane %v2990, 4
        %v2992 = vrot.slane %v2165, 5
        %v2993 = vsel %vm1336, %v2991, %v2992
        %v2994 = vrot.slane %v2992, 4
        %v2995 = vrot.slane %v2166, 5
        %v2996 = vsel %vm1336, %v2994, %v2995
        %v2997 = vrot.slane %v2915, 5
        %v2998 = vrot.slane %v2997, 4
        %v2999 = vrot.slane %v2168, 5
        %v3000 = vsel %vm1336, %v2998, %v2999
        %v3001 = vrot.slane %v2999, 4
        %v3002 = vrot.slane %v2169, 5
        %v3003 = vsel %vm1336, %v3001, %v3002
        %v3004 = vrot.slane %v2916, 5
        %v3005 = vrot.slane %v3004, 4
        %v3006 = vrot.slane %v2171, 5
        %v3007 = vsel %vm1336, %v3005, %v3006
        %v3008 = vrot.slane %v3006, 4
        %v3009 = vrot.slane %v2172, 5
        %v3010 = vsel %vm1336, %v3008, %v3009
        %v3011 = vrot.slane %v2917, 5
        %v3012 = vrot.slane %v3011, 4
        %v3013 = vrot.slane %v2174, 5
        %v3014 = vsel %vm1336, %v3012, %v3013
        %v3015 = vrot.slane %v3013, 4
        %v3016 = vrot.slane %v2175, 5
        %v3017 = vsel %vm1336, %v3015, %v3016
        %v3018 = vrot.slane %v2918, 5
        %v3019 = vrot.slane %v3018, 4
        %v3020 = vrot.slane %v2177, 5
        %v3021 = vsel %vm1336, %v3019, %v3020
        %v3022 = vrot.slane %v3020, 4
        %v3023 = vrot.slane %v2178, 5
        %v3024 = vsel %vm1336, %v3022, %v3023
        %v3025 = vrot.slane %v2919, 5
        %v3026 = vrot.slane %v3025, 4
        %v3027 = vrot.slane %v2180, 5
        %v3028 = vsel %vm1336, %v3026, %v3027
        %v3029 = vrot.slane %v3027, 4
        %v3030 = vrot.slane %v2181, 5
        %v3031 = vsel %vm1336, %v3029, %v3030
        %v3032 = vrot.slane %v2920, 5
        %v3033 = vrot.slane %v3032, 4
        %v3034 = vrot.slane %v2183, 5
        %v3035 = vsel %vm1336, %v3033, %v3034
        %v3036 = vrot.slane %v3034, 4
        %v3037 = vrot.slane %v2184, 5
        %v3038 = vsel %vm1336, %v3036, %v3037
        %v3039 = vrot.slane %v2921, 5
        %v3040 = vrot.slane %v3039, 4
        %v3041 = vrot.slane %v2186, 5
        %v3042 = vsel %vm1336, %v3040, %v3041
        %v3043 = vrot.slane %v3041, 4
        %v3044 = vrot.slane %v2187, 5
        %v3045 = vsel %vm1336, %v3043, %v3044
        %v3046 = vrot.slane %v2922, 5
        %v3047 = vrot.slane %v3046, 4
        %v3048 = vrot.slane %v2189, 5
        %v3049 = vsel %vm1336, %v3047, %v3048
        %v3050 = vrot.slane %v3048, 4
        %v3051 = vrot.slane %v2190, 5
        %v3052 = vsel %vm1336, %v3050, %v3051
        %v3053 = vrot.slane %v2923, 5
        %v3054 = vrot.slane %v3053, 4
        %v3055 = vrot.slane %v2192, 5
        %v3056 = vsel %vm1336, %v3054, %v3055
        %v3057 = vrot.slane %v3055, 4
        %v3058 = vrot.slane %v2193, 5
        %v3059 = vsel %vm1336, %v3057, %v3058
        %v3060 = vrot.slane %v2924, 5
        %v3061 = vrot.slane %v3060, 4
        %v3062 = vrot.slane %v2195, 5
        %v3063 = vsel %vm1336, %v3061, %v3062
        %v3064 = vrot.slane %v3062, 4
        %v3065 = vrot.slane %v2196, 5
        %v3066 = vsel %vm1336, %v3064, %v3065
        %v3067 = vrot.slane %v2925, 5
        %v3068 = vrot.slane %v3067, 4
        %v3069 = vrot.slane %v2198, 5
        %v3070 = vsel %vm1336, %v3068, %v3069
        %v3071 = vrot.slane %v3069, 4
        %v3072 = vrot.slane %v2199, 5
        %v3073 = vsel %vm1336, %v3071, %v3072
        %v3074 = vrot.slane %v2926, 5
        %v3075 = vrot.slane %v3074, 4
        %v3076 = vrot.slane %v2201, 5
        %v3077 = vsel %vm1336, %v3075, %v3076
        %v3078 = vrot.slane %v3076, 4
        %v3079 = vrot.slane %v2202, 5
        %v3080 = vsel %vm1336, %v3078, %v3079
        %v3081 = vrot.slane %v2927, 5
        %v3082 = vrot.slane %v3081, 4
        %v3083 = vrot.slane %v2204, 5
        %v3084 = vsel %vm1336, %v3082, %v3083
        %v3085 = vrot.slane %v3083, 4
        %v3086 = vrot.slane %v2205, 5
        %v3087 = vsel %vm1336, %v3085, %v3086
        %s3088 = scalar_lea.vmem [#allocation5], 320
        %v3089 = vld [vmem:[%s3088] sm:$0xf]
        %v3090 = vld [vmem:[%s3088 + $0x4] sm:$0xf]
        %v3091 = vld [vmem:[%s3088 + $0x8] sm:$0xf]
        %v3092 = vld [vmem:[%s3088 + $0xc] sm:$0xf]
        %v3093 = vld [vmem:[%s3088 + $0x10] sm:$0xf]
        %v3094 = vld [vmem:[%s3088 + $0x14] sm:$0xf]
        %v3095 = vld [vmem:[%s3088 + $0x18] sm:$0xf]
        %v3096 = vld [vmem:[%s3088 + $0x1c] sm:$0xf]
        %v3097 = vld [vmem:[%s3088 + $0x20] sm:$0xf]
        %v3098 = vld [vmem:[%s3088 + $0x24] sm:$0xf]
        %v3099 = vld [vmem:[%s3088 + $0x28] sm:$0xf]
        %v3100 = vld [vmem:[%s3088 + $0x2c] sm:$0xf]
        %v3101 = vld [vmem:[%s3088 + $0x30] sm:$0xf]
        %v3102 = vld [vmem:[%s3088 + $0x34] sm:$0xf]
        %v3103 = vld [vmem:[%s3088 + $0x38] sm:$0xf]
        %v3104 = vld [vmem:[%s3088 + $0x3c] sm:$0xf]
        %v3105 = vunpack.c.l.b16 %v2979
        %v3106 = vunpack.c.l.b16 %v2982
        %v3107 = vunpack.c.l.b16 %v2986
        %v3108 = vunpack.c.l.b16 %v2989
        %v3109 = vunpack.c.l.b16 %v2993
        %v3110 = vunpack.c.l.b16 %v2996
        %v3111 = vunpack.c.l.b16 %v3000
        %v3112 = vunpack.c.l.b16 %v3003
        %v3113 = vunpack.c.l.b16 %v3007
        %v3114 = vunpack.c.l.b16 %v3010
        %v3115 = vunpack.c.l.b16 %v3014
        %v3116 = vunpack.c.l.b16 %v3017
        %v3117 = vunpack.c.l.b16 %v3021
        %v3118 = vunpack.c.l.b16 %v3024
        %v3119 = vunpack.c.l.b16 %v3028
        %v3120 = vunpack.c.l.b16 %v3031
        %v3121 = vunpack.c.l.b16 %v3035
        %v3122 = vunpack.c.l.b16 %v3038
        %v3123 = vunpack.c.l.b16 %v3042
        %v3124 = vunpack.c.l.b16 %v3045
        %v3125 = vunpack.c.l.b16 %v3049
        %v3126 = vunpack.c.l.b16 %v3052
        %v3127 = vunpack.c.l.b16 %v3056
        %v3128 = vunpack.c.l.b16 %v3059
        %v3129 = vunpack.c.l.b16 %v3063
        %v3130 = vunpack.c.l.b16 %v3066
        %v3131 = vunpack.c.l.b16 %v3070
        %v3132 = vunpack.c.l.b16 %v3073
        %v3133 = vunpack.c.l.b16 %v3077
        %v3134 = vunpack.c.l.b16 %v3080
        %v3135 = vunpack.c.l.b16 %v3084
        %v3136 = vunpack.c.l.b16 %v3087
        %v3137 = vpack.c.b16 %v3106, %v3105
        %v3138 = vpack.c.b16 %v3108, %v3107
        %v3139 = vpack.c.b16 %v3110, %v3109
        %v3140 = vpack.c.b16 %v3112, %v3111
        %v3141 = vpack.c.b16 %v3114, %v3113
        %v3142 = vpack.c.b16 %v3116, %v3115
        %v3143 = vpack.c.b16 %v3118, %v3117
        %v3144 = vpack.c.b16 %v3120, %v3119
        %v3145 = vpack.c.b16 %v3122, %v3121
        %v3146 = vpack.c.b16 %v3124, %v3123
        %v3147 = vpack.c.b16 %v3126, %v3125
        %v3148 = vpack.c.b16 %v3128, %v3127
        %v3149 = vpack.c.b16 %v3130, %v3129
        %v3150 = vpack.c.b16 %v3132, %v3131
        %v3151 = vpack.c.b16 %v3134, %v3133
        %v3152 = vpack.c.b16 %v3136, %v3135
        %v3185 = vunpack.c.l.b16 %v3089
        %v3186 = vunpack.c.l.b16 %v3090
        %v3187 = vunpack.c.l.b16 %v3091
        %v3188 = vunpack.c.l.b16 %v3092
        %v3189 = vunpack.c.l.b16 %v3093
        %v3190 = vunpack.c.l.b16 %v3094
        %v3191 = vunpack.c.l.b16 %v3095
        %v3192 = vunpack.c.l.b16 %v3096
        %v3193 = vunpack.c.l.b16 %v3097
        %v3194 = vunpack.c.l.b16 %v3098
        %v3195 = vunpack.c.l.b16 %v3099
        %v3196 = vunpack.c.l.b16 %v3100
        %v3197 = vunpack.c.l.b16 %v3101
        %v3198 = vunpack.c.l.b16 %v3102
        %v3199 = vunpack.c.l.b16 %v3103
        %v3200 = vunpack.c.l.b16 %v3104
        %v3201 = vpack.c.b16 %v3186, %v3185
        %v3202 = vpack.c.b16 %v3188, %v3187
        %v3203 = vpack.c.b16 %v3190, %v3189
        %v3204 = vpack.c.b16 %v3192, %v3191
        %v3205 = vpack.c.b16 %v3194, %v3193
        %v3206 = vpack.c.b16 %v3196, %v3195
        %v3207 = vpack.c.b16 %v3198, %v3197
        %v3208 = vpack.c.b16 %v3200, %v3199
        %3217 = vmatprep.subr.bf16.mxu0 0
        %3218 = vmatpush1.bf16.msra.mxu0 %v3201
        %3219 = vmatprep.subr.bf16.mxu0 0
        %3220 = vmatpush1.bf16.msra.mxu0 %v3202
        %3221 = vmatprep.subr.bf16.mxu0 0
        %3222 = vmatpush1.bf16.msra.mxu0 %v3203
        %3223 = vmatprep.subr.bf16.mxu0 0
        %3224 = vmatpush1.bf16.msra.mxu0 %v3204
        %3225 = vmatprep.subr.bf16.mxu0 0
        %3226 = vmatpush1.bf16.msra.mxu0 %v3205
        %3227 = vmatprep.subr.bf16.mxu0 0
        %3228 = vmatpush1.bf16.msra.mxu0 %v3206
        %3229 = vmatprep.subr.bf16.mxu0 0
        %3230 = vmatpush1.bf16.msra.mxu0 %v3207
        %3231 = vmatprep.subr.bf16.mxu0 0
        %3232 = vmatpush1.bf16.msra.mxu0 %v3208
        %3233 = vmatprep.subr.bf16.mxu0 0
        %3234 = vmatpush1.bf16.msra.mxu0 0
        %3235 = vmatprep.subr.bf16.mxu0 0
        %3236 = vmatpush1.bf16.msra.mxu0 0
        %3237 = vmatprep.subr.bf16.mxu0 0
        %3238 = vmatpush1.bf16.msra.mxu0 0
        %3239 = vmatprep.subr.bf16.mxu0 0
        %3240 = vmatpush1.bf16.msra.mxu0 0
        %3241 = vmatprep.subr.bf16.mxu0 0
        %3242 = vmatpush1.bf16.msra.mxu0 0
        %3243 = vmatprep.subr.bf16.mxu0 0
        %3244 = vmatpush1.bf16.msra.mxu0 0
        %3245 = vmatprep.subr.bf16.mxu0 0
        %3246 = vmatpush1.bf16.msra.mxu0 0
        %3247 = vmatprep.subr.bf16.mxu0 0
        %3248 = vmatpush1.bf16.msra.mxu0 0
        %3249 = vmatprep.mubr.bf16.mxu0 0
        %3250 = vmatmul.mubr.bf16.gmra.mrb[0].mxu0 %v3137
        %v3251 = vpop.f32.mrb[0].mxu0
        %v3252 = vadd.f32 0.0, %v3251
        %v3253 = vpop.f32.mrb[0].mxu0
        %v3254 = vpop.f32.mrb[0].mxu0
        %v3255 = vadd.f32 0.0, %v3254
        %v3256 = vpop.f32.mrb[0].mxu0
        %3257 = vmatprep.mubr.bf16.mxu0 0
        %3258 = vmatmul.mubr.bf16.gmra.mrb[0].mxu0 %v3138
        %v3259 = vpop.f32.mrb[0].mxu0
        %v3260 = vadd.f32 0.0, %v3259
        %v3261 = vpop.f32.mrb[0].mxu0
        %v3262 = vpop.f32.mrb[0].mxu0
        %v3263 = vadd.f32 0.0, %v3262
        %v3264 = vpop.f32.mrb[0].mxu0
        %3265 = vmatprep.mubr.bf16.mxu0 0
        %3266 = vmatmul.mubr.bf16.gmra.mrb[0].mxu0 %v3139
        %v3267 = vpop.f32.mrb[0].mxu0
        %v3268 = vadd.f32 0.0, %v3267
        %v3269 = vpop.f32.mrb[0].mxu0
        %v3270 = vpop.f32.mrb[0].mxu0
        %v3271 = vadd.f32 0.0, %v3270
        %v3272 = vpop.f32.mrb[0].mxu0
        %3273 = vmatprep.mubr.bf16.mxu0 0
        %3274 = vmatmul.mubr.bf16.gmra.mrb[0].mxu0 %v3140
        %v3275 = vpop.f32.mrb[0].mxu0
        %v3276 = vadd.f32 0.0, %v3275
        %v3277 = vpop.f32.mrb[0].mxu0
        %v3278 = vpop.f32.mrb[0].mxu0
        %v3279 = vadd.f32 0.0, %v3278
        %v3280 = vpop.f32.mrb[0].mxu0
        %3281 = vmatprep.mubr.bf16.mxu0 0
        %3282 = vmatmul.mubr.bf16.gmra.mrb[0].mxu0 %v3141
        %v3283 = vpop.f32.mrb[0].mxu0
        %v3284 = vadd.f32 0.0, %v3283
        %v3285 = vpop.f32.mrb[0].mxu0
        %v3286 = vpop.f32.mrb[0].mxu0
        %v3287 = vadd.f32 0.0, %v3286
        %v3288 = vpop.f32.mrb[0].mxu0
        %3289 = vmatprep.mubr.bf16.mxu0 0
        %3290 = vmatmul.mubr.bf16.gmra.mrb[0].mxu0 %v3142
        %v3291 = vpop.f32.mrb[0].mxu0
        %v3292 = vadd.f32 0.0, %v3291
        %v3293 = vpop.f32.mrb[0].mxu0
        %v3294 = vpop.f32.mrb[0].mxu0
        %v3295 = vadd.f32 0.0, %v3294
        %v3296 = vpop.f32.mrb[0].mxu0
        %3297 = vmatprep.mubr.bf16.mxu0 0
        %3298 = vmatmul.mubr.bf16.gmra.mrb[0].mxu0 %v3143
        %v3299 = vpop.f32.mrb[0].mxu0
        %v3300 = vadd.f32 0.0, %v3299
        %v3301 = vpop.f32.mrb[0].mxu0
        %v3302 = vpop.f32.mrb[0].mxu0
        %v3303 = vadd.f32 0.0, %v3302
        %v3304 = vpop.f32.mrb[0].mxu0
        %3305 = vmatprep.mubr.bf16.mxu0 0
        %3306 = vmatmul.mubr.bf16.gmra.mrb[0].mxu0 %v3144
        %v3307 = vpop.f32.mrb[0].mxu0
        %v3308 = vadd.f32 0.0, %v3307
        %v3309 = vpop.f32.mrb[0].mxu0
        %v3310 = vpop.f32.mrb[0].mxu0
        %v3311 = vadd.f32 0.0, %v3310
        %v3312 = vpop.f32.mrb[0].mxu0
        %3313 = vmatprep.mubr.bf16.mxu0 0
        %3314 = vmatmul.mubr.bf16.gmra.mrb[0].mxu0 %v3145
        %v3315 = vpop.f32.mrb[0].mxu0
        %v3316 = vadd.f32 0.0, %v3315
        %v3317 = vpop.f32.mrb[0].mxu0
        %v3318 = vpop.f32.mrb[0].mxu0
        %v3319 = vadd.f32 0.0, %v3318
        %v3320 = vpop.f32.mrb[0].mxu0
        %3321 = vmatprep.mubr.bf16.mxu0 0
        %3322 = vmatmul.mubr.bf16.gmra.mrb[0].mxu0 %v3146
        %v3323 = vpop.f32.mrb[0].mxu0
        %v3324 = vadd.f32 0.0, %v3323
        %v3325 = vpop.f32.mrb[0].mxu0
        %v3326 = vpop.f32.mrb[0].mxu0
        %v3327 = vadd.f32 0.0, %v3326
        %v3328 = vpop.f32.mrb[0].mxu0
        %3329 = vmatprep.mubr.bf16.mxu0 0
        %3330 = vmatmul.mubr.bf16.gmra.mrb[0].mxu0 %v3147
        %v3331 = vpop.f32.mrb[0].mxu0
        %v3332 = vadd.f32 0.0, %v3331
        %v3333 = vpop.f32.mrb[0].mxu0
        %v3334 = vpop.f32.mrb[0].mxu0
        %v3335 = vadd.f32 0.0, %v3334
        %v3336 = vpop.f32.mrb[0].mxu0
        %3337 = vmatprep.mubr.bf16.mxu0 0
        %3338 = vmatmul.mubr.bf16.gmra.mrb[0].mxu0 %v3148
        %v3339 = vpop.f32.mrb[0].mxu0
        %v3340 = vadd.f32 0.0, %v3339
        %v3341 = vpop.f32.mrb[0].mxu0
        %v3342 = vpop.f32.mrb[0].mxu0
        %v3343 = vadd.f32 0.0, %v3342
        %v3344 = vpop.f32.mrb[0].mxu0
        %3345 = vmatprep.mubr.bf16.mxu0 0
        %3346 = vmatmul.mubr.bf16.gmra.mrb[0].mxu0 %v3149
        %v3347 = vpop.f32.mrb[0].mxu0
        %v3348 = vadd.f32 0.0, %v3347
        %v3349 = vpop.f32.mrb[0].mxu0
        %v3350 = vpop.f32.mrb[0].mxu0
        %v3351 = vadd.f32 0.0, %v3350
        %v3352 = vpop.f32.mrb[0].mxu0
        %3353 = vmatprep.mubr.bf16.mxu0 0
        %3354 = vmatmul.mubr.bf16.gmra.mrb[0].mxu0 %v3150
        %v3355 = vpop.f32.mrb[0].mxu0
        %v3356 = vadd.f32 0.0, %v3355
        %v3357 = vpop.f32.mrb[0].mxu0
        %v3358 = vpop.f32.mrb[0].mxu0
        %v3359 = vadd.f32 0.0, %v3358
        %v3360 = vpop.f32.mrb[0].mxu0
        %3361 = vmatprep.mubr.bf16.mxu0 0
        %3362 = vmatmul.mubr.bf16.gmra.mrb[0].mxu0 %v3151
        %v3363 = vpop.f32.mrb[0].mxu0
        %v3364 = vadd.f32 0.0, %v3363
        %v3365 = vpop.f32.mrb[0].mxu0
        %v3366 = vpop.f32.mrb[0].mxu0
        %v3367 = vadd.f32 0.0, %v3366
        %v3368 = vpop.f32.mrb[0].mxu0
        %3369 = vmatprep.mubr.bf16.mxu0 0
        %3370 = vmatmul.mubr.bf16.gmra.mrb[0].mxu0 %v3152
        %v3371 = vpop.f32.mrb[0].mxu0
        %v3372 = vadd.f32 0.0, %v3371
        %v3373 = vpop.f32.mrb[0].mxu0
        %v3374 = vpop.f32.mrb[0].mxu0
        %v3375 = vadd.f32 0.0, %v3374
        %v3376 = vpop.f32.mrb[0].mxu0
        %3377 = vdwg.mxu0
        %v3378 = vadd.f32 %v2880, %v3252
        %v3379 = vadd.f32 %v2881, %v3255
        %v3380 = vadd.f32 %v2882, %v3260
        %v3381 = vadd.f32 %v2883, %v3263
        %v3382 = vadd.f32 %v2884, %v3268
        %v3383 = vadd.f32 %v2885, %v3271
        %v3384 = vadd.f32 %v2886, %v3276
        %v3385 = vadd.f32 %v2887, %v3279
        %v3386 = vadd.f32 %v2888, %v3284
        %v3387 = vadd.f32 %v2889, %v3287
        %v3388 = vadd.f32 %v2890, %v3292
        %v3389 = vadd.f32 %v2891, %v3295
        %v3390 = vadd.f32 %v2892, %v3300
        %v3391 = vadd.f32 %v2893, %v3303
        %v3392 = vadd.f32 %v2894, %v3308
        %v3393 = vadd.f32 %v2895, %v3311
        %v3394 = vadd.f32 %v2896, %v3316
        %v3395 = vadd.f32 %v2897, %v3319
        %v3396 = vadd.f32 %v2898, %v3324
        %v3397 = vadd.f32 %v2899, %v3327
        %v3398 = vadd.f32 %v2900, %v3332
        %v3399 = vadd.f32 %v2901, %v3335
        %v3400 = vadd.f32 %v2902, %v3340
        %v3401 = vadd.f32 %v2903, %v3343
        %v3402 = vadd.f32 %v2904, %v3348
        %v3403 = vadd.f32 %v2905, %v3351
        %v3404 = vadd.f32 %v2906, %v3356
        %v3405 = vadd.f32 %v2907, %v3359
        %v3406 = vadd.f32 %v2908, %v3364
        %v3407 = vadd.f32 %v2909, %v3367
        %v3408 = vadd.f32 %v2910, %v3372
        %v3409 = vadd.f32 %v2911, %v3375
        %s3410 = scalar_lea.vmem %s206, 32 [#allocation2]
        %v3411 = vld [vmem:[%s3410] sm:$0xf]
        %v3412 = vld [vmem:[%s3410 + $0x4] sm:$0xf]
        %v3413 = vld [vmem:[%s3410 + $0x10] sm:$0xf]
        %v3414 = vld [vmem:[%s3410 + $0x14] sm:$0xf]
        %v3415 = vld [vmem:[%s3410 + $0x20] sm:$0xf]
        %v3416 = vld [vmem:[%s3410 + $0x24] sm:$0xf]
        %v3417 = vld [vmem:[%s3410 + $0x30] sm:$0xf]
        %v3418 = vld [vmem:[%s3410 + $0x34] sm:$0xf]
        %v3419 = vld [vmem:[%s3410 + $0x40] sm:$0xf]
        %v3420 = vld [vmem:[%s3410 + $0x44] sm:$0xf]
        %v3421 = vld [vmem:[%s3410 + $0x50] sm:$0xf]
        %v3422 = vld [vmem:[%s3410 + $0x54] sm:$0xf]
        %v3423 = vld [vmem:[%s3410 + $0x60] sm:$0xf]
        %v3424 = vld [vmem:[%s3410 + $0x64] sm:$0xf]
        %v3425 = vld [vmem:[%s3410 + $0x70] sm:$0xf]
        %v3426 = vld [vmem:[%s3410 + $0x74] sm:$0xf]
        %v3427 = vld [vmem:[%s3410 + $0x80] sm:$0xf]
        %v3428 = vld [vmem:[%s3410 + $0x84] sm:$0xf]
        %v3429 = vld [vmem:[%s3410 + $0x90] sm:$0xf]
        %v3430 = vld [vmem:[%s3410 + $0x94] sm:$0xf]
        %v3431 = vld [vmem:[%s3410 + $0xa0] sm:$0xf]
        %v3432 = vld [vmem:[%s3410 + $0xa4] sm:$0xf]
        %v3433 = vld [vmem:[%s3410 + $0xb0] sm:$0xf]
        %v3434 = vld [vmem:[%s3410 + $0xb4] sm:$0xf]
        %v3435 = vld [vmem:[%s3410 + $0xc0] sm:$0xf]
        %v3436 = vld [vmem:[%s3410 + $0xc4] sm:$0xf]
        %v3437 = vld [vmem:[%s3410 + $0xd0] sm:$0xf]
        %v3438 = vld [vmem:[%s3410 + $0xd4] sm:$0xf]
        %v3439 = vld [vmem:[%s3410 + $0xe0] sm:$0xf]
        %v3440 = vld [vmem:[%s3410 + $0xe4] sm:$0xf]
        %v3441 = vld [vmem:[%s3410 + $0xf0] sm:$0xf]
        %v3442 = vld [vmem:[%s3410 + $0xf4] sm:$0xf]
        %s3443 = scalar_lea.vmem [#allocation5], 384
        %v3444 = vld [vmem:[%s3443] sm:$0xf]
        %v3445 = vld [vmem:[%s3443 + $0x4] sm:$0xf]
        %v3446 = vld [vmem:[%s3443 + $0x8] sm:$0xf]
        %v3447 = vld [vmem:[%s3443 + $0xc] sm:$0xf]
        %v3448 = vld [vmem:[%s3443 + $0x10] sm:$0xf]
        %v3449 = vld [vmem:[%s3443 + $0x14] sm:$0xf]
        %v3450 = vld [vmem:[%s3443 + $0x18] sm:$0xf]
        %v3451 = vld [vmem:[%s3443 + $0x1c] sm:$0xf]
        %v3452 = vld [vmem:[%s3443 + $0x20] sm:$0xf]
        %v3453 = vld [vmem:[%s3443 + $0x24] sm:$0xf]
        %v3454 = vld [vmem:[%s3443 + $0x28] sm:$0xf]
        %v3455 = vld [vmem:[%s3443 + $0x2c] sm:$0xf]
        %v3456 = vld [vmem:[%s3443 + $0x30] sm:$0xf]
        %v3457 = vld [vmem:[%s3443 + $0x34] sm:$0xf]
        %v3458 = vld [vmem:[%s3443 + $0x38] sm:$0xf]
        %v3459 = vld [vmem:[%s3443 + $0x3c] sm:$0xf]
        %v3492 = vunpack.c.l.b16 %v3411
        %v3493 = vunpack.c.l.b16 %v3412
        %v3494 = vunpack.c.l.b16 %v3413
        %v3495 = vunpack.c.l.b16 %v3414
        %v3496 = vunpack.c.l.b16 %v3415
        %v3497 = vunpack.c.l.b16 %v3416
        %v3498 = vunpack.c.l.b16 %v3417
        %v3499 = vunpack.c.l.b16 %v3418
        %v3500 = vunpack.c.l.b16 %v3419
        %v3501 = vunpack.c.l.b16 %v3420
        %v3502 = vunpack.c.l.b16 %v3421
        %v3503 = vunpack.c.l.b16 %v3422
        %v3504 = vunpack.c.l.b16 %v3423
        %v3505 = vunpack.c.l.b16 %v3424
        %v3506 = vunpack.c.l.b16 %v3425
        %v3507 = vunpack.c.l.b16 %v3426
        %v3508 = vunpack.c.l.b16 %v3427
        %v3509 = vunpack.c.l.b16 %v3428
        %v3510 = vunpack.c.l.b16 %v3429
        %v3511 = vunpack.c.l.b16 %v3430
        %v3512 = vunpack.c.l.b16 %v3431
        %v3513 = vunpack.c.l.b16 %v3432
        %v3514 = vunpack.c.l.b16 %v3433
        %v3515 = vunpack.c.l.b16 %v3434
        %v3516 = vunpack.c.l.b16 %v3435
        %v3517 = vunpack.c.l.b16 %v3436
        %v3518 = vunpack.c.l.b16 %v3437
        %v3519 = vunpack.c.l.b16 %v3438
        %v3520 = vunpack.c.l.b16 %v3439
        %v3521 = vunpack.c.l.b16 %v3440
        %v3522 = vunpack.c.l.b16 %v3441
        %v3523 = vunpack.c.l.b16 %v3442
        %v3524 = vpack.c.b16 %v3493, %v3492
        %v3525 = vpack.c.b16 %v3495, %v3494
        %v3526 = vpack.c.b16 %v3497, %v3496
        %v3527 = vpack.c.b16 %v3499, %v3498
        %v3528 = vpack.c.b16 %v3501, %v3500
        %v3529 = vpack.c.b16 %v3503, %v3502
        %v3530 = vpack.c.b16 %v3505, %v3504
        %v3531 = vpack.c.b16 %v3507, %v3506
        %v3532 = vpack.c.b16 %v3509, %v3508
        %v3533 = vpack.c.b16 %v3511, %v3510
        %v3534 = vpack.c.b16 %v3513, %v3512
        %v3535 = vpack.c.b16 %v3515, %v3514
        %v3536 = vpack.c.b16 %v3517, %v3516
        %v3537 = vpack.c.b16 %v3519, %v3518
        %v3538 = vpack.c.b16 %v3521, %v3520
        %v3539 = vpack.c.b16 %v3523, %v3522
        %v3572 = vunpack.c.l.b16 %v3444
        %v3573 = vunpack.c.l.b16 %v3445
        %v3574 = vunpack.c.l.b16 %v3446
        %v3575 = vunpack.c.l.b16 %v3447
        %v3576 = vunpack.c.l.b16 %v3448
        %v3577 = vunpack.c.l.b16 %v3449
        %v3578 = vunpack.c.l.b16 %v3450
        %v3579 = vunpack.c.l.b16 %v3451
        %v3580 = vunpack.c.l.b16 %v3452
        %v3581 = vunpack.c.l.b16 %v3453
        %v3582 = vunpack.c.l.b16 %v3454
        %v3583 = vunpack.c.l.b16 %v3455
        %v3584 = vunpack.c.l.b16 %v3456
        %v3585 = vunpack.c.l.b16 %v3457
        %v3586 = vunpack.c.l.b16 %v3458
        %v3587 = vunpack.c.l.b16 %v3459
        %v3588 = vpack.c.b16 %v3573, %v3572
        %v3589 = vpack.c.b16 %v3575, %v3574
        %v3590 = vpack.c.b16 %v3577, %v3576
        %v3591 = vpack.c.b16 %v3579, %v3578
        %v3592 = vpack.c.b16 %v3581, %v3580
        %v3593 = vpack.c.b16 %v3583, %v3582
        %v3594 = vpack.c.b16 %v3585, %v3584
        %v3595 = vpack.c.b16 %v3587, %v3586
        %3604 = vmatprep.subr.bf16.mxu0 0
        %3605 = vmatpush1.bf16.msra.mxu0 %v3588
        %3606 = vmatprep.subr.bf16.mxu0 0
        %3607 = vmatpush1.bf16.msra.mxu0 %v3589
        %3608 = vmatprep.subr.bf16.mxu0 0
        %3609 = vmatpush1.bf16.msra.mxu0 %v3590
        %3610 = vmatprep.subr.bf16.mxu0 0
        %3611 = vmatpush1.bf16.msra.mxu0 %v3591
        %3612 = vmatprep.subr.bf16.mxu0 0
        %3613 = vmatpush1.bf16.msra.mxu0 %v3592
        %3614 = vmatprep.subr.bf16.mxu0 0
        %3615 = vmatpush1.bf16.msra.mxu0 %v3593
        %3616 = vmatprep.subr.bf16.mxu0 0
        %3617 = vmatpush1.bf16.msra.mxu0 %v3594
        %3618 = vmatprep.subr.bf16.mxu0 0
        %3619 = vmatpush1.bf16.msra.mxu0 %v3595
        %3620 = vmatprep.subr.bf16.mxu0 0
        %3621 = vmatpush1.bf16.msra.mxu0 0
        %3622 = vmatprep.subr.bf16.mxu0 0
        %3623 = vmatpush1.bf16.msra.mxu0 0
        %3624 = vmatprep.subr.bf16.mxu0 0
        %3625 = vmatpush1.bf16.msra.mxu0 0
        %3626 = vmatprep.subr.bf16.mxu0 0
        %3627 = vmatpush1.bf16.msra.mxu0 0
        %3628 = vmatprep.subr.bf16.mxu0 0
        %3629 = vmatpush1.bf16.msra.mxu0 0
        %3630 = vmatprep.subr.bf16.mxu0 0
        %3631 = vmatpush1.bf16.msra.mxu0 0
        %3632 = vmatprep.subr.bf16.mxu0 0
        %3633 = vmatpush1.bf16.msra.mxu0 0
        %3634 = vmatprep.subr.bf16.mxu0 0
        %3635 = vmatpush1.bf16.msra.mxu0 0
        %3636 = vmatprep.mubr.bf16.mxu0 0
        %3637 = vmatmul.mubr.bf16.gmra.mrb[0].mxu0 %v3524
        %v3638 = vpop.f32.mrb[0].mxu0
        %v3639 = vadd.f32 0.0, %v3638
        %v3640 = vpop.f32.mrb[0].mxu0
        %v3641 = vpop.f32.mrb[0].mxu0
        %v3642 = vadd.f32 0.0, %v3641
        %v3643 = vpop.f32.mrb[0].mxu0
        %3644 = vmatprep.mubr.bf16.mxu0 0
        %3645 = vmatmul.mubr.bf16.gmra.mrb[0].mxu0 %v3525
        %v3646 = vpop.f32.mrb[0].mxu0
        %v3647 = vadd.f32 0.0, %v3646
        %v3648 = vpop.f32.mrb[0].mxu0
        %v3649 = vpop.f32.mrb[0].mxu0
        %v3650 = vadd.f32 0.0, %v3649
        %v3651 = vpop.f32.mrb[0].mxu0
        %3652 = vmatprep.mubr.bf16.mxu0 0
        %3653 = vmatmul.mubr.bf16.gmra.mrb[0].mxu0 %v3526
        %v3654 = vpop.f32.mrb[0].mxu0
        %v3655 = vadd.f32 0.0, %v3654
        %v3656 = vpop.f32.mrb[0].mxu0
        %v3657 = vpop.f32.mrb[0].mxu0
        %v3658 = vadd.f32 0.0, %v3657
        %v3659 = vpop.f32.mrb[0].mxu0
        %3660 = vmatprep.mubr.bf16.mxu0 0
        %3661 = vmatmul.mubr.bf16.gmra.mrb[0].mxu0 %v3527
        %v3662 = vpop.f32.mrb[0].mxu0
        %v3663 = vadd.f32 0.0, %v3662
        %v3664 = vpop.f32.mrb[0].mxu0
        %v3665 = vpop.f32.mrb[0].mxu0
        %v3666 = vadd.f32 0.0, %v3665
        %v3667 = vpop.f32.mrb[0].mxu0
        %3668 = vmatprep.mubr.bf16.mxu0 0
        %3669 = vmatmul.mubr.bf16.gmra.mrb[0].mxu0 %v3528
        %v3670 = vpop.f32.mrb[0].mxu0
        %v3671 = vadd.f32 0.0, %v3670
        %v3672 = vpop.f32.mrb[0].mxu0
        %v3673 = vpop.f32.mrb[0].mxu0
        %v3674 = vadd.f32 0.0, %v3673
        %v3675 = vpop.f32.mrb[0].mxu0
        %3676 = vmatprep.mubr.bf16.mxu0 0
        %3677 = vmatmul.mubr.bf16.gmra.mrb[0].mxu0 %v3529
        %v3678 = vpop.f32.mrb[0].mxu0
        %v3679 = vadd.f32 0.0, %v3678
        %v3680 = vpop.f32.mrb[0].mxu0
        %v3681 = vpop.f32.mrb[0].mxu0
        %v3682 = vadd.f32 0.0, %v3681
        %v3683 = vpop.f32.mrb[0].mxu0
        %3684 = vmatprep.mubr.bf16.mxu0 0
        %3685 = vmatmul.mubr.bf16.gmra.mrb[0].mxu0 %v3530
        %v3686 = vpop.f32.mrb[0].mxu0
        %v3687 = vadd.f32 0.0, %v3686
        %v3688 = vpop.f32.mrb[0].mxu0
        %v3689 = vpop.f32.mrb[0].mxu0
        %v3690 = vadd.f32 0.0, %v3689
        %v3691 = vpop.f32.mrb[0].mxu0
        %3692 = vmatprep.mubr.bf16.mxu0 0
        %3693 = vmatmul.mubr.bf16.gmra.mrb[0].mxu0 %v3531
        %v3694 = vpop.f32.mrb[0].mxu0
        %v3695 = vadd.f32 0.0, %v3694
        %v3696 = vpop.f32.mrb[0].mxu0
        %v3697 = vpop.f32.mrb[0].mxu0
        %v3698 = vadd.f32 0.0, %v3697
        %v3699 = vpop.f32.mrb[0].mxu0
        %3700 = vmatprep.mubr.bf16.mxu0 0
        %3701 = vmatmul.mubr.bf16.gmra.mrb[0].mxu0 %v3532
        %v3702 = vpop.f32.mrb[0].mxu0
        %v3703 = vadd.f32 0.0, %v3702
        %v3704 = vpop.f32.mrb[0].mxu0
        %v3705 = vpop.f32.mrb[0].mxu0
        %v3706 = vadd.f32 0.0, %v3705
        %v3707 = vpop.f32.mrb[0].mxu0
        %3708 = vmatprep.mubr.bf16.mxu0 0
        %3709 = vmatmul.mubr.bf16.gmra.mrb[0].mxu0 %v3533
        %v3710 = vpop.f32.mrb[0].mxu0
        %v3711 = vadd.f32 0.0, %v3710
        %v3712 = vpop.f32.mrb[0].mxu0
        %v3713 = vpop.f32.mrb[0].mxu0
        %v3714 = vadd.f32 0.0, %v3713
        %v3715 = vpop.f32.mrb[0].mxu0
        %3716 = vmatprep.mubr.bf16.mxu0 0
        %3717 = vmatmul.mubr.bf16.gmra.mrb[0].mxu0 %v3534
        %v3718 = vpop.f32.mrb[0].mxu0
        %v3719 = vadd.f32 0.0, %v3718
        %v3720 = vpop.f32.mrb[0].mxu0
        %v3721 = vpop.f32.mrb[0].mxu0
        %v3722 = vadd.f32 0.0, %v3721
        %v3723 = vpop.f32.mrb[0].mxu0
        %3724 = vmatprep.mubr.bf16.mxu0 0
        %3725 = vmatmul.mubr.bf16.gmra.mrb[0].mxu0 %v3535
        %v3726 = vpop.f32.mrb[0].mxu0
        %v3727 = vadd.f32 0.0, %v3726
        %v3728 = vpop.f32.mrb[0].mxu0
        %v3729 = vpop.f32.mrb[0].mxu0
        %v3730 = vadd.f32 0.0, %v3729
        %v3731 = vpop.f32.mrb[0].mxu0
        %3732 = vmatprep.mubr.bf16.mxu0 0
        %3733 = vmatmul.mubr.bf16.gmra.mrb[0].mxu0 %v3536
        %v3734 = vpop.f32.mrb[0].mxu0
        %v3735 = vadd.f32 0.0, %v3734
        %v3736 = vpop.f32.mrb[0].mxu0
        %v3737 = vpop.f32.mrb[0].mxu0
        %v3738 = vadd.f32 0.0, %v3737
        %v3739 = vpop.f32.mrb[0].mxu0
        %3740 = vmatprep.mubr.bf16.mxu0 0
        %3741 = vmatmul.mubr.bf16.gmra.mrb[0].mxu0 %v3537
        %v3742 = vpop.f32.mrb[0].mxu0
        %v3743 = vadd.f32 0.0, %v3742
        %v3744 = vpop.f32.mrb[0].mxu0
        %v3745 = vpop.f32.mrb[0].mxu0
        %v3746 = vadd.f32 0.0, %v3745
        %v3747 = vpop.f32.mrb[0].mxu0
        %3748 = vmatprep.mubr.bf16.mxu0 0
        %3749 = vmatmul.mubr.bf16.gmra.mrb[0].mxu0 %v3538
        %v3750 = vpop.f32.mrb[0].mxu0
        %v3751 = vadd.f32 0.0, %v3750
        %v3752 = vpop.f32.mrb[0].mxu0
        %v3753 = vpop.f32.mrb[0].mxu0
        %v3754 = vadd.f32 0.0, %v3753
        %v3755 = vpop.f32.mrb[0].mxu0
        %3756 = vmatprep.mubr.bf16.mxu0 0
        %3757 = vmatmul.mubr.bf16.gmra.mrb[0].mxu0 %v3539
        %v3758 = vpop.f32.mrb[0].mxu0
        %v3759 = vadd.f32 0.0, %v3758
        %v3760 = vpop.f32.mrb[0].mxu0
        %v3761 = vpop.f32.mrb[0].mxu0
        %v3762 = vadd.f32 0.0, %v3761
        %v3763 = vpop.f32.mrb[0].mxu0
        %3764 = vdwg.mxu0
        %v3765 = vadd.f32 %v3378, %v3639
        %v3766 = vadd.f32 %v3379, %v3642
        %v3767 = vadd.f32 %v3380, %v3647
        %v3768 = vadd.f32 %v3381, %v3650
        %v3769 = vadd.f32 %v3382, %v3655
        %v3770 = vadd.f32 %v3383, %v3658
        %v3771 = vadd.f32 %v3384, %v3663
        %v3772 = vadd.f32 %v3385, %v3666
        %v3773 = vadd.f32 %v3386, %v3671
        %v3774 = vadd.f32 %v3387, %v3674
        %v3775 = vadd.f32 %v3388, %v3679
        %v3776 = vadd.f32 %v3389, %v3682
        %v3777 = vadd.f32 %v3390, %v3687
        %v3778 = vadd.f32 %v3391, %v3690
        %v3779 = vadd.f32 %v3392, %v3695
        %v3780 = vadd.f32 %v3393, %v3698
        %v3781 = vadd.f32 %v3394, %v3703
        %v3782 = vadd.f32 %v3395, %v3706
        %v3783 = vadd.f32 %v3396, %v3711
        %v3784 = vadd.f32 %v3397, %v3714
        %v3785 = vadd.f32 %v3398, %v3719
        %v3786 = vadd.f32 %v3399, %v3722
        %v3787 = vadd.f32 %v3400, %v3727
        %v3788 = vadd.f32 %v3401, %v3730
        %v3789 = vadd.f32 %v3402, %v3735
        %v3790 = vadd.f32 %v3403, %v3738
        %v3791 = vadd.f32 %v3404, %v3743
        %v3792 = vadd.f32 %v3405, %v3746
        %v3793 = vadd.f32 %v3406, %v3751
        %v3794 = vadd.f32 %v3407, %v3754
        %v3795 = vadd.f32 %v3408, %v3759
        %v3796 = vadd.f32 %v3409, %v3762
        %v3797 = vld [vmem:[%s3410] sm:$0xf]
        %v3798 = vld [vmem:[%s3410 + $0x4] sm:$0xf]
        %v3799 = vld [vmem:[%s3410 + $0x8] sm:$0x1]
        %v3800 = vld [vmem:[%s3410 + $0x10] sm:$0xf]
        %v3801 = vld [vmem:[%s3410 + $0x14] sm:$0xf]
        %v3802 = vld [vmem:[%s3410 + $0x18] sm:$0x1]
        %v3803 = vld [vmem:[%s3410 + $0x20] sm:$0xf]
        %v3804 = vld [vmem:[%s3410 + $0x24] sm:$0xf]
        %v3805 = vld [vmem:[%s3410 + $0x28] sm:$0x1]
        %v3806 = vld [vmem:[%s3410 + $0x30] sm:$0xf]
        %v3807 = vld [vmem:[%s3410 + $0x34] sm:$0xf]
        %v3808 = vld [vmem:[%s3410 + $0x38] sm:$0x1]
        %v3809 = vld [vmem:[%s3410 + $0x40] sm:$0xf]
        %v3810 = vld [vmem:[%s3410 + $0x44] sm:$0xf]
        %v3811 = vld [vmem:[%s3410 + $0x48] sm:$0x1]
        %v3812 = vld [vmem:[%s3410 + $0x50] sm:$0xf]
        %v3813 = vld [vmem:[%s3410 + $0x54] sm:$0xf]
        %v3814 = vld [vmem:[%s3410 + $0x58] sm:$0x1]
        %v3815 = vld [vmem:[%s3410 + $0x60] sm:$0xf]
        %v3816 = vld [vmem:[%s3410 + $0x64] sm:$0xf]
        %v3817 = vld [vmem:[%s3410 + $0x68] sm:$0x1]
        %v3818 = vld [vmem:[%s3410 + $0x70] sm:$0xf]
        %v3819 = vld [vmem:[%s3410 + $0x74] sm:$0xf]
        %v3820 = vld [vmem:[%s3410 + $0x78] sm:$0x1]
        %v3821 = vld [vmem:[%s3410 + $0x80] sm:$0xf]
        %v3822 = vld [vmem:[%s3410 + $0x84] sm:$0xf]
        %v3823 = vld [vmem:[%s3410 + $0x88] sm:$0x1]
        %v3824 = vld [vmem:[%s3410 + $0x90] sm:$0xf]
        %v3825 = vld [vmem:[%s3410 + $0x94] sm:$0xf]
        %v3826 = vld [vmem:[%s3410 + $0x98] sm:$0x1]
        %v3827 = vld [vmem:[%s3410 + $0xa0] sm:$0xf]
        %v3828 = vld [vmem:[%s3410 + $0xa4] sm:$0xf]
        %v3829 = vld [vmem:[%s3410 + $0xa8] sm:$0x1]
        %v3830 = vld [vmem:[%s3410 + $0xb0] sm:$0xf]
        %v3831 = vld [vmem:[%s3410 + $0xb4] sm:$0xf]
        %v3832 = vld [vmem:[%s3410 + $0xb8] sm:$0x1]
        %v3833 = vld [vmem:[%s3410 + $0xc0] sm:$0xf]
        %v3834 = vld [vmem:[%s3410 + $0xc4] sm:$0xf]
        %v3835 = vld [vmem:[%s3410 + $0xc8] sm:$0x1]
        %v3836 = vld [vmem:[%s3410 + $0xd0] sm:$0xf]
        %v3837 = vld [vmem:[%s3410 + $0xd4] sm:$0xf]
        %v3838 = vld [vmem:[%s3410 + $0xd8] sm:$0x1]
        %v3839 = vld [vmem:[%s3410 + $0xe0] sm:$0xf]
        %v3840 = vld [vmem:[%s3410 + $0xe4] sm:$0xf]
        %v3841 = vld [vmem:[%s3410 + $0xe8] sm:$0x1]
        %v3842 = vld [vmem:[%s3410 + $0xf0] sm:$0xf]
        %v3843 = vld [vmem:[%s3410 + $0xf4] sm:$0xf]
        %v3844 = vld [vmem:[%s3410 + $0xf8] sm:$0x1]
        %v3846 = vshrl.u32 %v3797, 16
        %v3848 = vrot.slane %v3846, 4
        %v3849 = vshll.u32 %v3797, 16
        %v3851 = vrot.slane %v3849, 5
        %v3852 = vor.u32 %v3848, %v3851
        %v3853 = vrot.slane %v3852, 4
        %v3855 = vshll.u32 %v3798, 16
        %v3857 = vrot.slane %v3855, 5
        %v3858 = vsel %vm306, %v3853, %v3857
        %v3859 = vshrl.u32 %v3798, 16
        %v3861 = vrot.slane %v3859, 4
        %v3862 = vor.u32 %v3861, %v3857
        %v3863 = vrot.slane %v3862, 4
        %v3865 = vshll.u32 %v3799, 16
        %v3867 = vrot.slane %v3865, 5
        %v3868 = vsel %vm306, %v3863, %v3867
        %v3870 = vshrl.u32 %v3800, 16
        %v3872 = vrot.slane %v3870, 4
        %v3873 = vshll.u32 %v3800, 16
        %v3875 = vrot.slane %v3873, 5
        %v3876 = vor.u32 %v3872, %v3875
        %v3877 = vrot.slane %v3876, 4
        %v3879 = vshll.u32 %v3801, 16
        %v3881 = vrot.slane %v3879, 5
        %v3882 = vsel %vm306, %v3877, %v3881
        %v3883 = vshrl.u32 %v3801, 16
        %v3885 = vrot.slane %v3883, 4
        %v3886 = vor.u32 %v3885, %v3881
        %v3887 = vrot.slane %v3886, 4
        %v3889 = vshll.u32 %v3802, 16
        %v3891 = vrot.slane %v3889, 5
        %v3892 = vsel %vm306, %v3887, %v3891
        %v3894 = vshrl.u32 %v3803, 16
        %v3896 = vrot.slane %v3894, 4
        %v3897 = vshll.u32 %v3803, 16
        %v3899 = vrot.slane %v3897, 5
        %v3900 = vor.u32 %v3896, %v3899
        %v3901 = vrot.slane %v3900, 4
        %v3903 = vshll.u32 %v3804, 16
        %v3905 = vrot.slane %v3903, 5
        %v3906 = vsel %vm306, %v3901, %v3905
        %v3907 = vshrl.u32 %v3804, 16
        %v3909 = vrot.slane %v3907, 4
        %v3910 = vor.u32 %v3909, %v3905
        %v3911 = vrot.slane %v3910, 4
        %v3913 = vshll.u32 %v3805, 16
        %v3915 = vrot.slane %v3913, 5
        %v3916 = vsel %vm306, %v3911, %v3915
        %v3918 = vshrl.u32 %v3806, 16
        %v3920 = vrot.slane %v3918, 4
        %v3921 = vshll.u32 %v3806, 16
        %v3923 = vrot.slane %v3921, 5
        %v3924 = vor.u32 %v3920, %v3923
        %v3925 = vrot.slane %v3924, 4
        %v3927 = vshll.u32 %v3807, 16
        %v3929 = vrot.slane %v3927, 5
        %v3930 = vsel %vm306, %v3925, %v3929
        %v3931 = vshrl.u32 %v3807, 16
        %v3933 = vrot.slane %v3931, 4
        %v3934 = vor.u32 %v3933, %v3929
        %v3935 = vrot.slane %v3934, 4
        %v3937 = vshll.u32 %v3808, 16
        %v3939 = vrot.slane %v3937, 5
        %v3940 = vsel %vm306, %v3935, %v3939
        %v3942 = vshrl.u32 %v3809, 16
        %v3944 = vrot.slane %v3942, 4
        %v3945 = vshll.u32 %v3809, 16
        %v3947 = vrot.slane %v3945, 5
        %v3948 = vor.u32 %v3944, %v3947
        %v3949 = vrot.slane %v3948, 4
        %v3951 = vshll.u32 %v3810, 16
        %v3953 = vrot.slane %v3951, 5
        %v3954 = vsel %vm306, %v3949, %v3953
        %v3955 = vshrl.u32 %v3810, 16
        %v3957 = vrot.slane %v3955, 4
        %v3958 = vor.u32 %v3957, %v3953
        %v3959 = vrot.slane %v3958, 4
        %v3961 = vshll.u32 %v3811, 16
        %v3963 = vrot.slane %v3961, 5
        %v3964 = vsel %vm306, %v3959, %v3963
        %v3966 = vshrl.u32 %v3812, 16
        %v3968 = vrot.slane %v3966, 4
        %v3969 = vshll.u32 %v3812, 16
        %v3971 = vrot.slane %v3969, 5
        %v3972 = vor.u32 %v3968, %v3971
        %v3973 = vrot.slane %v3972, 4
        %v3975 = vshll.u32 %v3813, 16
        %v3977 = vrot.slane %v3975, 5
        %v3978 = vsel %vm306, %v3973, %v3977
        %v3979 = vshrl.u32 %v3813, 16
        %v3981 = vrot.slane %v3979, 4
        %v3982 = vor.u32 %v3981, %v3977
        %v3983 = vrot.slane %v3982, 4
        %v3985 = vshll.u32 %v3814, 16
        %v3987 = vrot.slane %v3985, 5
        %v3988 = vsel %vm306, %v3983, %v3987
        %v3990 = vshrl.u32 %v3815, 16
        %v3992 = vrot.slane %v3990, 4
        %v3993 = vshll.u32 %v3815, 16
        %v3995 = vrot.slane %v3993, 5
        %v3996 = vor.u32 %v3992, %v3995
        %v3997 = vrot.slane %v3996, 4
        %v3999 = vshll.u32 %v3816, 16
        %v4001 = vrot.slane %v3999, 5
        %v4002 = vsel %vm306, %v3997, %v4001
        %v4003 = vshrl.u32 %v3816, 16
        %v4005 = vrot.slane %v4003, 4
        %v4006 = vor.u32 %v4005, %v4001
        %v4007 = vrot.slane %v4006, 4
        %v4009 = vshll.u32 %v3817, 16
        %v4011 = vrot.slane %v4009, 5
        %v4012 = vsel %vm306, %v4007, %v4011
        %v4014 = vshrl.u32 %v3818, 16
        %v4016 = vrot.slane %v4014, 4
        %v4017 = vshll.u32 %v3818, 16
        %v4019 = vrot.slane %v4017, 5
        %v4020 = vor.u32 %v4016, %v4019
        %v4021 = vrot.slane %v4020, 4
        %v4023 = vshll.u32 %v3819, 16
        %v4025 = vrot.slane %v4023, 5
        %v4026 = vsel %vm306, %v4021, %v4025
        %v4027 = vshrl.u32 %v3819, 16
        %v4029 = vrot.slane %v4027, 4
        %v4030 = vor.u32 %v4029, %v4025
        %v4031 = vrot.slane %v4030, 4
        %v4033 = vshll.u32 %v3820, 16
        %v4035 = vrot.slane %v4033, 5
        %v4036 = vsel %vm306, %v4031, %v4035
        %v4038 = vshrl.u32 %v3821, 16
        %v4040 = vrot.slane %v4038, 4
        %v4041 = vshll.u32 %v3821, 16
        %v4043 = vrot.slane %v4041, 5
        %v4044 = vor.u32 %v4040, %v4043
        %v4045 = vrot.slane %v4044, 4
        %v4047 = vshll.u32 %v3822, 16
        %v4049 = vrot.slane %v4047, 5
        %v4050 = vsel %vm306, %v4045, %v4049
        %v4051 = vshrl.u32 %v3822, 16
        %v4053 = vrot.slane %v4051, 4
        %v4054 = vor.u32 %v4053, %v4049
        %v4055 = vrot.slane %v4054, 4
        %v4057 = vshll.u32 %v3823, 16
        %v4059 = vrot.slane %v4057, 5
        %v4060 = vsel %vm306, %v4055, %v4059
        %v4062 = vshrl.u32 %v3824, 16
        %v4064 = vrot.slane %v4062, 4
        %v4065 = vshll.u32 %v3824, 16
        %v4067 = vrot.slane %v4065, 5
        %v4068 = vor.u32 %v4064, %v4067
        %v4069 = vrot.slane %v4068, 4
        %v4071 = vshll.u32 %v3825, 16
        %v4073 = vrot.slane %v4071, 5
        %v4074 = vsel %vm306, %v4069, %v4073
        %v4075 = vshrl.u32 %v3825, 16
        %v4077 = vrot.slane %v4075, 4
        %v4078 = vor.u32 %v4077, %v4073
        %v4079 = vrot.slane %v4078, 4
        %v4081 = vshll.u32 %v3826, 16
        %v4083 = vrot.slane %v4081, 5
        %v4084 = vsel %vm306, %v4079, %v4083
        %v4086 = vshrl.u32 %v3827, 16
        %v4088 = vrot.slane %v4086, 4
        %v4089 = vshll.u32 %v3827, 16
        %v4091 = vrot.slane %v4089, 5
        %v4092 = vor.u32 %v4088, %v4091
        %v4093 = vrot.slane %v4092, 4
        %v4095 = vshll.u32 %v3828, 16
        %v4097 = vrot.slane %v4095, 5
        %v4098 = vsel %vm306, %v4093, %v4097
        %v4099 = vshrl.u32 %v3828, 16
        %v4101 = vrot.slane %v4099, 4
        %v4102 = vor.u32 %v4101, %v4097
        %v4103 = vrot.slane %v4102, 4
        %v4105 = vshll.u32 %v3829, 16
        %v4107 = vrot.slane %v4105, 5
        %v4108 = vsel %vm306, %v4103, %v4107
        %v4110 = vshrl.u32 %v3830, 16
        %v4112 = vrot.slane %v4110, 4
        %v4113 = vshll.u32 %v3830, 16
        %v4115 = vrot.slane %v4113, 5
        %v4116 = vor.u32 %v4112, %v4115
        %v4117 = vrot.slane %v4116, 4
        %v4119 = vshll.u32 %v3831, 16
        %v4121 = vrot.slane %v4119, 5
        %v4122 = vsel %vm306, %v4117, %v4121
        %v4123 = vshrl.u32 %v3831, 16
        %v4125 = vrot.slane %v4123, 4
        %v4126 = vor.u32 %v4125, %v4121
        %v4127 = vrot.slane %v4126, 4
        %v4129 = vshll.u32 %v3832, 16
        %v4131 = vrot.slane %v4129, 5
        %v4132 = vsel %vm306, %v4127, %v4131
        %v4134 = vshrl.u32 %v3833, 16
        %v4136 = vrot.slane %v4134, 4
        %v4137 = vshll.u32 %v3833, 16
        %v4139 = vrot.slane %v4137, 5
        %v4140 = vor.u32 %v4136, %v4139
        %v4141 = vrot.slane %v4140, 4
        %v4143 = vshll.u32 %v3834, 16
        %v4145 = vrot.slane %v4143, 5
        %v4146 = vsel %vm306, %v4141, %v4145
        %v4147 = vshrl.u32 %v3834, 16
        %v4149 = vrot.slane %v4147, 4
        %v4150 = vor.u32 %v4149, %v4145
        %v4151 = vrot.slane %v4150, 4
        %v4153 = vshll.u32 %v3835, 16
        %v4155 = vrot.slane %v4153, 5
        %v4156 = vsel %vm306, %v4151, %v4155
        %v4158 = vshrl.u32 %v3836, 16
        %v4160 = vrot.slane %v4158, 4
        %v4161 = vshll.u32 %v3836, 16
        %v4163 = vrot.slane %v4161, 5
        %v4164 = vor.u32 %v4160, %v4163
        %v4165 = vrot.slane %v4164, 4
        %v4167 = vshll.u32 %v3837, 16
        %v4169 = vrot.slane %v4167, 5
        %v4170 = vsel %vm306, %v4165, %v4169
        %v4171 = vshrl.u32 %v3837, 16
        %v4173 = vrot.slane %v4171, 4
        %v4174 = vor.u32 %v4173, %v4169
        %v4175 = vrot.slane %v4174, 4
        %v4177 = vshll.u32 %v3838, 16
        %v4179 = vrot.slane %v4177, 5
        %v4180 = vsel %vm306, %v4175, %v4179
        %v4182 = vshrl.u32 %v3839, 16
        %v4184 = vrot.slane %v4182, 4
        %v4185 = vshll.u32 %v3839, 16
        %v4187 = vrot.slane %v4185, 5
        %v4188 = vor.u32 %v4184, %v4187
        %v4189 = vrot.slane %v4188, 4
        %v4191 = vshll.u32 %v3840, 16
        %v4193 = vrot.slane %v4191, 5
        %v4194 = vsel %vm306, %v4189, %v4193
        %v4195 = vshrl.u32 %v3840, 16
        %v4197 = vrot.slane %v4195, 4
        %v4198 = vor.u32 %v4197, %v4193
        %v4199 = vrot.slane %v4198, 4
        %v4201 = vshll.u32 %v3841, 16
        %v4203 = vrot.slane %v4201, 5
        %v4204 = vsel %vm306, %v4199, %v4203
        %v4206 = vshrl.u32 %v3842, 16
        %v4208 = vrot.slane %v4206, 4
        %v4209 = vshll.u32 %v3842, 16
        %v4211 = vrot.slane %v4209, 5
        %v4212 = vor.u32 %v4208, %v4211
        %v4213 = vrot.slane %v4212, 4
        %v4215 = vshll.u32 %v3843, 16
        %v4217 = vrot.slane %v4215, 5
        %v4218 = vsel %vm306, %v4213, %v4217
        %v4219 = vshrl.u32 %v3843, 16
        %v4221 = vrot.slane %v4219, 4
        %v4222 = vor.u32 %v4221, %v4217
        %v4223 = vrot.slane %v4222, 4
        %v4225 = vshll.u32 %v3844, 16
        %v4227 = vrot.slane %v4225, 5
        %v4228 = vsel %vm306, %v4223, %v4227
        %s4229 = scalar_lea.vmem [#allocation5], 448
        %v4230 = vld [vmem:[%s4229] sm:$0xf]
        %v4231 = vld [vmem:[%s4229 + $0x4] sm:$0xf]
        %v4232 = vld [vmem:[%s4229 + $0x8] sm:$0xf]
        %v4233 = vld [vmem:[%s4229 + $0xc] sm:$0xf]
        %v4234 = vld [vmem:[%s4229 + $0x10] sm:$0xf]
        %v4235 = vld [vmem:[%s4229 + $0x14] sm:$0xf]
        %v4236 = vld [vmem:[%s4229 + $0x18] sm:$0xf]
        %v4237 = vld [vmem:[%s4229 + $0x1c] sm:$0xf]
        %v4238 = vld [vmem:[%s4229 + $0x20] sm:$0xf]
        %v4239 = vld [vmem:[%s4229 + $0x24] sm:$0xf]
        %v4240 = vld [vmem:[%s4229 + $0x28] sm:$0xf]
        %v4241 = vld [vmem:[%s4229 + $0x2c] sm:$0xf]
        %v4242 = vld [vmem:[%s4229 + $0x30] sm:$0xf]
        %v4243 = vld [vmem:[%s4229 + $0x34] sm:$0xf]
        %v4244 = vld [vmem:[%s4229 + $0x38] sm:$0xf]
        %v4245 = vld [vmem:[%s4229 + $0x3c] sm:$0xf]
        %v4246 = vunpack.c.l.b16 %v3858
        %v4247 = vunpack.c.l.b16 %v3868
        %v4248 = vunpack.c.l.b16 %v3882
        %v4249 = vunpack.c.l.b16 %v3892
        %v4250 = vunpack.c.l.b16 %v3906
        %v4251 = vunpack.c.l.b16 %v3916
        %v4252 = vunpack.c.l.b16 %v3930
        %v4253 = vunpack.c.l.b16 %v3940
        %v4254 = vunpack.c.l.b16 %v3954
        %v4255 = vunpack.c.l.b16 %v3964
        %v4256 = vunpack.c.l.b16 %v3978
        %v4257 = vunpack.c.l.b16 %v3988
        %v4258 = vunpack.c.l.b16 %v4002
        %v4259 = vunpack.c.l.b16 %v4012
        %v4260 = vunpack.c.l.b16 %v4026
        %v4261 = vunpack.c.l.b16 %v4036
        %v4262 = vunpack.c.l.b16 %v4050
        %v4263 = vunpack.c.l.b16 %v4060
        %v4264 = vunpack.c.l.b16 %v4074
        %v4265 = vunpack.c.l.b16 %v4084
        %v4266 = vunpack.c.l.b16 %v4098
        %v4267 = vunpack.c.l.b16 %v4108
        %v4268 = vunpack.c.l.b16 %v4122
        %v4269 = vunpack.c.l.b16 %v4132
        %v4270 = vunpack.c.l.b16 %v4146
        %v4271 = vunpack.c.l.b16 %v4156
        %v4272 = vunpack.c.l.b16 %v4170
        %v4273 = vunpack.c.l.b16 %v4180
        %v4274 = vunpack.c.l.b16 %v4194
        %v4275 = vunpack.c.l.b16 %v4204
        %v4276 = vunpack.c.l.b16 %v4218
        %v4277 = vunpack.c.l.b16 %v4228
        %v4278 = vpack.c.b16 %v4247, %v4246
        %v4279 = vpack.c.b16 %v4249, %v4248
        %v4280 = vpack.c.b16 %v4251, %v4250
        %v4281 = vpack.c.b16 %v4253, %v4252
        %v4282 = vpack.c.b16 %v4255, %v4254
        %v4283 = vpack.c.b16 %v4257, %v4256
        %v4284 = vpack.c.b16 %v4259, %v4258
        %v4285 = vpack.c.b16 %v4261, %v4260
        %v4286 = vpack.c.b16 %v4263, %v4262
        %v4287 = vpack.c.b16 %v4265, %v4264
        %v4288 = vpack.c.b16 %v4267, %v4266
        %v4289 = vpack.c.b16 %v4269, %v4268
        %v4290 = vpack.c.b16 %v4271, %v4270
        %v4291 = vpack.c.b16 %v4273, %v4272
        %v4292 = vpack.c.b16 %v4275, %v4274
        %v4293 = vpack.c.b16 %v4277, %v4276
        %v4326 = vunpack.c.l.b16 %v4230
        %v4327 = vunpack.c.l.b16 %v4231
        %v4328 = vunpack.c.l.b16 %v4232
        %v4329 = vunpack.c.l.b16 %v4233
        %v4330 = vunpack.c.l.b16 %v4234
        %v4331 = vunpack.c.l.b16 %v4235
        %v4332 = vunpack.c.l.b16 %v4236
        %v4333 = vunpack.c.l.b16 %v4237
        %v4334 = vunpack.c.l.b16 %v4238
        %v4335 = vunpack.c.l.b16 %v4239
        %v4336 = vunpack.c.l.b16 %v4240
        %v4337 = vunpack.c.l.b16 %v4241
        %v4338 = vunpack.c.l.b16 %v4242
        %v4339 = vunpack.c.l.b16 %v4243
        %v4340 = vunpack.c.l.b16 %v4244
        %v4341 = vunpack.c.l.b16 %v4245
        %v4342 = vpack.c.b16 %v4327, %v4326
        %v4343 = vpack.c.b16 %v4329, %v4328
        %v4344 = vpack.c.b16 %v4331, %v4330
        %v4345 = vpack.c.b16 %v4333, %v4332
        %v4346 = vpack.c.b16 %v4335, %v4334
        %v4347 = vpack.c.b16 %v4337, %v4336
        %v4348 = vpack.c.b16 %v4339, %v4338
        %v4349 = vpack.c.b16 %v4341, %v4340
        %4358 = vmatprep.subr.bf16.mxu0 0
        %4359 = vmatpush1.bf16.msra.mxu0 %v4342
        %4360 = vmatprep.subr.bf16.mxu0 0
        %4361 = vmatpush1.bf16.msra.mxu0 %v4343
        %4362 = vmatprep.subr.bf16.mxu0 0
        %4363 = vmatpush1.bf16.msra.mxu0 %v4344
        %4364 = vmatprep.subr.bf16.mxu0 0
        %4365 = vmatpush1.bf16.msra.mxu0 %v4345
        %4366 = vmatprep.subr.bf16.mxu0 0
        %4367 = vmatpush1.bf16.msra.mxu0 %v4346
        %4368 = vmatprep.subr.bf16.mxu0 0
        %4369 = vmatpush1.bf16.msra.mxu0 %v4347
        %4370 = vmatprep.subr.bf16.mxu0 0
        %4371 = vmatpush1.bf16.msra.mxu0 %v4348
        %4372 = vmatprep.subr.bf16.mxu0 0
        %4373 = vmatpush1.bf16.msra.mxu0 %v4349
        %4374 = vmatprep.subr.bf16.mxu0 0
        %4375 = vmatpush1.bf16.msra.mxu0 0
        %4376 = vmatprep.subr.bf16.mxu0 0
        %4377 = vmatpush1.bf16.msra.mxu0 0
        %4378 = vmatprep.subr.bf16.mxu0 0
        %4379 = vmatpush1.bf16.msra.mxu0 0
        %4380 = vmatprep.subr.bf16.mxu0 0
        %4381 = vmatpush1.bf16.msra.mxu0 0
        %4382 = vmatprep.subr.bf16.mxu0 0
        %4383 = vmatpush1.bf16.msra.mxu0 0
        %4384 = vmatprep.subr.bf16.mxu0 0
        %4385 = vmatpush1.bf16.msra.mxu0 0
        %4386 = vmatprep.subr.bf16.mxu0 0
        %4387 = vmatpush1.bf16.msra.mxu0 0
        %4388 = vmatprep.subr.bf16.mxu0 0
        %4389 = vmatpush1.bf16.msra.mxu0 0
        %4390 = vmatprep.mubr.bf16.mxu0 0
        %4391 = vmatmul.mubr.bf16.gmra.mrb[0].mxu0 %v4278
        %v4392 = vpop.f32.mrb[0].mxu0
        %v4393 = vadd.f32 0.0, %v4392
        %v4394 = vpop.f32.mrb[0].mxu0
        %v4395 = vpop.f32.mrb[0].mxu0
        %v4396 = vadd.f32 0.0, %v4395
        %v4397 = vpop.f32.mrb[0].mxu0
        %4398 = vmatprep.mubr.bf16.mxu0 0
        %4399 = vmatmul.mubr.bf16.gmra.mrb[0].mxu0 %v4279
        %v4400 = vpop.f32.mrb[0].mxu0
        %v4401 = vadd.f32 0.0, %v4400
        %v4402 = vpop.f32.mrb[0].mxu0
        %v4403 = vpop.f32.mrb[0].mxu0
        %v4404 = vadd.f32 0.0, %v4403
        %v4405 = vpop.f32.mrb[0].mxu0
        %4406 = vmatprep.mubr.bf16.mxu0 0
        %4407 = vmatmul.mubr.bf16.gmra.mrb[0].mxu0 %v4280
        %v4408 = vpop.f32.mrb[0].mxu0
        %v4409 = vadd.f32 0.0, %v4408
        %v4410 = vpop.f32.mrb[0].mxu0
        %v4411 = vpop.f32.mrb[0].mxu0
        %v4412 = vadd.f32 0.0, %v4411
        %v4413 = vpop.f32.mrb[0].mxu0
        %4414 = vmatprep.mubr.bf16.mxu0 0
        %4415 = vmatmul.mubr.bf16.gmra.mrb[0].mxu0 %v4281
        %v4416 = vpop.f32.mrb[0].mxu0
        %v4417 = vadd.f32 0.0, %v4416
        %v4418 = vpop.f32.mrb[0].mxu0
        %v4419 = vpop.f32.mrb[0].mxu0
        %v4420 = vadd.f32 0.0, %v4419
        %v4421 = vpop.f32.mrb[0].mxu0
        %4422 = vmatprep.mubr.bf16.mxu0 0
        %4423 = vmatmul.mubr.bf16.gmra.mrb[0].mxu0 %v4282
        %v4424 = vpop.f32.mrb[0].mxu0
        %v4425 = vadd.f32 0.0, %v4424
        %v4426 = vpop.f32.mrb[0].mxu0
        %v4427 = vpop.f32.mrb[0].mxu0
        %v4428 = vadd.f32 0.0, %v4427
        %v4429 = vpop.f32.mrb[0].mxu0
        %4430 = vmatprep.mubr.bf16.mxu0 0
        %4431 = vmatmul.mubr.bf16.gmra.mrb[0].mxu0 %v4283
        %v4432 = vpop.f32.mrb[0].mxu0
        %v4433 = vadd.f32 0.0, %v4432
        %v4434 = vpop.f32.mrb[0].mxu0
        %v4435 = vpop.f32.mrb[0].mxu0
        %v4436 = vadd.f32 0.0, %v4435
        %v4437 = vpop.f32.mrb[0].mxu0
        %4438 = vmatprep.mubr.bf16.mxu0 0
        %4439 = vmatmul.mubr.bf16.gmra.mrb[0].mxu0 %v4284
        %v4440 = vpop.f32.mrb[0].mxu0
        %v4441 = vadd.f32 0.0, %v4440
        %v4442 = vpop.f32.mrb[0].mxu0
        %v4443 = vpop.f32.mrb[0].mxu0
        %v4444 = vadd.f32 0.0, %v4443
        %v4445 = vpop.f32.mrb[0].mxu0
        %4446 = vmatprep.mubr.bf16.mxu0 0
        %4447 = vmatmul.mubr.bf16.gmra.mrb[0].mxu0 %v4285
        %v4448 = vpop.f32.mrb[0].mxu0
        %v4449 = vadd.f32 0.0, %v4448
        %v4450 = vpop.f32.mrb[0].mxu0
        %v4451 = vpop.f32.mrb[0].mxu0
        %v4452 = vadd.f32 0.0, %v4451
        %v4453 = vpop.f32.mrb[0].mxu0
        %4454 = vmatprep.mubr.bf16.mxu0 0
        %4455 = vmatmul.mubr.bf16.gmra.mrb[0].mxu0 %v4286
        %v4456 = vpop.f32.mrb[0].mxu0
        %v4457 = vadd.f32 0.0, %v4456
        %v4458 = vpop.f32.mrb[0].mxu0
        %v4459 = vpop.f32.mrb[0].mxu0
        %v4460 = vadd.f32 0.0, %v4459
        %v4461 = vpop.f32.mrb[0].mxu0
        %4462 = vmatprep.mubr.bf16.mxu0 0
        %4463 = vmatmul.mubr.bf16.gmra.mrb[0].mxu0 %v4287
        %v4464 = vpop.f32.mrb[0].mxu0
        %v4465 = vadd.f32 0.0, %v4464
        %v4466 = vpop.f32.mrb[0].mxu0
        %v4467 = vpop.f32.mrb[0].mxu0
        %v4468 = vadd.f32 0.0, %v4467
        %v4469 = vpop.f32.mrb[0].mxu0
        %4470 = vmatprep.mubr.bf16.mxu0 0
        %4471 = vmatmul.mubr.bf16.gmra.mrb[0].mxu0 %v4288
        %v4472 = vpop.f32.mrb[0].mxu0
        %v4473 = vadd.f32 0.0, %v4472
        %v4474 = vpop.f32.mrb[0].mxu0
        %v4475 = vpop.f32.mrb[0].mxu0
        %v4476 = vadd.f32 0.0, %v4475
        %v4477 = vpop.f32.mrb[0].mxu0
        %4478 = vmatprep.mubr.bf16.mxu0 0
        %4479 = vmatmul.mubr.bf16.gmra.mrb[0].mxu0 %v4289
        %v4480 = vpop.f32.mrb[0].mxu0
        %v4481 = vadd.f32 0.0, %v4480
        %v4482 = vpop.f32.mrb[0].mxu0
        %v4483 = vpop.f32.mrb[0].mxu0
        %v4484 = vadd.f32 0.0, %v4483
        %v4485 = vpop.f32.mrb[0].mxu0
        %4486 = vmatprep.mubr.bf16.mxu0 0
        %4487 = vmatmul.mubr.bf16.gmra.mrb[0].mxu0 %v4290
        %v4488 = vpop.f32.mrb[0].mxu0
        %v4489 = vadd.f32 0.0, %v4488
        %v4490 = vpop.f32.mrb[0].mxu0
        %v4491 = vpop.f32.mrb[0].mxu0
        %v4492 = vadd.f32 0.0, %v4491
        %v4493 = vpop.f32.mrb[0].mxu0
        %4494 = vmatprep.mubr.bf16.mxu0 0
        %4495 = vmatmul.mubr.bf16.gmra.mrb[0].mxu0 %v4291
        %v4496 = vpop.f32.mrb[0].mxu0
        %v4497 = vadd.f32 0.0, %v4496
        %v4498 = vpop.f32.mrb[0].mxu0
        %v4499 = vpop.f32.mrb[0].mxu0
        %v4500 = vadd.f32 0.0, %v4499
        %v4501 = vpop.f32.mrb[0].mxu0
        %4502 = vmatprep.mubr.bf16.mxu0 0
        %4503 = vmatmul.mubr.bf16.gmra.mrb[0].mxu0 %v4292
        %v4504 = vpop.f32.mrb[0].mxu0
        %v4505 = vadd.f32 0.0, %v4504
        %v4506 = vpop.f32.mrb[0].mxu0
        %v4507 = vpop.f32.mrb[0].mxu0
        %v4508 = vadd.f32 0.0, %v4507
        %v4509 = vpop.f32.mrb[0].mxu0
        %4510 = vmatprep.mubr.bf16.mxu0 0
        %4511 = vmatmul.mubr.bf16.gmra.mrb[0].mxu0 %v4293
        %v4512 = vpop.f32.mrb[0].mxu0
        %v4513 = vadd.f32 0.0, %v4512
        %v4514 = vpop.f32.mrb[0].mxu0
        %v4515 = vpop.f32.mrb[0].mxu0
        %v4516 = vadd.f32 0.0, %v4515
        %v4517 = vpop.f32.mrb[0].mxu0
        %4518 = vdwg.mxu0
        %v4519 = vadd.f32 %v3765, %v4393
        %v4520 = vadd.f32 %v3766, %v4396
        %v4521 = vadd.f32 %v3767, %v4401
        %v4522 = vadd.f32 %v3768, %v4404
        %v4523 = vadd.f32 %v3769, %v4409
        %v4524 = vadd.f32 %v3770, %v4412
        %v4525 = vadd.f32 %v3771, %v4417
        %v4526 = vadd.f32 %v3772, %v4420
        %v4527 = vadd.f32 %v3773, %v4425
        %v4528 = vadd.f32 %v3774, %v4428
        %v4529 = vadd.f32 %v3775, %v4433
        %v4530 = vadd.f32 %v3776, %v4436
        %v4531 = vadd.f32 %v3777, %v4441
        %v4532 = vadd.f32 %v3778, %v4444
        %v4533 = vadd.f32 %v3779, %v4449
        %v4534 = vadd.f32 %v3780, %v4452
        %v4535 = vadd.f32 %v3781, %v4457
        %v4536 = vadd.f32 %v3782, %v4460
        %v4537 = vadd.f32 %v3783, %v4465
        %v4538 = vadd.f32 %v3784, %v4468
        %v4539 = vadd.f32 %v3785, %v4473
        %v4540 = vadd.f32 %v3786, %v4476
        %v4541 = vadd.f32 %v3787, %v4481
        %v4542 = vadd.f32 %v3788, %v4484
        %v4543 = vadd.f32 %v3789, %v4489
        %v4544 = vadd.f32 %v3790, %v4492
        %v4545 = vadd.f32 %v3791, %v4497
        %v4546 = vadd.f32 %v3792, %v4500
        %v4547 = vadd.f32 %v3793, %v4505
        %v4548 = vadd.f32 %v3794, %v4508
        %v4549 = vadd.f32 %v3795, %v4513
        %v4550 = vadd.f32 %v3796, %v4516
        %v4551 = vld [vmem:[%s3410] sm:$0xe]
        %v4552 = vld [vmem:[%s3410 + $0x10] sm:$0xe]
        %v4553 = vld [vmem:[%s3410 + $0x20] sm:$0xe]
        %v4554 = vld [vmem:[%s3410 + $0x30] sm:$0xe]
        %v4555 = vld [vmem:[%s3410 + $0x40] sm:$0xe]
        %v4556 = vld [vmem:[%s3410 + $0x50] sm:$0xe]
        %v4557 = vld [vmem:[%s3410 + $0x60] sm:$0xe]
        %v4558 = vld [vmem:[%s3410 + $0x70] sm:$0xe]
        %v4559 = vld [vmem:[%s3410 + $0x80] sm:$0xe]
        %v4560 = vld [vmem:[%s3410 + $0x90] sm:$0xe]
        %v4561 = vld [vmem:[%s3410 + $0xa0] sm:$0xe]
        %v4562 = vld [vmem:[%s3410 + $0xb0] sm:$0xe]
        %v4563 = vld [vmem:[%s3410 + $0xc0] sm:$0xe]
        %v4564 = vld [vmem:[%s3410 + $0xd0] sm:$0xe]
        %v4565 = vld [vmem:[%s3410 + $0xe0] sm:$0xe]
        %v4566 = vld [vmem:[%s3410 + $0xf0] sm:$0xe]
        %v4615 = vrot.slane %v4551, 5
        %v4616 = vrot.slane %v4615, 4
        %v4617 = vrot.slane %v3798, 5
        %v4618 = vsel %vm1336, %v4616, %v4617
        %v4619 = vrot.slane %v4617, 4
        %v4620 = vrot.slane %v3799, 5
        %v4621 = vsel %vm1336, %v4619, %v4620
        %v4622 = vrot.slane %v4552, 5
        %v4623 = vrot.slane %v4622, 4
        %v4624 = vrot.slane %v3801, 5
        %v4625 = vsel %vm1336, %v4623, %v4624
        %v4626 = vrot.slane %v4624, 4
        %v4627 = vrot.slane %v3802, 5
        %v4628 = vsel %vm1336, %v4626, %v4627
        %v4629 = vrot.slane %v4553, 5
        %v4630 = vrot.slane %v4629, 4
        %v4631 = vrot.slane %v3804, 5
        %v4632 = vsel %vm1336, %v4630, %v4631
        %v4633 = vrot.slane %v4631, 4
        %v4634 = vrot.slane %v3805, 5
        %v4635 = vsel %vm1336, %v4633, %v4634
        %v4636 = vrot.slane %v4554, 5
        %v4637 = vrot.slane %v4636, 4
        %v4638 = vrot.slane %v3807, 5
        %v4639 = vsel %vm1336, %v4637, %v4638
        %v4640 = vrot.slane %v4638, 4
        %v4641 = vrot.slane %v3808, 5
        %v4642 = vsel %vm1336, %v4640, %v4641
        %v4643 = vrot.slane %v4555, 5
        %v4644 = vrot.slane %v4643, 4
        %v4645 = vrot.slane %v3810, 5
        %v4646 = vsel %vm1336, %v4644, %v4645
        %v4647 = vrot.slane %v4645, 4
        %v4648 = vrot.slane %v3811, 5
        %v4649 = vsel %vm1336, %v4647, %v4648
        %v4650 = vrot.slane %v4556, 5
        %v4651 = vrot.slane %v4650, 4
        %v4652 = vrot.slane %v3813, 5
        %v4653 = vsel %vm1336, %v4651, %v4652
        %v4654 = vrot.slane %v4652, 4
        %v4655 = vrot.slane %v3814, 5
        %v4656 = vsel %vm1336, %v4654, %v4655
        %v4657 = vrot.slane %v4557, 5
        %v4658 = vrot.slane %v4657, 4
        %v4659 = vrot.slane %v3816, 5
        %v4660 = vsel %vm1336, %v4658, %v4659
        %v4661 = vrot.slane %v4659, 4
        %v4662 = vrot.slane %v3817, 5
        %v4663 = vsel %vm1336, %v4661, %v4662
        %v4664 = vrot.slane %v4558, 5
        %v4665 = vrot.slane %v4664, 4
        %v4666 = vrot.slane %v3819, 5
        %v4667 = vsel %vm1336, %v4665, %v4666
        %v4668 = vrot.slane %v4666, 4
        %v4669 = vrot.slane %v3820, 5
        %v4670 = vsel %vm1336, %v4668, %v4669
        %v4671 = vrot.slane %v4559, 5
        %v4672 = vrot.slane %v4671, 4
        %v4673 = vrot.slane %v3822, 5
        %v4674 = vsel %vm1336, %v4672, %v4673
        %v4675 = vrot.slane %v4673, 4
        %v4676 = vrot.slane %v3823, 5
        %v4677 = vsel %vm1336, %v4675, %v4676
        %v4678 = vrot.slane %v4560, 5
        %v4679 = vrot.slane %v4678, 4
        %v4680 = vrot.slane %v3825, 5
        %v4681 = vsel %vm1336, %v4679, %v4680
        %v4682 = vrot.slane %v4680, 4
        %v4683 = vrot.slane %v3826, 5
        %v4684 = vsel %vm1336, %v4682, %v4683
        %v4685 = vrot.slane %v4561, 5
        %v4686 = vrot.slane %v4685, 4
        %v4687 = vrot.slane %v3828, 5
        %v4688 = vsel %vm1336, %v4686, %v4687
        %v4689 = vrot.slane %v4687, 4
        %v4690 = vrot.slane %v3829, 5
        %v4691 = vsel %vm1336, %v4689, %v4690
        %v4692 = vrot.slane %v4562, 5
        %v4693 = vrot.slane %v4692, 4
        %v4694 = vrot.slane %v3831, 5
        %v4695 = vsel %vm1336, %v4693, %v4694
        %v4696 = vrot.slane %v4694, 4
        %v4697 = vrot.slane %v3832, 5
        %v4698 = vsel %vm1336, %v4696, %v4697
        %v4699 = vrot.slane %v4563, 5
        %v4700 = vrot.slane %v4699, 4
        %v4701 = vrot.slane %v3834, 5
        %v4702 = vsel %vm1336, %v4700, %v4701
        %v4703 = vrot.slane %v4701, 4
        %v4704 = vrot.slane %v3835, 5
        %v4705 = vsel %vm1336, %v4703, %v4704
        %v4706 = vrot.slane %v4564, 5
        %v4707 = vrot.slane %v4706, 4
        %v4708 = vrot.slane %v3837, 5
        %v4709 = vsel %vm1336, %v4707, %v4708
        %v4710 = vrot.slane %v4708, 4
        %v4711 = vrot.slane %v3838, 5
        %v4712 = vsel %vm1336, %v4710, %v4711
        %v4713 = vrot.slane %v4565, 5
        %v4714 = vrot.slane %v4713, 4
        %v4715 = vrot.slane %v3840, 5
        %v4716 = vsel %vm1336, %v4714, %v4715
        %v4717 = vrot.slane %v4715, 4
        %v4718 = vrot.slane %v3841, 5
        %v4719 = vsel %vm1336, %v4717, %v4718
        %v4720 = vrot.slane %v4566, 5
        %v4721 = vrot.slane %v4720, 4
        %v4722 = vrot.slane %v3843, 5
        %v4723 = vsel %vm1336, %v4721, %v4722
        %v4724 = vrot.slane %v4722, 4
        %v4725 = vrot.slane %v3844, 5
        %v4726 = vsel %vm1336, %v4724, %v4725
        %s4727 = scalar_lea.vmem [#allocation5], 512
        %v4728 = vld [vmem:[%s4727] sm:$0xf]
        %v4729 = vld [vmem:[%s4727 + $0x4] sm:$0xf]
        %v4730 = vld [vmem:[%s4727 + $0x8] sm:$0xf]
        %v4731 = vld [vmem:[%s4727 + $0xc] sm:$0xf]
        %v4732 = vld [vmem:[%s4727 + $0x10] sm:$0xf]
        %v4733 = vld [vmem:[%s4727 + $0x14] sm:$0xf]
        %v4734 = vld [vmem:[%s4727 + $0x18] sm:$0xf]
        %v4735 = vld [vmem:[%s4727 + $0x1c] sm:$0xf]
        %v4736 = vld [vmem:[%s4727 + $0x20] sm:$0xf]
        %v4737 = vld [vmem:[%s4727 + $0x24] sm:$0xf]
        %v4738 = vld [vmem:[%s4727 + $0x28] sm:$0xf]
        %v4739 = vld [vmem:[%s4727 + $0x2c] sm:$0xf]
        %v4740 = vld [vmem:[%s4727 + $0x30] sm:$0xf]
        %v4741 = vld [vmem:[%s4727 + $0x34] sm:$0xf]
        %v4742 = vld [vmem:[%s4727 + $0x38] sm:$0xf]
        %v4743 = vld [vmem:[%s4727 + $0x3c] sm:$0xf]
        %v4744 = vunpack.c.l.b16 %v4618
        %v4745 = vunpack.c.l.b16 %v4621
        %v4746 = vunpack.c.l.b16 %v4625
        %v4747 = vunpack.c.l.b16 %v4628
        %v4748 = vunpack.c.l.b16 %v4632
        %v4749 = vunpack.c.l.b16 %v4635
        %v4750 = vunpack.c.l.b16 %v4639
        %v4751 = vunpack.c.l.b16 %v4642
        %v4752 = vunpack.c.l.b16 %v4646
        %v4753 = vunpack.c.l.b16 %v4649
        %v4754 = vunpack.c.l.b16 %v4653
        %v4755 = vunpack.c.l.b16 %v4656
        %v4756 = vunpack.c.l.b16 %v4660
        %v4757 = vunpack.c.l.b16 %v4663
        %v4758 = vunpack.c.l.b16 %v4667
        %v4759 = vunpack.c.l.b16 %v4670
        %v4760 = vunpack.c.l.b16 %v4674
        %v4761 = vunpack.c.l.b16 %v4677
        %v4762 = vunpack.c.l.b16 %v4681
        %v4763 = vunpack.c.l.b16 %v4684
        %v4764 = vunpack.c.l.b16 %v4688
        %v4765 = vunpack.c.l.b16 %v4691
        %v4766 = vunpack.c.l.b16 %v4695
        %v4767 = vunpack.c.l.b16 %v4698
        %v4768 = vunpack.c.l.b16 %v4702
        %v4769 = vunpack.c.l.b16 %v4705
        %v4770 = vunpack.c.l.b16 %v4709
        %v4771 = vunpack.c.l.b16 %v4712
        %v4772 = vunpack.c.l.b16 %v4716
        %v4773 = vunpack.c.l.b16 %v4719
        %v4774 = vunpack.c.l.b16 %v4723
        %v4775 = vunpack.c.l.b16 %v4726
        %v4776 = vpack.c.b16 %v4745, %v4744
        %v4777 = vpack.c.b16 %v4747, %v4746
        %v4778 = vpack.c.b16 %v4749, %v4748
        %v4779 = vpack.c.b16 %v4751, %v4750
        %v4780 = vpack.c.b16 %v4753, %v4752
        %v4781 = vpack.c.b16 %v4755, %v4754
        %v4782 = vpack.c.b16 %v4757, %v4756
        %v4783 = vpack.c.b16 %v4759, %v4758
        %v4784 = vpack.c.b16 %v4761, %v4760
        %v4785 = vpack.c.b16 %v4763, %v4762
        %v4786 = vpack.c.b16 %v4765, %v4764
        %v4787 = vpack.c.b16 %v4767, %v4766
        %v4788 = vpack.c.b16 %v4769, %v4768
        %v4789 = vpack.c.b16 %v4771, %v4770
        %v4790 = vpack.c.b16 %v4773, %v4772
        %v4791 = vpack.c.b16 %v4775, %v4774
        %v4824 = vunpack.c.l.b16 %v4728
        %v4825 = vunpack.c.l.b16 %v4729
        %v4826 = vunpack.c.l.b16 %v4730
        %v4827 = vunpack.c.l.b16 %v4731
        %v4828 = vunpack.c.l.b16 %v4732
        %v4829 = vunpack.c.l.b16 %v4733
        %v4830 = vunpack.c.l.b16 %v4734
        %v4831 = vunpack.c.l.b16 %v4735
        %v4832 = vunpack.c.l.b16 %v4736
        %v4833 = vunpack.c.l.b16 %v4737
        %v4834 = vunpack.c.l.b16 %v4738
        %v4835 = vunpack.c.l.b16 %v4739
        %v4836 = vunpack.c.l.b16 %v4740
        %v4837 = vunpack.c.l.b16 %v4741
        %v4838 = vunpack.c.l.b16 %v4742
        %v4839 = vunpack.c.l.b16 %v4743
        %v4840 = vpack.c.b16 %v4825, %v4824
        %v4841 = vpack.c.b16 %v4827, %v4826
        %v4842 = vpack.c.b16 %v4829, %v4828
        %v4843 = vpack.c.b16 %v4831, %v4830
        %v4844 = vpack.c.b16 %v4833, %v4832
        %v4845 = vpack.c.b16 %v4835, %v4834
        %v4846 = vpack.c.b16 %v4837, %v4836
        %v4847 = vpack.c.b16 %v4839, %v4838
        %4856 = vmatprep.subr.bf16.mxu0 0
        %4857 = vmatpush1.bf16.msra.mxu0 %v4840
        %4858 = vmatprep.subr.bf16.mxu0 0
        %4859 = vmatpush1.bf16.msra.mxu0 %v4841
        %4860 = vmatprep.subr.bf16.mxu0 0
        %4861 = vmatpush1.bf16.msra.mxu0 %v4842
        %4862 = vmatprep.subr.bf16.mxu0 0
        %4863 = vmatpush1.bf16.msra.mxu0 %v4843
        %4864 = vmatprep.subr.bf16.mxu0 0
        %4865 = vmatpush1.bf16.msra.mxu0 %v4844
        %4866 = vmatprep.subr.bf16.mxu0 0
        %4867 = vmatpush1.bf16.msra.mxu0 %v4845
        %4868 = vmatprep.subr.bf16.mxu0 0
        %4869 = vmatpush1.bf16.msra.mxu0 %v4846
        %4870 = vmatprep.subr.bf16.mxu0 0
        %4871 = vmatpush1.bf16.msra.mxu0 %v4847
        %4872 = vmatprep.subr.bf16.mxu0 0
        %4873 = vmatpush1.bf16.msra.mxu0 0
        %4874 = vmatprep.subr.bf16.mxu0 0
        %4875 = vmatpush1.bf16.msra.mxu0 0
        %4876 = vmatprep.subr.bf16.mxu0 0
        %4877 = vmatpush1.bf16.msra.mxu0 0
        %4878 = vmatprep.subr.bf16.mxu0 0
        %4879 = vmatpush1.bf16.msra.mxu0 0
        %4880 = vmatprep.subr.bf16.mxu0 0
        %4881 = vmatpush1.bf16.msra.mxu0 0
        %4882 = vmatprep.subr.bf16.mxu0 0
        %4883 = vmatpush1.bf16.msra.mxu0 0
        %4884 = vmatprep.subr.bf16.mxu0 0
        %4885 = vmatpush1.bf16.msra.mxu0 0
        %4886 = vmatprep.subr.bf16.mxu0 0
        %4887 = vmatpush1.bf16.msra.mxu0 0
        %4888 = vmatprep.mubr.bf16.mxu0 0
        %4889 = vmatmul.mubr.bf16.gmra.mrb[0].mxu0 %v4776
        %v4890 = vpop.f32.mrb[0].mxu0
        %v4891 = vadd.f32 0.0, %v4890
        %v4892 = vpop.f32.mrb[0].mxu0
        %v4893 = vpop.f32.mrb[0].mxu0
        %v4894 = vadd.f32 0.0, %v4893
        %v4895 = vpop.f32.mrb[0].mxu0
        %4896 = vmatprep.mubr.bf16.mxu0 0
        %4897 = vmatmul.mubr.bf16.gmra.mrb[0].mxu0 %v4777
        %v4898 = vpop.f32.mrb[0].mxu0
        %v4899 = vadd.f32 0.0, %v4898
        %v4900 = vpop.f32.mrb[0].mxu0
        %v4901 = vpop.f32.mrb[0].mxu0
        %v4902 = vadd.f32 0.0, %v4901
        %v4903 = vpop.f32.mrb[0].mxu0
        %4904 = vmatprep.mubr.bf16.mxu0 0
        %4905 = vmatmul.mubr.bf16.gmra.mrb[0].mxu0 %v4778
        %v4906 = vpop.f32.mrb[0].mxu0
        %v4907 = vadd.f32 0.0, %v4906
        %v4908 = vpop.f32.mrb[0].mxu0
        %v4909 = vpop.f32.mrb[0].mxu0
        %v4910 = vadd.f32 0.0, %v4909
        %v4911 = vpop.f32.mrb[0].mxu0
        %4912 = vmatprep.mubr.bf16.mxu0 0
        %4913 = vmatmul.mubr.bf16.gmra.mrb[0].mxu0 %v4779
        %v4914 = vpop.f32.mrb[0].mxu0
        %v4915 = vadd.f32 0.0, %v4914
        %v4916 = vpop.f32.mrb[0].mxu0
        %v4917 = vpop.f32.mrb[0].mxu0
        %v4918 = vadd.f32 0.0, %v4917
        %v4919 = vpop.f32.mrb[0].mxu0
        %4920 = vmatprep.mubr.bf16.mxu0 0
        %4921 = vmatmul.mubr.bf16.gmra.mrb[0].mxu0 %v4780
        %v4922 = vpop.f32.mrb[0].mxu0
        %v4923 = vadd.f32 0.0, %v4922
        %v4924 = vpop.f32.mrb[0].mxu0
        %v4925 = vpop.f32.mrb[0].mxu0
        %v4926 = vadd.f32 0.0, %v4925
        %v4927 = vpop.f32.mrb[0].mxu0
        %4928 = vmatprep.mubr.bf16.mxu0 0
        %4929 = vmatmul.mubr.bf16.gmra.mrb[0].mxu0 %v4781
        %v4930 = vpop.f32.mrb[0].mxu0
        %v4931 = vadd.f32 0.0, %v4930
        %v4932 = vpop.f32.mrb[0].mxu0
        %v4933 = vpop.f32.mrb[0].mxu0
        %v4934 = vadd.f32 0.0, %v4933
        %v4935 = vpop.f32.mrb[0].mxu0
        %4936 = vmatprep.mubr.bf16.mxu0 0
        %4937 = vmatmul.mubr.bf16.gmra.mrb[0].mxu0 %v4782
        %v4938 = vpop.f32.mrb[0].mxu0
        %v4939 = vadd.f32 0.0, %v4938
        %v4940 = vpop.f32.mrb[0].mxu0
        %v4941 = vpop.f32.mrb[0].mxu0
        %v4942 = vadd.f32 0.0, %v4941
        %v4943 = vpop.f32.mrb[0].mxu0
        %4944 = vmatprep.mubr.bf16.mxu0 0
        %4945 = vmatmul.mubr.bf16.gmra.mrb[0].mxu0 %v4783
        %v4946 = vpop.f32.mrb[0].mxu0
        %v4947 = vadd.f32 0.0, %v4946
        %v4948 = vpop.f32.mrb[0].mxu0
        %v4949 = vpop.f32.mrb[0].mxu0
        %v4950 = vadd.f32 0.0, %v4949
        %v4951 = vpop.f32.mrb[0].mxu0
        %4952 = vmatprep.mubr.bf16.mxu0 0
        %4953 = vmatmul.mubr.bf16.gmra.mrb[0].mxu0 %v4784
        %v4954 = vpop.f32.mrb[0].mxu0
        %v4955 = vadd.f32 0.0, %v4954
        %v4956 = vpop.f32.mrb[0].mxu0
        %v4957 = vpop.f32.mrb[0].mxu0
        %v4958 = vadd.f32 0.0, %v4957
        %v4959 = vpop.f32.mrb[0].mxu0
        %4960 = vmatprep.mubr.bf16.mxu0 0
        %4961 = vmatmul.mubr.bf16.gmra.mrb[0].mxu0 %v4785
        %v4962 = vpop.f32.mrb[0].mxu0
        %v4963 = vadd.f32 0.0, %v4962
        %v4964 = vpop.f32.mrb[0].mxu0
        %v4965 = vpop.f32.mrb[0].mxu0
        %v4966 = vadd.f32 0.0, %v4965
        %v4967 = vpop.f32.mrb[0].mxu0
        %4968 = vmatprep.mubr.bf16.mxu0 0
        %4969 = vmatmul.mubr.bf16.gmra.mrb[0].mxu0 %v4786
        %v4970 = vpop.f32.mrb[0].mxu0
        %v4971 = vadd.f32 0.0, %v4970
        %v4972 = vpop.f32.mrb[0].mxu0
        %v4973 = vpop.f32.mrb[0].mxu0
        %v4974 = vadd.f32 0.0, %v4973
        %v4975 = vpop.f32.mrb[0].mxu0
        %4976 = vmatprep.mubr.bf16.mxu0 0
        %4977 = vmatmul.mubr.bf16.gmra.mrb[0].mxu0 %v4787
        %v4978 = vpop.f32.mrb[0].mxu0
        %v4979 = vadd.f32 0.0, %v4978
        %v4980 = vpop.f32.mrb[0].mxu0
        %v4981 = vpop.f32.mrb[0].mxu0
        %v4982 = vadd.f32 0.0, %v4981
        %v4983 = vpop.f32.mrb[0].mxu0
        %4984 = vmatprep.mubr.bf16.mxu0 0
        %4985 = vmatmul.mubr.bf16.gmra.mrb[0].mxu0 %v4788
        %v4986 = vpop.f32.mrb[0].mxu0
        %v4987 = vadd.f32 0.0, %v4986
        %v4988 = vpop.f32.mrb[0].mxu0
        %v4989 = vpop.f32.mrb[0].mxu0
        %v4990 = vadd.f32 0.0, %v4989
        %v4991 = vpop.f32.mrb[0].mxu0
        %4992 = vmatprep.mubr.bf16.mxu0 0
        %4993 = vmatmul.mubr.bf16.gmra.mrb[0].mxu0 %v4789
        %v4994 = vpop.f32.mrb[0].mxu0
        %v4995 = vadd.f32 0.0, %v4994
        %v4996 = vpop.f32.mrb[0].mxu0
        %v4997 = vpop.f32.mrb[0].mxu0
        %v4998 = vadd.f32 0.0, %v4997
        %v4999 = vpop.f32.mrb[0].mxu0
        %5000 = vmatprep.mubr.bf16.mxu0 0
        %5001 = vmatmul.mubr.bf16.gmra.mrb[0].mxu0 %v4790
        %v5002 = vpop.f32.mrb[0].mxu0
        %v5003 = vadd.f32 0.0, %v5002
        %v5004 = vpop.f32.mrb[0].mxu0
        %v5005 = vpop.f32.mrb[0].mxu0
        %v5006 = vadd.f32 0.0, %v5005
        %v5007 = vpop.f32.mrb[0].mxu0
        %5008 = vmatprep.mubr.bf16.mxu0 0
        %5009 = vmatmul.mubr.bf16.gmra.mrb[0].mxu0 %v4791
        %v5010 = vpop.f32.mrb[0].mxu0
        %v5011 = vadd.f32 0.0, %v5010
        %v5012 = vpop.f32.mrb[0].mxu0
        %v5013 = vpop.f32.mrb[0].mxu0
        %v5014 = vadd.f32 0.0, %v5013
        %v5015 = vpop.f32.mrb[0].mxu0
        %5016 = vdwg.mxu0
        %v5017 = vadd.f32 %v4519, %v4891
        %v5018 = vadd.f32 %v4520, %v4894
        %v5019 = vadd.f32 %v4521, %v4899
        %v5020 = vadd.f32 %v4522, %v4902
        %v5021 = vadd.f32 %v4523, %v4907
        %v5022 = vadd.f32 %v4524, %v4910
        %v5023 = vadd.f32 %v4525, %v4915
        %v5024 = vadd.f32 %v4526, %v4918
        %v5025 = vadd.f32 %v4527, %v4923
        %v5026 = vadd.f32 %v4528, %v4926
        %v5027 = vadd.f32 %v4529, %v4931
        %v5028 = vadd.f32 %v4530, %v4934
        %v5029 = vadd.f32 %v4531, %v4939
        %v5030 = vadd.f32 %v4532, %v4942
        %v5031 = vadd.f32 %v4533, %v4947
        %v5032 = vadd.f32 %v4534, %v4950
        %v5033 = vadd.f32 %v4535, %v4955
        %v5034 = vadd.f32 %v4536, %v4958
        %v5035 = vadd.f32 %v4537, %v4963
        %v5036 = vadd.f32 %v4538, %v4966
        %v5037 = vadd.f32 %v4539, %v4971
        %v5038 = vadd.f32 %v4540, %v4974
        %v5039 = vadd.f32 %v4541, %v4979
        %v5040 = vadd.f32 %v4542, %v4982
        %v5041 = vadd.f32 %v4543, %v4987
        %v5042 = vadd.f32 %v4544, %v4990
        %v5043 = vadd.f32 %v4545, %v4995
        %v5044 = vadd.f32 %v4546, %v4998
        %v5045 = vadd.f32 %v4547, %v5003
        %v5046 = vadd.f32 %v4548, %v5006
        %v5047 = vadd.f32 %v4549, %v5011
        %v5048 = vadd.f32 %v4550, %v5014
        %v5049 = vld [vmem:[%s238] sm:$0x1]
        %v5051 = vlaneseq
        %v5052 = vshrl.u32 %v5051, 7
        %v5053 = vsub.s32 0, %v5052
        %v5054 = vrot.slane %v5049, %v5053
        %v5056 = vadd.f32 %v5017, %v5054
        %v5057 = vadd.f32 %v5018, %v5054
        %v5058 = vadd.f32 %v5019, %v5054
        %v5059 = vadd.f32 %v5020, %v5054
        %v5060 = vadd.f32 %v5021, %v5054
        %v5061 = vadd.f32 %v5022, %v5054
        %v5062 = vadd.f32 %v5023, %v5054
        %v5063 = vadd.f32 %v5024, %v5054
        %v5064 = vadd.f32 %v5025, %v5054
        %v5065 = vadd.f32 %v5026, %v5054
        %v5066 = vadd.f32 %v5027, %v5054
        %v5067 = vadd.f32 %v5028, %v5054
        %v5068 = vadd.f32 %v5029, %v5054
        %v5069 = vadd.f32 %v5030, %v5054
        %v5070 = vadd.f32 %v5031, %v5054
        %v5071 = vadd.f32 %v5032, %v5054
        %v5072 = vadd.f32 %v5033, %v5054
        %v5073 = vadd.f32 %v5034, %v5054
        %v5074 = vadd.f32 %v5035, %v5054
        %v5075 = vadd.f32 %v5036, %v5054
        %v5076 = vadd.f32 %v5037, %v5054
        %v5077 = vadd.f32 %v5038, %v5054
        %v5078 = vadd.f32 %v5039, %v5054
        %v5079 = vadd.f32 %v5040, %v5054
        %v5080 = vadd.f32 %v5041, %v5054
        %v5081 = vadd.f32 %v5042, %v5054
        %v5082 = vadd.f32 %v5043, %v5054
        %v5083 = vadd.f32 %v5044, %v5054
        %v5084 = vadd.f32 %v5045, %v5054
        %v5085 = vadd.f32 %v5046, %v5054
        %v5086 = vadd.f32 %v5047, %v5054
        %v5087 = vadd.f32 %v5048, %v5054
        %v5088 = vmax.f32 %v5056, 0.0
        %v5089 = vmax.f32 %v5057, 0.0
        %v5090 = vmax.f32 %v5058, 0.0
        %v5091 = vmax.f32 %v5059, 0.0
        %v5092 = vmax.f32 %v5060, 0.0
        %v5093 = vmax.f32 %v5061, 0.0
        %v5094 = vmax.f32 %v5062, 0.0
        %v5095 = vmax.f32 %v5063, 0.0
        %v5096 = vmax.f32 %v5064, 0.0
        %v5097 = vmax.f32 %v5065, 0.0
        %v5098 = vmax.f32 %v5066, 0.0
        %v5099 = vmax.f32 %v5067, 0.0
        %v5100 = vmax.f32 %v5068, 0.0
        %v5101 = vmax.f32 %v5069, 0.0
        %v5102 = vmax.f32 %v5070, 0.0
        %v5103 = vmax.f32 %v5071, 0.0
        %v5104 = vmax.f32 %v5072, 0.0
        %v5105 = vmax.f32 %v5073, 0.0
        %v5106 = vmax.f32 %v5074, 0.0
        %v5107 = vmax.f32 %v5075, 0.0
        %v5108 = vmax.f32 %v5076, 0.0
        %v5109 = vmax.f32 %v5077, 0.0
        %v5110 = vmax.f32 %v5078, 0.0
        %v5111 = vmax.f32 %v5079, 0.0
        %v5112 = vmax.f32 %v5080, 0.0
        %v5113 = vmax.f32 %v5081, 0.0
        %v5114 = vmax.f32 %v5082, 0.0
        %v5115 = vmax.f32 %v5083, 0.0
        %v5116 = vmax.f32 %v5084, 0.0
        %v5117 = vmax.f32 %v5085, 0.0
        %v5118 = vmax.f32 %v5086, 0.0
        %v5119 = vmax.f32 %v5087, 0.0
        %5120 = vst [vmem:[%s235] sm:$0xff] %v5088
        %5121 = vst [vmem:[%s235 + $0x8] sm:$0xff] %v5089
        %5122 = vst [vmem:[%s235 + $0x10] sm:$0xff] %v5090
        %5123 = vst [vmem:[%s235 + $0x18] sm:$0xff] %v5091
        %5124 = vst [vmem:[%s235 + $0x20] sm:$0xff] %v5092
        %5125 = vst [vmem:[%s235 + $0x28] sm:$0xff] %v5093
        %5126 = vst [vmem:[%s235 + $0x30] sm:$0xff] %v5094
        %5127 = vst [vmem:[%s235 + $0x38] sm:$0xff] %v5095
        %5128 = vst [vmem:[%s235 + $0x40] sm:$0xff] %v5096
        %5129 = vst [vmem:[%s235 + $0x48] sm:$0xff] %v5097
        %5130 = vst [vmem:[%s235 + $0x50] sm:$0xff] %v5098
        %5131 = vst [vmem:[%s235 + $0x58] sm:$0xff] %v5099
        %5132 = vst [vmem:[%s235 + $0x60] sm:$0xff] %v5100
        %5133 = vst [vmem:[%s235 + $0x68] sm:$0xff] %v5101
        %5134 = vst [vmem:[%s235 + $0x70] sm:$0xff] %v5102
        %5135 = vst [vmem:[%s235 + $0x78] sm:$0xff] %v5103
        %5136 = vst [vmem:[%s235 + $0x80] sm:$0xff] %v5104
        %5137 = vst [vmem:[%s235 + $0x88] sm:$0xff] %v5105
        %5138 = vst [vmem:[%s235 + $0x90] sm:$0xff] %v5106
        %5139 = vst [vmem:[%s235 + $0x98] sm:$0xff] %v5107
        %5140 = vst [vmem:[%s235 + $0xa0] sm:$0xff] %v5108
        %5141 = vst [vmem:[%s235 + $0xa8] sm:$0xff] %v5109
        %5142 = vst [vmem:[%s235 + $0xb0] sm:$0xff] %v5110
        %5143 = vst [vmem:[%s235 + $0xb8] sm:$0xff] %v5111
        %5144 = vst [vmem:[%s235 + $0xc0] sm:$0xff] %v5112
        %5145 = vst [vmem:[%s235 + $0xc8] sm:$0xff] %v5113
        %5146 = vst [vmem:[%s235 + $0xd0] sm:$0xff] %v5114
        %5147 = vst [vmem:[%s235 + $0xd8] sm:$0xff] %v5115
        %5148 = vst [vmem:[%s235 + $0xe0] sm:$0xff] %v5116
        %5149 = vst [vmem:[%s235 + $0xe8] sm:$0xff] %v5117
        %5150 = vst [vmem:[%s235 + $0xf0] sm:$0xff] %v5118
        %5151 = vst [vmem:[%s235 + $0xf8] sm:$0xff] %v5119
        %s5152 = sand.u32 %s121, 1
        %s5153 = scalar_lea.sflag [#allocation4], %s5152
        %s5154 = sand.u32 %s121, 1
        %s5155 = smul.addr %s5154, 256
        %s5156 = scalar_lea.vmem [#allocation7], %s5155
        // Predicated region
        $region41: #{tpu_custom_call.1} parent=31 // pred_check
          %p5157 = pneg %p131
        $region42: #{tpu_custom_call.1} parent=31 // pred_check_branch
          %5159 = sbr.rel (%p5157) target = $region44
        $region43: #{tpu_custom_call.1} parent=31 // pred_region
          %s5161 = ssub.s32 4096, 4096
          %5162 = vsyncadd %s5153, %s5161
          %s5163 = smul.addr %s26, 32
          %s5164 = sadd.s32 %s25, %s5163
          %s5165 = smul.addr %s5164, 128
          %s5166 = scalar_lea.hbm %s3, %s5165
          %s5167 = sshll.u32 %s5156, 4
          %s5168 = int_to_ptr.vmem [resolvable:$true] %s5167
          %5173 = dma.vmem_to_hbm [thread:$0]  %s5168, 4096, %s5166, %s5153, 128, 128, 8
        $region44: #{tpu_custom_call.1} parent=31 // pred_fallthru
          _
      $region32: #{tpu_custom_call.1} parent=5 // pred_fallthru
        _
      %p5174 = scmp.le.s32.totalorder 2, %s16
      // Predicated region
      $region45: #{tpu_custom_call.1} parent=5 // pred_check
        %p5175 = pneg %p5174
      $region46: #{tpu_custom_call.1} parent=5 // pred_check_branch
        %5177 = sbr.rel (%p5175) target = $region48
      $region47: #{tpu_custom_call.1} parent=5 // pred_region
        %s5178 = ssub.s32 %s16, 2
        // Predicated region
        $region49: #{tpu_custom_call.1} parent=47 // pred_check
          %p5179 = pneg %p137
        $region50: #{tpu_custom_call.1} parent=47 // pred_check_branch
          %5181 = sbr.rel (%p5179) target = $region52
        $region51: #{tpu_custom_call.1} parent=47 // pred_region
          %s5182 = sand.u32 %s122, 1
          %s5183 = scalar_lea.sflag [#allocation4], %s5182
          %s5184 = sand.u32 %s122, 1
          %s5185 = smul.addr %s5184, 256
          %s5186 = scalar_lea.vmem [#allocation7], %s5185
          %5187 = dma.done %s5183, 4096
        $region52: #{tpu_custom_call.1} parent=47 // pred_fallthru
          _
      $region48: #{tpu_custom_call.1} parent=5 // pred_fallthru
        _
    $region6: #{tpu_custom_call.1} parent=1 // loop_footer
      %s20 = sadd.s32 1, %s16
    $region7: #{tpu_custom_call.1} parent=1 // loop_footer_branch
      %15 = sbr.rel target = $region3
    $region8: #{tpu_custom_call.1} parent=1 // loop_exit
      _
    %5188 = vsyncpa [#allocation3], 1
    %s5189 = scalar_lea.sflag [#allocation3], 1
    %5190 = vsyncpa %s5189, 1
    %5191 = vsyncpa [#allocation6], 1
    %5192 = vsyncpa [#allocation4], 1
    %s5193 = scalar_lea.sflag [#allocation4], 1
    %5194 = vsyncpa %s5193, 1

// kernel: tpu_custom_call.1
$region0: #{tpu_custom_call.1}
  #allocation0 [shape = 'u32[]', space=smem, size = 0x4, offset = 0x4, fixed_abs, tag = 'smem constant byte address 0x4 - core index']
  #allocation1 [shape = 'u32[144,128]{1,0:T(1,128)}', space=vmem, size = 0x12000, scoped, tag = 'internal scratch']
  %s0 = inlined_call_operand.hbm [shape: bf16[2,18,32,128], index: 0, kind: input, shape index: {}]
  %s1 = inlined_call_operand.hbm [shape: bf16[3,3,128,128], index: 1, kind: input, shape index: {}]
  %s2 = inlined_call_operand.vmem [shape: f32[1,128], index: 2, kind: input, shape index: {}]
  %s3 = inlined_call_operand.hbm [shape: f32[2,16,16,128], index: 3, kind: output, shape index: {}]
  %s4 = sld [smem:[#allocation0]]
  $region53: #{tpu_custom_call.1} parent=0
    _
  %s6 = ssub.s32 1, %s4
  %s7 = scalar_select 0, %s6, %s4
  $region1: #{tpu_custom_call.1} parent=0
    #allocation2 [shape = 'u8[294912]{0}', space=vmem, size = 0x48000, scoped, tag = 'input window, operand 0']
    #allocation3 [shape = 's32[2]{0}', space=sflag, size = 0x8, scoped, tag = 'scoped memory for tpu_custom_call.1']
    #allocation4 [shape = 's32[2]{0}', space=sflag, size = 0x8, scoped, tag = 'scoped memory for tpu_custom_call.1']
    #allocation5 [shape = 'u8[294912]{0}', space=vmem, size = 0x48000, scoped, tag = 'input window, operand 1, single buffered']
    #allocation6 [shape = 's32[1]{0}', space=sflag, size = 0x4, scoped, tag = 'scoped memory for tpu_custom_call.1']
    #allocation7 [shape = 'u8[262144]{0}', space=vmem, size = 0x40000, scoped, tag = 'output window, operand 0']
    %8 = vsyncpa [#allocation3], 0
    %s9 = scalar_lea.sflag [#allocation3], 1
    %10 = vsyncpa %s9, 0
    %11 = vsyncpa [#allocation6], 0
    %12 = vsyncpa [#allocation4], 0
    %s13 = scalar_lea.sflag [#allocation4], 1
    %14 = vsyncpa %s13, 0
    loop: start=0, step=1, limit=4
    $region2: #{tpu_custom_call.1} parent=1 // loop_pre_header
      _
    $region3: #{tpu_custom_call.1} parent=1 // loop_header
      %s16 = sphi 0, %s20
      %p17 = scmp.ge.s32.totalorder %s16, 4
      %s23 = sphi 0, %s35
      %s24 = sphi 0, %s31
      %s25 = sphi 0, %s23
      %s26 = sphi 0, %s24
      %s27 = sphi 0, %s25
      %s28 = sphi 0, %s26
      %s38 = sphi 0, %s40
      %s41 = sphi 0, %s38
      %s42 = sphi 0, %s41
      %s58 = sphi 0, %s42
      %s64 = sphi 0, %s66
      %s67 = sphi 0, %s64
      %s68 = sphi 0, %s67
      %s84 = sphi 0, %s68
      %s90 = sphi 0, %s92
      %s93 = sphi 0, %s90
      %s94 = sphi 0, %s93
      %s110 = sphi 0, %s94
      %s118 = sphi 0, %s120
      %s121 = sphi 0, %s118
      %s122 = sphi 0, %s121
      %s138 = sphi 0, %s122
    $region4: #{tpu_custom_call.1} parent=1 // loop_header_branch
      %19 = sbr.rel (%p17) target = $region8
    $region5: #{tpu_custom_call.1} parent=1 // loop_body
      %s21 = ssub.s32 %s16, 1
      %s22 = ssub.s32 %s16, 2
      %s29 = sadd.s32 1, %s24
      %p30 = scmp.ge.s32.totalorder %s29, 2
      %s31 = scalar_select %p30, 0, %s29
      %s32 = sadd.s32 1, %s23
      %s33 = scalar_select %p30, %s32, %s23
      %p34 = scmp.ge.s32.totalorder %s33, 1
      %s35 = scalar_select %p34, 0, %s33
      %s36 = ssub.s32 %s24, %s31
      %p37 = scmp.eq.s32.totalorder %s36, 0
      %s39 = sadd.s32 %s38, 1
      %s40 = scalar_select %p37, %s38, %s39
      %p43 = pneg %p37
      %p44 = scmp.eq.s32.totalorder %s16, 1
      %p45 = por %p43, %p44
      %p46 = scmp.ne.s32.totalorder %s38, %s41
      %p47 = scmp.eq.s32.totalorder %s16, 0
      %p48 = por %p46, %p47
      %p49 = scmp.ne.s32.totalorder %s38, %s41
      %p50 = scmp.eq.s32.totalorder %s21, 1
      %p51 = por %p49, %p50
      %p52 = scmp.ne.s32.totalorder %s41, %s42
      %p53 = scmp.eq.s32.totalorder %s21, 0
      %p54 = por %p52, %p53
      %p55 = scmp.ne.s32.totalorder %s41, %s42
      %p56 = scmp.eq.s32.totalorder %s22, 1
      %p57 = por %p55, %p56
      %p59 = scmp.ne.s32.totalorder %s42, %s58
      %p60 = scmp.eq.s32.totalorder %s22, 0
      %p61 = por %p59, %p60
      %s62 = ssub.s32 %s23, %s35
      %p63 = scmp.eq.s32.totalorder %s62, 0
      %s65 = sadd.s32 %s64, 1
      %s66 = scalar_select %p63, %s64, %s65
      %p69 = pneg %p63
      %p70 = scmp.eq.s32.totalorder %s16, 1
      %p71 = por %p69, %p70
      %p72 = scmp.ne.s32.totalorder %s64, %s67
      %p73 = scmp.eq.s32.totalorder %s16, 0
      %p74 = por %p72, %p73
      %p75 = scmp.ne.s32.totalorder %s64, %s67
      %p76 = scmp.eq.s32.totalorder %s21, 1
      %p77 = por %p75, %p76
      %p78 = scmp.ne.s32.totalorder %s67, %s68
      %p79 = scmp.eq.s32.totalorder %s21, 0
      %p80 = por %p78, %p79
      %p81 = scmp.ne.s32.totalorder %s67, %s68
      %p82 = scmp.eq.s32.totalorder %s22, 1
      %p83 = por %p81, %p82
      %p85 = scmp.ne.s32.totalorder %s68, %s84
      %p86 = scmp.eq.s32.totalorder %s22, 0
      %p87 = por %p85, %p86
      %s88 = ssub.s32 %s23, %s35
      %p89 = scmp.eq.s32.totalorder %s88, 0
      %s91 = sadd.s32 %s90, 1
      %s92 = scalar_select %p89, %s90, %s91
      %p95 = pneg %p89
      %p96 = scmp.eq.s32.totalorder %s16, 1
      %p97 = por %p95, %p96
      %p98 = scmp.ne.s32.totalorder %s90, %s93
      %p99 = scmp.eq.s32.totalorder %s16, 0
      %p100 = por %p98, %p99
      %p101 = scmp.ne.s32.totalorder %s90, %s93
      %p102 = scmp.eq.s32.totalorder %s21, 1
      %p103 = por %p101, %p102
      %p104 = scmp.ne.s32.totalorder %s93, %s94
      %p105 = scmp.eq.s32.totalorder %s21, 0
      %p106 = por %p104, %p105
      %p107 = scmp.ne.s32.totalorder %s93, %s94
      %p108 = scmp.eq.s32.totalorder %s22, 1
      %p109 = por %p107, %p108
      %p111 = scmp.ne.s32.totalorder %s94, %s110
      %p112 = scmp.eq.s32.totalorder %s22, 0
      %p113 = por %p111, %p112
      %s114 = ssub.s32 %s24, %s31
      %s115 = ssub.s32 %s23, %s35
      %s116 = sor.u32 %s114, %s115
      %p117 = scmp.eq.s32.totalorder %s116, 0
      %s119 = sadd.s32 %s118, 1
      %s120 = scalar_select %p117, %s118, %s119
      %p123 = pneg %p117
      %p124 = scmp.eq.s32.totalorder %s16, 1
      %p125 = por %p123, %p124
      %p126 = scmp.ne.s32.totalorder %s118, %s121
      %p127 = scmp.eq.s32.totalorder %s16, 0
      %p128 = por %p126, %p127
      %p129 = scmp.ne.s32.totalorder %s118, %s121
      %p130 = scmp.eq.s32.totalorder %s21, 1
      %p131 = por %p129, %p130
      %p132 = scmp.ne.s32.totalorder %s121, %s122
      %p133 = scmp.eq.s32.totalorder %s21, 0
      %p134 = por %p132, %p133
      %p135 = scmp.ne.s32.totalorder %s121, %s122
      %p136 = scmp.eq.s32.totalorder %s22, 1
      %p137 = por %p135, %p136
      %p139 = scmp.ne.s32.totalorder %s122, %s138
      %p140 = scmp.eq.s32.totalorder %s22, 0
      %p141 = por %p139, %p140
      %p142 = scmp.le.s32.totalorder 1, %s16
      %p143 = scmp.lt.s32.totalorder %s16, 3
      %p144 = pnand %p142, %p143
      %p145 = pneg %p144
      // Predicated region
      $region9: #{tpu_custom_call.1} parent=5 // pred_check
        _
      $region10: #{tpu_custom_call.1} parent=5 // pred_check_branch
        %147 = sbr.rel (%p144) target = $region12
      $region11: #{tpu_custom_call.1} parent=5 // pred_region
        %s148 = ssub.s32 %s16, 1
        // Predicated region
        $region13: #{tpu_custom_call.1} parent=11 // pred_check
          %p149 = pneg %p80
        $region14: #{tpu_custom_call.1} parent=11 // pred_check_branch
          %151 = sbr.rel (%p149) target = $region16
        $region15: #{tpu_custom_call.1} parent=11 // pred_region
          %s153 = ssub.s32 9216, 9216
          %154 = vsyncadd [#allocation6], %s153
          %s155 = smul.addr %s25, 64
          %s156 = scalar_lea.hbm %s1, %s155
          %s157 = sshll.u32 [#allocation5], 4
          %s158 = int_to_ptr.vmem [resolvable:$true] %s157
          %163 = dma.hbm_to_vmem [thread:$0]  %s156, 9216, %s158, [#allocation6], 64, 64, 4
        $region16: #{tpu_custom_call.1} parent=11 // pred_fallthru
          _
        // Predicated region
        $region17: #{tpu_custom_call.1} parent=11 // pred_check
          %p164 = pneg %p106
        $region18: #{tpu_custom_call.1} parent=11 // pred_check_branch
          %166 = sbr.rel (%p164) target = $region20
        $region19: #{tpu_custom_call.1} parent=11 // pred_region
          %p167 = scmp.lt.s32.totalorder %s25, 0
          %s168 = scalar_select %p167, %s25, 0
          %s169 = scalar_lea.vmem %s2, %s168
        $region20: #{tpu_custom_call.1} parent=11 // pred_fallthru
          _
      $region12: #{tpu_custom_call.1} parent=5 // pred_fallthru
        _
      %p170 = scmp.lt.s32.totalorder %s16, 2
      // Predicated region
      $region21: #{tpu_custom_call.1} parent=5 // pred_check
        %p171 = pneg %p170
      $region22: #{tpu_custom_call.1} parent=5 // pred_check_branch
        %173 = sbr.rel (%p171) target = $region24
      $region23: #{tpu_custom_call.1} parent=5 // pred_region
        // Predicated region
        $region25: #{tpu_custom_call.1} parent=23 // pred_check
          %p174 = pneg %p48
        $region26: #{tpu_custom_call.1} parent=23 // pred_check_branch
          %176 = sbr.rel (%p174) target = $region28
        $region27: #{tpu_custom_call.1} parent=23 // pred_region
          %s177 = sand.u32 %s38, 1
          %s178 = scalar_lea.sflag [#allocation3], %s177
          %s179 = sand.u32 %s38, 1
          %s180 = smul.addr %s179, 288
          %s181 = scalar_lea.vmem [#allocation2], %s180
          %s183 = ssub.s32 4608, 4608
          %184 = vsyncadd %s178, %s183
          %s185 = smul.addr %s24, 72
          %s186 = smul.addr %s185, 64
          %s187 = scalar_lea.hbm %s0, %s186
          %s188 = sshll.u32 %s181, 4
          %s189 = int_to_ptr.vmem [resolvable:$true] %s188
          %194 = dma.hbm_to_vmem [thread:$0]  %s187, 4608, %s189, %s178, 64, 64, 4
        $region28: #{tpu_custom_call.1} parent=23 // pred_fallthru
          _
      $region24: #{tpu_custom_call.1} parent=5 // pred_fallthru
        _
      %p195 = scmp.le.s32.totalorder 1, %s16
      %p196 = scmp.lt.s32.totalorder %s16, 3
      %p197 = pnand %p195, %p196
      %p198 = pneg %p197
      // Predicated region
      $region29: #{tpu_custom_call.1} parent=5 // pred_check
        _
      $region30: #{tpu_custom_call.1} parent=5 // pred_check_branch
        %200 = sbr.rel (%p197) target = $region32
      $region31: #{tpu_custom_call.1} parent=5 // pred_region
        %s201 = ssub.s32 %s16, 1
        %s202 = sand.u32 %s41, 1
        %s203 = scalar_lea.sflag [#allocation3], %s202
        %s204 = sand.u32 %s41, 1
        %s205 = smul.addr %s204, 288
        %s206 = scalar_lea.vmem [#allocation2], %s205
        // Predicated region
        $region33: #{tpu_custom_call.1} parent=31 // pred_check
          %p207 = pneg %p54
        $region34: #{tpu_custom_call.1} parent=31 // pred_check_branch
          %209 = sbr.rel (%p207) target = $region36
        $region35: #{tpu_custom_call.1} parent=31 // pred_region
          %210 = dma.done %s203, 4608
        $region36: #{tpu_custom_call.1} parent=31 // pred_fallthru
          _
        // Predicated region
        $region37: #{tpu_custom_call.1} parent=31 // pred_check
          %p211 = pneg %p80
        $region38: #{tpu_custom_call.1} parent=31 // pred_check_branch
          %213 = sbr.rel (%p211) target = $region40
        $region39: #{tpu_custom_call.1} parent=31 // pred_region
          %214 = dma.done [#allocation6], 9216
        $region40: #{tpu_custom_call.1} parent=31 // pred_fallthru
          _
        %s215 = sand.u32 %s41, 1
        %s216 = scalar_lea.sflag [#allocation3], %s215
        %s217 = sand.u32 %s41, 1
        %s218 = smul.addr %s217, 288
        %s219 = scalar_lea.vmem [#allocation2], %s218
        %p220 = pneg %p54
        %p221 = pneg %p51
        %p222 = pneg %p80
        %p223 = pneg %p77
        %p224 = scmp.lt.s32.totalorder %s25, 0
        %s225 = scalar_select %p224, %s25, 0
        %s226 = scalar_lea.vmem %s2, %s225
        %p227 = pneg %p106
        %p228 = pneg %p103
        %p229 = pneg %p134
        %p230 = pneg %p131
        %s231 = sand.u32 %s121, 1
        %s232 = scalar_lea.sflag [#allocation4], %s231
        %s233 = sand.u32 %s121, 1
        %s234 = smul.addr %s233, 256
        %s235 = scalar_lea.vmem [#allocation7], %s234
        %p236 = scmp.lt.s32.totalorder %s25, 0
        %s237 = scalar_select %p236, %s25, 0
        %s238 = scalar_lea.vmem %s2, %s237
        %v240 = vld [vmem:[%s206] sm:$0xf]
        %v241 = vld [vmem:[%s206 + $0x4] sm:$0xf]
        %v242 = vld [vmem:[%s206 + $0x10] sm:$0xf]
        %v243 = vld [vmem:[%s206 + $0x14] sm:$0xf]
        %v244 = vld [vmem:[%s206 + $0x20] sm:$0xf]
        %v245 = vld [vmem:[%s206 + $0x24] sm:$0xf]
        %v246 = vld [vmem:[%s206 + $0x30] sm:$0xf]
        %v247 = vld [vmem:[%s206 + $0x34] sm:$0xf]
        %v248 = vld [vmem:[%s206 + $0x40] sm:$0xf]
        %v249 = vld [vmem:[%s206 + $0x44] sm:$0xf]
        %v250 = vld [vmem:[%s206 + $0x50] sm:$0xf]
        %v251 = vld [vmem:[%s206 + $0x54] sm:$0xf]
        %v252 = vld [vmem:[%s206 + $0x60] sm:$0xf]
        %v253 = vld [vmem:[%s206 + $0x64] sm:$0xf]
        %v254 = vld [vmem:[%s206 + $0x70] sm:$0xf]
        %v255 = vld [vmem:[%s206 + $0x74] sm:$0xf]
        %v256 = vld [vmem:[%s206 + $0x80] sm:$0xf]
        %v257 = vld [vmem:[%s206 + $0x84] sm:$0xf]
        %v258 = vld [vmem:[%s206 + $0x90] sm:$0xf]
        %v259 = vld [vmem:[%s206 + $0x94] sm:$0xf]
        %v260 = vld [vmem:[%s206 + $0xa0] sm:$0xf]
        %v261 = vld [vmem:[%s206 + $0xa4] sm:$0xf]
        %v262 = vld [vmem:[%s206 + $0xb0] sm:$0xf]
        %v263 = vld [vmem:[%s206 + $0xb4] sm:$0xf]
        %v264 = vld [vmem:[%s206 + $0xc0] sm:$0xf]
        %v265 = vld [vmem:[%s206 + $0xc4] sm:$0xf]
        %v266 = vld [vmem:[%s206 + $0xd0] sm:$0xf]
        %v267 = vld [vmem:[%s206 + $0xd4] sm:$0xf]
        %v268 = vld [vmem:[%s206 + $0xe0] sm:$0xf]
        %v269 = vld [vmem:[%s206 + $0xe4] sm:$0xf]
        %v270 = vld [vmem:[%s206 + $0xf0] sm:$0xf]
        %v271 = vld [vmem:[%s206 + $0xf4] sm:$0xf]
        %v272 = vld [vmem:[#allocation5] sm:$0xf]
        %v273 = vld [vmem:[#allocation5 + $0x4] sm:$0xf]
        %v274 = vld [vmem:[#allocation5 + $0x8] sm:$0xf]
        %v275 = vld [vmem:[#allocation5 + $0xc] sm:$0xf]
        %v276 = vld [vmem:[#allocation5 + $0x10] sm:$0xf]
        %v277 = vld [vmem:[#allocation5 + $0x14] sm:$0xf]
        %v278 = vld [vmem:[#allocation5 + $0x18] sm:$0xf]
        %v279 = vld [vmem:[#allocation5 + $0x1c] sm:$0xf]
        %v280 = vld [vmem:[#allocation5 + $0x20] sm:$0xf]
        %v281 = vld [vmem:[#allocation5 + $0x24] sm:$0xf]
        %v282 = vld [vmem:[#allocation5 + $0x28] sm:$0xf]
        %v283 = vld [vmem:[#allocation5 + $0x2c] sm:$0xf]
        %v284 = vld [vmem:[#allocation5 + $0x30] sm:$0xf]
        %v285 = vld [vmem:[#allocation5 + $0x34] sm:$0xf]
        %v286 = vld [vmem:[#allocation5 + $0x38] sm:$0xf]
        %v287 = vld [vmem:[#allocation5 + $0x3c] sm:$0xf]
        %v288 = vld [vmem:[%s206 + $0x8] sm:$0x1]
        %v289 = vld [vmem:[%s206 + $0x18] sm:$0x1]
        %v290 = vld [vmem:[%s206 + $0x28] sm:$0x1]
        %v291 = vld [vmem:[%s206 + $0x38] sm:$0x1]
        %v292 = vld [vmem:[%s206 + $0x48] sm:$0x1]
        %v293 = vld [vmem:[%s206 + $0x58] sm:$0x1]
        %v294 = vld [vmem:[%s206 + $0x68] sm:$0x1]
        %v295 = vld [vmem:[%s206 + $0x78] sm:$0x1]
        %v296 = vld [vmem:[%s206 + $0x88] sm:$0x1]
        %v297 = vld [vmem:[%s206 + $0x98] sm:$0x1]
        %v298 = vld [vmem:[%s206 + $0xa8] sm:$0x1]
        %v299 = vld [vmem:[%s206 + $0xb8] sm:$0x1]
        %v300 = vld [vmem:[%s206 + $0xc8] sm:$0x1]
        %v301 = vld [vmem:[%s206 + $0xd8] sm:$0x1]
        %v302 = vld [vmem:[%s206 + $0xe8] sm:$0x1]
        %v303 = vld [vmem:[%s206 + $0xf8] sm:$0x1]
        %vm304 = vsmask.f32 3328
        %vm305 = vsmask.f32 7440
        %vm306 = vmor %vm304, %vm305
        %v308 = vshrl.u32 %v240, 16
        %v310 = vrot.slane %v308, 4
        %v311 = vshll.u32 %v240, 16
        %v313 = vrot.slane %v311, 5
        %v314 = vor.u32 %v310, %v313
        %v315 = vrot.slane %v314, 4
        %v317 = vshll.u32 %v241, 16
        %v319 = vrot.slane %v317, 5
        %v320 = vsel %vm306, %v315, %v319
        %v321 = vshrl.u32 %v241, 16
        %v323 = vrot.slane %v321, 4
        %v324 = vor.u32 %v323, %v319
        %v325 = vrot.slane %v324, 4
        %v327 = vshll.u32 %v288, 16
        %v329 = vrot.slane %v327, 5
        %v330 = vsel %vm306, %v325, %v329
        %v332 = vshrl.u32 %v242, 16
        %v334 = vrot.slane %v332, 4
        %v335 = vshll.u32 %v242, 16
        %v337 = vrot.slane %v335, 5
        %v338 = vor.u32 %v334, %v337
        %v339 = vrot.slane %v338, 4
        %v341 = vshll.u32 %v243, 16
        %v343 = vrot.slane %v341, 5
        %v344 = vsel %vm306, %v339, %v343
        %v345 = vshrl.u32 %v243, 16
        %v347 = vrot.slane %v345, 4
        %v348 = vor.u32 %v347, %v343
        %v349 = vrot.slane %v348, 4
        %v351 = vshll.u32 %v289, 16
        %v353 = vrot.slane %v351, 5
        %v354 = vsel %vm306, %v349, %v353
        %v356 = vshrl.u32 %v244, 16
        %v358 = vrot.slane %v356, 4
        %v359 = vshll.u32 %v244, 16
        %v361 = vrot.slane %v359, 5
        %v362 = vor.u32 %v358, %v361
        %v363 = vrot.slane %v362, 4
        %v365 = vshll.u32 %v245, 16
        %v367 = vrot.slane %v365, 5
        %v368 = vsel %vm306, %v363, %v367
        %v369 = vshrl.u32 %v245, 16
        %v371 = vrot.slane %v369, 4
        %v372 = vor.u32 %v371, %v367
        %v373 = vrot.slane %v372, 4
        %v375 = vshll.u32 %v290, 16
        %v377 = vrot.slane %v375, 5
        %v378 = vsel %vm306, %v373, %v377
        %v380 = vshrl.u32 %v246, 16
        %v382 = vrot.slane %v380, 4
        %v383 = vshll.u32 %v246, 16
        %v385 = vrot.slane %v383, 5
        %v386 = vor.u32 %v382, %v385
        %v387 = vrot.slane %v386, 4
        %v389 = vshll.u32 %v247, 16
        %v391 = vrot.slane %v389, 5
        %v392 = vsel %vm306, %v387, %v391
        %v393 = vshrl.u32 %v247, 16
        %v395 = vrot.slane %v393, 4
        %v396 = vor.u32 %v395, %v391
        %v397 = vrot.slane %v396, 4
        %v399 = vshll.u32 %v291, 16
        %v401 = vrot.slane %v399, 5
        %v402 = vsel %vm306, %v397, %v401
        %v404 = vshrl.u32 %v248, 16
        %v406 = vrot.slane %v404, 4
        %v407 = vshll.u32 %v248, 16
        %v409 = vrot.slane %v407, 5
        %v410 = vor.u32 %v406, %v409
        %v411 = vrot.slane %v410, 4
        %v413 = vshll.u32 %v249, 16
        %v415 = vrot.slane %v413, 5
        %v416 = vsel %vm306, %v411, %v415
        %v417 = vshrl.u32 %v249, 16
        %v419 = vrot.slane %v417, 4
        %v420 = vor.u32 %v419, %v415
        %v421 = vrot.slane %v420, 4
        %v423 = vshll.u32 %v292, 16
        %v425 = vrot.slane %v423, 5
        %v426 = vsel %vm306, %v421, %v425
        %v428 = vshrl.u32 %v250, 16
        %v430 = vrot.slane %v428, 4
        %v431 = vshll.u32 %v250, 16
        %v433 = vrot.slane %v431, 5
        %v434 = vor.u32 %v430, %v433
        %v435 = vrot.slane %v434, 4
        %v437 = vshll.u32 %v251, 16
        %v439 = vrot.slane %v437, 5
        %v440 = vsel %vm306, %v435, %v439
        %v441 = vshrl.u32 %v251, 16
        %v443 = vrot.slane %v441, 4
        %v444 = vor.u32 %v443, %v439
        %v445 = vrot.slane %v444, 4
        %v447 = vshll.u32 %v293, 16
        %v449 = vrot.slane %v447, 5
        %v450 = vsel %vm306, %v445, %v449
        %v452 = vshrl.u32 %v252, 16
        %v454 = vrot.slane %v452, 4
        %v455 = vshll.u32 %v252, 16
        %v457 = vrot.slane %v455, 5
        %v458 = vor.u32 %v454, %v457
        %v459 = vrot.slane %v458, 4
        %v461 = vshll.u32 %v253, 16
        %v463 = vrot.slane %v461, 5
        %v464 = vsel %vm306, %v459, %v463
        %v465 = vshrl.u32 %v253, 16
        %v467 = vrot.slane %v465, 4
        %v468 = vor.u32 %v467, %v463
        %v469 = vrot.slane %v468, 4
        %v471 = vshll.u32 %v294, 16
        %v473 = vrot.slane %v471, 5
        %v474 = vsel %vm306, %v469, %v473
        %v476 = vshrl.u32 %v254, 16
        %v478 = vrot.slane %v476, 4
        %v479 = vshll.u32 %v254, 16
        %v481 = vrot.slane %v479, 5
        %v482 = vor.u32 %v478, %v481
        %v483 = vrot.slane %v482, 4
        %v485 = vshll.u32 %v255, 16
        %v487 = vrot.slane %v485, 5
        %v488 = vsel %vm306, %v483, %v487
        %v489 = vshrl.u32 %v255, 16
        %v491 = vrot.slane %v489, 4
        %v492 = vor.u32 %v491, %v487
        %v493 = vrot.slane %v492, 4
        %v495 = vshll.u32 %v295, 16
        %v497 = vrot.slane %v495, 5
        %v498 = vsel %vm306, %v493, %v497
        %v500 = vshrl.u32 %v256, 16
        %v502 = vrot.slane %v500, 4
        %v503 = vshll.u32 %v256, 16
        %v505 = vrot.slane %v503, 5
        %v506 = vor.u32 %v502, %v505
        %v507 = vrot.slane %v506, 4
        %v509 = vshll.u32 %v257, 16
        %v511 = vrot.slane %v509, 5
        %v512 = vsel %vm306, %v507, %v511
        %v513 = vshrl.u32 %v257, 16
        %v515 = vrot.slane %v513, 4
        %v516 = vor.u32 %v515, %v511
        %v517 = vrot.slane %v516, 4
        %v519 = vshll.u32 %v296, 16
        %v521 = vrot.slane %v519, 5
        %v522 = vsel %vm306, %v517, %v521
        %v524 = vshrl.u32 %v258, 16
        %v526 = vrot.slane %v524, 4
        %v527 = vshll.u32 %v258, 16
        %v529 = vrot.slane %v527, 5
        %v530 = vor.u32 %v526, %v529
        %v531 = vrot.slane %v530, 4
        %v533 = vshll.u32 %v259, 16
        %v535 = vrot.slane %v533, 5
        %v536 = vsel %vm306, %v531, %v535
        %v537 = vshrl.u32 %v259, 16
        %v539 = vrot.slane %v537, 4
        %v540 = vor.u32 %v539, %v535
        %v541 = vrot.slane %v540, 4
        %v543 = vshll.u32 %v297, 16
        %v545 = vrot.slane %v543, 5
        %v546 = vsel %vm306, %v541, %v545
        %v548 = vshrl.u32 %v260, 16
        %v550 = vrot.slane %v548, 4
        %v551 = vshll.u32 %v260, 16
        %v553 = vrot.slane %v551, 5
        %v554 = vor.u32 %v550, %v553
        %v555 = vrot.slane %v554, 4
        %v557 = vshll.u32 %v261, 16
        %v559 = vrot.slane %v557, 5
        %v560 = vsel %vm306, %v555, %v559
        %v561 = vshrl.u32 %v261, 16
        %v563 = vrot.slane %v561, 4
        %v564 = vor.u32 %v563, %v559
        %v565 = vrot.slane %v564, 4
        %v567 = vshll.u32 %v298, 16
        %v569 = vrot.slane %v567, 5
        %v570 = vsel %vm306, %v565, %v569
        %v572 = vshrl.u32 %v262, 16
        %v574 = vrot.slane %v572, 4
        %v575 = vshll.u32 %v262, 16
        %v577 = vrot.slane %v575, 5
        %v578 = vor.u32 %v574, %v577
        %v579 = vrot.slane %v578, 4
        %v581 = vshll.u32 %v263, 16
        %v583 = vrot.slane %v581, 5
        %v584 = vsel %vm306, %v579, %v583
        %v585 = vshrl.u32 %v263, 16
        %v587 = vrot.slane %v585, 4
        %v588 = vor.u32 %v587, %v583
        %v589 = vrot.slane %v588, 4
        %v591 = vshll.u32 %v299, 16
        %v593 = vrot.slane %v591, 5
        %v594 = vsel %vm306, %v589, %v593
        %v596 = vshrl.u32 %v264, 16
        %v598 = vrot.slane %v596, 4
        %v599 = vshll.u32 %v264, 16
        %v601 = vrot.slane %v599, 5
        %v602 = vor.u32 %v598, %v601
        %v603 = vrot.slane %v602, 4
        %v605 = vshll.u32 %v265, 16
        %v607 = vrot.slane %v605, 5
        %v608 = vsel %vm306, %v603, %v607
        %v609 = vshrl.u32 %v265, 16
        %v611 = vrot.slane %v609, 4
        %v612 = vor.u32 %v611, %v607
        %v613 = vrot.slane %v612, 4
        %v615 = vshll.u32 %v300, 16
        %v617 = vrot.slane %v615, 5
        %v618 = vsel %vm306, %v613, %v617
        %v620 = vshrl.u32 %v266, 16
        %v622 = vrot.slane %v620, 4
        %v623 = vshll.u32 %v266, 16
        %v625 = vrot.slane %v623, 5
        %v626 = vor.u32 %v622, %v625
        %v627 = vrot.slane %v626, 4
        %v629 = vshll.u32 %v267, 16
        %v631 = vrot.slane %v629, 5
        %v632 = vsel %vm306, %v627, %v631
        %v633 = vshrl.u32 %v267, 16
        %v635 = vrot.slane %v633, 4
        %v636 = vor.u32 %v635, %v631
        %v637 = vrot.slane %v636, 4
        %v639 = vshll.u32 %v301, 16
        %v641 = vrot.slane %v639, 5
        %v642 = vsel %vm306, %v637, %v641
        %v644 = vshrl.u32 %v268, 16
        %v646 = vrot.slane %v644, 4
        %v647 = vshll.u32 %v268, 16
        %v649 = vrot.slane %v647, 5
        %v650 = vor.u32 %v646, %v649
        %v651 = vrot.slane %v650, 4
        %v653 = vshll.u32 %v269, 16
        %v655 = vrot.slane %v653, 5
        %v656 = vsel %vm306, %v651, %v655
        %v657 = vshrl.u32 %v269, 16
        %v659 = vrot.slane %v657, 4
        %v660 = vor.u32 %v659, %v655
        %v661 = vrot.slane %v660, 4
        %v663 = vshll.u32 %v302, 16
        %v665 = vrot.slane %v663, 5
        %v666 = vsel %vm306, %v661, %v665
        %v668 = vshrl.u32 %v270, 16
        %v670 = vrot.slane %v668, 4
        %v671 = vshll.u32 %v270, 16
        %v673 = vrot.slane %v671, 5
        %v674 = vor.u32 %v670, %v673
        %v675 = vrot.slane %v674, 4
        %v677 = vshll.u32 %v271, 16
        %v679 = vrot.slane %v677, 5
        %v680 = vsel %vm306, %v675, %v679
        %v681 = vshrl.u32 %v271, 16
        %v683 = vrot.slane %v681, 4
        %v684 = vor.u32 %v683, %v679
        %v685 = vrot.slane %v684, 4
        %v687 = vshll.u32 %v303, 16
        %v689 = vrot.slane %v687, 5
        %v690 = vsel %vm306, %v685, %v689
        %s691 = scalar_lea.vmem [#allocation5], 64
        %v692 = vld [vmem:[%s691] sm:$0xf]
        %v693 = vld [vmem:[%s691 + $0x4] sm:$0xf]
        %v694 = vld [vmem:[%s691 + $0x8] sm:$0xf]
        %v695 = vld [vmem:[%s691 + $0xc] sm:$0xf]
        %v696 = vld [vmem:[%s691 + $0x10] sm:$0xf]
        %v697 = vld [vmem:[%s691 + $0x14] sm:$0xf]
        %v698 = vld [vmem:[%s691 + $0x18] sm:$0xf]
        %v699 = vld [vmem:[%s691 + $0x1c] sm:$0xf]
        %v700 = vld [vmem:[%s691 + $0x20] sm:$0xf]
        %v701 = vld [vmem:[%s691 + $0x24] sm:$0xf]
        %v702 = vld [vmem:[%s691 + $0x28] sm:$0xf]
        %v703 = vld [vmem:[%s691 + $0x2c] sm:$0xf]
        %v704 = vld [vmem:[%s691 + $0x30] sm:$0xf]
        %v705 = vld [vmem:[%s691 + $0x34] sm:$0xf]
        %v706 = vld [vmem:[%s691 + $0x38] sm:$0xf]
        %v707 = vld [vmem:[%s691 + $0x3c] sm:$0xf]
        %v708 = vunpack.c.l.b16 %v320
        %v709 = vunpack.c.l.b16 %v330
        %v710 = vunpack.c.l.b16 %v344
        %v711 = vunpack.c.l.b16 %v354
        %v712 = vunpack.c.l.b16 %v368
        %v713 = vunpack.c.l.b16 %v378
        %v714 = vunpack.c.l.b16 %v392
        %v715 = vunpack.c.l.b16 %v402
        %v716 = vunpack.c.l.b16 %v416
        %v717 = vunpack.c.l.b16 %v426
        %v718 = vunpack.c.l.b16 %v440
        %v719 = vunpack.c.l.b16 %v450
        %v720 = vunpack.c.l.b16 %v464
        %v721 = vunpack.c.l.b16 %v474
        %v722 = vunpack.c.l.b16 %v488
        %v723 = vunpack.c.l.b16 %v498
        %v724 = vunpack.c.l.b16 %v512
        %v725 = vunpack.c.l.b16 %v522
        %v726 = vunpack.c.l.b16 %v536
        %v727 = vunpack.c.l.b16 %v546
        %v728 = vunpack.c.l.b16 %v560
        %v729 = vunpack.c.l.b16 %v570
        %v730 = vunpack.c.l.b16 %v584
        %v731 = vunpack.c.l.b16 %v594
        %v732 = vunpack.c.l.b16 %v608
        %v733 = vunpack.c.l.b16 %v618
        %v734 = vunpack.c.l.b16 %v632
        %v735 = vunpack.c.l.b16 %v642
        %v736 = vunpack.c.l.b16 %v656
        %v737 = vunpack.c.l.b16 %v666
        %v738 = vunpack.c.l.b16 %v680
        %v739 = vunpack.c.l.b16 %v690
        %v740 = vpack.c.b16 %v709, %v708
        %v741 = vpack.c.b16 %v711, %v710
        %v742 = vpack.c.b16 %v713, %v712
        %v743 = vpack.c.b16 %v715, %v714
        %v744 = vpack.c.b16 %v717, %v716
        %v745 = vpack.c.b16 %v719, %v718
        %v746 = vpack.c.b16 %v721, %v720
        %v747 = vpack.c.b16 %v723, %v722
        %v748 = vpack.c.b16 %v725, %v724
        %v749 = vpack.c.b16 %v727, %v726
        %v750 = vpack.c.b16 %v729, %v728
        %v751 = vpack.c.b16 %v731, %v730
        %v752 = vpack.c.b16 %v733, %v732
        %v753 = vpack.c.b16 %v735, %v734
        %v754 = vpack.c.b16 %v737, %v736
        %v755 = vpack.c.b16 %v739, %v738
        %v788 = vunpack.c.l.b16 %v692
        %v789 = vunpack.c.l.b16 %v693
        %v790 = vunpack.c.l.b16 %v694
        %v791 = vunpack.c.l.b16 %v695
        %v792 = vunpack.c.l.b16 %v696
        %v793 = vunpack.c.l.b16 %v697
        %v794 = vunpack.c.l.b16 %v698
        %v795 = vunpack.c.l.b16 %v699
        %v796 = vunpack.c.l.b16 %v700
        %v797 = vunpack.c.l.b16 %v701
        %v798 = vunpack.c.l.b16 %v702
        %v799 = vunpack.c.l.b16 %v703
        %v800 = vunpack.c.l.b16 %v704
        %v801 = vunpack.c.l.b16 %v705
        %v802 = vunpack.c.l.b16 %v706
        %v803 = vunpack.c.l.b16 %v707
        %v804 = vpack.c.b16 %v789, %v788
        %v805 = vpack.c.b16 %v791, %v790
        %v806 = vpack.c.b16 %v793, %v792
        %v807 = vpack.c.b16 %v795, %v794
        %v808 = vpack.c.b16 %v797, %v796
        %v809 = vpack.c.b16 %v799, %v798
        %v810 = vpack.c.b16 %v801, %v800
        %v811 = vpack.c.b16 %v803, %v802
        %820 = vmatprep.subr.bf16.mxu0 0
        %821 = vmatpush1.bf16.msra.mxu0 %v804
        %822 = vmatprep.subr.bf16.mxu0 0
        %823 = vmatpush1.bf16.msra.mxu0 %v805
        %824 = vmatprep.subr.bf16.mxu0 0
        %825 = vmatpush1.bf16.msra.mxu0 %v806
        %826 = vmatprep.subr.bf16.mxu0 0
        %827 = vmatpush1.bf16.msra.mxu0 %v807
        %828 = vmatprep.subr.bf16.mxu0 0
        %829 = vmatpush1.bf16.msra.mxu0 %v808
        %830 = vmatprep.subr.bf16.mxu0 0
        %831 = vmatpush1.bf16.msra.mxu0 %v809
        %832 = vmatprep.subr.bf16.mxu0 0
        %833 = vmatpush1.bf16.msra.mxu0 %v810
        %834 = vmatprep.subr.bf16.mxu0 0
        %835 = vmatpush1.bf16.msra.mxu0 %v811
        %836 = vmatprep.subr.bf16.mxu0 0
        %837 = vmatpush1.bf16.msra.mxu0 0
        %838 = vmatprep.subr.bf16.mxu0 0
        %839 = vmatpush1.bf16.msra.mxu0 0
        %840 = vmatprep.subr.bf16.mxu0 0
        %841 = vmatpush1.bf16.msra.mxu0 0
        %842 = vmatprep.subr.bf16.mxu0 0
        %843 = vmatpush1.bf16.msra.mxu0 0
        %844 = vmatprep.subr.bf16.mxu0 0
        %845 = vmatpush1.bf16.msra.mxu0 0
        %846 = vmatprep.subr.bf16.mxu0 0
        %847 = vmatpush1.bf16.msra.mxu0 0
        %848 = vmatprep.subr.bf16.mxu0 0
        %849 = vmatpush1.bf16.msra.mxu0 0
        %850 = vmatprep.subr.bf16.mxu0 0
        %851 = vmatpush1.bf16.msra.mxu0 0
        %852 = vmatprep.mubr.bf16.mxu0 0
        %853 = vmatmul.mubr.bf16.gmra.mrb[0].mxu0 %v740
        %v854 = vpop.f32.mrb[0].mxu0
        %v855 = vadd.f32 0.0, %v854
        %v856 = vpop.f32.mrb[0].mxu0
        %v857 = vpop.f32.mrb[0].mxu0
        %v858 = vadd.f32 0.0, %v857
        %v859 = vpop.f32.mrb[0].mxu0
        %860 = vmatprep.mubr.bf16.mxu0 0
        %861 = vmatmul.mubr.bf16.gmra.mrb[0].mxu0 %v741
        %v862 = vpop.f32.mrb[0].mxu0
        %v863 = vadd.f32 0.0, %v862
        %v864 = vpop.f32.mrb[0].mxu0
        %v865 = vpop.f32.mrb[0].mxu0
        %v866 = vadd.f32 0.0, %v865
        %v867 = vpop.f32.mrb[0].mxu0
        %868 = vmatprep.mubr.bf16.mxu0 0
        %869 = vmatmul.mubr.bf16.gmra.mrb[0].mxu0 %v742
        %v870 = vpop.f32.mrb[0].mxu0
        %v871 = vadd.f32 0.0, %v870
        %v872 = vpop.f32.mrb[0].mxu0
        %v873 = vpop.f32.mrb[0].mxu0
        %v874 = vadd.f32 0.0, %v873
        %v875 = vpop.f32.mrb[0].mxu0
        %876 = vmatprep.mubr.bf16.mxu0 0
        %877 = vmatmul.mubr.bf16.gmra.mrb[0].mxu0 %v743
        %v878 = vpop.f32.mrb[0].mxu0
        %v879 = vadd.f32 0.0, %v878
        %v880 = vpop.f32.mrb[0].mxu0
        %v881 = vpop.f32.mrb[0].mxu0
        %v882 = vadd.f32 0.0, %v881
        %v883 = vpop.f32.mrb[0].mxu0
        %884 = vmatprep.mubr.bf16.mxu0 0
        %885 = vmatmul.mubr.bf16.gmra.mrb[0].mxu0 %v744
        %v886 = vpop.f32.mrb[0].mxu0
        %v887 = vadd.f32 0.0, %v886
        %v888 = vpop.f32.mrb[0].mxu0
        %v889 = vpop.f32.mrb[0].mxu0
        %v890 = vadd.f32 0.0, %v889
        %v891 = vpop.f32.mrb[0].mxu0
        %892 = vmatprep.mubr.bf16.mxu0 0
        %893 = vmatmul.mubr.bf16.gmra.mrb[0].mxu0 %v745
        %v894 = vpop.f32.mrb[0].mxu0
        %v895 = vadd.f32 0.0, %v894
        %v896 = vpop.f32.mrb[0].mxu0
        %v897 = vpop.f32.mrb[0].mxu0
        %v898 = vadd.f32 0.0, %v897
        %v899 = vpop.f32.mrb[0].mxu0
        %900 = vmatprep.mubr.bf16.mxu0 0
        %901 = vmatmul.mubr.bf16.gmra.mrb[0].mxu0 %v746
        %v902 = vpop.f32.mrb[0].mxu0
        %v903 = vadd.f32 0.0, %v902
        %v904 = vpop.f32.mrb[0].mxu0
        %v905 = vpop.f32.mrb[0].mxu0
        %v906 = vadd.f32 0.0, %v905
        %v907 = vpop.f32.mrb[0].mxu0
        %908 = vmatprep.mubr.bf16.mxu0 0
        %909 = vmatmul.mubr.bf16.gmra.mrb[0].mxu0 %v747
        %v910 = vpop.f32.mrb[0].mxu0
        %v911 = vadd.f32 0.0, %v910
        %v912 = vpop.f32.mrb[0].mxu0
        %v913 = vpop.f32.mrb[0].mxu0
        %v914 = vadd.f32 0.0, %v913
        %v915 = vpop.f32.mrb[0].mxu0
        %916 = vmatprep.mubr.bf16.mxu0 0
        %917 = vmatmul.mubr.bf16.gmra.mrb[0].mxu0 %v748
        %v918 = vpop.f32.mrb[0].mxu0
        %v919 = vadd.f32 0.0, %v918
        %v920 = vpop.f32.mrb[0].mxu0
        %v921 = vpop.f32.mrb[0].mxu0
        %v922 = vadd.f32 0.0, %v921
        %v923 = vpop.f32.mrb[0].mxu0
        %924 = vmatprep.mubr.bf16.mxu0 0
        %925 = vmatmul.mubr.bf16.gmra.mrb[0].mxu0 %v749
        %v926 = vpop.f32.mrb[0].mxu0
        %v927 = vadd.f32 0.0, %v926
        %v928 = vpop.f32.mrb[0].mxu0
        %v929 = vpop.f32.mrb[0].mxu0
        %v930 = vadd.f32 0.0, %v929
        %v931 = vpop.f32.mrb[0].mxu0
        %932 = vmatprep.mubr.bf16.mxu0 0
        %933 = vmatmul.mubr.bf16.gmra.mrb[0].mxu0 %v750
        %v934 = vpop.f32.mrb[0].mxu0
        %v935 = vadd.f32 0.0, %v934
        %v936 = vpop.f32.mrb[0].mxu0
        %v937 = vpop.f32.mrb[0].mxu0
        %v938 = vadd.f32 0.0, %v937
        %v939 = vpop.f32.mrb[0].mxu0
        %940 = vmatprep.mubr.bf16.mxu0 0
        %941 = vmatmul.mubr.bf16.gmra.mrb[0].mxu0 %v751
        %v942 = vpop.f32.mrb[0].mxu0
        %v943 = vadd.f32 0.0, %v942
        %v944 = vpop.f32.mrb[0].mxu0
        %v945 = vpop.f32.mrb[0].mxu0
        %v946 = vadd.f32 0.0, %v945
        %v947 = vpop.f32.mrb[0].mxu0
        %948 = vmatprep.mubr.bf16.mxu0 0
        %949 = vmatmul.mubr.bf16.gmra.mrb[0].mxu0 %v752
        %v950 = vpop.f32.mrb[0].mxu0
        %v951 = vadd.f32 0.0, %v950
        %v952 = vpop.f32.mrb[0].mxu0
        %v953 = vpop.f32.mrb[0].mxu0
        %v954 = vadd.f32 0.0, %v953
        %v955 = vpop.f32.mrb[0].mxu0
        %956 = vmatprep.mubr.bf16.mxu0 0
        %957 = vmatmul.mubr.bf16.gmra.mrb[0].mxu0 %v753
        %v958 = vpop.f32.mrb[0].mxu0
        %v959 = vadd.f32 0.0, %v958
        %v960 = vpop.f32.mrb[0].mxu0
        %v961 = vpop.f32.mrb[0].mxu0
        %v962 = vadd.f32 0.0, %v961
        %v963 = vpop.f32.mrb[0].mxu0
        %964 = vmatprep.mubr.bf16.mxu0 0
        %965 = vmatmul.mubr.bf16.gmra.mrb[0].mxu0 %v754
        %v966 = vpop.f32.mrb[0].mxu0
        %v967 = vadd.f32 0.0, %v966
        %v968 = vpop.f32.mrb[0].mxu0
        %v969 = vpop.f32.mrb[0].mxu0
        %v970 = vadd.f32 0.0, %v969
        %v971 = vpop.f32.mrb[0].mxu0
        %972 = vmatprep.mubr.bf16.mxu0 0
        %973 = vmatmul.mubr.bf16.gmra.mrb[0].mxu0 %v755
        %v974 = vpop.f32.mrb[0].mxu0
        %v975 = vadd.f32 0.0, %v974
        %v976 = vpop.f32.mrb[0].mxu0
        %v977 = vpop.f32.mrb[0].mxu0
        %v978 = vadd.f32 0.0, %v977
        %v979 = vpop.f32.mrb[0].mxu0
        %980 = vdwg.mxu0
        %v1013 = vunpack.c.l.b16 %v240
        %v1014 = vunpack.c.l.b16 %v241
        %v1015 = vunpack.c.l.b16 %v242
        %v1016 = vunpack.c.l.b16 %v243
        %v1017 = vunpack.c.l.b16 %v244
        %v1018 = vunpack.c.l.b16 %v245
        %v1019 = vunpack.c.l.b16 %v246
        %v1020 = vunpack.c.l.b16 %v247
        %v1021 = vunpack.c.l.b16 %v248
        %v1022 = vunpack.c.l.b16 %v249
        %v1023 = vunpack.c.l.b16 %v250
        %v1024 = vunpack.c.l.b16 %v251
        %v1025 = vunpack.c.l.b16 %v252
        %v1026 = vunpack.c.l.b16 %v253
        %v1027 = vunpack.c.l.b16 %v254
        %v1028 = vunpack.c.l.b16 %v255
        %v1029 = vunpack.c.l.b16 %v256
        %v1030 = vunpack.c.l.b16 %v257
        %v1031 = vunpack.c.l.b16 %v258
        %v1032 = vunpack.c.l.b16 %v259
        %v1033 = vunpack.c.l.b16 %v260
        %v1034 = vunpack.c.l.b16 %v261
        %v1035 = vunpack.c.l.b16 %v262
        %v1036 = vunpack.c.l.b16 %v263
        %v1037 = vunpack.c.l.b16 %v264
        %v1038 = vunpack.c.l.b16 %v265
        %v1039 = vunpack.c.l.b16 %v266
        %v1040 = vunpack.c.l.b16 %v267
        %v1041 = vunpack.c.l.b16 %v268
        %v1042 = vunpack.c.l.b16 %v269
        %v1043 = vunpack.c.l.b16 %v270
        %v1044 = vunpack.c.l.b16 %v271
        %v1045 = vpack.c.b16 %v1014, %v1013
        %v1046 = vpack.c.b16 %v1016, %v1015
        %v1047 = vpack.c.b16 %v1018, %v1017
        %v1048 = vpack.c.b16 %v1020, %v1019
        %v1049 = vpack.c.b16 %v1022, %v1021
        %v1050 = vpack.c.b16 %v1024, %v1023
        %v1051 = vpack.c.b16 %v1026, %v1025
        %v1052 = vpack.c.b16 %v1028, %v1027
        %v1053 = vpack.c.b16 %v1030, %v1029
        %v1054 = vpack.c.b16 %v1032, %v1031
        %v1055 = vpack.c.b16 %v1034, %v1033
        %v1056 = vpack.c.b16 %v1036, %v1035
        %v1057 = vpack.c.b16 %v1038, %v1037
        %v1058 = vpack.c.b16 %v1040, %v1039
        %v1059 = vpack.c.b16 %v1042, %v1041
        %v1060 = vpack.c.b16 %v1044, %v1043
        %v1093 = vunpack.c.l.b16 %v272
        %v1094 = vunpack.c.l.b16 %v273
        %v1095 = vunpack.c.l.b16 %v274
        %v1096 = vunpack.c.l.b16 %v275
        %v1097 = vunpack.c.l.b16 %v276
        %v1098 = vunpack.c.l.b16 %v277
        %v1099 = vunpack.c.l.b16 %v278
        %v1100 = vunpack.c.l.b16 %v279
        %v1101 = vunpack.c.l.b16 %v280
        %v1102 = vunpack.c.l.b16 %v281
        %v1103 = vunpack.c.l.b16 %v282
        %v1104 = vunpack.c.l.b16 %v283
        %v1105 = vunpack.c.l.b16 %v284
        %v1106 = vunpack.c.l.b16 %v285
        %v1107 = vunpack.c.l.b16 %v286
        %v1108 = vunpack.c.l.b16 %v287
        %v1109 = vpack.c.b16 %v1094, %v1093
        %v1110 = vpack.c.b16 %v1096, %v1095
        %v1111 = vpack.c.b16 %v1098, %v1097
        %v1112 = vpack.c.b16 %v1100, %v1099
        %v1113 = vpack.c.b16 %v1102, %v1101
        %v1114 = vpack.c.b16 %v1104, %v1103
        %v1115 = vpack.c.b16 %v1106, %v1105
        %v1116 = vpack.c.b16 %v1108, %v1107
        %1125 = vmatprep.subr.bf16.mxu0 0
        %1126 = vmatpush1.bf16.msra.mxu0 %v1109
        %1127 = vmatprep.subr.bf16.mxu0 0
        %1128 = vmatpush1.bf16.msra.mxu0 %v1110
        %1129 = vmatprep.subr.bf16.mxu0 0
        %1130 = vmatpush1.bf16.msra.mxu0 %v1111
        %1131 = vmatprep.subr.bf16.mxu0 0
        %1132 = vmatpush1.bf16.msra.mxu0 %v1112
        %1133 = vmatprep.subr.bf16.mxu0 0
        %1134 = vmatpush1.bf16.msra.mxu0 %v1113
        %1135 = vmatprep.subr.bf16.mxu0 0
        %1136 = vmatpush1.bf16.msra.mxu0 %v1114
        %1137 = vmatprep.subr.bf16.mxu0 0
        %1138 = vmatpush1.bf16.msra.mxu0 %v1115
        %1139 = vmatprep.subr.bf16.mxu0 0
        %1140 = vmatpush1.bf16.msra.mxu0 %v1116
        %1141 = vmatprep.subr.bf16.mxu0 0
        %1142 = vmatpush1.bf16.msra.mxu0 0
        %1143 = vmatprep.subr.bf16.mxu0 0
        %1144 = vmatpush1.bf16.msra.mxu0 0
        %1145 = vmatprep.subr.bf16.mxu0 0
        %1146 = vmatpush1.bf16.msra.mxu0 0
        %1147 = vmatprep.subr.bf16.mxu0 0
        %1148 = vmatpush1.bf16.msra.mxu0 0
        %1149 = vmatprep.subr.bf16.mxu0 0
        %1150 = vmatpush1.bf16.msra.mxu0 0
        %1151 = vmatprep.subr.bf16.mxu0 0
        %1152 = vmatpush1.bf16.msra.mxu0 0
        %1153 = vmatprep.subr.bf16.mxu0 0
        %1154 = vmatpush1.bf16.msra.mxu0 0
        %1155 = vmatprep.subr.bf16.mxu0 0
        %1156 = vmatpush1.bf16.msra.mxu0 0
        %1157 = vmatprep.mubr.bf16.mxu0 0
        %1158 = vmatmul.mubr.bf16.gmra.mrb[0].mxu0 %v1045
        %v1159 = vpop.f32.mrb[0].mxu0
        %v1160 = vadd.f32 %v855, %v1159
        %v1161 = vpop.f32.mrb[0].mxu0
        %v1162 = vpop.f32.mrb[0].mxu0
        %v1163 = vadd.f32 %v858, %v1162
        %v1164 = vpop.f32.mrb[0].mxu0
        %1165 = vmatprep.mubr.bf16.mxu0 0
        %1166 = vmatmul.mubr.bf16.gmra.mrb[0].mxu0 %v1046
        %v1167 = vpop.f32.mrb[0].mxu0
        %v1168 = vadd.f32 %v863, %v1167
        %v1169 = vpop.f32.mrb[0].mxu0
        %v1170 = vpop.f32.mrb[0].mxu0
        %v1171 = vadd.f32 %v866, %v1170
        %v1172 = vpop.f32.mrb[0].mxu0
        %1173 = vmatprep.mubr.bf16.mxu0 0
        %1174 = vmatmul.mubr.bf16.gmra.mrb[0].mxu0 %v1047
        %v1175 = vpop.f32.mrb[0].mxu0
        %v1176 = vadd.f32 %v871, %v1175
        %v1177 = vpop.f32.mrb[0].mxu0
        %v1178 = vpop.f32.mrb[0].mxu0
        %v1179 = vadd.f32 %v874, %v1178
        %v1180 = vpop.f32.mrb[0].mxu0
        %1181 = vmatprep.mubr.bf16.mxu0 0
        %1182 = vmatmul.mubr.bf16.gmra.mrb[0].mxu0 %v1048
        %v1183 = vpop.f32.mrb[0].mxu0
        %v1184 = vadd.f32 %v879, %v1183
        %v1185 = vpop.f32.mrb[0].mxu0
        %v1186 = vpop.f32.mrb[0].mxu0
        %v1187 = vadd.f32 %v882, %v1186
        %v1188 = vpop.f32.mrb[0].mxu0
        %1189 = vmatprep.mubr.bf16.mxu0 0
        %1190 = vmatmul.mubr.bf16.gmra.mrb[0].mxu0 %v1049
        %v1191 = vpop.f32.mrb[0].mxu0
        %v1192 = vadd.f32 %v887, %v1191
        %v1193 = vpop.f32.mrb[0].mxu0
        %v1194 = vpop.f32.mrb[0].mxu0
        %v1195 = vadd.f32 %v890, %v1194
        %v1196 = vpop.f32.mrb[0].mxu0
        %1197 = vmatprep.mubr.bf16.mxu0 0
        %1198 = vmatmul.mubr.bf16.gmra.mrb[0].mxu0 %v1050
        %v1199 = vpop.f32.mrb[0].mxu0
        %v1200 = vadd.f32 %v895, %v1199
        %v1201 = vpop.f32.mrb[0].mxu0
        %v1202 = vpop.f32.mrb[0].mxu0
        %v1203 = vadd.f32 %v898, %v1202
        %v1204 = vpop.f32.mrb[0].mxu0
        %1205 = vmatprep.mubr.bf16.mxu0 0
        %1206 = vmatmul.mubr.bf16.gmra.mrb[0].mxu0 %v1051
        %v1207 = vpop.f32.mrb[0].mxu0
        %v1208 = vadd.f32 %v903, %v1207
        %v1209 = vpop.f32.mrb[0].mxu0
        %v1210 = vpop.f32.mrb[0].mxu0
        %v1211 = vadd.f32 %v906, %v1210
        %v1212 = vpop.f32.mrb[0].mxu0
        %1213 = vmatprep.mubr.bf16.mxu0 0
        %1214 = vmatmul.mubr.bf16.gmra.mrb[0].mxu0 %v1052
        %v1215 = vpop.f32.mrb[0].mxu0
        %v1216 = vadd.f32 %v911, %v1215
        %v1217 = vpop.f32.mrb[0].mxu0
        %v1218 = vpop.f32.mrb[0].mxu0
        %v1219 = vadd.f32 %v914, %v1218
        %v1220 = vpop.f32.mrb[0].mxu0
        %1221 = vmatprep.mubr.bf16.mxu0 0
        %1222 = vmatmul.mubr.bf16.gmra.mrb[0].mxu0 %v1053
        %v1223 = vpop.f32.mrb[0].mxu0
        %v1224 = vadd.f32 %v919, %v1223
        %v1225 = vpop.f32.mrb[0].mxu0
        %v1226 = vpop.f32.mrb[0].mxu0
        %v1227 = vadd.f32 %v922, %v1226
        %v1228 = vpop.f32.mrb[0].mxu0
        %1229 = vmatprep.mubr.bf16.mxu0 0
        %1230 = vmatmul.mubr.bf16.gmra.mrb[0].mxu0 %v1054
        %v1231 = vpop.f32.mrb[0].mxu0
        %v1232 = vadd.f32 %v927, %v1231
        %v1233 = vpop.f32.mrb[0].mxu0
        %v1234 = vpop.f32.mrb[0].mxu0
        %v1235 = vadd.f32 %v930, %v1234
        %v1236 = vpop.f32.mrb[0].mxu0
        %1237 = vmatprep.mubr.bf16.mxu0 0
        %1238 = vmatmul.mubr.bf16.gmra.mrb[0].mxu0 %v1055
        %v1239 = vpop.f32.mrb[0].mxu0
        %v1240 = vadd.f32 %v935, %v1239
        %v1241 = vpop.f32.mrb[0].mxu0
        %v1242 = vpop.f32.mrb[0].mxu0
        %v1243 = vadd.f32 %v938, %v1242
        %v1244 = vpop.f32.mrb[0].mxu0
        %1245 = vmatprep.mubr.bf16.mxu0 0
        %1246 = vmatmul.mubr.bf16.gmra.mrb[0].mxu0 %v1056
        %v1247 = vpop.f32.mrb[0].mxu0
        %v1248 = vadd.f32 %v943, %v1247
        %v1249 = vpop.f32.mrb[0].mxu0
        %v1250 = vpop.f32.mrb[0].mxu0
        %v1251 = vadd.f32 %v946, %v1250
        %v1252 = vpop.f32.mrb[0].mxu0
        %1253 = vmatprep.mubr.bf16.mxu0 0
        %1254 = vmatmul.mubr.bf16.gmra.mrb[0].mxu0 %v1057
        %v1255 = vpop.f32.mrb[0].mxu0
        %v1256 = vadd.f32 %v951, %v1255
        %v1257 = vpop.f32.mrb[0].mxu0
        %v1258 = vpop.f32.mrb[0].mxu0
        %v1259 = vadd.f32 %v954, %v1258
        %v1260 = vpop.f32.mrb[0].mxu0
        %1261 = vmatprep.mubr.bf16.mxu0 0
        %1262 = vmatmul.mubr.bf16.gmra.mrb[0].mxu0 %v1058
        %v1263 = vpop.f32.mrb[0].mxu0
        %v1264 = vadd.f32 %v959, %v1263
        %v1265 = vpop.f32.mrb[0].mxu0
        %v1266 = vpop.f32.mrb[0].mxu0
        %v1267 = vadd.f32 %v962, %v1266
        %v1268 = vpop.f32.mrb[0].mxu0
        %1269 = vmatprep.mubr.bf16.mxu0 0
        %1270 = vmatmul.mubr.bf16.gmra.mrb[0].mxu0 %v1059
        %v1271 = vpop.f32.mrb[0].mxu0
        %v1272 = vadd.f32 %v967, %v1271
        %v1273 = vpop.f32.mrb[0].mxu0
        %v1274 = vpop.f32.mrb[0].mxu0
        %v1275 = vadd.f32 %v970, %v1274
        %v1276 = vpop.f32.mrb[0].mxu0
        %1277 = vmatprep.mubr.bf16.mxu0 0
        %1278 = vmatmul.mubr.bf16.gmra.mrb[0].mxu0 %v1060
        %v1279 = vpop.f32.mrb[0].mxu0
        %v1280 = vadd.f32 %v975, %v1279
        %v1281 = vpop.f32.mrb[0].mxu0
        %v1282 = vpop.f32.mrb[0].mxu0
        %v1283 = vadd.f32 %v978, %v1282
        %v1284 = vpop.f32.mrb[0].mxu0
        %1285 = vdwg.mxu0
        %v1286 = vld [vmem:[%s206] sm:$0xe]
        %v1287 = vld [vmem:[%s206 + $0x10] sm:$0xe]
        %v1288 = vld [vmem:[%s206 + $0x20] sm:$0xe]
        %v1289 = vld [vmem:[%s206 + $0x30] sm:$0xe]
        %v1290 = vld [vmem:[%s206 + $0x40] sm:$0xe]
        %v1291 = vld [vmem:[%s206 + $0x50] sm:$0xe]
        %v1292 = vld [vmem:[%s206 + $0x60] sm:$0xe]
        %v1293 = vld [vmem:[%s206 + $0x70] sm:$0xe]
        %v1294 = vld [vmem:[%s206 + $0x80] sm:$0xe]
        %v1295 = vld [vmem:[%s206 + $0x90] sm:$0xe]
        %v1296 = vld [vmem:[%s206 + $0xa0] sm:$0xe]
        %v1297 = vld [vmem:[%s206 + $0xb0] sm:$0xe]
        %v1298 = vld [vmem:[%s206 + $0xc0] sm:$0xe]
        %v1299 = vld [vmem:[%s206 + $0xd0] sm:$0xe]
        %v1300 = vld [vmem:[%s206 + $0xe0] sm:$0xe]
        %v1301 = vld [vmem:[%s206 + $0xf0] sm:$0xe]
        %vm1334 = vcmask 1042432
        %vm1335 = vcmask 1046532
        %vm1336 = vmor %vm1334, %vm1335
        %v1337 = vrot.slane %v1286, 5
        %v1338 = vrot.slane %v1337, 4
        %v1339 = vrot.slane %v241, 5
        %v1340 = vsel %vm1336, %v1338, %v1339
        %v1341 = vrot.slane %v1339, 4
        %v1342 = vrot.slane %v288, 5
        %v1343 = vsel %vm1336, %v1341, %v1342
        %v1344 = vrot.slane %v1287, 5
        %v1345 = vrot.slane %v1344, 4
        %v1346 = vrot.slane %v243, 5
        %v1347 = vsel %vm1336, %v1345, %v1346
        %v1348 = vrot.slane %v1346, 4
        %v1349 = vrot.slane %v289, 5
        %v1350 = vsel %vm1336, %v1348, %v1349
        %v1351 = vrot.slane %v1288, 5
        %v1352 = vrot.slane %v1351, 4
        %v1353 = vrot.slane %v245, 5
        %v1354 = vsel %vm1336, %v1352, %v1353
        %v1355 = vrot.slane %v1353, 4
        %v1356 = vrot.slane %v290, 5
        %v1357 = vsel %vm1336, %v1355, %v1356
        %v1358 = vrot.slane %v1289, 5
        %v1359 = vrot.slane %v1358, 4
        %v1360 = vrot.slane %v247, 5
        %v1361 = vsel %vm1336, %v1359, %v1360
        %v1362 = vrot.slane %v1360, 4
        %v1363 = vrot.slane %v291, 5
        %v1364 = vsel %vm1336, %v1362, %v1363
        %v1365 = vrot.slane %v1290, 5
        %v1366 = vrot.slane %v1365, 4
        %v1367 = vrot.slane %v249, 5
        %v1368 = vsel %vm1336, %v1366, %v1367
        %v1369 = vrot.slane %v1367, 4
        %v1370 = vrot.slane %v292, 5
        %v1371 = vsel %vm1336, %v1369, %v1370
        %v1372 = vrot.slane %v1291, 5
        %v1373 = vrot.slane %v1372, 4
        %v1374 = vrot.slane %v251, 5
        %v1375 = vsel %vm1336, %v1373, %v1374
        %v1376 = vrot.slane %v1374, 4
        %v1377 = vrot.slane %v293, 5
        %v1378 = vsel %vm1336, %v1376, %v1377
        %v1379 = vrot.slane %v1292, 5
        %v1380 = vrot.slane %v1379, 4
        %v1381 = vrot.slane %v253, 5
        %v1382 = vsel %vm1336, %v1380, %v1381
        %v1383 = vrot.slane %v1381, 4
        %v1384 = vrot.slane %v294, 5
        %v1385 = vsel %vm1336, %v1383, %v1384
        %v1386 = vrot.slane %v1293, 5
        %v1387 = vrot.slane %v1386, 4
        %v1388 = vrot.slane %v255, 5
        %v1389 = vsel %vm1336, %v1387, %v1388
        %v1390 = vrot.slane %v1388, 4
        %v1391 = vrot.slane %v295, 5
        %v1392 = vsel %vm1336, %v1390, %v1391
        %v1393 = vrot.slane %v1294, 5
        %v1394 = vrot.slane %v1393, 4
        %v1395 = vrot.slane %v257, 5
        %v1396 = vsel %vm1336, %v1394, %v1395
        %v1397 = vrot.slane %v1395, 4
        %v1398 = vrot.slane %v296, 5
        %v1399 = vsel %vm1336, %v1397, %v1398
        %v1400 = vrot.slane %v1295, 5
        %v1401 = vrot.slane %v1400, 4
        %v1402 = vrot.slane %v259, 5
        %v1403 = vsel %vm1336, %v1401, %v1402
        %v1404 = vrot.slane %v1402, 4
        %v1405 = vrot.slane %v297, 5
        %v1406 = vsel %vm1336, %v1404, %v1405
        %v1407 = vrot.slane %v1296, 5
        %v1408 = vrot.slane %v1407, 4
        %v1409 = vrot.slane %v261, 5
        %v1410 = vsel %vm1336, %v1408, %v1409
        %v1411 = vrot.slane %v1409, 4
        %v1412 = vrot.slane %v298, 5
        %v1413 = vsel %vm1336, %v1411, %v1412
        %v1414 = vrot.slane %v1297, 5
        %v1415 = vrot.slane %v1414, 4
        %v1416 = vrot.slane %v263, 5
        %v1417 = vsel %vm1336, %v1415, %v1416
        %v1418 = vrot.slane %v1416, 4
        %v1419 = vrot.slane %v299, 5
        %v1420 = vsel %vm1336, %v1418, %v1419
        %v1421 = vrot.slane %v1298, 5
        %v1422 = vrot.slane %v1421, 4
        %v1423 = vrot.slane %v265, 5
        %v1424 = vsel %vm1336, %v1422, %v1423
        %v1425 = vrot.slane %v1423, 4
        %v1426 = vrot.slane %v300, 5
        %v1427 = vsel %vm1336, %v1425, %v1426
        %v1428 = vrot.slane %v1299, 5
        %v1429 = vrot.slane %v1428, 4
        %v1430 = vrot.slane %v267, 5
        %v1431 = vsel %vm1336, %v1429, %v1430
        %v1432 = vrot.slane %v1430, 4
        %v1433 = vrot.slane %v301, 5
        %v1434 = vsel %vm1336, %v1432, %v1433
        %v1435 = vrot.slane %v1300, 5
        %v1436 = vrot.slane %v1435, 4
        %v1437 = vrot.slane %v269, 5
        %v1438 = vsel %vm1336, %v1436, %v1437
        %v1439 = vrot.slane %v1437, 4
        %v1440 = vrot.slane %v302, 5
        %v1441 = vsel %vm1336, %v1439, %v1440
        %v1442 = vrot.slane %v1301, 5
        %v1443 = vrot.slane %v1442, 4
        %v1444 = vrot.slane %v271, 5
        %v1445 = vsel %vm1336, %v1443, %v1444
        %v1446 = vrot.slane %v1444, 4
        %v1447 = vrot.slane %v303, 5
        %v1448 = vsel %vm1336, %v1446, %v1447
        %s1449 = scalar_lea.vmem [#allocation5], 128
        %v1450 = vld [vmem:[%s1449] sm:$0xf]
        %v1451 = vld [vmem:[%s1449 + $0x4] sm:$0xf]
        %v1452 = vld [vmem:[%s1449 + $0x8] sm:$0xf]
        %v1453 = vld [vmem:[%s1449 + $0xc] sm:$0xf]
        %v1454 = vld [vmem:[%s1449 + $0x10] sm:$0xf]
        %v1455 = vld [vmem:[%s1449 + $0x14] sm:$0xf]
        %v1456 = vld [vmem:[%s1449 + $0x18] sm:$0xf]
        %v1457 = vld [vmem:[%s1449 + $0x1c] sm:$0xf]
        %v1458 = vld [vmem:[%s1449 + $0x20] sm:$0xf]
        %v1459 = vld [vmem:[%s1449 + $0x24] sm:$0xf]
        %v1460 = vld [vmem:[%s1449 + $0x28] sm:$0xf]
        %v1461 = vld [vmem:[%s1449 + $0x2c] sm:$0xf]
        %v1462 = vld [vmem:[%s1449 + $0x30] sm:$0xf]
        %v1463 = vld [vmem:[%s1449 + $0x34] sm:$0xf]
        %v1464 = vld [vmem:[%s1449 + $0x38] sm:$0xf]
        %v1465 = vld [vmem:[%s1449 + $0x3c] sm:$0xf]
        %v1466 = vunpack.c.l.b16 %v1340
        %v1467 = vunpack.c.l.b16 %v1343
        %v1468 = vunpack.c.l.b16 %v1347
        %v1469 = vunpack.c.l.b16 %v1350
        %v1470 = vunpack.c.l.b16 %v1354
        %v1471 = vunpack.c.l.b16 %v1357
        %v1472 = vunpack.c.l.b16 %v1361
        %v1473 = vunpack.c.l.b16 %v1364
        %v1474 = vunpack.c.l.b16 %v1368
        %v1475 = vunpack.c.l.b16 %v1371
        %v1476 = vunpack.c.l.b16 %v1375
        %v1477 = vunpack.c.l.b16 %v1378
        %v1478 = vunpack.c.l.b16 %v1382
        %v1479 = vunpack.c.l.b16 %v1385
        %v1480 = vunpack.c.l.b16 %v1389
        %v1481 = vunpack.c.l.b16 %v1392
        %v1482 = vunpack.c.l.b16 %v1396
        %v1483 = vunpack.c.l.b16 %v1399
        %v1484 = vunpack.c.l.b16 %v1403
        %v1485 = vunpack.c.l.b16 %v1406
        %v1486 = vunpack.c.l.b16 %v1410
        %v1487 = vunpack.c.l.b16 %v1413
        %v1488 = vunpack.c.l.b16 %v1417
        %v1489 = vunpack.c.l.b16 %v1420
        %v1490 = vunpack.c.l.b16 %v1424
        %v1491 = vunpack.c.l.b16 %v1427
        %v1492 = vunpack.c.l.b16 %v1431
        %v1493 = vunpack.c.l.b16 %v1434
        %v1494 = vunpack.c.l.b16 %v1438
        %v1495 = vunpack.c.l.b16 %v1441
        %v1496 = vunpack.c.l.b16 %v1445
        %v1497 = vunpack.c.l.b16 %v1448
        %v1498 = vpack.c.b16 %v1467, %v1466
        %v1499 = vpack.c.b16 %v1469, %v1468
        %v1500 = vpack.c.b16 %v1471, %v1470
        %v1501 = vpack.c.b16 %v1473, %v1472
        %v1502 = vpack.c.b16 %v1475, %v1474
        %v1503 = vpack.c.b16 %v1477, %v1476
        %v1504 = vpack.c.b16 %v1479, %v1478
        %v1505 = vpack.c.b16 %v1481, %v1480
        %v1506 = vpack.c.b16 %v1483, %v1482
        %v1507 = vpack.c.b16 %v1485, %v1484
        %v1508 = vpack.c.b16 %v1487, %v1486
        %v1509 = vpack.c.b16 %v1489, %v1488
        %v1510 = vpack.c.b16 %v1491, %v1490
        %v1511 = vpack.c.b16 %v1493, %v1492
        %v1512 = vpack.c.b16 %v1495, %v1494
        %v1513 = vpack.c.b16 %v1497, %v1496
        %v1546 = vunpack.c.l.b16 %v1450
        %v1547 = vunpack.c.l.b16 %v1451
        %v1548 = vunpack.c.l.b16 %v1452
        %v1549 = vunpack.c.l.b16 %v1453
        %v1550 = vunpack.c.l.b16 %v1454
        %v1551 = vunpack.c.l.b16 %v1455
        %v1552 = vunpack.c.l.b16 %v1456
        %v1553 = vunpack.c.l.b16 %v1457
        %v1554 = vunpack.c.l.b16 %v1458
        %v1555 = vunpack.c.l.b16 %v1459
        %v1556 = vunpack.c.l.b16 %v1460
        %v1557 = vunpack.c.l.b16 %v1461
        %v1558 = vunpack.c.l.b16 %v1462
        %v1559 = vunpack.c.l.b16 %v1463
        %v1560 = vunpack.c.l.b16 %v1464
        %v1561 = vunpack.c.l.b16 %v1465
        %v1562 = vpack.c.b16 %v1547, %v1546
        %v1563 = vpack.c.b16 %v1549, %v1548
        %v1564 = vpack.c.b16 %v1551, %v1550
        %v1565 = vpack.c.b16 %v1553, %v1552
        %v1566 = vpack.c.b16 %v1555, %v1554
        %v1567 = vpack.c.b16 %v1557, %v1556
        %v1568 = vpack.c.b16 %v1559, %v1558
        %v1569 = vpack.c.b16 %v1561, %v1560
        %1578 = vmatprep.subr.bf16.mxu0 0
        %1579 = vmatpush1.bf16.msra.mxu0 %v1562
        %1580 = vmatprep.subr.bf16.mxu0 0
        %1581 = vmatpush1.bf16.msra.mxu0 %v1563
        %1582 = vmatprep.subr.bf16.mxu0 0
        %1583 = vmatpush1.bf16.msra.mxu0 %v1564
        %1584 = vmatprep.subr.bf16.mxu0 0
        %1585 = vmatpush1.bf16.msra.mxu0 %v1565
        %1586 = vmatprep.subr.bf16.mxu0 0
        %1587 = vmatpush1.bf16.msra.mxu0 %v1566
        %1588 = vmatprep.subr.bf16.mxu0 0
        %1589 = vmatpush1.bf16.msra.mxu0 %v1567
        %1590 = vmatprep.subr.bf16.mxu0 0
        %1591 = vmatpush1.bf16.msra.mxu0 %v1568
        %1592 = vmatprep.subr.bf16.mxu0 0
        %1593 = vmatpush1.bf16.msra.mxu0 %v1569
        %1594 = vmatprep.subr.bf16.mxu0 0
        %1595 = vmatpush1.bf16.msra.mxu0 0
        %1596 = vmatprep.subr.bf16.mxu0 0
        %1597 = vmatpush1.bf16.msra.mxu0 0
        %1598 = vmatprep.subr.bf16.mxu0 0
        %1599 = vmatpush1.bf16.msra.mxu0 0
        %1600 = vmatprep.subr.bf16.mxu0 0
        %1601 = vmatpush1.bf16.msra.mxu0 0
        %1602 = vmatprep.subr.bf16.mxu0 0
        %1603 = vmatpush1.bf16.msra.mxu0 0
        %1604 = vmatprep.subr.bf16.mxu0 0
        %1605 = vmatpush1.bf16.msra.mxu0 0
        %1606 = vmatprep.subr.bf16.mxu0 0
        %1607 = vmatpush1.bf16.msra.mxu0 0
        %1608 = vmatprep.subr.bf16.mxu0 0
        %1609 = vmatpush1.bf16.msra.mxu0 0
        %1610 = vmatprep.mubr.bf16.mxu0 0
        %1611 = vmatmul.mubr.bf16.gmra.mrb[0].mxu0 %v1498
        %v1612 = vpop.f32.mrb[0].mxu0
        %v1613 = vadd.f32 0.0, %v1612
        %v1614 = vpop.f32.mrb[0].mxu0
        %v1615 = vpop.f32.mrb[0].mxu0
        %v1616 = vadd.f32 0.0, %v1615
        %v1617 = vpop.f32.mrb[0].mxu0
        %1618 = vmatprep.mubr.bf16.mxu0 0
        %1619 = vmatmul.mubr.bf16.gmra.mrb[0].mxu0 %v1499
        %v1620 = vpop.f32.mrb[0].mxu0
        %v1621 = vadd.f32 0.0, %v1620
        %v1622 = vpop.f32.mrb[0].mxu0
        %v1623 = vpop.f32.mrb[0].mxu0
        %v1624 = vadd.f32 0.0, %v1623
        %v1625 = vpop.f32.mrb[0].mxu0
        %1626 = vmatprep.mubr.bf16.mxu0 0
        %1627 = vmatmul.mubr.bf16.gmra.mrb[0].mxu0 %v1500
        %v1628 = vpop.f32.mrb[0].mxu0
        %v1629 = vadd.f32 0.0, %v1628
        %v1630 = vpop.f32.mrb[0].mxu0
        %v1631 = vpop.f32.mrb[0].mxu0
        %v1632 = vadd.f32 0.0, %v1631
        %v1633 = vpop.f32.mrb[0].mxu0
        %1634 = vmatprep.mubr.bf16.mxu0 0
        %1635 = vmatmul.mubr.bf16.gmra.mrb[0].mxu0 %v1501
        %v1636 = vpop.f32.mrb[0].mxu0
        %v1637 = vadd.f32 0.0, %v1636
        %v1638 = vpop.f32.mrb[0].mxu0
        %v1639 = vpop.f32.mrb[0].mxu0
        %v1640 = vadd.f32 0.0, %v1639
        %v1641 = vpop.f32.mrb[0].mxu0
        %1642 = vmatprep.mubr.bf16.mxu0 0
        %1643 = vmatmul.mubr.bf16.gmra.mrb[0].mxu0 %v1502
        %v1644 = vpop.f32.mrb[0].mxu0
        %v1645 = vadd.f32 0.0, %v1644
        %v1646 = vpop.f32.mrb[0].mxu0
        %v1647 = vpop.f32.mrb[0].mxu0
        %v1648 = vadd.f32 0.0, %v1647
        %v1649 = vpop.f32.mrb[0].mxu0
        %1650 = vmatprep.mubr.bf16.mxu0 0
        %1651 = vmatmul.mubr.bf16.gmra.mrb[0].mxu0 %v1503
        %v1652 = vpop.f32.mrb[0].mxu0
        %v1653 = vadd.f32 0.0, %v1652
        %v1654 = vpop.f32.mrb[0].mxu0
        %v1655 = vpop.f32.mrb[0].mxu0
        %v1656 = vadd.f32 0.0, %v1655
        %v1657 = vpop.f32.mrb[0].mxu0
        %1658 = vmatprep.mubr.bf16.mxu0 0
        %1659 = vmatmul.mubr.bf16.gmra.mrb[0].mxu0 %v1504
        %v1660 = vpop.f32.mrb[0].mxu0
        %v1661 = vadd.f32 0.0, %v1660
        %v1662 = vpop.f32.mrb[0].mxu0
        %v1663 = vpop.f32.mrb[0].mxu0
        %v1664 = vadd.f32 0.0, %v1663
        %v1665 = vpop.f32.mrb[0].mxu0
        %1666 = vmatprep.mubr.bf16.mxu0 0
        %1667 = vmatmul.mubr.bf16.gmra.mrb[0].mxu0 %v1505
        %v1668 = vpop.f32.mrb[0].mxu0
        %v1669 = vadd.f32 0.0, %v1668
        %v1670 = vpop.f32.mrb[0].mxu0
        %v1671 = vpop.f32.mrb[0].mxu0
        %v1672 = vadd.f32 0.0, %v1671
        %v1673 = vpop.f32.mrb[0].mxu0
        %1674 = vmatprep.mubr.bf16.mxu0 0
        %1675 = vmatmul.mubr.bf16.gmra.mrb[0].mxu0 %v1506
        %v1676 = vpop.f32.mrb[0].mxu0
        %v1677 = vadd.f32 0.0, %v1676
        %v1678 = vpop.f32.mrb[0].mxu0
        %v1679 = vpop.f32.mrb[0].mxu0
        %v1680 = vadd.f32 0.0, %v1679
        %v1681 = vpop.f32.mrb[0].mxu0
        %1682 = vmatprep.mubr.bf16.mxu0 0
        %1683 = vmatmul.mubr.bf16.gmra.mrb[0].mxu0 %v1507
        %v1684 = vpop.f32.mrb[0].mxu0
        %v1685 = vadd.f32 0.0, %v1684
        %v1686 = vpop.f32.mrb[0].mxu0
        %v1687 = vpop.f32.mrb[0].mxu0
        %v1688 = vadd.f32 0.0, %v1687
        %v1689 = vpop.f32.mrb[0].mxu0
        %1690 = vmatprep.mubr.bf16.mxu0 0
        %1691 = vmatmul.mubr.bf16.gmra.mrb[0].mxu0 %v1508
        %v1692 = vpop.f32.mrb[0].mxu0
        %v1693 = vadd.f32 0.0, %v1692
        %v1694 = vpop.f32.mrb[0].mxu0
        %v1695 = vpop.f32.mrb[0].mxu0
        %v1696 = vadd.f32 0.0, %v1695
        %v1697 = vpop.f32.mrb[0].mxu0
        %1698 = vmatprep.mubr.bf16.mxu0 0
        %1699 = vmatmul.mubr.bf16.gmra.mrb[0].mxu0 %v1509
        %v1700 = vpop.f32.mrb[0].mxu0
        %v1701 = vadd.f32 0.0, %v1700
        %v1702 = vpop.f32.mrb[0].mxu0
        %v1703 = vpop.f32.mrb[0].mxu0
        %v1704 = vadd.f32 0.0, %v1703
        %v1705 = vpop.f32.mrb[0].mxu0
        %1706 = vmatprep.mubr.bf16.mxu0 0
        %1707 = vmatmul.mubr.bf16.gmra.mrb[0].mxu0 %v1510
        %v1708 = vpop.f32.mrb[0].mxu0
        %v1709 = vadd.f32 0.0, %v1708
        %v1710 = vpop.f32.mrb[0].mxu0
        %v1711 = vpop.f32.mrb[0].mxu0
        %v1712 = vadd.f32 0.0, %v1711
        %v1713 = vpop.f32.mrb[0].mxu0
        %1714 = vmatprep.mubr.bf16.mxu0 0
        %1715 = vmatmul.mubr.bf16.gmra.mrb[0].mxu0 %v1511
        %v1716 = vpop.f32.mrb[0].mxu0
        %v1717 = vadd.f32 0.0, %v1716
        %v1718 = vpop.f32.mrb[0].mxu0
        %v1719 = vpop.f32.mrb[0].mxu0
        %v1720 = vadd.f32 0.0, %v1719
        %v1721 = vpop.f32.mrb[0].mxu0
        %1722 = vmatprep.mubr.bf16.mxu0 0
        %1723 = vmatmul.mubr.bf16.gmra.mrb[0].mxu0 %v1512
        %v1724 = vpop.f32.mrb[0].mxu0
        %v1725 = vadd.f32 0.0, %v1724
        %v1726 = vpop.f32.mrb[0].mxu0
        %v1727 = vpop.f32.mrb[0].mxu0
        %v1728 = vadd.f32 0.0, %v1727
        %v1729 = vpop.f32.mrb[0].mxu0
        %1730 = vmatprep.mubr.bf16.mxu0 0
        %1731 = vmatmul.mubr.bf16.gmra.mrb[0].mxu0 %v1513
        %v1732 = vpop.f32.mrb[0].mxu0
        %v1733 = vadd.f32 0.0, %v1732
        %v1734 = vpop.f32.mrb[0].mxu0
        %v1735 = vpop.f32.mrb[0].mxu0
        %v1736 = vadd.f32 0.0, %v1735
        %v1737 = vpop.f32.mrb[0].mxu0
        %1738 = vdwg.mxu0
        %v1739 = vadd.f32 %v1160, %v1613
        %v1740 = vadd.f32 %v1163, %v1616
        %v1741 = vadd.f32 %v1168, %v1621
        %v1742 = vadd.f32 %v1171, %v1624
        %v1743 = vadd.f32 %v1176, %v1629
        %v1744 = vadd.f32 %v1179, %v1632
        %v1745 = vadd.f32 %v1184, %v1637
        %v1746 = vadd.f32 %v1187, %v1640
        %v1747 = vadd.f32 %v1192, %v1645
        %v1748 = vadd.f32 %v1195, %v1648
        %v1749 = vadd.f32 %v1200, %v1653
        %v1750 = vadd.f32 %v1203, %v1656
        %v1751 = vadd.f32 %v1208, %v1661
        %v1752 = vadd.f32 %v1211, %v1664
        %v1753 = vadd.f32 %v1216, %v1669
        %v1754 = vadd.f32 %v1219, %v1672
        %v1755 = vadd.f32 %v1224, %v1677
        %v1756 = vadd.f32 %v1227, %v1680
        %v1757 = vadd.f32 %v1232, %v1685
        %v1758 = vadd.f32 %v1235, %v1688
        %v1759 = vadd.f32 %v1240, %v1693
        %v1760 = vadd.f32 %v1243, %v1696
        %v1761 = vadd.f32 %v1248, %v1701
        %v1762 = vadd.f32 %v1251, %v1704
        %v1763 = vadd.f32 %v1256, %v1709
        %v1764 = vadd.f32 %v1259, %v1712
        %v1765 = vadd.f32 %v1264, %v1717
        %v1766 = vadd.f32 %v1267, %v1720
        %v1767 = vadd.f32 %v1272, %v1725
        %v1768 = vadd.f32 %v1275, %v1728
        %v1769 = vadd.f32 %v1280, %v1733
        %v1770 = vadd.f32 %v1283, %v1736
        %s1771 = scalar_lea.vmem %s206, 16 [#allocation2]
        %v1772 = vld [vmem:[%s1771] sm:$0xf]
        %v1773 = vld [vmem:[%s1771 + $0x4] sm:$0xf]
        %v1774 = vld [vmem:[%s1771 + $0x10] sm:$0xf]
        %v1775 = vld [vmem:[%s1771 + $0x14] sm:$0xf]
        %v1776 = vld [vmem:[%s1771 + $0x20] sm:$0xf]
        %v1777 = vld [vmem:[%s1771 + $0x24] sm:$0xf]
        %v1778 = vld [vmem:[%s1771 + $0x30] sm:$0xf]
        %v1779 = vld [vmem:[%s1771 + $0x34] sm:$0xf]
        %v1780 = vld [vmem:[%s1771 + $0x40] sm:$0xf]
        %v1781 = vld [vmem:[%s1771 + $0x44] sm:$0xf]
        %v1782 = vld [vmem:[%s1771 + $0x50] sm:$0xf]
        %v1783 = vld [vmem:[%s1771 + $0x54] sm:$0xf]
        %v1784 = vld [vmem:[%s1771 + $0x60] sm:$0xf]
        %v1785 = vld [vmem:[%s1771 + $0x64] sm:$0xf]
        %v1786 = vld [vmem:[%s1771 + $0x70] sm:$0xf]
        %v1787 = vld [vmem:[%s1771 + $0x74] sm:$0xf]
        %v1788 = vld [vmem:[%s1771 + $0x80] sm:$0xf]
        %v1789 = vld [vmem:[%s1771 + $0x84] sm:$0xf]
        %v1790 = vld [vmem:[%s1771 + $0x90] sm:$0xf]
        %v1791 = vld [vmem:[%s1771 + $0x94] sm:$0xf]
        %v1792 = vld [vmem:[%s1771 + $0xa0] sm:$0xf]
        %v1793 = vld [vmem:[%s1771 + $0xa4] sm:$0xf]
        %v1794 = vld [vmem:[%s1771 + $0xb0] sm:$0xf]
        %v1795 = vld [vmem:[%s1771 + $0xb4] sm:$0xf]
        %v1796 = vld [vmem:[%s1771 + $0xc0] sm:$0xf]
        %v1797 = vld [vmem:[%s1771 + $0xc4] sm:$0xf]
        %v1798 = vld [vmem:[%s1771 + $0xd0] sm:$0xf]
        %v1799 = vld [vmem:[%s1771 + $0xd4] sm:$0xf]
        %v1800 = vld [vmem:[%s1771 + $0xe0] sm:$0xf]
        %v1801 = vld [vmem:[%s1771 + $0xe4] sm:$0xf]
        %v1802 = vld [vmem:[%s1771 + $0xf0] sm:$0xf]
        %v1803 = vld [vmem:[%s1771 + $0xf4] sm:$0xf]
        %s1804 = scalar_lea.vmem [#allocation5], 192
        %v1805 = vld [vmem:[%s1804] sm:$0xf]
        %v1806 = vld [vmem:[%s1804 + $0x4] sm:$0xf]
        %v1807 = vld [vmem:[%s1804 + $0x8] sm:$0xf]
        %v1808 = vld [vmem:[%s1804 + $0xc] sm:$0xf]
        %v1809 = vld [vmem:[%s1804 + $0x10] sm:$0xf]
        %v1810 = vld [vmem:[%s1804 + $0x14] sm:$0xf]
        %v1811 = vld [vmem:[%s1804 + $0x18] sm:$0xf]
        %v1812 = vld [vmem:[%s1804 + $0x1c] sm:$0xf]
        %v1813 = vld [vmem:[%s1804 + $0x20] sm:$0xf]
        %v1814 = vld [vmem:[%s1804 + $0x24] sm:$0xf]
        %v1815 = vld [vmem:[%s1804 + $0x28] sm:$0xf]
        %v1816 = vld [vmem:[%s1804 + $0x2c] sm:$0xf]
        %v1817 = vld [vmem:[%s1804 + $0x30] sm:$0xf]
        %v1818 = vld [vmem:[%s1804 + $0x34] sm:$0xf]
        %v1819 = vld [vmem:[%s1804 + $0x38] sm:$0xf]
        %v1820 = vld [vmem:[%s1804 + $0x3c] sm:$0xf]
        %v1853 = vunpack.c.l.b16 %v1772
        %v1854 = vunpack.c.l.b16 %v1773
        %v1855 = vunpack.c.l.b16 %v1774
        %v1856 = vunpack.c.l.b16 %v1775
        %v1857 = vunpack.c.l.b16 %v1776
        %v1858 = vunpack.c.l.b16 %v1777
        %v1859 = vunpack.c.l.b16 %v1778
        %v1860 = vunpack.c.l.b16 %v1779
        %v1861 = vunpack.c.l.b16 %v1780
        %v1862 = vunpack.c.l.b16 %v1781
        %v1863 = vunpack.c.l.b16 %v1782
        %v1864 = vunpack.c.l.b16 %v1783
        %v1865 = vunpack.c.l.b16 %v1784
        %v1866 = vunpack.c.l.b16 %v1785
        %v1867 = vunpack.c.l.b16 %v1786
        %v1868 = vunpack.c.l.b16 %v1787
        %v1869 = vunpack.c.l.b16 %v1788
        %v1870 = vunpack.c.l.b16 %v1789
        %v1871 = vunpack.c.l.b16 %v1790
        %v1872 = vunpack.c.l.b16 %v1791
        %v1873 = vunpack.c.l.b16 %v1792
        %v1874 = vunpack.c.l.b16 %v1793
        %v1875 = vunpack.c.l.b16 %v1794
        %v1876 = vunpack.c.l.b16 %v1795
        %v1877 = vunpack.c.l.b16 %v1796
        %v1878 = vunpack.c.l.b16 %v1797
        %v1879 = vunpack.c.l.b16 %v1798
        %v1880 = vunpack.c.l.b16 %v1799
        %v1881 = vunpack.c.l.b16 %v1800
        %v1882 = vunpack.c.l.b16 %v1801
        %v1883 = vunpack.c.l.b16 %v1802
        %v1884 = vunpack.c.l.b16 %v1803
        %v1885 = vpack.c.b16 %v1854, %v1853
        %v1886 = vpack.c.b16 %v1856, %v1855
        %v1887 = vpack.c.b16 %v1858, %v1857
        %v1888 = vpack.c.b16 %v1860, %v1859
        %v1889 = vpack.c.b16 %v1862, %v1861
        %v1890 = vpack.c.b16 %v1864, %v1863
        %v1891 = vpack.c.b16 %v1866, %v1865
        %v1892 = vpack.c.b16 %v1868, %v1867
        %v1893 = vpack.c.b16 %v1870, %v1869
        %v1894 = vpack.c.b16 %v1872, %v1871
        %v1895 = vpack.c.b16 %v1874, %v1873
        %v1896 = vpack.c.b16 %v1876, %v1875
        %v1897 = vpack.c.b16 %v1878, %v1877
        %v1898 = vpack.c.b16 %v1880, %v1879
        %v1899 = vpack.c.b16 %v1882, %v1881
        %v1900 = vpack.c.b16 %v1884, %v1883
        %v1933 = vunpack.c.l.b16 %v1805
        %v1934 = vunpack.c.l.b16 %v1806
        %v1935 = vunpack.c.l.b16 %v1807
        %v1936 = vunpack.c.l.b16 %v1808
        %v1937 = vunpack.c.l.b16 %v1809
        %v1938 = vunpack.c.l.b16 %v1810
        %v1939 = vunpack.c.l.b16 %v1811
        %v1940 = vunpack.c.l.b16 %v1812
        %v1941 = vunpack.c.l.b16 %v1813
        %v1942 = vunpack.c.l.b16 %v1814
        %v1943 = vunpack.c.l.b16 %v1815
        %v1944 = vunpack.c.l.b16 %v1816
        %v1945 = vunpack.c.l.b16 %v1817
        %v1946 = vunpack.c.l.b16 %v1818
        %v1947 = vunpack.c.l.b16 %v1819
        %v1948 = vunpack.c.l.b16 %v1820
        %v1949 = vpack.c.b16 %v1934, %v1933
        %v1950 = vpack.c.b16 %v1936, %v1935
        %v1951 = vpack.c.b16 %v1938, %v1937
        %v1952 = vpack.c.b16 %v1940, %v1939
        %v1953 = vpack.c.b16 %v1942, %v1941
        %v1954 = vpack.c.b16 %v1944, %v1943
        %v1955 = vpack.c.b16 %v1946, %v1945
        %v1956 = vpack.c.b16 %v1948, %v1947
        %1965 = vmatprep.subr.bf16.mxu0 0
        %1966 = vmatpush1.bf16.msra.mxu0 %v1949
        %1967 = vmatprep.subr.bf16.mxu0 0
        %1968 = vmatpush1.bf16.msra.mxu0 %v1950
        %1969 = vmatprep.subr.bf16.mxu0 0
        %1970 = vmatpush1.bf16.msra.mxu0 %v1951
        %1971 = vmatprep.subr.bf16.mxu0 0
        %1972 = vmatpush1.bf16.msra.mxu0 %v1952
        %1973 = vmatprep.subr.bf16.mxu0 0
        %1974 = vmatpush1.bf16.msra.mxu0 %v1953
        %1975 = vmatprep.subr.bf16.mxu0 0
        %1976 = vmatpush1.bf16.msra.mxu0 %v1954
        %1977 = vmatprep.subr.bf16.mxu0 0
        %1978 = vmatpush1.bf16.msra.mxu0 %v1955
        %1979 = vmatprep.subr.bf16.mxu0 0
        %1980 = vmatpush1.bf16.msra.mxu0 %v1956
        %1981 = vmatprep.subr.bf16.mxu0 0
        %1982 = vmatpush1.bf16.msra.mxu0 0
        %1983 = vmatprep.subr.bf16.mxu0 0
        %1984 = vmatpush1.bf16.msra.mxu0 0
        %1985 = vmatprep.subr.bf16.mxu0 0
        %1986 = vmatpush1.bf16.msra.mxu0 0
        %1987 = vmatprep.subr.bf16.mxu0 0
        %1988 = vmatpush1.bf16.msra.mxu0 0
        %1989 = vmatprep.subr.bf16.mxu0 0
        %1990 = vmatpush1.bf16.msra.mxu0 0
        %1991 = vmatprep.subr.bf16.mxu0 0
        %1992 = vmatpush1.bf16.msra.mxu0 0
        %1993 = vmatprep.subr.bf16.mxu0 0
        %1994 = vmatpush1.bf16.msra.mxu0 0
        %1995 = vmatprep.subr.bf16.mxu0 0
        %1996 = vmatpush1.bf16.msra.mxu0 0
        %1997 = vmatprep.mubr.bf16.mxu0 0
        %1998 = vmatmul.mubr.bf16.gmra.mrb[0].mxu0 %v1885
        %v1999 = vpop.f32.mrb[0].mxu0
        %v2000 = vadd.f32 0.0, %v1999
        %v2001 = vpop.f32.mrb[0].mxu0
        %v2002 = vpop.f32.mrb[0].mxu0
        %v2003 = vadd.f32 0.0, %v2002
        %v2004 = vpop.f32.mrb[0].mxu0
        %2005 = vmatprep.mubr.bf16.mxu0 0
        %2006 = vmatmul.mubr.bf16.gmra.mrb[0].mxu0 %v1886
        %v2007 = vpop.f32.mrb[0].mxu0
        %v2008 = vadd.f32 0.0, %v2007
        %v2009 = vpop.f32.mrb[0].mxu0
        %v2010 = vpop.f32.mrb[0].mxu0
        %v2011 = vadd.f32 0.0, %v2010
        %v2012 = vpop.f32.mrb[0].mxu0
        %2013 = vmatprep.mubr.bf16.mxu0 0
        %2014 = vmatmul.mubr.bf16.gmra.mrb[0].mxu0 %v1887
        %v2015 = vpop.f32.mrb[0].mxu0
        %v2016 = vadd.f32 0.0, %v2015
        %v2017 = vpop.f32.mrb[0].mxu0
        %v2018 = vpop.f32.mrb[0].mxu0
        %v2019 = vadd.f32 0.0, %v2018
        %v2020 = vpop.f32.mrb[0].mxu0
        %2021 = vmatprep.mubr.bf16.mxu0 0
        %2022 = vmatmul.mubr.bf16.gmra.mrb[0].mxu0 %v1888
        %v2023 = vpop.f32.mrb[0].mxu0
        %v2024 = vadd.f32 0.0, %v2023
        %v2025 = vpop.f32.mrb[0].mxu0
        %v2026 = vpop.f32.mrb[0].mxu0
        %v2027 = vadd.f32 0.0, %v2026
        %v2028 = vpop.f32.mrb[0].mxu0
        %2029 = vmatprep.mubr.bf16.mxu0 0
        %2030 = vmatmul.mubr.bf16.gmra.mrb[0].mxu0 %v1889
        %v2031 = vpop.f32.mrb[0].mxu0
        %v2032 = vadd.f32 0.0, %v2031
        %v2033 = vpop.f32.mrb[0].mxu0
        %v2034 = vpop.f32.mrb[0].mxu0
        %v2035 = vadd.f32 0.0, %v2034
        %v2036 = vpop.f32.mrb[0].mxu0
        %2037 = vmatprep.mubr.bf16.mxu0 0
        %2038 = vmatmul.mubr.bf16.gmra.mrb[0].mxu0 %v1890
        %v2039 = vpop.f32.mrb[0].mxu0
        %v2040 = vadd.f32 0.0, %v2039
        %v2041 = vpop.f32.mrb[0].mxu0
        %v2042 = vpop.f32.mrb[0].mxu0
        %v2043 = vadd.f32 0.0, %v2042
        %v2044 = vpop.f32.mrb[0].mxu0
        %2045 = vmatprep.mubr.bf16.mxu0 0
        %2046 = vmatmul.mubr.bf16.gmra.mrb[0].mxu0 %v1891
        %v2047 = vpop.f32.mrb[0].mxu0
        %v2048 = vadd.f32 0.0, %v2047
        %v2049 = vpop.f32.mrb[0].mxu0
        %v2050 = vpop.f32.mrb[0].mxu0
        %v2051 = vadd.f32 0.0, %v2050
        %v2052 = vpop.f32.mrb[0].mxu0
        %2053 = vmatprep.mubr.bf16.mxu0 0
        %2054 = vmatmul.mubr.bf16.gmra.mrb[0].mxu0 %v1892
        %v2055 = vpop.f32.mrb[0].mxu0
        %v2056 = vadd.f32 0.0, %v2055
        %v2057 = vpop.f32.mrb[0].mxu0
        %v2058 = vpop.f32.mrb[0].mxu0
        %v2059 = vadd.f32 0.0, %v2058
        %v2060 = vpop.f32.mrb[0].mxu0
        %2061 = vmatprep.mubr.bf16.mxu0 0
        %2062 = vmatmul.mubr.bf16.gmra.mrb[0].mxu0 %v1893
        %v2063 = vpop.f32.mrb[0].mxu0
        %v2064 = vadd.f32 0.0, %v2063
        %v2065 = vpop.f32.mrb[0].mxu0
        %v2066 = vpop.f32.mrb[0].mxu0
        %v2067 = vadd.f32 0.0, %v2066
        %v2068 = vpop.f32.mrb[0].mxu0
        %2069 = vmatprep.mubr.bf16.mxu0 0
        %2070 = vmatmul.mubr.bf16.gmra.mrb[0].mxu0 %v1894
        %v2071 = vpop.f32.mrb[0].mxu0
        %v2072 = vadd.f32 0.0, %v2071
        %v2073 = vpop.f32.mrb[0].mxu0
        %v2074 = vpop.f32.mrb[0].mxu0
        %v2075 = vadd.f32 0.0, %v2074
        %v2076 = vpop.f32.mrb[0].mxu0
        %2077 = vmatprep.mubr.bf16.mxu0 0
        %2078 = vmatmul.mubr.bf16.gmra.mrb[0].mxu0 %v1895
        %v2079 = vpop.f32.mrb[0].mxu0
        %v2080 = vadd.f32 0.0, %v2079
        %v2081 = vpop.f32.mrb[0].mxu0
        %v2082 = vpop.f32.mrb[0].mxu0
        %v2083 = vadd.f32 0.0, %v2082
        %v2084 = vpop.f32.mrb[0].mxu0
        %2085 = vmatprep.mubr.bf16.mxu0 0
        %2086 = vmatmul.mubr.bf16.gmra.mrb[0].mxu0 %v1896
        %v2087 = vpop.f32.mrb[0].mxu0
        %v2088 = vadd.f32 0.0, %v2087
        %v2089 = vpop.f32.mrb[0].mxu0
        %v2090 = vpop.f32.mrb[0].mxu0
        %v2091 = vadd.f32 0.0, %v2090
        %v2092 = vpop.f32.mrb[0].mxu0
        %2093 = vmatprep.mubr.bf16.mxu0 0
        %2094 = vmatmul.mubr.bf16.gmra.mrb[0].mxu0 %v1897
        %v2095 = vpop.f32.mrb[0].mxu0
        %v2096 = vadd.f32 0.0, %v2095
        %v2097 = vpop.f32.mrb[0].mxu0
        %v2098 = vpop.f32.mrb[0].mxu0
        %v2099 = vadd.f32 0.0, %v2098
        %v2100 = vpop.f32.mrb[0].mxu0
        %2101 = vmatprep.mubr.bf16.mxu0 0
        %2102 = vmatmul.mubr.bf16.gmra.mrb[0].mxu0 %v1898
        %v2103 = vpop.f32.mrb[0].mxu0
        %v2104 = vadd.f32 0.0, %v2103
        %v2105 = vpop.f32.mrb[0].mxu0
        %v2106 = vpop.f32.mrb[0].mxu0
        %v2107 = vadd.f32 0.0, %v2106
        %v2108 = vpop.f32.mrb[0].mxu0
        %2109 = vmatprep.mubr.bf16.mxu0 0
        %2110 = vmatmul.mubr.bf16.gmra.mrb[0].mxu0 %v1899
        %v2111 = vpop.f32.mrb[0].mxu0
        %v2112 = vadd.f32 0.0, %v2111
        %v2113 = vpop.f32.mrb[0].mxu0
        %v2114 = vpop.f32.mrb[0].mxu0
        %v2115 = vadd.f32 0.0, %v2114
        %v2116 = vpop.f32.mrb[0].mxu0
        %2117 = vmatprep.mubr.bf16.mxu0 0
        %2118 = vmatmul.mubr.bf16.gmra.mrb[0].mxu0 %v1900
        %v2119 = vpop.f32.mrb[0].mxu0
        %v2120 = vadd.f32 0.0, %v2119
        %v2121 = vpop.f32.mrb[0].mxu0
        %v2122 = vpop.f32.mrb[0].mxu0
        %v2123 = vadd.f32 0.0, %v2122
        %v2124 = vpop.f32.mrb[0].mxu0
        %2125 = vdwg.mxu0
        %v2126 = vadd.f32 %v1739, %v2000
        %v2127 = vadd.f32 %v1740, %v2003
        %v2128 = vadd.f32 %v1741, %v2008
        %v2129 = vadd.f32 %v1742, %v2011
        %v2130 = vadd.f32 %v1743, %v2016
        %v2131 = vadd.f32 %v1744, %v2019
        %v2132 = vadd.f32 %v1745, %v2024
        %v2133 = vadd.f32 %v1746, %v2027
        %v2134 = vadd.f32 %v1747, %v2032
        %v2135 = vadd.f32 %v1748, %v2035
        %v2136 = vadd.f32 %v1749, %v2040
        %v2137 = vadd.f32 %v1750, %v2043
        %v2138 = vadd.f32 %v1751, %v2048
        %v2139 = vadd.f32 %v1752, %v2051
        %v2140 = vadd.f32 %v1753, %v2056
        %v2141 = vadd.f32 %v1754, %v2059
        %v2142 = vadd.f32 %v1755, %v2064
        %v2143 = vadd.f32 %v1756, %v2067
        %v2144 = vadd.f32 %v1757, %v2072
        %v2145 = vadd.f32 %v1758, %v2075
        %v2146 = vadd.f32 %v1759, %v2080
        %v2147 = vadd.f32 %v1760, %v2083
        %v2148 = vadd.f32 %v1761, %v2088
        %v2149 = vadd.f32 %v1762, %v2091
        %v2150 = vadd.f32 %v1763, %v2096
        %v2151 = vadd.f32 %v1764, %v2099
        %v2152 = vadd.f32 %v1765, %v2104
        %v2153 = vadd.f32 %v1766, %v2107
        %v2154 = vadd.f32 %v1767, %v2112
        %v2155 = vadd.f32 %v1768, %v2115
        %v2156 = vadd.f32 %v1769, %v2120
        %v2157 = vadd.f32 %v1770, %v2123
        %v2158 = vld [vmem:[%s1771] sm:$0xf]
        %v2159 = vld [vmem:[%s1771 + $0x4] sm:$0xf]
        %v2160 = vld [vmem:[%s1771 + $0x8] sm:$0x1]
        %v2161 = vld [vmem:[%s1771 + $0x10] sm:$0xf]
        %v2162 = vld [vmem:[%s1771 + $0x14] sm:$0xf]
        %v2163 = vld [vmem:[%s1771 + $0x18] sm:$0x1]
        %v2164 = vld [vmem:[%s1771 + $0x20] sm:$0xf]
        %v2165 = vld [vmem:[%s1771 + $0x24] sm:$0xf]
        %v2166 = vld [vmem:[%s1771 + $0x28] sm:$0x1]
        %v2167 = vld [vmem:[%s1771 + $0x30] sm:$0xf]
        %v2168 = vld [vmem:[%s1771 + $0x34] sm:$0xf]
        %v2169 = vld [vmem:[%s1771 + $0x38] sm:$0x1]
        %v2170 = vld [vmem:[%s1771 + $0x40] sm:$0xf]
        %v2171 = vld [vmem:[%s1771 + $0x44] sm:$0xf]
        %v2172 = vld [vmem:[%s1771 + $0x48] sm:$0x1]
        %v2173 = vld [vmem:[%s1771 + $0x50] sm:$0xf]
        %v2174 = vld [vmem:[%s1771 + $0x54] sm:$0xf]
        %v2175 = vld [vmem:[%s1771 + $0x58] sm:$0x1]
        %v2176 = vld [vmem:[%s1771 + $0x60] sm:$0xf]
        %v2177 = vld [vmem:[%s1771 + $0x64] sm:$0xf]
        %v2178 = vld [vmem:[%s1771 + $0x68] sm:$0x1]
        %v2179 = vld [vmem:[%s1771 + $0x70] sm:$0xf]
        %v2180 = vld [vmem:[%s1771 + $0x74] sm:$0xf]
        %v2181 = vld [vmem:[%s1771 + $0x78] sm:$0x1]
        %v2182 = vld [vmem:[%s1771 + $0x80] sm:$0xf]
        %v2183 = vld [vmem:[%s1771 + $0x84] sm:$0xf]
        %v2184 = vld [vmem:[%s1771 + $0x88] sm:$0x1]
        %v2185 = vld [vmem:[%s1771 + $0x90] sm:$0xf]
        %v2186 = vld [vmem:[%s1771 + $0x94] sm:$0xf]
        %v2187 = vld [vmem:[%s1771 + $0x98] sm:$0x1]
        %v2188 = vld [vmem:[%s1771 + $0xa0] sm:$0xf]
        %v2189 = vld [vmem:[%s1771 + $0xa4] sm:$0xf]
        %v2190 = vld [vmem:[%s1771 + $0xa8] sm:$0x1]
        %v2191 = vld [vmem:[%s1771 + $0xb0] sm:$0xf]
        %v2192 = vld [vmem:[%s1771 + $0xb4] sm:$0xf]
        %v2193 = vld [vmem:[%s1771 + $0xb8] sm:$0x1]
        %v2194 = vld [vmem:[%s1771 + $0xc0] sm:$0xf]
        %v2195 = vld [vmem:[%s1771 + $0xc4] sm:$0xf]
        %v2196 = vld [vmem:[%s1771 + $0xc8] sm:$0x1]
        %v2197 = vld [vmem:[%s1771 + $0xd0] sm:$0xf]
        %v2198 = vld [vmem:[%s1771 + $0xd4] sm:$0xf]
        %v2199 = vld [vmem:[%s1771 + $0xd8] sm:$0x1]
        %v2200 = vld [vmem:[%s1771 + $0xe0] sm:$0xf]
        %v2201 = vld [vmem:[%s1771 + $0xe4] sm:$0xf]
        %v2202 = vld [vmem:[%s1771 + $0xe8] sm:$0x1]
        %v2203 = vld [vmem:[%s1771 + $0xf0] sm:$0xf]
        %v2204 = vld [vmem:[%s1771 + $0xf4] sm:$0xf]
        %v2205 = vld [vmem:[%s1771 + $0xf8] sm:$0x1]
        %v2207 = vshrl.u32 %v2158, 16
        %v2209 = vrot.slane %v2207, 4
        %v2210 = vshll.u32 %v2158, 16
        %v2212 = vrot.slane %v2210, 5
        %v2213 = vor.u32 %v2209, %v2212
        %v2214 = vrot.slane %v2213, 4
        %v2216 = vshll.u32 %v2159, 16
        %v2218 = vrot.slane %v2216, 5
        %v2219 = vsel %vm306, %v2214, %v2218
        %v2220 = vshrl.u32 %v2159, 16
        %v2222 = vrot.slane %v2220, 4
        %v2223 = vor.u32 %v2222, %v2218
        %v2224 = vrot.slane %v2223, 4
        %v2226 = vshll.u32 %v2160, 16
        %v2228 = vrot.slane %v2226, 5
        %v2229 = vsel %vm306, %v2224, %v2228
        %v2231 = vshrl.u32 %v2161, 16
        %v2233 = vrot.slane %v2231, 4
        %v2234 = vshll.u32 %v2161, 16
        %v2236 = vrot.slane %v2234, 5
        %v2237 = vor.u32 %v2233, %v2236
        %v2238 = vrot.slane %v2237, 4
        %v2240 = vshll.u32 %v2162, 16
        %v2242 = vrot.slane %v2240, 5
        %v2243 = vsel %vm306, %v2238, %v2242
        %v2244 = vshrl.u32 %v2162, 16
        %v2246 = vrot.slane %v2244, 4
        %v2247 = vor.u32 %v2246, %v2242
        %v2248 = vrot.slane %v2247, 4
        %v2250 = vshll.u32 %v2163, 16
        %v2252 = vrot.slane %v2250, 5
        %v2253 = vsel %vm306, %v2248, %v2252
        %v2255 = vshrl.u32 %v2164, 16
        %v2257 = vrot.slane %v2255, 4
        %v2258 = vshll.u32 %v2164, 16
        %v2260 = vrot.slane %v2258, 5
        %v2261 = vor.u32 %v2257, %v2260
        %v2262 = vrot.slane %v2261, 4
        %v2264 = vshll.u32 %v2165, 16
        %v2266 = vrot.slane %v2264, 5
        %v2267 = vsel %vm306, %v2262, %v2266
        %v2268 = vshrl.u32 %v2165, 16
        %v2270 = vrot.slane %v2268, 4
        %v2271 = vor.u32 %v2270, %v2266
        %v2272 = vrot.slane %v2271, 4
        %v2274 = vshll.u32 %v2166, 16
        %v2276 = vrot.slane %v2274, 5
        %v2277 = vsel %vm306, %v2272, %v2276
        %v2279 = vshrl.u32 %v2167, 16
        %v2281 = vrot.slane %v2279, 4
        %v2282 = vshll.u32 %v2167, 16
        %v2284 = vrot.slane %v2282, 5
        %v2285 = vor.u32 %v2281, %v2284
        %v2286 = vrot.slane %v2285, 4
        %v2288 = vshll.u32 %v2168, 16
        %v2290 = vrot.slane %v2288, 5
        %v2291 = vsel %vm306, %v2286, %v2290
        %v2292 = vshrl.u32 %v2168, 16
        %v2294 = vrot.slane %v2292, 4
        %v2295 = vor.u32 %v2294, %v2290
        %v2296 = vrot.slane %v2295, 4
        %v2298 = vshll.u32 %v2169, 16
        %v2300 = vrot.slane %v2298, 5
        %v2301 = vsel %vm306, %v2296, %v2300
        %v2303 = vshrl.u32 %v2170, 16
        %v2305 = vrot.slane %v2303, 4
        %v2306 = vshll.u32 %v2170, 16
        %v2308 = vrot.slane %v2306, 5
        %v2309 = vor.u32 %v2305, %v2308
        %v2310 = vrot.slane %v2309, 4
        %v2312 = vshll.u32 %v2171, 16
        %v2314 = vrot.slane %v2312, 5
        %v2315 = vsel %vm306, %v2310, %v2314
        %v2316 = vshrl.u32 %v2171, 16
        %v2318 = vrot.slane %v2316, 4
        %v2319 = vor.u32 %v2318, %v2314
        %v2320 = vrot.slane %v2319, 4
        %v2322 = vshll.u32 %v2172, 16
        %v2324 = vrot.slane %v2322, 5
        %v2325 = vsel %vm306, %v2320, %v2324
        %v2327 = vshrl.u32 %v2173, 16
        %v2329 = vrot.slane %v2327, 4
        %v2330 = vshll.u32 %v2173, 16
        %v2332 = vrot.slane %v2330, 5
        %v2333 = vor.u32 %v2329, %v2332
        %v2334 = vrot.slane %v2333, 4
        %v2336 = vshll.u32 %v2174, 16
        %v2338 = vrot.slane %v2336, 5
        %v2339 = vsel %vm306, %v2334, %v2338
        %v2340 = vshrl.u32 %v2174, 16
        %v2342 = vrot.slane %v2340, 4
        %v2343 = vor.u32 %v2342, %v2338
        %v2344 = vrot.slane %v2343, 4
        %v2346 = vshll.u32 %v2175, 16
        %v2348 = vrot.slane %v2346, 5
        %v2349 = vsel %vm306, %v2344, %v2348
        %v2351 = vshrl.u32 %v2176, 16
        %v2353 = vrot.slane %v2351, 4
        %v2354 = vshll.u32 %v2176, 16
        %v2356 = vrot.slane %v2354, 5
        %v2357 = vor.u32 %v2353, %v2356
        %v2358 = vrot.slane %v2357, 4
        %v2360 = vshll.u32 %v2177, 16
        %v2362 = vrot.slane %v2360, 5
        %v2363 = vsel %vm306, %v2358, %v2362
        %v2364 = vshrl.u32 %v2177, 16
        %v2366 = vrot.slane %v2364, 4
        %v2367 = vor.u32 %v2366, %v2362
        %v2368 = vrot.slane %v2367, 4
        %v2370 = vshll.u32 %v2178, 16
        %v2372 = vrot.slane %v2370, 5
        %v2373 = vsel %vm306, %v2368, %v2372
        %v2375 = vshrl.u32 %v2179, 16
        %v2377 = vrot.slane %v2375, 4
        %v2378 = vshll.u32 %v2179, 16
        %v2380 = vrot.slane %v2378, 5
        %v2381 = vor.u32 %v2377, %v2380
        %v2382 = vrot.slane %v2381, 4
        %v2384 = vshll.u32 %v2180, 16
        %v2386 = vrot.slane %v2384, 5
        %v2387 = vsel %vm306, %v2382, %v2386
        %v2388 = vshrl.u32 %v2180, 16
        %v2390 = vrot.slane %v2388, 4
        %v2391 = vor.u32 %v2390, %v2386
        %v2392 = vrot.slane %v2391, 4
        %v2394 = vshll.u32 %v2181, 16
        %v2396 = vrot.slane %v2394, 5
        %v2397 = vsel %vm306, %v2392, %v2396
        %v2399 = vshrl.u32 %v2182, 16
        %v2401 = vrot.slane %v2399, 4
        %v2402 = vshll.u32 %v2182, 16
        %v2404 = vrot.slane %v2402, 5
        %v2405 = vor.u32 %v2401, %v2404
        %v2406 = vrot.slane %v2405, 4
        %v2408 = vshll.u32 %v2183, 16
        %v2410 = vrot.slane %v2408, 5
        %v2411 = vsel %vm306, %v2406, %v2410
        %v2412 = vshrl.u32 %v2183, 16
        %v2414 = vrot.slane %v2412, 4
        %v2415 = vor.u32 %v2414, %v2410
        %v2416 = vrot.slane %v2415, 4
        %v2418 = vshll.u32 %v2184, 16
        %v2420 = vrot.slane %v2418, 5
        %v2421 = vsel %vm306, %v2416, %v2420
        %v2423 = vshrl.u32 %v2185, 16
        %v2425 = vrot.slane %v2423, 4
        %v2426 = vshll.u32 %v2185, 16
        %v2428 = vrot.slane %v2426, 5
        %v2429 = vor.u32 %v2425, %v2428
        %v2430 = vrot.slane %v2429, 4
        %v2432 = vshll.u32 %v2186, 16
        %v2434 = vrot.slane %v2432, 5
        %v2435 = vsel %vm306, %v2430, %v2434
        %v2436 = vshrl.u32 %v2186, 16
        %v2438 = vrot.slane %v2436, 4
        %v2439 = vor.u32 %v2438, %v2434
        %v2440 = vrot.slane %v2439, 4
        %v2442 = vshll.u32 %v2187, 16
        %v2444 = vrot.slane %v2442, 5
        %v2445 = vsel %vm306, %v2440, %v2444
        %v2447 = vshrl.u32 %v2188, 16
        %v2449 = vrot.slane %v2447, 4
        %v2450 = vshll.u32 %v2188, 16
        %v2452 = vrot.slane %v2450, 5
        %v2453 = vor.u32 %v2449, %v2452
        %v2454 = vrot.slane %v2453, 4
        %v2456 = vshll.u32 %v2189, 16
        %v2458 = vrot.slane %v2456, 5
        %v2459 = vsel %vm306, %v2454, %v2458
        %v2460 = vshrl.u32 %v2189, 16
        %v2462 = vrot.slane %v2460, 4
        %v2463 = vor.u32 %v2462, %v2458
        %v2464 = vrot.slane %v2463, 4
        %v2466 = vshll.u32 %v2190, 16
        %v2468 = vrot.slane %v2466, 5
        %v2469 = vsel %vm306, %v2464, %v2468
        %v2471 = vshrl.u32 %v2191, 16
        %v2473 = vrot.slane %v2471, 4
        %v2474 = vshll.u32 %v2191, 16
        %v2476 = vrot.slane %v2474, 5
        %v2477 = vor.u32 %v2473, %v2476
        %v2478 = vrot.slane %v2477, 4
        %v2480 = vshll.u32 %v2192, 16
        %v2482 = vrot.slane %v2480, 5
        %v2483 = vsel %vm306, %v2478, %v2482
        %v2484 = vshrl.u32 %v2192, 16
        %v2486 = vrot.slane %v2484, 4
        %v2487 = vor.u32 %v2486, %v2482
        %v2488 = vrot.slane %v2487, 4
        %v2490 = vshll.u32 %v2193, 16
        %v2492 = vrot.slane %v2490, 5
        %v2493 = vsel %vm306, %v2488, %v2492
        %v2495 = vshrl.u32 %v2194, 16
        %v2497 = vrot.slane %v2495, 4
        %v2498 = vshll.u32 %v2194, 16
        %v2500 = vrot.slane %v2498, 5
        %v2501 = vor.u32 %v2497, %v2500
        %v2502 = vrot.slane %v2501, 4
        %v2504 = vshll.u32 %v2195, 16
        %v2506 = vrot.slane %v2504, 5
        %v2507 = vsel %vm306, %v2502, %v2506
        %v2508 = vshrl.u32 %v2195, 16
        %v2510 = vrot.slane %v2508, 4
        %v2511 = vor.u32 %v2510, %v2506
        %v2512 = vrot.slane %v2511, 4
        %v2514 = vshll.u32 %v2196, 16
        %v2516 = vrot.slane %v2514, 5
        %v2517 = vsel %vm306, %v2512, %v2516
        %v2519 = vshrl.u32 %v2197, 16
        %v2521 = vrot.slane %v2519, 4
        %v2522 = vshll.u32 %v2197, 16
        %v2524 = vrot.slane %v2522, 5
        %v2525 = vor.u32 %v2521, %v2524
        %v2526 = vrot.slane %v2525, 4
        %v2528 = vshll.u32 %v2198, 16
        %v2530 = vrot.slane %v2528, 5
        %v2531 = vsel %vm306, %v2526, %v2530
        %v2532 = vshrl.u32 %v2198, 16
        %v2534 = vrot.slane %v2532, 4
        %v2535 = vor.u32 %v2534, %v2530
        %v2536 = vrot.slane %v2535, 4
        %v2538 = vshll.u32 %v2199, 16
        %v2540 = vrot.slane %v2538, 5
        %v2541 = vsel %vm306, %v2536, %v2540
        %v2543 = vshrl.u32 %v2200, 16
        %v2545 = vrot.slane %v2543, 4
        %v2546 = vshll.u32 %v2200, 16
        %v2548 = vrot.slane %v2546, 5
        %v2549 = vor.u32 %v2545, %v2548
        %v2550 = vrot.slane %v2549, 4
        %v2552 = vshll.u32 %v2201, 16
        %v2554 = vrot.slane %v2552, 5
        %v2555 = vsel %vm306, %v2550, %v2554
        %v2556 = vshrl.u32 %v2201, 16
        %v2558 = vrot.slane %v2556, 4
        %v2559 = vor.u32 %v2558, %v2554
        %v2560 = vrot.slane %v2559, 4
        %v2562 = vshll.u32 %v2202, 16
        %v2564 = vrot.slane %v2562, 5
        %v2565 = vsel %vm306, %v2560, %v2564
        %v2567 = vshrl.u32 %v2203, 16
        %v2569 = vrot.slane %v2567, 4
        %v2570 = vshll.u32 %v2203, 16
        %v2572 = vrot.slane %v2570, 5
        %v2573 = vor.u32 %v2569, %v2572
        %v2574 = vrot.slane %v2573, 4
        %v2576 = vshll.u32 %v2204, 16
        %v2578 = vrot.slane %v2576, 5
        %v2579 = vsel %vm306, %v2574, %v2578
        %v2580 = vshrl.u32 %v2204, 16
        %v2582 = vrot.slane %v2580, 4
        %v2583 = vor.u32 %v2582, %v2578
        %v2584 = vrot.slane %v2583, 4
        %v2586 = vshll.u32 %v2205, 16
        %v2588 = vrot.slane %v2586, 5
        %v2589 = vsel %vm306, %v2584, %v2588
        %s2590 = scalar_lea.vmem [#allocation5], 256
        %v2591 = vld [vmem:[%s2590] sm:$0xf]
        %v2592 = vld [vmem:[%s2590 + $0x4] sm:$0xf]
        %v2593 = vld [vmem:[%s2590 + $0x8] sm:$0xf]
        %v2594 = vld [vmem:[%s2590 + $0xc] sm:$0xf]
        %v2595 = vld [vmem:[%s2590 + $0x10] sm:$0xf]
        %v2596 = vld [vmem:[%s2590 + $0x14] sm:$0xf]
        %v2597 = vld [vmem:[%s2590 + $0x18] sm:$0xf]
        %v2598 = vld [vmem:[%s2590 + $0x1c] sm:$0xf]
        %v2599 = vld [vmem:[%s2590 + $0x20] sm:$0xf]
        %v2600 = vld [vmem:[%s2590 + $0x24] sm:$0xf]
        %v2601 = vld [vmem:[%s2590 + $0x28] sm:$0xf]
        %v2602 = vld [vmem:[%s2590 + $0x2c] sm:$0xf]
        %v2603 = vld [vmem:[%s2590 + $0x30] sm:$0xf]
        %v2604 = vld [vmem:[%s2590 + $0x34] sm:$0xf]
        %v2605 = vld [vmem:[%s2590 + $0x38] sm:$0xf]
        %v2606 = vld [vmem:[%s2590 + $0x3c] sm:$0xf]
        %v2607 = vunpack.c.l.b16 %v2219
        %v2608 = vunpack.c.l.b16 %v2229
        %v2609 = vunpack.c.l.b16 %v2243
        %v2610 = vunpack.c.l.b16 %v2253
        %v2611 = vunpack.c.l.b16 %v2267
        %v2612 = vunpack.c.l.b16 %v2277
        %v2613 = vunpack.c.l.b16 %v2291
        %v2614 = vunpack.c.l.b16 %v2301
        %v2615 = vunpack.c.l.b16 %v2315
        %v2616 = vunpack.c.l.b16 %v2325
        %v2617 = vunpack.c.l.b16 %v2339
        %v2618 = vunpack.c.l.b16 %v2349
        %v2619 = vunpack.c.l.b16 %v2363
        %v2620 = vunpack.c.l.b16 %v2373
        %v2621 = vunpack.c.l.b16 %v2387
        %v2622 = vunpack.c.l.b16 %v2397
        %v2623 = vunpack.c.l.b16 %v2411
        %v2624 = vunpack.c.l.b16 %v2421
        %v2625 = vunpack.c.l.b16 %v2435
        %v2626 = vunpack.c.l.b16 %v2445
        %v2627 = vunpack.c.l.b16 %v2459
        %v2628 = vunpack.c.l.b16 %v2469
        %v2629 = vunpack.c.l.b16 %v2483
        %v2630 = vunpack.c.l.b16 %v2493
        %v2631 = vunpack.c.l.b16 %v2507
        %v2632 = vunpack.c.l.b16 %v2517
        %v2633 = vunpack.c.l.b16 %v2531
        %v2634 = vunpack.c.l.b16 %v2541
        %v2635 = vunpack.c.l.b16 %v2555
        %v2636 = vunpack.c.l.b16 %v2565
        %v2637 = vunpack.c.l.b16 %v2579
        %v2638 = vunpack.c.l.b16 %v2589
        %v2639 = vpack.c.b16 %v2608, %v2607
        %v2640 = vpack.c.b16 %v2610, %v2609
        %v2641 = vpack.c.b16 %v2612, %v2611
        %v2642 = vpack.c.b16 %v2614, %v2613
        %v2643 = vpack.c.b16 %v2616, %v2615
        %v2644 = vpack.c.b16 %v2618, %v2617
        %v2645 = vpack.c.b16 %v2620, %v2619
        %v2646 = vpack.c.b16 %v2622, %v2621
        %v2647 = vpack.c.b16 %v2624, %v2623
        %v2648 = vpack.c.b16 %v2626, %v2625
        %v2649 = vpack.c.b16 %v2628, %v2627
        %v2650 = vpack.c.b16 %v2630, %v2629
        %v2651 = vpack.c.b16 %v2632, %v2631
        %v2652 = vpack.c.b16 %v2634, %v2633
        %v2653 = vpack.c.b16 %v2636, %v2635
        %v2654 = vpack.c.b16 %v2638, %v2637
        %v2687 = vunpack.c.l.b16 %v2591
        %v2688 = vunpack.c.l.b16 %v2592
        %v2689 = vunpack.c.l.b16 %v2593
        %v2690 = vunpack.c.l.b16 %v2594
        %v2691 = vunpack.c.l.b16 %v2595
        %v2692 = vunpack.c.l.b16 %v2596
        %v2693 = vunpack.c.l.b16 %v2597
        %v2694 = vunpack.c.l.b16 %v2598
        %v2695 = vunpack.c.l.b16 %v2599
        %v2696 = vunpack.c.l.b16 %v2600
        %v2697 = vunpack.c.l.b16 %v2601
        %v2698 = vunpack.c.l.b16 %v2602
        %v2699 = vunpack.c.l.b16 %v2603
        %v2700 = vunpack.c.l.b16 %v2604
        %v2701 = vunpack.c.l.b16 %v2605
        %v2702 = vunpack.c.l.b16 %v2606
        %v2703 = vpack.c.b16 %v2688, %v2687
        %v2704 = vpack.c.b16 %v2690, %v2689
        %v2705 = vpack.c.b16 %v2692, %v2691
        %v2706 = vpack.c.b16 %v2694, %v2693
        %v2707 = vpack.c.b16 %v2696, %v2695
        %v2708 = vpack.c.b16 %v2698, %v2697
        %v2709 = vpack.c.b16 %v2700, %v2699
        %v2710 = vpack.c.b16 %v2702, %v2701
        %2719 = vmatprep.subr.bf16.mxu0 0
        %2720 = vmatpush1.bf16.msra.mxu0 %v2703
        %2721 = vmatprep.subr.bf16.mxu0 0
        %2722 = vmatpush1.bf16.msra.mxu0 %v2704
        %2723 = vmatprep.subr.bf16.mxu0 0
        %2724 = vmatpush1.bf16.msra.mxu0 %v2705
        %2725 = vmatprep.subr.bf16.mxu0 0
        %2726 = vmatpush1.bf16.msra.mxu0 %v2706
        %2727 = vmatprep.subr.bf16.mxu0 0
        %2728 = vmatpush1.bf16.msra.mxu0 %v2707
        %2729 = vmatprep.subr.bf16.mxu0 0
        %2730 = vmatpush1.bf16.msra.mxu0 %v2708
        %2731 = vmatprep.subr.bf16.mxu0 0
        %2732 = vmatpush1.bf16.msra.mxu0 %v2709
        %2733 = vmatprep.subr.bf16.mxu0 0
        %2734 = vmatpush1.bf16.msra.mxu0 %v2710
        %2735 = vmatprep.subr.bf16.mxu0 0
        %2736 = vmatpush1.bf16.msra.mxu0 0
        %2737 = vmatprep.subr.bf16.mxu0 0
        %2738 = vmatpush1.bf16.msra.mxu0 0
        %2739 = vmatprep.subr.bf16.mxu0 0
        %2740 = vmatpush1.bf16.msra.mxu0 0
        %2741 = vmatprep.subr.bf16.mxu0 0
        %2742 = vmatpush1.bf16.msra.mxu0 0
        %2743 = vmatprep.subr.bf16.mxu0 0
        %2744 = vmatpush1.bf16.msra.mxu0 0
        %2745 = vmatprep.subr.bf16.mxu0 0
        %2746 = vmatpush1.bf16.msra.mxu0 0
        %2747 = vmatprep.subr.bf16.mxu0 0
        %2748 = vmatpush1.bf16.msra.mxu0 0
        %2749 = vmatprep.subr.bf16.mxu0 0
        %2750 = vmatpush1.bf16.msra.mxu0 0
        %2751 = vmatprep.mubr.bf16.mxu0 0
        %2752 = vmatmul.mubr.bf16.gmra.mrb[0].mxu0 %v2639
        %v2753 = vpop.f32.mrb[0].mxu0
        %v2754 = vadd.f32 0.0, %v2753
        %v2755 = vpop.f32.mrb[0].mxu0
        %v2756 = vpop.f32.mrb[0].mxu0
        %v2757 = vadd.f32 0.0, %v2756
        %v2758 = vpop.f32.mrb[0].mxu0
        %2759 = vmatprep.mubr.bf16.mxu0 0
        %2760 = vmatmul.mubr.bf16.gmra.mrb[0].mxu0 %v2640
        %v2761 = vpop.f32.mrb[0].mxu0
        %v2762 = vadd.f32 0.0, %v2761
        %v2763 = vpop.f32.mrb[0].mxu0
        %v2764 = vpop.f32.mrb[0].mxu0
        %v2765 = vadd.f32 0.0, %v2764
        %v2766 = vpop.f32.mrb[0].mxu0
        %2767 = vmatprep.mubr.bf16.mxu0 0
        %2768 = vmatmul.mubr.bf16.gmra.mrb[0].mxu0 %v2641
        %v2769 = vpop.f32.mrb[0].mxu0
        %v2770 = vadd.f32 0.0, %v2769
        %v2771 = vpop.f32.mrb[0].mxu0
        %v2772 = vpop.f32.mrb[0].mxu0
        %v2773 = vadd.f32 0.0, %v2772
        %v2774 = vpop.f32.mrb[0].mxu0
        %2775 = vmatprep.mubr.bf16.mxu0 0
        %2776 = vmatmul.mubr.bf16.gmra.mrb[0].mxu0 %v2642
        %v2777 = vpop.f32.mrb[0].mxu0
        %v2778 = vadd.f32 0.0, %v2777
        %v2779 = vpop.f32.mrb[0].mxu0
        %v2780 = vpop.f32.mrb[0].mxu0
        %v2781 = vadd.f32 0.0, %v2780
        %v2782 = vpop.f32.mrb[0].mxu0
        %2783 = vmatprep.mubr.bf16.mxu0 0
        %2784 = vmatmul.mubr.bf16.gmra.mrb[0].mxu0 %v2643
        %v2785 = vpop.f32.mrb[0].mxu0
        %v2786 = vadd.f32 0.0, %v2785
        %v2787 = vpop.f32.mrb[0].mxu0
        %v2788 = vpop.f32.mrb[0].mxu0
        %v2789 = vadd.f32 0.0, %v2788
        %v2790 = vpop.f32.mrb[0].mxu0
        %2791 = vmatprep.mubr.bf16.mxu0 0
        %2792 = vmatmul.mubr.bf16.gmra.mrb[0].mxu0 %v2644
        %v2793 = vpop.f32.mrb[0].mxu0
        %v2794 = vadd.f32 0.0, %v2793
        %v2795 = vpop.f32.mrb[0].mxu0
        %v2796 = vpop.f32.mrb[0].mxu0
        %v2797 = vadd.f32 0.0, %v2796
        %v2798 = vpop.f32.mrb[0].mxu0
        %2799 = vmatprep.mubr.bf16.mxu0 0
        %2800 = vmatmul.mubr.bf16.gmra.mrb[0].mxu0 %v2645
        %v2801 = vpop.f32.mrb[0].mxu0
        %v2802 = vadd.f32 0.0, %v2801
        %v2803 = vpop.f32.mrb[0].mxu0
        %v2804 = vpop.f32.mrb[0].mxu0
        %v2805 = vadd.f32 0.0, %v2804
        %v2806 = vpop.f32.mrb[0].mxu0
        %2807 = vmatprep.mubr.bf16.mxu0 0
        %2808 = vmatmul.mubr.bf16.gmra.mrb[0].mxu0 %v2646
        %v2809 = vpop.f32.mrb[0].mxu0
        %v2810 = vadd.f32 0.0, %v2809
        %v2811 = vpop.f32.mrb[0].mxu0
        %v2812 = vpop.f32.mrb[0].mxu0
        %v2813 = vadd.f32 0.0, %v2812
        %v2814 = vpop.f32.mrb[0].mxu0
        %2815 = vmatprep.mubr.bf16.mxu0 0
        %2816 = vmatmul.mubr.bf16.gmra.mrb[0].mxu0 %v2647
        %v2817 = vpop.f32.mrb[0].mxu0
        %v2818 = vadd.f32 0.0, %v2817
        %v2819 = vpop.f32.mrb[0].mxu0
        %v2820 = vpop.f32.mrb[0].mxu0
        %v2821 = vadd.f32 0.0, %v2820
        %v2822 = vpop.f32.mrb[0].mxu0
        %2823 = vmatprep.mubr.bf16.mxu0 0
        %2824 = vmatmul.mubr.bf16.gmra.mrb[0].mxu0 %v2648
        %v2825 = vpop.f32.mrb[0].mxu0
        %v2826 = vadd.f32 0.0, %v2825
        %v2827 = vpop.f32.mrb[0].mxu0
        %v2828 = vpop.f32.mrb[0].mxu0
        %v2829 = vadd.f32 0.0, %v2828
        %v2830 = vpop.f32.mrb[0].mxu0
        %2831 = vmatprep.mubr.bf16.mxu0 0
        %2832 = vmatmul.mubr.bf16.gmra.mrb[0].mxu0 %v2649
        %v2833 = vpop.f32.mrb[0].mxu0
        %v2834 = vadd.f32 0.0, %v2833
        %v2835 = vpop.f32.mrb[0].mxu0
        %v2836 = vpop.f32.mrb[0].mxu0
        %v2837 = vadd.f32 0.0, %v2836
        %v2838 = vpop.f32.mrb[0].mxu0
        %2839 = vmatprep.mubr.bf16.mxu0 0
        %2840 = vmatmul.mubr.bf16.gmra.mrb[0].mxu0 %v2650
        %v2841 = vpop.f32.mrb[0].mxu0
        %v2842 = vadd.f32 0.0, %v2841
        %v2843 = vpop.f32.mrb[0].mxu0
        %v2844 = vpop.f32.mrb[0].mxu0
        %v2845 = vadd.f32 0.0, %v2844
        %v2846 = vpop.f32.mrb[0].mxu0
        %2847 = vmatprep.mubr.bf16.mxu0 0
        %2848 = vmatmul.mubr.bf16.gmra.mrb[0].mxu0 %v2651
        %v2849 = vpop.f32.mrb[0].mxu0
        %v2850 = vadd.f32 0.0, %v2849
        %v2851 = vpop.f32.mrb[0].mxu0
        %v2852 = vpop.f32.mrb[0].mxu0
        %v2853 = vadd.f32 0.0, %v2852
        %v2854 = vpop.f32.mrb[0].mxu0
        %2855 = vmatprep.mubr.bf16.mxu0 0
        %2856 = vmatmul.mubr.bf16.gmra.mrb[0].mxu0 %v2652
        %v2857 = vpop.f32.mrb[0].mxu0
        %v2858 = vadd.f32 0.0, %v2857
        %v2859 = vpop.f32.mrb[0].mxu0
        %v2860 = vpop.f32.mrb[0].mxu0
        %v2861 = vadd.f32 0.0, %v2860
        %v2862 = vpop.f32.mrb[0].mxu0
        %2863 = vmatprep.mubr.bf16.mxu0 0
        %2864 = vmatmul.mubr.bf16.gmra.mrb[0].mxu0 %v2653
        %v2865 = vpop.f32.mrb[0].mxu0
        %v2866 = vadd.f32 0.0, %v2865
        %v2867 = vpop.f32.mrb[0].mxu0
        %v2868 = vpop.f32.mrb[0].mxu0
        %v2869 = vadd.f32 0.0, %v2868
        %v2870 = vpop.f32.mrb[0].mxu0
        %2871 = vmatprep.mubr.bf16.mxu0 0
        %2872 = vmatmul.mubr.bf16.gmra.mrb[0].mxu0 %v2654
        %v2873 = vpop.f32.mrb[0].mxu0
        %v2874 = vadd.f32 0.0, %v2873
        %v2875 = vpop.f32.mrb[0].mxu0
        %v2876 = vpop.f32.mrb[0].mxu0
        %v2877 = vadd.f32 0.0, %v2876
        %v2878 = vpop.f32.mrb[0].mxu0
        %2879 = vdwg.mxu0
        %v2880 = vadd.f32 %v2126, %v2754
        %v2881 = vadd.f32 %v2127, %v2757
        %v2882 = vadd.f32 %v2128, %v2762
        %v2883 = vadd.f32 %v2129, %v2765
        %v2884 = vadd.f32 %v2130, %v2770
        %v2885 = vadd.f32 %v2131, %v2773
        %v2886 = vadd.f32 %v2132, %v2778
        %v2887 = vadd.f32 %v2133, %v2781
        %v2888 = vadd.f32 %v2134, %v2786
        %v2889 = vadd.f32 %v2135, %v2789
        %v2890 = vadd.f32 %v2136, %v2794
        %v2891 = vadd.f32 %v2137, %v2797
        %v2892 = vadd.f32 %v2138, %v2802
        %v2893 = vadd.f32 %v2139, %v2805
        %v2894 = vadd.f32 %v2140, %v2810
        %v2895 = vadd.f32 %v2141, %v2813
        %v2896 = vadd.f32 %v2142, %v2818
        %v2897 = vadd.f32 %v2143, %v2821
        %v2898 = vadd.f32 %v2144, %v2826
        %v2899 = vadd.f32 %v2145, %v2829
        %v2900 = vadd.f32 %v2146, %v2834
        %v2901 = vadd.f32 %v2147, %v2837
        %v2902 = vadd.f32 %v2148, %v2842
        %v2903 = vadd.f32 %v2149, %v2845
        %v2904 = vadd.f32 %v2150, %v2850
        %v2905 = vadd.f32 %v2151, %v2853
        %v2906 = vadd.f32 %v2152, %v2858
        %v2907 = vadd.f32 %v2153, %v2861
        %v2908 = vadd.f32 %v2154, %v2866
        %v2909 = vadd.f32 %v2155, %v2869
        %v2910 = vadd.f32 %v2156, %v2874
        %v2911 = vadd.f32 %v2157, %v2877
        %v2912 = vld [vmem:[%s1771] sm:$0xe]
        %v2913 = vld [vmem:[%s1771 + $0x10] sm:$0xe]
        %v2914 = vld [vmem:[%s1771 + $0x20] sm:$0xe]
        %v2915 = vld [vmem:[%s1771 + $0x30] sm:$0xe]
        %v2916 = vld [vmem:[%s1771 + $0x40] sm:$0xe]
        %v2917 = vld [vmem:[%s1771 + $0x50] sm:$0xe]
        %v2918 = vld [vmem:[%s1771 + $0x60] sm:$0xe]
        %v2919 = vld [vmem:[%s1771 + $0x70] sm:$0xe]
        %v2920 = vld [vmem:[%s1771 + $0x80] sm:$0xe]
        %v2921 = vld [vmem:[%s1771 + $0x90] sm:$0xe]
        %v2922 = vld [vmem:[%s1771 + $0xa0] sm:$0xe]
        %v2923 = vld [vmem:[%s1771 + $0xb0] sm:$0xe]
        %v2924 = vld [vmem:[%s1771 + $0xc0] sm:$0xe]
        %v2925 = vld [vmem:[%s1771 + $0xd0] sm:$0xe]
        %v2926 = vld [vmem:[%s1771 + $0xe0] sm:$0xe]
        %v2927 = vld [vmem:[%s1771 + $0xf0] sm:$0xe]
        %v2976 = vrot.slane %v2912, 5
        %v2977 = vrot.slane %v2976, 4
        %v2978 = vrot.slane %v2159, 5
        %v2979 = vsel %vm1336, %v2977, %v2978
        %v2980 = vrot.slane %v2978, 4
        %v2981 = vrot.slane %v2160, 5
        %v2982 = vsel %vm1336, %v2980, %v2981
        %v2983 = vrot.slane %v2913, 5
        %v2984 = vrot.slane %v2983, 4
        %v2985 = vrot.slane %v2162, 5
        %v2986 = vsel %vm1336, %v2984, %v2985
        %v2987 = vrot.slane %v2985, 4
        %v2988 = vrot.slane %v2163, 5
        %v2989 = vsel %vm1336, %v2987, %v2988
        %v2990 = vrot.slane %v2914, 5
        %v2991 = vrot.slane %v2990, 4
        %v2992 = vrot.slane %v2165, 5
        %v2993 = vsel %vm1336, %v2991, %v2992
        %v2994 = vrot.slane %v2992, 4
        %v2995 = vrot.slane %v2166, 5
        %v2996 = vsel %vm1336, %v2994, %v2995
        %v2997 = vrot.slane %v2915, 5
        %v2998 = vrot.slane %v2997, 4
        %v2999 = vrot.slane %v2168, 5
        %v3000 = vsel %vm1336, %v2998, %v2999
        %v3001 = vrot.slane %v2999, 4
        %v3002 = vrot.slane %v2169, 5
        %v3003 = vsel %vm1336, %v3001, %v3002
        %v3004 = vrot.slane %v2916, 5
        %v3005 = vrot.slane %v3004, 4
        %v3006 = vrot.slane %v2171, 5
        %v3007 = vsel %vm1336, %v3005, %v3006
        %v3008 = vrot.slane %v3006, 4
        %v3009 = vrot.slane %v2172, 5
        %v3010 = vsel %vm1336, %v3008, %v3009
        %v3011 = vrot.slane %v2917, 5
        %v3012 = vrot.slane %v3011, 4
        %v3013 = vrot.slane %v2174, 5
        %v3014 = vsel %vm1336, %v3012, %v3013
        %v3015 = vrot.slane %v3013, 4
        %v3016 = vrot.slane %v2175, 5
        %v3017 = vsel %vm1336, %v3015, %v3016
        %v3018 = vrot.slane %v2918, 5
        %v3019 = vrot.slane %v3018, 4
        %v3020 = vrot.slane %v2177, 5
        %v3021 = vsel %vm1336, %v3019, %v3020
        %v3022 = vrot.slane %v3020, 4
        %v3023 = vrot.slane %v2178, 5
        %v3024 = vsel %vm1336, %v3022, %v3023
        %v3025 = vrot.slane %v2919, 5
        %v3026 = vrot.slane %v3025, 4
        %v3027 = vrot.slane %v2180, 5
        %v3028 = vsel %vm1336, %v3026, %v3027
        %v3029 = vrot.slane %v3027, 4
        %v3030 = vrot.slane %v2181, 5
        %v3031 = vsel %vm1336, %v3029, %v3030
        %v3032 = vrot.slane %v2920, 5
        %v3033 = vrot.slane %v3032, 4
        %v3034 = vrot.slane %v2183, 5
        %v3035 = vsel %vm1336, %v3033, %v3034
        %v3036 = vrot.slane %v3034, 4
        %v3037 = vrot.slane %v2184, 5
        %v3038 = vsel %vm1336, %v3036, %v3037
        %v3039 = vrot.slane %v2921, 5
        %v3040 = vrot.slane %v3039, 4
        %v3041 = vrot.slane %v2186, 5
        %v3042 = vsel %vm1336, %v3040, %v3041
        %v3043 = vrot.slane %v3041, 4
        %v3044 = vrot.slane %v2187, 5
        %v3045 = vsel %vm1336, %v3043, %v3044
        %v3046 = vrot.slane %v2922, 5
        %v3047 = vrot.slane %v3046, 4
        %v3048 = vrot.slane %v2189, 5
        %v3049 = vsel %vm1336, %v3047, %v3048
        %v3050 = vrot.slane %v3048, 4
        %v3051 = vrot.slane %v2190, 5
        %v3052 = vsel %vm1336, %v3050, %v3051
        %v3053 = vrot.slane %v2923, 5
        %v3054 = vrot.slane %v3053, 4
        %v3055 = vrot.slane %v2192, 5
        %v3056 = vsel %vm1336, %v3054, %v3055
        %v3057 = vrot.slane %v3055, 4
        %v3058 = vrot.slane %v2193, 5
        %v3059 = vsel %vm1336, %v3057, %v3058
        %v3060 = vrot.slane %v2924, 5
        %v3061 = vrot.slane %v3060, 4
        %v3062 = vrot.slane %v2195, 5
        %v3063 = vsel %vm1336, %v3061, %v3062
        %v3064 = vrot.slane %v3062, 4
        %v3065 = vrot.slane %v2196, 5
        %v3066 = vsel %vm1336, %v3064, %v3065
        %v3067 = vrot.slane %v2925, 5
        %v3068 = vrot.slane %v3067, 4
        %v3069 = vrot.slane %v2198, 5
        %v3070 = vsel %vm1336, %v3068, %v3069
        %v3071 = vrot.slane %v3069, 4
        %v3072 = vrot.slane %v2199, 5
        %v3073 = vsel %vm1336, %v3071, %v3072
        %v3074 = vrot.slane %v2926, 5
        %v3075 = vrot.slane %v3074, 4
        %v3076 = vrot.slane %v2201, 5
        %v3077 = vsel %vm1336, %v3075, %v3076
        %v3078 = vrot.slane %v3076, 4
        %v3079 = vrot.slane %v2202, 5
        %v3080 = vsel %vm1336, %v3078, %v3079
        %v3081 = vrot.slane %v2927, 5
        %v3082 = vrot.slane %v3081, 4
        %v3083 = vrot.slane %v2204, 5
        %v3084 = vsel %vm1336, %v3082, %v3083
        %v3085 = vrot.slane %v3083, 4
        %v3086 = vrot.slane %v2205, 5
        %v3087 = vsel %vm1336, %v3085, %v3086
        %s3088 = scalar_lea.vmem [#allocation5], 320
        %v3089 = vld [vmem:[%s3088] sm:$0xf]
        %v3090 = vld [vmem:[%s3088 + $0x4] sm:$0xf]
        %v3091 = vld [vmem:[%s3088 + $0x8] sm:$0xf]
        %v3092 = vld [vmem:[%s3088 + $0xc] sm:$0xf]
        %v3093 = vld [vmem:[%s3088 + $0x10] sm:$0xf]
        %v3094 = vld [vmem:[%s3088 + $0x14] sm:$0xf]
        %v3095 = vld [vmem:[%s3088 + $0x18] sm:$0xf]
        %v3096 = vld [vmem:[%s3088 + $0x1c] sm:$0xf]
        %v3097 = vld [vmem:[%s3088 + $0x20] sm:$0xf]
        %v3098 = vld [vmem:[%s3088 + $0x24] sm:$0xf]
        %v3099 = vld [vmem:[%s3088 + $0x28] sm:$0xf]
        %v3100 = vld [vmem:[%s3088 + $0x2c] sm:$0xf]
        %v3101 = vld [vmem:[%s3088 + $0x30] sm:$0xf]
        %v3102 = vld [vmem:[%s3088 + $0x34] sm:$0xf]
        %v3103 = vld [vmem:[%s3088 + $0x38] sm:$0xf]
        %v3104 = vld [vmem:[%s3088 + $0x3c] sm:$0xf]
        %v3105 = vunpack.c.l.b16 %v2979
        %v3106 = vunpack.c.l.b16 %v2982
        %v3107 = vunpack.c.l.b16 %v2986
        %v3108 = vunpack.c.l.b16 %v2989
        %v3109 = vunpack.c.l.b16 %v2993
        %v3110 = vunpack.c.l.b16 %v2996
        %v3111 = vunpack.c.l.b16 %v3000
        %v3112 = vunpack.c.l.b16 %v3003
        %v3113 = vunpack.c.l.b16 %v3007
        %v3114 = vunpack.c.l.b16 %v3010
        %v3115 = vunpack.c.l.b16 %v3014
        %v3116 = vunpack.c.l.b16 %v3017
        %v3117 = vunpack.c.l.b16 %v3021
        %v3118 = vunpack.c.l.b16 %v3024
        %v3119 = vunpack.c.l.b16 %v3028
        %v3120 = vunpack.c.l.b16 %v3031
        %v3121 = vunpack.c.l.b16 %v3035
        %v3122 = vunpack.c.l.b16 %v3038
        %v3123 = vunpack.c.l.b16 %v3042
        %v3124 = vunpack.c.l.b16 %v3045
        %v3125 = vunpack.c.l.b16 %v3049
        %v3126 = vunpack.c.l.b16 %v3052
        %v3127 = vunpack.c.l.b16 %v3056
        %v3128 = vunpack.c.l.b16 %v3059
        %v3129 = vunpack.c.l.b16 %v3063
        %v3130 = vunpack.c.l.b16 %v3066
        %v3131 = vunpack.c.l.b16 %v3070
        %v3132 = vunpack.c.l.b16 %v3073
        %v3133 = vunpack.c.l.b16 %v3077
        %v3134 = vunpack.c.l.b16 %v3080
        %v3135 = vunpack.c.l.b16 %v3084
        %v3136 = vunpack.c.l.b16 %v3087
        %v3137 = vpack.c.b16 %v3106, %v3105
        %v3138 = vpack.c.b16 %v3108, %v3107
        %v3139 = vpack.c.b16 %v3110, %v3109
        %v3140 = vpack.c.b16 %v3112, %v3111
        %v3141 = vpack.c.b16 %v3114, %v3113
        %v3142 = vpack.c.b16 %v3116, %v3115
        %v3143 = vpack.c.b16 %v3118, %v3117
        %v3144 = vpack.c.b16 %v3120, %v3119
        %v3145 = vpack.c.b16 %v3122, %v3121
        %v3146 = vpack.c.b16 %v3124, %v3123
        %v3147 = vpack.c.b16 %v3126, %v3125
        %v3148 = vpack.c.b16 %v3128, %v3127
        %v3149 = vpack.c.b16 %v3130, %v3129
        %v3150 = vpack.c.b16 %v3132, %v3131
        %v3151 = vpack.c.b16 %v3134, %v3133
        %v3152 = vpack.c.b16 %v3136, %v3135
        %v3185 = vunpack.c.l.b16 %v3089
        %v3186 = vunpack.c.l.b16 %v3090
        %v3187 = vunpack.c.l.b16 %v3091
        %v3188 = vunpack.c.l.b16 %v3092
        %v3189 = vunpack.c.l.b16 %v3093
        %v3190 = vunpack.c.l.b16 %v3094
        %v3191 = vunpack.c.l.b16 %v3095
        %v3192 = vunpack.c.l.b16 %v3096
        %v3193 = vunpack.c.l.b16 %v3097
        %v3194 = vunpack.c.l.b16 %v3098
        %v3195 = vunpack.c.l.b16 %v3099
        %v3196 = vunpack.c.l.b16 %v3100
        %v3197 = vunpack.c.l.b16 %v3101
        %v3198 = vunpack.c.l.b16 %v3102
        %v3199 = vunpack.c.l.b16 %v3103
        %v3200 = vunpack.c.l.b16 %v3104
        %v3201 = vpack.c.b16 %v3186, %v3185
        %v3202 = vpack.c.b16 %v3188, %v3187
        %v3203 = vpack.c.b16 %v3190, %v3189
        %v3204 = vpack.c.b16 %v3192, %v3191
        %v3205 = vpack.c.b16 %v3194, %v3193
        %v3206 = vpack.c.b16 %v3196, %v3195
        %v3207 = vpack.c.b16 %v3198, %v3197
        %v3208 = vpack.c.b16 %v3200, %v3199
        %3217 = vmatprep.subr.bf16.mxu0 0
        %3218 = vmatpush1.bf16.msra.mxu0 %v3201
        %3219 = vmatprep.subr.bf16.mxu0 0
        %3220 = vmatpush1.bf16.msra.mxu0 %v3202
        %3221 = vmatprep.subr.bf16.mxu0 0
        %3222 = vmatpush1.bf16.msra.mxu0 %v3203
        %3223 = vmatprep.subr.bf16.mxu0 0
        %3224 = vmatpush1.bf16.msra.mxu0 %v3204
        %3225 = vmatprep.subr.bf16.mxu0 0
        %3226 = vmatpush1.bf16.msra.mxu0 %v3205
        %3227 = vmatprep.subr.bf16.mxu0 0
        %3228 = vmatpush1.bf16.msra.mxu0 %v3206
        %3229 = vmatprep.subr.bf16.mxu0 0
        %3230 = vmatpush1.bf16.msra.mxu0 %v3207
        %3231 = vmatprep.subr.bf16.mxu0 0
        %3232 = vmatpush1.bf16.msra.mxu0 %v3208
        %3233 = vmatprep.subr.bf16.mxu0 0
        %3234 = vmatpush1.bf16.msra.mxu0 0
        %3235 = vmatprep.subr.bf16.mxu0 0
        %3236 = vmatpush1.bf16.msra.mxu0 0
        %3237 = vmatprep.subr.bf16.mxu0 0
        %3238 = vmatpush1.bf16.msra.mxu0 0
        %3239 = vmatprep.subr.bf16.mxu0 0
        %3240 = vmatpush1.bf16.msra.mxu0 0
        %3241 = vmatprep.subr.bf16.mxu0 0
        %3242 = vmatpush1.bf16.msra.mxu0 0
        %3243 = vmatprep.subr.bf16.mxu0 0
        %3244 = vmatpush1.bf16.msra.mxu0 0
        %3245 = vmatprep.subr.bf16.mxu0 0
        %3246 = vmatpush1.bf16.msra.mxu0 0
        %3247 = vmatprep.subr.bf16.mxu0 0
        %3248 = vmatpush1.bf16.msra.mxu0 0
        %3249 = vmatprep.mubr.bf16.mxu0 0
        %3250 = vmatmul.mubr.bf16.gmra.mrb[0].mxu0 %v3137
        %v3251 = vpop.f32.mrb[0].mxu0
        %v3252 = vadd.f32 0.0, %v3251
        %v3253 = vpop.f32.mrb[0].mxu0
        %v3254 = vpop.f32.mrb[0].mxu0
        %v3255 = vadd.f32 0.0, %v3254
        %v3256 = vpop.f32.mrb[0].mxu0
        %3257 = vmatprep.mubr.bf16.mxu0 0
        %3258 = vmatmul.mubr.bf16.gmra.mrb[0].mxu0 %v3138
        %v3259 = vpop.f32.mrb[0].mxu0
        %v3260 = vadd.f32 0.0, %v3259
        %v3261 = vpop.f32.mrb[0].mxu0
        %v3262 = vpop.f32.mrb[0].mxu0
        %v3263 = vadd.f32 0.0, %v3262
        %v3264 = vpop.f32.mrb[0].mxu0
        %3265 = vmatprep.mubr.bf16.mxu0 0
        %3266 = vmatmul.mubr.bf16.gmra.mrb[0].mxu0 %v3139
        %v3267 = vpop.f32.mrb[0].mxu0
        %v3268 = vadd.f32 0.0, %v3267
        %v3269 = vpop.f32.mrb[0].mxu0
        %v3270 = vpop.f32.mrb[0].mxu0
        %v3271 = vadd.f32 0.0, %v3270
        %v3272 = vpop.f32.mrb[0].mxu0
        %3273 = vmatprep.mubr.bf16.mxu0 0
        %3274 = vmatmul.mubr.bf16.gmra.mrb[0].mxu0 %v3140
        %v3275 = vpop.f32.mrb[0].mxu0
        %v3276 = vadd.f32 0.0, %v3275
        %v3277 = vpop.f32.mrb[0].mxu0
        %v3278 = vpop.f32.mrb[0].mxu0
        %v3279 = vadd.f32 0.0, %v3278
        %v3280 = vpop.f32.mrb[0].mxu0
        %3281 = vmatprep.mubr.bf16.mxu0 0
        %3282 = vmatmul.mubr.bf16.gmra.mrb[0].mxu0 %v3141
        %v3283 = vpop.f32.mrb[0].mxu0
        %v3284 = vadd.f32 0.0, %v3283
        %v3285 = vpop.f32.mrb[0].mxu0
        %v3286 = vpop.f32.mrb[0].mxu0
        %v3287 = vadd.f32 0.0, %v3286
        %v3288 = vpop.f32.mrb[0].mxu0
        %3289 = vmatprep.mubr.bf16.mxu0 0
        %3290 = vmatmul.mubr.bf16.gmra.mrb[0].mxu0 %v3142
        %v3291 = vpop.f32.mrb[0].mxu0
        %v3292 = vadd.f32 0.0, %v3291
        %v3293 = vpop.f32.mrb[0].mxu0
        %v3294 = vpop.f32.mrb[0].mxu0
        %v3295 = vadd.f32 0.0, %v3294
        %v3296 = vpop.f32.mrb[0].mxu0
        %3297 = vmatprep.mubr.bf16.mxu0 0
        %3298 = vmatmul.mubr.bf16.gmra.mrb[0].mxu0 %v3143
        %v3299 = vpop.f32.mrb[0].mxu0
        %v3300 = vadd.f32 0.0, %v3299
        %v3301 = vpop.f32.mrb[0].mxu0
        %v3302 = vpop.f32.mrb[0].mxu0
        %v3303 = vadd.f32 0.0, %v3302
        %v3304 = vpop.f32.mrb[0].mxu0
        %3305 = vmatprep.mubr.bf16.mxu0 0
        %3306 = vmatmul.mubr.bf16.gmra.mrb[0].mxu0 %v3144
        %v3307 = vpop.f32.mrb[0].mxu0
        %v3308 = vadd.f32 0.0, %v3307
        %v3309 = vpop.f32.mrb[0].mxu0
        %v3310 = vpop.f32.mrb[0].mxu0
        %v3311 = vadd.f32 0.0, %v3310
        %v3312 = vpop.f32.mrb[0].mxu0
        %3313 = vmatprep.mubr.bf16.mxu0 0
        %3314 = vmatmul.mubr.bf16.gmra.mrb[0].mxu0 %v3145
        %v3315 = vpop.f32.mrb[0].mxu0
        %v3316 = vadd.f32 0.0, %v3315
        %v3317 = vpop.f32.mrb[0].mxu0
        %v3318 = vpop.f32.mrb[0].mxu0
        %v3319 = vadd.f32 0.0, %v3318
        %v3320 = vpop.f32.mrb[0].mxu0
        %3321 = vmatprep.mubr.bf16.mxu0 0
        %3322 = vmatmul.mubr.bf16.gmra.mrb[0].mxu0 %v3146
        %v3323 = vpop.f32.mrb[0].mxu0
        %v3324 = vadd.f32 0.0, %v3323
        %v3325 = vpop.f32.mrb[0].mxu0
        %v3326 = vpop.f32.mrb[0].mxu0
        %v3327 = vadd.f32 0.0, %v3326
        %v3328 = vpop.f32.mrb[0].mxu0
        %3329 = vmatprep.mubr.bf16.mxu0 0
        %3330 = vmatmul.mubr.bf16.gmra.mrb[0].mxu0 %v3147
        %v3331 = vpop.f32.mrb[0].mxu0
        %v3332 = vadd.f32 0.0, %v3331
        %v3333 = vpop.f32.mrb[0].mxu0
        %v3334 = vpop.f32.mrb[0].mxu0
        %v3335 = vadd.f32 0.0, %v3334
        %v3336 = vpop.f32.mrb[0].mxu0
        %3337 = vmatprep.mubr.bf16.mxu0 0
        %3338 = vmatmul.mubr.bf16.gmra.mrb[0].mxu0 %v3148
        %v3339 = vpop.f32.mrb[0].mxu0
        %v3340 = vadd.f32 0.0, %v3339
        %v3341 = vpop.f32.mrb[0].mxu0
        %v3342 = vpop.f32.mrb[0].mxu0
        %v3343 = vadd.f32 0.0, %v3342
        %v3344 = vpop.f32.mrb[0].mxu0
        %3345 = vmatprep.mubr.bf16.mxu0 0
        %3346 = vmatmul.mubr.bf16.gmra.mrb[0].mxu0 %v3149
        %v3347 = vpop.f32.mrb[0].mxu0
        %v3348 = vadd.f32 0.0, %v3347
        %v3349 = vpop.f32.mrb[0].mxu0
        %v3350 = vpop.f32.mrb[0].mxu0
        %v3351 = vadd.f32 0.0, %v3350
        %v3352 = vpop.f32.mrb[0].mxu0
        %3353 = vmatprep.mubr.bf16.mxu0 0
        %3354 = vmatmul.mubr.bf16.gmra.mrb[0].mxu0 %v3150
        %v3355 = vpop.f32.mrb[0].mxu0
        %v3356 = vadd.f32 0.0, %v3355
        %v3357 = vpop.f32.mrb[0].mxu0
        %v3358 = vpop.f32.mrb[0].mxu0
        %v3359 = vadd.f32 0.0, %v3358
        %v3360 = vpop.f32.mrb[0].mxu0
        %3361 = vmatprep.mubr.bf16.mxu0 0
        %3362 = vmatmul.mubr.bf16.gmra.mrb[0].mxu0 %v3151
        %v3363 = vpop.f32.mrb[0].mxu0
        %v3364 = vadd.f32 0.0, %v3363
        %v3365 = vpop.f32.mrb[0].mxu0
        %v3366 = vpop.f32.mrb[0].mxu0
        %v3367 = vadd.f32 0.0, %v3366
        %v3368 = vpop.f32.mrb[0].mxu0
        %3369 = vmatprep.mubr.bf16.mxu0 0
        %3370 = vmatmul.mubr.bf16.gmra.mrb[0].mxu0 %v3152
        %v3371 = vpop.f32.mrb[0].mxu0
        %v3372 = vadd.f32 0.0, %v3371
        %v3373 = vpop.f32.mrb[0].mxu0
        %v3374 = vpop.f32.mrb[0].mxu0
        %v3375 = vadd.f32 0.0, %v3374
        %v3376 = vpop.f32.mrb[0].mxu0
        %3377 = vdwg.mxu0
        %v3378 = vadd.f32 %v2880, %v3252
        %v3379 = vadd.f32 %v2881, %v3255
        %v3380 = vadd.f32 %v2882, %v3260
        %v3381 = vadd.f32 %v2883, %v3263
        %v3382 = vadd.f32 %v2884, %v3268
        %v3383 = vadd.f32 %v2885, %v3271
        %v3384 = vadd.f32 %v2886, %v3276
        %v3385 = vadd.f32 %v2887, %v3279
        %v3386 = vadd.f32 %v2888, %v3284
        %v3387 = vadd.f32 %v2889, %v3287
        %v3388 = vadd.f32 %v2890, %v3292
        %v3389 = vadd.f32 %v2891, %v3295
        %v3390 = vadd.f32 %v2892, %v3300
        %v3391 = vadd.f32 %v2893, %v3303
        %v3392 = vadd.f32 %v2894, %v3308
        %v3393 = vadd.f32 %v2895, %v3311
        %v3394 = vadd.f32 %v2896, %v3316
        %v3395 = vadd.f32 %v2897, %v3319
        %v3396 = vadd.f32 %v2898, %v3324
        %v3397 = vadd.f32 %v2899, %v3327
        %v3398 = vadd.f32 %v2900, %v3332
        %v3399 = vadd.f32 %v2901, %v3335
        %v3400 = vadd.f32 %v2902, %v3340
        %v3401 = vadd.f32 %v2903, %v3343
        %v3402 = vadd.f32 %v2904, %v3348
        %v3403 = vadd.f32 %v2905, %v3351
        %v3404 = vadd.f32 %v2906, %v3356
        %v3405 = vadd.f32 %v2907, %v3359
        %v3406 = vadd.f32 %v2908, %v3364
        %v3407 = vadd.f32 %v2909, %v3367
        %v3408 = vadd.f32 %v2910, %v3372
        %v3409 = vadd.f32 %v2911, %v3375
        %s3410 = scalar_lea.vmem %s206, 32 [#allocation2]
        %v3411 = vld [vmem:[%s3410] sm:$0xf]
        %v3412 = vld [vmem:[%s3410 + $0x4] sm:$0xf]
        %v3413 = vld [vmem:[%s3410 + $0x10] sm:$0xf]
        %v3414 = vld [vmem:[%s3410 + $0x14] sm:$0xf]
        %v3415 = vld [vmem:[%s3410 + $0x20] sm:$0xf]
        %v3416 = vld [vmem:[%s3410 + $0x24] sm:$0xf]
        %v3417 = vld [vmem:[%s3410 + $0x30] sm:$0xf]
        %v3418 = vld [vmem:[%s3410 + $0x34] sm:$0xf]
        %v3419 = vld [vmem:[%s3410 + $0x40] sm:$0xf]
        %v3420 = vld [vmem:[%s3410 + $0x44] sm:$0xf]
        %v3421 = vld [vmem:[%s3410 + $0x50] sm:$0xf]
        %v3422 = vld [vmem:[%s3410 + $0x54] sm:$0xf]
        %v3423 = vld [vmem:[%s3410 + $0x60] sm:$0xf]
        %v3424 = vld [vmem:[%s3410 + $0x64] sm:$0xf]
        %v3425 = vld [vmem:[%s3410 + $0x70] sm:$0xf]
        %v3426 = vld [vmem:[%s3410 + $0x74] sm:$0xf]
        %v3427 = vld [vmem:[%s3410 + $0x80] sm:$0xf]
        %v3428 = vld [vmem:[%s3410 + $0x84] sm:$0xf]
        %v3429 = vld [vmem:[%s3410 + $0x90] sm:$0xf]
        %v3430 = vld [vmem:[%s3410 + $0x94] sm:$0xf]
        %v3431 = vld [vmem:[%s3410 + $0xa0] sm:$0xf]
        %v3432 = vld [vmem:[%s3410 + $0xa4] sm:$0xf]
        %v3433 = vld [vmem:[%s3410 + $0xb0] sm:$0xf]
        %v3434 = vld [vmem:[%s3410 + $0xb4] sm:$0xf]
        %v3435 = vld [vmem:[%s3410 + $0xc0] sm:$0xf]
        %v3436 = vld [vmem:[%s3410 + $0xc4] sm:$0xf]
        %v3437 = vld [vmem:[%s3410 + $0xd0] sm:$0xf]
        %v3438 = vld [vmem:[%s3410 + $0xd4] sm:$0xf]
        %v3439 = vld [vmem:[%s3410 + $0xe0] sm:$0xf]
        %v3440 = vld [vmem:[%s3410 + $0xe4] sm:$0xf]
        %v3441 = vld [vmem:[%s3410 + $0xf0] sm:$0xf]
        %v3442 = vld [vmem:[%s3410 + $0xf4] sm:$0xf]
        %s3443 = scalar_lea.vmem [#allocation5], 384
        %v3444 = vld [vmem:[%s3443] sm:$0xf]
        %v3445 = vld [vmem:[%s3443 + $0x4] sm:$0xf]
        %v3446 = vld [vmem:[%s3443 + $0x8] sm:$0xf]
        %v3447 = vld [vmem:[%s3443 + $0xc] sm:$0xf]
        %v3448 = vld [vmem:[%s3443 + $0x10] sm:$0xf]
        %v3449 = vld [vmem:[%s3443 + $0x14] sm:$0xf]
        %v3450 = vld [vmem:[%s3443 + $0x18] sm:$0xf]
        %v3451 = vld [vmem:[%s3443 + $0x1c] sm:$0xf]
        %v3452 = vld [vmem:[%s3443 + $0x20] sm:$0xf]
        %v3453 = vld [vmem:[%s3443 + $0x24] sm:$0xf]
        %v3454 = vld [vmem:[%s3443 + $0x28] sm:$0xf]
        %v3455 = vld [vmem:[%s3443 + $0x2c] sm:$0xf]
        %v3456 = vld [vmem:[%s3443 + $0x30] sm:$0xf]
        %v3457 = vld [vmem:[%s3443 + $0x34] sm:$0xf]
        %v3458 = vld [vmem:[%s3443 + $0x38] sm:$0xf]
        %v3459 = vld [vmem:[%s3443 + $0x3c] sm:$0xf]
        %v3492 = vunpack.c.l.b16 %v3411
        %v3493 = vunpack.c.l.b16 %v3412
        %v3494 = vunpack.c.l.b16 %v3413
        %v3495 = vunpack.c.l.b16 %v3414
        %v3496 = vunpack.c.l.b16 %v3415
        %v3497 = vunpack.c.l.b16 %v3416
        %v3498 = vunpack.c.l.b16 %v3417
        %v3499 = vunpack.c.l.b16 %v3418
        %v3500 = vunpack.c.l.b16 %v3419
        %v3501 = vunpack.c.l.b16 %v3420
        %v3502 = vunpack.c.l.b16 %v3421
        %v3503 = vunpack.c.l.b16 %v3422
        %v3504 = vunpack.c.l.b16 %v3423
        %v3505 = vunpack.c.l.b16 %v3424
        %v3506 = vunpack.c.l.b16 %v3425
        %v3507 = vunpack.c.l.b16 %v3426
        %v3508 = vunpack.c.l.b16 %v3427
        %v3509 = vunpack.c.l.b16 %v3428
        %v3510 = vunpack.c.l.b16 %v3429
        %v3511 = vunpack.c.l.b16 %v3430
        %v3512 = vunpack.c.l.b16 %v3431
        %v3513 = vunpack.c.l.b16 %v3432
        %v3514 = vunpack.c.l.b16 %v3433
        %v3515 = vunpack.c.l.b16 %v3434
        %v3516 = vunpack.c.l.b16 %v3435
        %v3517 = vunpack.c.l.b16 %v3436
        %v3518 = vunpack.c.l.b16 %v3437
        %v3519 = vunpack.c.l.b16 %v3438
        %v3520 = vunpack.c.l.b16 %v3439
        %v3521 = vunpack.c.l.b16 %v3440
        %v3522 = vunpack.c.l.b16 %v3441
        %v3523 = vunpack.c.l.b16 %v3442
        %v3524 = vpack.c.b16 %v3493, %v3492
        %v3525 = vpack.c.b16 %v3495, %v3494
        %v3526 = vpack.c.b16 %v3497, %v3496
        %v3527 = vpack.c.b16 %v3499, %v3498
        %v3528 = vpack.c.b16 %v3501, %v3500
        %v3529 = vpack.c.b16 %v3503, %v3502
        %v3530 = vpack.c.b16 %v3505, %v3504
        %v3531 = vpack.c.b16 %v3507, %v3506
        %v3532 = vpack.c.b16 %v3509, %v3508
        %v3533 = vpack.c.b16 %v3511, %v3510
        %v3534 = vpack.c.b16 %v3513, %v3512
        %v3535 = vpack.c.b16 %v3515, %v3514
        %v3536 = vpack.c.b16 %v3517, %v3516
        %v3537 = vpack.c.b16 %v3519, %v3518
        %v3538 = vpack.c.b16 %v3521, %v3520
        %v3539 = vpack.c.b16 %v3523, %v3522
        %v3572 = vunpack.c.l.b16 %v3444
        %v3573 = vunpack.c.l.b16 %v3445
        %v3574 = vunpack.c.l.b16 %v3446
        %v3575 = vunpack.c.l.b16 %v3447
        %v3576 = vunpack.c.l.b16 %v3448
        %v3577 = vunpack.c.l.b16 %v3449
        %v3578 = vunpack.c.l.b16 %v3450
        %v3579 = vunpack.c.l.b16 %v3451
        %v3580 = vunpack.c.l.b16 %v3452
        %v3581 = vunpack.c.l.b16 %v3453
        %v3582 = vunpack.c.l.b16 %v3454
        %v3583 = vunpack.c.l.b16 %v3455
        %v3584 = vunpack.c.l.b16 %v3456
        %v3585 = vunpack.c.l.b16 %v3457
        %v3586 = vunpack.c.l.b16 %v3458
        %v3587 = vunpack.c.l.b16 %v3459
        %v3588 = vpack.c.b16 %v3573, %v3572
        %v3589 = vpack.c.b16 %v3575, %v3574
        %v3590 = vpack.c.b16 %v3577, %v3576
        %v3591 = vpack.c.b16 %v3579, %v3578
        %v3592 = vpack.c.b16 %v3581, %v3580
        %v3593 = vpack.c.b16 %v3583, %v3582
        %v3594 = vpack.c.b16 %v3585, %v3584
        %v3595 = vpack.c.b16 %v3587, %v3586
        %3604 = vmatprep.subr.bf16.mxu0 0
        %3605 = vmatpush1.bf16.msra.mxu0 %v3588
        %3606 = vmatprep.subr.bf16.mxu0 0
        %3607 = vmatpush1.bf16.msra.mxu0 %v3589
        %3608 = vmatprep.subr.bf16.mxu0 0
        %3609 = vmatpush1.bf16.msra.mxu0 %v3590
        %3610 = vmatprep.subr.bf16.mxu0 0
        %3611 = vmatpush1.bf16.msra.mxu0 %v3591
        %3612 = vmatprep.subr.bf16.mxu0 0
        %3613 = vmatpush1.bf16.msra.mxu0 %v3592
        %3614 = vmatprep.subr.bf16.mxu0 0
        %3615 = vmatpush1.bf16.msra.mxu0 %v3593
        %3616 = vmatprep.subr.bf16.mxu0 0
        %3617 = vmatpush1.bf16.msra.mxu0 %v3594
        %3618 = vmatprep.subr.bf16.mxu0 0
        %3619 = vmatpush1.bf16.msra.mxu0 %v3595
        %3620 = vmatprep.subr.bf16.mxu0 0
        %3621 = vmatpush1.bf16.msra.mxu0 0
        %3622 = vmatprep.subr.bf16.mxu0 0
        %3623 = vmatpush1.bf16.msra.mxu0 0
        %3624 = vmatprep.subr.bf16.mxu0 0
        %3625 = vmatpush1.bf16.msra.mxu0 0
        %3626 = vmatprep.subr.bf16.mxu0 0
        %3627 = vmatpush1.bf16.msra.mxu0 0
        %3628 = vmatprep.subr.bf16.mxu0 0
        %3629 = vmatpush1.bf16.msra.mxu0 0
        %3630 = vmatprep.subr.bf16.mxu0 0
        %3631 = vmatpush1.bf16.msra.mxu0 0
        %3632 = vmatprep.subr.bf16.mxu0 0
        %3633 = vmatpush1.bf16.msra.mxu0 0
        %3634 = vmatprep.subr.bf16.mxu0 0
        %3635 = vmatpush1.bf16.msra.mxu0 0
        %3636 = vmatprep.mubr.bf16.mxu0 0
        %3637 = vmatmul.mubr.bf16.gmra.mrb[0].mxu0 %v3524
        %v3638 = vpop.f32.mrb[0].mxu0
        %v3639 = vadd.f32 0.0, %v3638
        %v3640 = vpop.f32.mrb[0].mxu0
        %v3641 = vpop.f32.mrb[0].mxu0
        %v3642 = vadd.f32 0.0, %v3641
        %v3643 = vpop.f32.mrb[0].mxu0
        %3644 = vmatprep.mubr.bf16.mxu0 0
        %3645 = vmatmul.mubr.bf16.gmra.mrb[0].mxu0 %v3525
        %v3646 = vpop.f32.mrb[0].mxu0
        %v3647 = vadd.f32 0.0, %v3646
        %v3648 = vpop.f32.mrb[0].mxu0
        %v3649 = vpop.f32.mrb[0].mxu0
        %v3650 = vadd.f32 0.0, %v3649
        %v3651 = vpop.f32.mrb[0].mxu0
        %3652 = vmatprep.mubr.bf16.mxu0 0
        %3653 = vmatmul.mubr.bf16.gmra.mrb[0].mxu0 %v3526
        %v3654 = vpop.f32.mrb[0].mxu0
        %v3655 = vadd.f32 0.0, %v3654
        %v3656 = vpop.f32.mrb[0].mxu0
        %v3657 = vpop.f32.mrb[0].mxu0
        %v3658 = vadd.f32 0.0, %v3657
        %v3659 = vpop.f32.mrb[0].mxu0
        %3660 = vmatprep.mubr.bf16.mxu0 0
        %3661 = vmatmul.mubr.bf16.gmra.mrb[0].mxu0 %v3527
        %v3662 = vpop.f32.mrb[0].mxu0
        %v3663 = vadd.f32 0.0, %v3662
        %v3664 = vpop.f32.mrb[0].mxu0
        %v3665 = vpop.f32.mrb[0].mxu0
        %v3666 = vadd.f32 0.0, %v3665
        %v3667 = vpop.f32.mrb[0].mxu0
        %3668 = vmatprep.mubr.bf16.mxu0 0
        %3669 = vmatmul.mubr.bf16.gmra.mrb[0].mxu0 %v3528
        %v3670 = vpop.f32.mrb[0].mxu0
        %v3671 = vadd.f32 0.0, %v3670
        %v3672 = vpop.f32.mrb[0].mxu0
        %v3673 = vpop.f32.mrb[0].mxu0
        %v3674 = vadd.f32 0.0, %v3673
        %v3675 = vpop.f32.mrb[0].mxu0
        %3676 = vmatprep.mubr.bf16.mxu0 0
        %3677 = vmatmul.mubr.bf16.gmra.mrb[0].mxu0 %v3529
        %v3678 = vpop.f32.mrb[0].mxu0
        %v3679 = vadd.f32 0.0, %v3678
        %v3680 = vpop.f32.mrb[0].mxu0
        %v3681 = vpop.f32.mrb[0].mxu0
        %v3682 = vadd.f32 0.0, %v3681
        %v3683 = vpop.f32.mrb[0].mxu0
        %3684 = vmatprep.mubr.bf16.mxu0 0
        %3685 = vmatmul.mubr.bf16.gmra.mrb[0].mxu0 %v3530
        %v3686 = vpop.f32.mrb[0].mxu0
        %v3687 = vadd.f32 0.0, %v3686
        %v3688 = vpop.f32.mrb[0].mxu0
        %v3689 = vpop.f32.mrb[0].mxu0
        %v3690 = vadd.f32 0.0, %v3689
        %v3691 = vpop.f32.mrb[0].mxu0
        %3692 = vmatprep.mubr.bf16.mxu0 0
        %3693 = vmatmul.mubr.bf16.gmra.mrb[0].mxu0 %v3531
        %v3694 = vpop.f32.mrb[0].mxu0
        %v3695 = vadd.f32 0.0, %v3694
        %v3696 = vpop.f32.mrb[0].mxu0
        %v3697 = vpop.f32.mrb[0].mxu0
        %v3698 = vadd.f32 0.0, %v3697
        %v3699 = vpop.f32.mrb[0].mxu0
        %3700 = vmatprep.mubr.bf16.mxu0 0
        %3701 = vmatmul.mubr.bf16.gmra.mrb[0].mxu0 %v3532
        %v3702 = vpop.f32.mrb[0].mxu0
        %v3703 = vadd.f32 0.0, %v3702
        %v3704 = vpop.f32.mrb[0].mxu0
        %v3705 = vpop.f32.mrb[0].mxu0
        %v3706 = vadd.f32 0.0, %v3705
        %v3707 = vpop.f32.mrb[0].mxu0
        %3708 = vmatprep.mubr.bf16.mxu0 0
        %3709 = vmatmul.mubr.bf16.gmra.mrb[0].mxu0 %v3533
        %v3710 = vpop.f32.mrb[0].mxu0
        %v3711 = vadd.f32 0.0, %v3710
        %v3712 = vpop.f32.mrb[0].mxu0
        %v3713 = vpop.f32.mrb[0].mxu0
        %v3714 = vadd.f32 0.0, %v3713
        %v3715 = vpop.f32.mrb[0].mxu0
        %3716 = vmatprep.mubr.bf16.mxu0 0
        %3717 = vmatmul.mubr.bf16.gmra.mrb[0].mxu0 %v3534
        %v3718 = vpop.f32.mrb[0].mxu0
        %v3719 = vadd.f32 0.0, %v3718
        %v3720 = vpop.f32.mrb[0].mxu0
        %v3721 = vpop.f32.mrb[0].mxu0
        %v3722 = vadd.f32 0.0, %v3721
        %v3723 = vpop.f32.mrb[0].mxu0
        %3724 = vmatprep.mubr.bf16.mxu0 0
        %3725 = vmatmul.mubr.bf16.gmra.mrb[0].mxu0 %v3535
        %v3726 = vpop.f32.mrb[0].mxu0
        %v3727 = vadd.f32 0.0, %v3726
        %v3728 = vpop.f32.mrb[0].mxu0
        %v3729 = vpop.f32.mrb[0].mxu0
        %v3730 = vadd.f32 0.0, %v3729
        %v3731 = vpop.f32.mrb[0].mxu0
        %3732 = vmatprep.mubr.bf16.mxu0 0
        %3733 = vmatmul.mubr.bf16.gmra.mrb[0].mxu0 %v3536
        %v3734 = vpop.f32.mrb[0].mxu0
        %v3735 = vadd.f32 0.0, %v3734
        %v3736 = vpop.f32.mrb[0].mxu0
        %v3737 = vpop.f32.mrb[0].mxu0
        %v3738 = vadd.f32 0.0, %v3737
        %v3739 = vpop.f32.mrb[0].mxu0
        %3740 = vmatprep.mubr.bf16.mxu0 0
        %3741 = vmatmul.mubr.bf16.gmra.mrb[0].mxu0 %v3537
        %v3742 = vpop.f32.mrb[0].mxu0
        %v3743 = vadd.f32 0.0, %v3742
        %v3744 = vpop.f32.mrb[0].mxu0
        %v3745 = vpop.f32.mrb[0].mxu0
        %v3746 = vadd.f32 0.0, %v3745
        %v3747 = vpop.f32.mrb[0].mxu0
        %3748 = vmatprep.mubr.bf16.mxu0 0
        %3749 = vmatmul.mubr.bf16.gmra.mrb[0].mxu0 %v3538
        %v3750 = vpop.f32.mrb[0].mxu0
        %v3751 = vadd.f32 0.0, %v3750
        %v3752 = vpop.f32.mrb[0].mxu0
        %v3753 = vpop.f32.mrb[0].mxu0
        %v3754 = vadd.f32 0.0, %v3753
        %v3755 = vpop.f32.mrb[0].mxu0
        %3756 = vmatprep.mubr.bf16.mxu0 0
        %3757 = vmatmul.mubr.bf16.gmra.mrb[0].mxu0 %v3539
        %v3758 = vpop.f32.mrb[0].mxu0
        %v3759 = vadd.f32 0.0, %v3758
        %v3760 = vpop.f32.mrb[0].mxu0
        %v3761 = vpop.f32.mrb[0].mxu0
        %v3762 = vadd.f32 0.0, %v3761
        %v3763 = vpop.f32.mrb[0].mxu0
        %3764 = vdwg.mxu0
        %v3765 = vadd.f32 %v3378, %v3639
        %v3766 = vadd.f32 %v3379, %v3642
        %v3767 = vadd.f32 %v3380, %v3647
        %v3768 = vadd.f32 %v3381, %v3650
        %v3769 = vadd.f32 %v3382, %v3655
        %v3770 = vadd.f32 %v3383, %v3658
        %v3771 = vadd.f32 %v3384, %v3663
        %v3772 = vadd.f32 %v3385, %v3666
        %v3773 = vadd.f32 %v3386, %v3671
        %v3774 = vadd.f32 %v3387, %v3674
        %v3775 = vadd.f32 %v3388, %v3679
        %v3776 = vadd.f32 %v3389, %v3682
        %v3777 = vadd.f32 %v3390, %v3687
        %v3778 = vadd.f32 %v3391, %v3690
        %v3779 = vadd.f32 %v3392, %v3695
        %v3780 = vadd.f32 %v3393, %v3698
        %v3781 = vadd.f32 %v3394, %v3703
        %v3782 = vadd.f32 %v3395, %v3706
        %v3783 = vadd.f32 %v3396, %v3711
        %v3784 = vadd.f32 %v3397, %v3714
        %v3785 = vadd.f32 %v3398, %v3719
        %v3786 = vadd.f32 %v3399, %v3722
        %v3787 = vadd.f32 %v3400, %v3727
        %v3788 = vadd.f32 %v3401, %v3730
        %v3789 = vadd.f32 %v3402, %v3735
        %v3790 = vadd.f32 %v3403, %v3738
        %v3791 = vadd.f32 %v3404, %v3743
        %v3792 = vadd.f32 %v3405, %v3746
        %v3793 = vadd.f32 %v3406, %v3751
        %v3794 = vadd.f32 %v3407, %v3754
        %v3795 = vadd.f32 %v3408, %v3759
        %v3796 = vadd.f32 %v3409, %v3762
        %v3797 = vld [vmem:[%s3410] sm:$0xf]
        %v3798 = vld [vmem:[%s3410 + $0x4] sm:$0xf]
        %v3799 = vld [vmem:[%s3410 + $0x8] sm:$0x1]
        %v3800 = vld [vmem:[%s3410 + $0x10] sm:$0xf]
        %v3801 = vld [vmem:[%s3410 + $0x14] sm:$0xf]
        %v3802 = vld [vmem:[%s3410 + $0x18] sm:$0x1]
        %v3803 = vld [vmem:[%s3410 + $0x20] sm:$0xf]
        %v3804 = vld [vmem:[%s3410 + $0x24] sm:$0xf]
        %v3805 = vld [vmem:[%s3410 + $0x28] sm:$0x1]
        %v3806 = vld [vmem:[%s3410 + $0x30] sm:$0xf]
        %v3807 = vld [vmem:[%s3410 + $0x34] sm:$0xf]
        %v3808 = vld [vmem:[%s3410 + $0x38] sm:$0x1]
        %v3809 = vld [vmem:[%s3410 + $0x40] sm:$0xf]
        %v3810 = vld [vmem:[%s3410 + $0x44] sm:$0xf]
        %v3811 = vld [vmem:[%s3410 + $0x48] sm:$0x1]
        %v3812 = vld [vmem:[%s3410 + $0x50] sm:$0xf]
        %v3813 = vld [vmem:[%s3410 + $0x54] sm:$0xf]
        %v3814 = vld [vmem:[%s3410 + $0x58] sm:$0x1]
        %v3815 = vld [vmem:[%s3410 + $0x60] sm:$0xf]
        %v3816 = vld [vmem:[%s3410 + $0x64] sm:$0xf]
        %v3817 = vld [vmem:[%s3410 + $0x68] sm:$0x1]
        %v3818 = vld [vmem:[%s3410 + $0x70] sm:$0xf]
        %v3819 = vld [vmem:[%s3410 + $0x74] sm:$0xf]
        %v3820 = vld [vmem:[%s3410 + $0x78] sm:$0x1]
        %v3821 = vld [vmem:[%s3410 + $0x80] sm:$0xf]
        %v3822 = vld [vmem:[%s3410 + $0x84] sm:$0xf]
        %v3823 = vld [vmem:[%s3410 + $0x88] sm:$0x1]
        %v3824 = vld [vmem:[%s3410 + $0x90] sm:$0xf]
        %v3825 = vld [vmem:[%s3410 + $0x94] sm:$0xf]
        %v3826 = vld [vmem:[%s3410 + $0x98] sm:$0x1]
        %v3827 = vld [vmem:[%s3410 + $0xa0] sm:$0xf]
        %v3828 = vld [vmem:[%s3410 + $0xa4] sm:$0xf]
        %v3829 = vld [vmem:[%s3410 + $0xa8] sm:$0x1]
        %v3830 = vld [vmem:[%s3410 + $0xb0] sm:$0xf]
        %v3831 = vld [vmem:[%s3410 + $0xb4] sm:$0xf]
        %v3832 = vld [vmem:[%s3410 + $0xb8] sm:$0x1]
        %v3833 = vld [vmem:[%s3410 + $0xc0] sm:$0xf]
        %v3834 = vld [vmem:[%s3410 + $0xc4] sm:$0xf]
        %v3835 = vld [vmem:[%s3410 + $0xc8] sm:$0x1]
        %v3836 = vld [vmem:[%s3410 + $0xd0] sm:$0xf]
        %v3837 = vld [vmem:[%s3410 + $0xd4] sm:$0xf]
        %v3838 = vld [vmem:[%s3410 + $0xd8] sm:$0x1]
        %v3839 = vld [vmem:[%s3410 + $0xe0] sm:$0xf]
        %v3840 = vld [vmem:[%s3410 + $0xe4] sm:$0xf]
        %v3841 = vld [vmem:[%s3410 + $0xe8] sm:$0x1]
        %v3842 = vld [vmem:[%s3410 + $0xf0] sm:$0xf]
        %v3843 = vld [vmem:[%s3410 + $0xf4] sm:$0xf]
        %v3844 = vld [vmem:[%s3410 + $0xf8] sm:$0x1]
        %v3846 = vshrl.u32 %v3797, 16
        %v3848 = vrot.slane %v3846, 4
        %v3849 = vshll.u32 %v3797, 16
        %v3851 = vrot.slane %v3849, 5
        %v3852 = vor.u32 %v3848, %v3851
        %v3853 = vrot.slane %v3852, 4
        %v3855 = vshll.u32 %v3798, 16
        %v3857 = vrot.slane %v3855, 5
        %v3858 = vsel %vm306, %v3853, %v3857
        %v3859 = vshrl.u32 %v3798, 16
        %v3861 = vrot.slane %v3859, 4
        %v3862 = vor.u32 %v3861, %v3857
        %v3863 = vrot.slane %v3862, 4
        %v3865 = vshll.u32 %v3799, 16
        %v3867 = vrot.slane %v3865, 5
        %v3868 = vsel %vm306, %v3863, %v3867
        %v3870 = vshrl.u32 %v3800, 16
        %v3872 = vrot.slane %v3870, 4
        %v3873 = vshll.u32 %v3800, 16
        %v3875 = vrot.slane %v3873, 5
        %v3876 = vor.u32 %v3872, %v3875
        %v3877 = vrot.slane %v3876, 4
        %v3879 = vshll.u32 %v3801, 16
        %v3881 = vrot.slane %v3879, 5
        %v3882 = vsel %vm306, %v3877, %v3881
        %v3883 = vshrl.u32 %v3801, 16
        %v3885 = vrot.slane %v3883, 4
        %v3886 = vor.u32 %v3885, %v3881
        %v3887 = vrot.slane %v3886, 4
        %v3889 = vshll.u32 %v3802, 16
        %v3891 = vrot.slane %v3889, 5
        %v3892 = vsel %vm306, %v3887, %v3891
        %v3894 = vshrl.u32 %v3803, 16
        %v3896 = vrot.slane %v3894, 4
        %v3897 = vshll.u32 %v3803, 16
        %v3899 = vrot.slane %v3897, 5
        %v3900 = vor.u32 %v3896, %v3899
        %v3901 = vrot.slane %v3900, 4
        %v3903 = vshll.u32 %v3804, 16
        %v3905 = vrot.slane %v3903, 5
        %v3906 = vsel %vm306, %v3901, %v3905
        %v3907 = vshrl.u32 %v3804, 16
        %v3909 = vrot.slane %v3907, 4
        %v3910 = vor.u32 %v3909, %v3905
        %v3911 = vrot.slane %v3910, 4
        %v3913 = vshll.u32 %v3805, 16
        %v3915 = vrot.slane %v3913, 5
        %v3916 = vsel %vm306, %v3911, %v3915
        %v3918 = vshrl.u32 %v3806, 16
        %v3920 = vrot.slane %v3918, 4
        %v3921 = vshll.u32 %v3806, 16
        %v3923 = vrot.slane %v3921, 5
        %v3924 = vor.u32 %v3920, %v3923
        %v3925 = vrot.slane %v3924, 4
        %v3927 = vshll.u32 %v3807, 16
        %v3929 = vrot.slane %v3927, 5
        %v3930 = vsel %vm306, %v3925, %v3929
        %v3931 = vshrl.u32 %v3807, 16
        %v3933 = vrot.slane %v3931, 4
        %v3934 = vor.u32 %v3933, %v3929
        %v3935 = vrot.slane %v3934, 4
        %v3937 = vshll.u32 %v3808, 16
        %v3939 = vrot.slane %v3937, 5
        %v3940 = vsel %vm306, %v3935, %v3939
        %v3942 = vshrl.u32 %v3809, 16
        %v3944 = vrot.slane %v3942, 4
        %v3945 = vshll.u32 %v3809, 16
        %v3947 = vrot.slane %v3945, 5
        %v3948 = vor.u32 %v3944, %v3947
        %v3949 = vrot.slane %v3948, 4
        %v3951 = vshll.u32 %v3810, 16
        %v3953 = vrot.slane %v3951, 5
        %v3954 = vsel %vm306, %v3949, %v3953
        %v3955 = vshrl.u32 %v3810, 16
        %v3957 = vrot.slane %v3955, 4
        %v3958 = vor.u32 %v3957, %v3953
        %v3959 = vrot.slane %v3958, 4
        %v3961 = vshll.u32 %v3811, 16
        %v3963 = vrot.slane %v3961, 5
        %v3964 = vsel %vm306, %v3959, %v3963
        %v3966 = vshrl.u32 %v3812, 16
        %v3968 = vrot.slane %v3966, 4
        %v3969 = vshll.u32 %v3812, 16
        %v3971 = vrot.slane %v3969, 5
        %v3972 = vor.u32 %v3968, %v3971
        %v3973 = vrot.slane %v3972, 4
        %v3975 = vshll.u32 %v3813, 16
        %v3977 = vrot.slane %v3975, 5
        %v3978 = vsel %vm306, %v3973, %v3977
        %v3979 = vshrl.u32 %v3813, 16
        %v3981 = vrot.slane %v3979, 4
        %v3982 = vor.u32 %v3981, %v3977
        %v3983 = vrot.slane %v3982, 4
        %v3985 = vshll.u32 %v3814, 16
        %v3987 = vrot.slane %v3985, 5
        %v3988 = vsel %vm306, %v3983, %v3987
        %v3990 = vshrl.u32 %v3815, 16
        %v3992 = vrot.slane %v3990, 4
        %v3993 = vshll.u32 %v3815, 16
        %v3995 = vrot.slane %v3993, 5
        %v3996 = vor.u32 %v3992, %v3995
        %v3997 = vrot.slane %v3996, 4
        %v3999 = vshll.u32 %v3816, 16
        %v4001 = vrot.slane %v3999, 5
        %v4002 = vsel %vm306, %v3997, %v4001
        %v4003 = vshrl.u32 %v3816, 16
        %v4005 = vrot.slane %v4003, 4
        %v4006 = vor.u32 %v4005, %v4001
        %v4007 = vrot.slane %v4006, 4
        %v4009 = vshll.u32 %v3817, 16
        %v4011 = vrot.slane %v4009, 5
        %v4012 = vsel %vm306, %v4007, %v4011
        %v4014 = vshrl.u32 %v3818, 16
        %v4016 = vrot.slane %v4014, 4
        %v4017 = vshll.u32 %v3818, 16
        %v4019 = vrot.slane %v4017, 5
        %v4020 = vor.u32 %v4016, %v4019
        %v4021 = vrot.slane %v4020, 4
        %v4023 = vshll.u32 %v3819, 16
        %v4025 = vrot.slane %v4023, 5
        %v4026 = vsel %vm306, %v4021, %v4025
        %v4027 = vshrl.u32 %v3819, 16
        %v4029 = vrot.slane %v4027, 4
        %v4030 = vor.u32 %v4029, %v4025
        %v4031 = vrot.slane %v4030, 4
        %v4033 = vshll.u32 %v3820, 16
        %v4035 = vrot.slane %v4033, 5
        %v4036 = vsel %vm306, %v4031, %v4035
        %v4038 = vshrl.u32 %v3821, 16
        %v4040 = vrot.slane %v4038, 4
        %v4041 = vshll.u32 %v3821, 16
        %v4043 = vrot.slane %v4041, 5
        %v4044 = vor.u32 %v4040, %v4043
        %v4045 = vrot.slane %v4044, 4
        %v4047 = vshll.u32 %v3822, 16
        %v4049 = vrot.slane %v4047, 5
        %v4050 = vsel %vm306, %v4045, %v4049
        %v4051 = vshrl.u32 %v3822, 16
        %v4053 = vrot.slane %v4051, 4
        %v4054 = vor.u32 %v4053, %v4049
        %v4055 = vrot.slane %v4054, 4
        %v4057 = vshll.u32 %v3823, 16
        %v4059 = vrot.slane %v4057, 5
        %v4060 = vsel %vm306, %v4055, %v4059
        %v4062 = vshrl.u32 %v3824, 16
        %v4064 = vrot.slane %v4062, 4
        %v4065 = vshll.u32 %v3824, 16
        %v4067 = vrot.slane %v4065, 5
        %v4068 = vor.u32 %v4064, %v4067
        %v4069 = vrot.slane %v4068, 4
        %v4071 = vshll.u32 %v3825, 16
        %v4073 = vrot.slane %v4071, 5
        %v4074 = vsel %vm306, %v4069, %v4073
        %v4075 = vshrl.u32 %v3825, 16
        %v4077 = vrot.slane %v4075, 4
        %v4078 = vor.u32 %v4077, %v4073
        %v4079 = vrot.slane %v4078, 4
        %v4081 = vshll.u32 %v3826, 16
        %v4083 = vrot.slane %v4081, 5
        %v4084 = vsel %vm306, %v4079, %v4083
        %v4086 = vshrl.u32 %v3827, 16
        %v4088 = vrot.slane %v4086, 4
        %v4089 = vshll.u32 %v3827, 16
        %v4091 = vrot.slane %v4089, 5
        %v4092 = vor.u32 %v4088, %v4091
        %v4093 = vrot.slane %v4092, 4
        %v4095 = vshll.u32 %v3828, 16
        %v4097 = vrot.slane %v4095, 5
        %v4098 = vsel %vm306, %v4093, %v4097
        %v4099 = vshrl.u32 %v3828, 16
        %v4101 = vrot.slane %v4099, 4
        %v4102 = vor.u32 %v4101, %v4097
        %v4103 = vrot.slane %v4102, 4
        %v4105 = vshll.u32 %v3829, 16
        %v4107 = vrot.slane %v4105, 5
        %v4108 = vsel %vm306, %v4103, %v4107
        %v4110 = vshrl.u32 %v3830, 16
        %v4112 = vrot.slane %v4110, 4
        %v4113 = vshll.u32 %v3830, 16
        %v4115 = vrot.slane %v4113, 5
        %v4116 = vor.u32 %v4112, %v4115
        %v4117 = vrot.slane %v4116, 4
        %v4119 = vshll.u32 %v3831, 16
        %v4121 = vrot.slane %v4119, 5
        %v4122 = vsel %vm306, %v4117, %v4121
        %v4123 = vshrl.u32 %v3831, 16
        %v4125 = vrot.slane %v4123, 4
        %v4126 = vor.u32 %v4125, %v4121
        %v4127 = vrot.slane %v4126, 4
        %v4129 = vshll.u32 %v3832, 16
        %v4131 = vrot.slane %v4129, 5
        %v4132 = vsel %vm306, %v4127, %v4131
        %v4134 = vshrl.u32 %v3833, 16
        %v4136 = vrot.slane %v4134, 4
        %v4137 = vshll.u32 %v3833, 16
        %v4139 = vrot.slane %v4137, 5
        %v4140 = vor.u32 %v4136, %v4139
        %v4141 = vrot.slane %v4140, 4
        %v4143 = vshll.u32 %v3834, 16
        %v4145 = vrot.slane %v4143, 5
        %v4146 = vsel %vm306, %v4141, %v4145
        %v4147 = vshrl.u32 %v3834, 16
        %v4149 = vrot.slane %v4147, 4
        %v4150 = vor.u32 %v4149, %v4145
        %v4151 = vrot.slane %v4150, 4
        %v4153 = vshll.u32 %v3835, 16
        %v4155 = vrot.slane %v4153, 5
        %v4156 = vsel %vm306, %v4151, %v4155
        %v4158 = vshrl.u32 %v3836, 16
        %v4160 = vrot.slane %v4158, 4
        %v4161 = vshll.u32 %v3836, 16
        %v4163 = vrot.slane %v4161, 5
        %v4164 = vor.u32 %v4160, %v4163
        %v4165 = vrot.slane %v4164, 4
        %v4167 = vshll.u32 %v3837, 16
        %v4169 = vrot.slane %v4167, 5
        %v4170 = vsel %vm306, %v4165, %v4169
        %v4171 = vshrl.u32 %v3837, 16
        %v4173 = vrot.slane %v4171, 4
        %v4174 = vor.u32 %v4173, %v4169
        %v4175 = vrot.slane %v4174, 4
        %v4177 = vshll.u32 %v3838, 16
        %v4179 = vrot.slane %v4177, 5
        %v4180 = vsel %vm306, %v4175, %v4179
        %v4182 = vshrl.u32 %v3839, 16
        %v4184 = vrot.slane %v4182, 4
        %v4185 = vshll.u32 %v3839, 16
        %v4187 = vrot.slane %v4185, 5
        %v4188 = vor.u32 %v4184, %v4187
        %v4189 = vrot.slane %v4188, 4
        %v4191 = vshll.u32 %v3840, 16
        %v4193 = vrot.slane %v4191, 5
        %v4194 = vsel %vm306, %v4189, %v4193
        %v4195 = vshrl.u32 %v3840, 16
        %v4197 = vrot.slane %v4195, 4
        %v4198 = vor.u32 %v4197, %v4193
        %v4199 = vrot.slane %v4198, 4
        %v4201 = vshll.u32 %v3841, 16
        %v4203 = vrot.slane %v4201, 5
        %v4204 = vsel %vm306, %v4199, %v4203
        %v4206 = vshrl.u32 %v3842, 16
        %v4208 = vrot.slane %v4206, 4
        %v4209 = vshll.u32 %v3842, 16
        %v4211 = vrot.slane %v4209, 5
        %v4212 = vor.u32 %v4208, %v4211
        %v4213 = vrot.slane %v4212, 4
        %v4215 = vshll.u32 %v3843, 16
        %v4217 = vrot.slane %v4215, 5
        %v4218 = vsel %vm306, %v4213, %v4217
        %v4219 = vshrl.u32 %v3843, 16
        %v4221 = vrot.slane %v4219, 4
        %v4222 = vor.u32 %v4221, %v4217
        %v4223 = vrot.slane %v4222, 4
        %v4225 = vshll.u32 %v3844, 16
        %v4227 = vrot.slane %v4225, 5
        %v4228 = vsel %vm306, %v4223, %v4227
        %s4229 = scalar_lea.vmem [#allocation5], 448
        %v4230 = vld [vmem:[%s4229] sm:$0xf]
        %v4231 = vld [vmem:[%s4229 + $0x4] sm:$0xf]
        %v4232 = vld [vmem:[%s4229 + $0x8] sm:$0xf]
        %v4233 = vld [vmem:[%s4229 + $0xc] sm:$0xf]
        %v4234 = vld [vmem:[%s4229 + $0x10] sm:$0xf]
        %v4235 = vld [vmem:[%s4229 + $0x14] sm:$0xf]
        %v4236 = vld [vmem:[%s4229 + $0x18] sm:$0xf]
        %v4237 = vld [vmem:[%s4229 + $0x1c] sm:$0xf]
        %v4238 = vld [vmem:[%s4229 + $0x20] sm:$0xf]
        %v4239 = vld [vmem:[%s4229 + $0x24] sm:$0xf]
        %v4240 = vld [vmem:[%s4229 + $0x28] sm:$0xf]
        %v4241 = vld [vmem:[%s4229 + $0x2c] sm:$0xf]
        %v4242 = vld [vmem:[%s4229 + $0x30] sm:$0xf]
        %v4243 = vld [vmem:[%s4229 + $0x34] sm:$0xf]
        %v4244 = vld [vmem:[%s4229 + $0x38] sm:$0xf]
        %v4245 = vld [vmem:[%s4229 + $0x3c] sm:$0xf]
        %v4246 = vunpack.c.l.b16 %v3858
        %v4247 = vunpack.c.l.b16 %v3868
        %v4248 = vunpack.c.l.b16 %v3882
        %v4249 = vunpack.c.l.b16 %v3892
        %v4250 = vunpack.c.l.b16 %v3906
        %v4251 = vunpack.c.l.b16 %v3916
        %v4252 = vunpack.c.l.b16 %v3930
        %v4253 = vunpack.c.l.b16 %v3940
        %v4254 = vunpack.c.l.b16 %v3954
        %v4255 = vunpack.c.l.b16 %v3964
        %v4256 = vunpack.c.l.b16 %v3978
        %v4257 = vunpack.c.l.b16 %v3988
        %v4258 = vunpack.c.l.b16 %v4002
        %v4259 = vunpack.c.l.b16 %v4012
        %v4260 = vunpack.c.l.b16 %v4026
        %v4261 = vunpack.c.l.b16 %v4036
        %v4262 = vunpack.c.l.b16 %v4050
        %v4263 = vunpack.c.l.b16 %v4060
        %v4264 = vunpack.c.l.b16 %v4074
        %v4265 = vunpack.c.l.b16 %v4084
        %v4266 = vunpack.c.l.b16 %v4098
        %v4267 = vunpack.c.l.b16 %v4108
        %v4268 = vunpack.c.l.b16 %v4122
        %v4269 = vunpack.c.l.b16 %v4132
        %v4270 = vunpack.c.l.b16 %v4146
        %v4271 = vunpack.c.l.b16 %v4156
        %v4272 = vunpack.c.l.b16 %v4170
        %v4273 = vunpack.c.l.b16 %v4180
        %v4274 = vunpack.c.l.b16 %v4194
        %v4275 = vunpack.c.l.b16 %v4204
        %v4276 = vunpack.c.l.b16 %v4218
        %v4277 = vunpack.c.l.b16 %v4228
        %v4278 = vpack.c.b16 %v4247, %v4246
        %v4279 = vpack.c.b16 %v4249, %v4248
        %v4280 = vpack.c.b16 %v4251, %v4250
        %v4281 = vpack.c.b16 %v4253, %v4252
        %v4282 = vpack.c.b16 %v4255, %v4254
        %v4283 = vpack.c.b16 %v4257, %v4256
        %v4284 = vpack.c.b16 %v4259, %v4258
        %v4285 = vpack.c.b16 %v4261, %v4260
        %v4286 = vpack.c.b16 %v4263, %v4262
        %v4287 = vpack.c.b16 %v4265, %v4264
        %v4288 = vpack.c.b16 %v4267, %v4266
        %v4289 = vpack.c.b16 %v4269, %v4268
        %v4290 = vpack.c.b16 %v4271, %v4270
        %v4291 = vpack.c.b16 %v4273, %v4272
        %v4292 = vpack.c.b16 %v4275, %v4274
        %v4293 = vpack.c.b16 %v4277, %v4276
        %v4326 = vunpack.c.l.b16 %v4230
        %v4327 = vunpack.c.l.b16 %v4231
        %v4328 = vunpack.c.l.b16 %v4232
        %v4329 = vunpack.c.l.b16 %v4233
        %v4330 = vunpack.c.l.b16 %v4234
        %v4331 = vunpack.c.l.b16 %v4235
        %v4332 = vunpack.c.l.b16 %v4236
        %v4333 = vunpack.c.l.b16 %v4237
        %v4334 = vunpack.c.l.b16 %v4238
        %v4335 = vunpack.c.l.b16 %v4239
        %v4336 = vunpack.c.l.b16 %v4240
        %v4337 = vunpack.c.l.b16 %v4241
        %v4338 = vunpack.c.l.b16 %v4242
        %v4339 = vunpack.c.l.b16 %v4243
        %v4340 = vunpack.c.l.b16 %v4244
        %v4341 = vunpack.c.l.b16 %v4245
        %v4342 = vpack.c.b16 %v4327, %v4326
        %v4343 = vpack.c.b16 %v4329, %v4328
        %v4344 = vpack.c.b16 %v4331, %v4330
        %v4345 = vpack.c.b16 %v4333, %v4332
        %v4346 = vpack.c.b16 %v4335, %v4334
        %v4347 = vpack.c.b16 %v4337, %v4336
        %v4348 = vpack.c.b16 %v4339, %v4338
        %v4349 = vpack.c.b16 %v4341, %v4340
        %4358 = vmatprep.subr.bf16.mxu0 0
        %4359 = vmatpush1.bf16.msra.mxu0 %v4342
        %4360 = vmatprep.subr.bf16.mxu0 0
        %4361 = vmatpush1.bf16.msra.mxu0 %v4343
        %4362 = vmatprep.subr.bf16.mxu0 0
        %4363 = vmatpush1.bf16.msra.mxu0 %v4344
        %4364 = vmatprep.subr.bf16.mxu0 0
        %4365 = vmatpush1.bf16.msra.mxu0 %v4345
        %4366 = vmatprep.subr.bf16.mxu0 0
        %4367 = vmatpush1.bf16.msra.mxu0 %v4346
        %4368 = vmatprep.subr.bf16.mxu0 0
        %4369 = vmatpush1.bf16.msra.mxu0 %v4347
        %4370 = vmatprep.subr.bf16.mxu0 0
        %4371 = vmatpush1.bf16.msra.mxu0 %v4348
        %4372 = vmatprep.subr.bf16.mxu0 0
        %4373 = vmatpush1.bf16.msra.mxu0 %v4349
        %4374 = vmatprep.subr.bf16.mxu0 0
        %4375 = vmatpush1.bf16.msra.mxu0 0
        %4376 = vmatprep.subr.bf16.mxu0 0
        %4377 = vmatpush1.bf16.msra.mxu0 0
        %4378 = vmatprep.subr.bf16.mxu0 0
        %4379 = vmatpush1.bf16.msra.mxu0 0
        %4380 = vmatprep.subr.bf16.mxu0 0
        %4381 = vmatpush1.bf16.msra.mxu0 0
        %4382 = vmatprep.subr.bf16.mxu0 0
        %4383 = vmatpush1.bf16.msra.mxu0 0
        %4384 = vmatprep.subr.bf16.mxu0 0
        %4385 = vmatpush1.bf16.msra.mxu0 0
        %4386 = vmatprep.subr.bf16.mxu0 0
        %4387 = vmatpush1.bf16.msra.mxu0 0
        %4388 = vmatprep.subr.bf16.mxu0 0
        %4389 = vmatpush1.bf16.msra.mxu0 0
        %4390 = vmatprep.mubr.bf16.mxu0 0
        %4391 = vmatmul.mubr.bf16.gmra.mrb[0].mxu0 %v4278
        %v4392 = vpop.f32.mrb[0].mxu0
        %v4393 = vadd.f32 0.0, %v4392
        %v4394 = vpop.f32.mrb[0].mxu0
        %v4395 = vpop.f32.mrb[0].mxu0
        %v4396 = vadd.f32 0.0, %v4395
        %v4397 = vpop.f32.mrb[0].mxu0
        %4398 = vmatprep.mubr.bf16.mxu0 0
        %4399 = vmatmul.mubr.bf16.gmra.mrb[0].mxu0 %v4279
        %v4400 = vpop.f32.mrb[0].mxu0
        %v4401 = vadd.f32 0.0, %v4400
        %v4402 = vpop.f32.mrb[0].mxu0
        %v4403 = vpop.f32.mrb[0].mxu0
        %v4404 = vadd.f32 0.0, %v4403
        %v4405 = vpop.f32.mrb[0].mxu0
        %4406 = vmatprep.mubr.bf16.mxu0 0
        %4407 = vmatmul.mubr.bf16.gmra.mrb[0].mxu0 %v4280
        %v4408 = vpop.f32.mrb[0].mxu0
        %v4409 = vadd.f32 0.0, %v4408
        %v4410 = vpop.f32.mrb[0].mxu0
        %v4411 = vpop.f32.mrb[0].mxu0
        %v4412 = vadd.f32 0.0, %v4411
        %v4413 = vpop.f32.mrb[0].mxu0
        %4414 = vmatprep.mubr.bf16.mxu0 0
        %4415 = vmatmul.mubr.bf16.gmra.mrb[0].mxu0 %v4281
        %v4416 = vpop.f32.mrb[0].mxu0
        %v4417 = vadd.f32 0.0, %v4416
        %v4418 = vpop.f32.mrb[0].mxu0
        %v4419 = vpop.f32.mrb[0].mxu0
        %v4420 = vadd.f32 0.0, %v4419
        %v4421 = vpop.f32.mrb[0].mxu0
        %4422 = vmatprep.mubr.bf16.mxu0 0
        %4423 = vmatmul.mubr.bf16.gmra.mrb[0].mxu0 %v4282
        %v4424 = vpop.f32.mrb[0].mxu0
        %v4425 = vadd.f32 0.0, %v4424
        %v4426 = vpop.f32.mrb[0].mxu0
        %v4427 = vpop.f32.mrb[0].mxu0
        %v4428 = vadd.f32 0.0, %v4427
        %v4429 = vpop.f32.mrb[0].mxu0
        %4430 = vmatprep.mubr.bf16.mxu0 0
        %4431 = vmatmul.mubr.bf16.gmra.mrb[0].mxu0 %v4283
        %v4432 = vpop.f32.mrb[0].mxu0
        %v4433 = vadd.f32 0.0, %v4432
        %v4434 = vpop.f32.mrb[0].mxu0
        %v4435 = vpop.f32.mrb[0].mxu0
        %v4436 = vadd.f32 0.0, %v4435
        %v4437 = vpop.f32.mrb[0].mxu0
        %4438 = vmatprep.mubr.bf16.mxu0 0
        %4439 = vmatmul.mubr.bf16.gmra.mrb[0].mxu0 %v4284
        %v4440 = vpop.f32.mrb[0].mxu0
        %v4441 = vadd.f32 0.0, %v4440
        %v4442 = vpop.f32.mrb[0].mxu0
        %v4443 = vpop.f32.mrb[0].mxu0
        %v4444 = vadd.f32 0.0, %v4443
        %v4445 = vpop.f32.mrb[0].mxu0
        %4446 = vmatprep.mubr.bf16.mxu0 0
        %4447 = vmatmul.mubr.bf16.gmra.mrb[0].mxu0 %v4285
        %v4448 = vpop.f32.mrb[0].mxu0
        %v4449 = vadd.f32 0.0, %v4448
        %v4450 = vpop.f32.mrb[0].mxu0
        %v4451 = vpop.f32.mrb[0].mxu0
        %v4452 = vadd.f32 0.0, %v4451
        %v4453 = vpop.f32.mrb[0].mxu0
        %4454 = vmatprep.mubr.bf16.mxu0 0
        %4455 = vmatmul.mubr.bf16.gmra.mrb[0].mxu0 %v4286
        %v4456 = vpop.f32.mrb[0].mxu0
        %v4457 = vadd.f32 0.0, %v4456
        %v4458 = vpop.f32.mrb[0].mxu0
        %v4459 = vpop.f32.mrb[0].mxu0
        %v4460 = vadd.f32 0.0, %v4459
        %v4461 = vpop.f32.mrb[0].mxu0
        %4462 = vmatprep.mubr.bf16.mxu0 0
        %4463 = vmatmul.mubr.bf16.gmra.mrb[0].mxu0 %v4287
        %v4464 = vpop.f32.mrb[0].mxu0
        %v4465 = vadd.f32 0.0, %v4464
        %v4466 = vpop.f32.mrb[0].mxu0
        %v4467 = vpop.f32.mrb[0].mxu0
        %v4468 = vadd.f32 0.0, %v4467
        %v4469 = vpop.f32.mrb[0].mxu0
        %4470 = vmatprep.mubr.bf16.mxu0 0
        %4471 = vmatmul.mubr.bf16.gmra.mrb[0].mxu0 %v4288
        %v4472 = vpop.f32.mrb[0].mxu0
        %v4473 = vadd.f32 0.0, %v4472
        %v4474 = vpop.f32.mrb[0].mxu0
        %v4475 = vpop.f32.mrb[0].mxu0
        %v4476 = vadd.f32 0.0, %v4475
        %v4477 = vpop.f32.mrb[0].mxu0
        %4478 = vmatprep.mubr.bf16.mxu0 0
        %4479 = vmatmul.mubr.bf16.gmra.mrb[0].mxu0 %v4289
        %v4480 = vpop.f32.mrb[0].mxu0
        %v4481 = vadd.f32 0.0, %v4480
        %v4482 = vpop.f32.mrb[0].mxu0
        %v4483 = vpop.f32.mrb[0].mxu0
        %v4484 = vadd.f32 0.0, %v4483
        %v4485 = vpop.f32.mrb[0].mxu0
        %4486 = vmatprep.mubr.bf16.mxu0 0
        %4487 = vmatmul.mubr.bf16.gmra.mrb[0].mxu0 %v4290
        %v4488 = vpop.f32.mrb[0].mxu0
        %v4489 = vadd.f32 0.0, %v4488
        %v4490 = vpop.f32.mrb[0].mxu0
        %v4491 = vpop.f32.mrb[0].mxu0
        %v4492 = vadd.f32 0.0, %v4491
        %v4493 = vpop.f32.mrb[0].mxu0
        %4494 = vmatprep.mubr.bf16.mxu0 0
        %4495 = vmatmul.mubr.bf16.gmra.mrb[0].mxu0 %v4291
        %v4496 = vpop.f32.mrb[0].mxu0
        %v4497 = vadd.f32 0.0, %v4496
        %v4498 = vpop.f32.mrb[0].mxu0
        %v4499 = vpop.f32.mrb[0].mxu0
        %v4500 = vadd.f32 0.0, %v4499
        %v4501 = vpop.f32.mrb[0].mxu0
        %4502 = vmatprep.mubr.bf16.mxu0 0
        %4503 = vmatmul.mubr.bf16.gmra.mrb[0].mxu0 %v4292
        %v4504 = vpop.f32.mrb[0].mxu0
        %v4505 = vadd.f32 0.0, %v4504
        %v4506 = vpop.f32.mrb[0].mxu0
        %v4507 = vpop.f32.mrb[0].mxu0
        %v4508 = vadd.f32 0.0, %v4507
        %v4509 = vpop.f32.mrb[0].mxu0
        %4510 = vmatprep.mubr.bf16.mxu0 0
        %4511 = vmatmul.mubr.bf16.gmra.mrb[0].mxu0 %v4293
        %v4512 = vpop.f32.mrb[0].mxu0
        %v4513 = vadd.f32 0.0, %v4512
        %v4514 = vpop.f32.mrb[0].mxu0
        %v4515 = vpop.f32.mrb[0].mxu0
        %v4516 = vadd.f32 0.0, %v4515
        %v4517 = vpop.f32.mrb[0].mxu0
        %4518 = vdwg.mxu0
        %v4519 = vadd.f32 %v3765, %v4393
        %v4520 = vadd.f32 %v3766, %v4396
        %v4521 = vadd.f32 %v3767, %v4401
        %v4522 = vadd.f32 %v3768, %v4404
        %v4523 = vadd.f32 %v3769, %v4409
        %v4524 = vadd.f32 %v3770, %v4412
        %v4525 = vadd.f32 %v3771, %v4417
        %v4526 = vadd.f32 %v3772, %v4420
        %v4527 = vadd.f32 %v3773, %v4425
        %v4528 = vadd.f32 %v3774, %v4428
        %v4529 = vadd.f32 %v3775, %v4433
        %v4530 = vadd.f32 %v3776, %v4436
        %v4531 = vadd.f32 %v3777, %v4441
        %v4532 = vadd.f32 %v3778, %v4444
        %v4533 = vadd.f32 %v3779, %v4449
        %v4534 = vadd.f32 %v3780, %v4452
        %v4535 = vadd.f32 %v3781, %v4457
        %v4536 = vadd.f32 %v3782, %v4460
        %v4537 = vadd.f32 %v3783, %v4465
        %v4538 = vadd.f32 %v3784, %v4468
        %v4539 = vadd.f32 %v3785, %v4473
        %v4540 = vadd.f32 %v3786, %v4476
        %v4541 = vadd.f32 %v3787, %v4481
        %v4542 = vadd.f32 %v3788, %v4484
        %v4543 = vadd.f32 %v3789, %v4489
        %v4544 = vadd.f32 %v3790, %v4492
        %v4545 = vadd.f32 %v3791, %v4497
        %v4546 = vadd.f32 %v3792, %v4500
        %v4547 = vadd.f32 %v3793, %v4505
        %v4548 = vadd.f32 %v3794, %v4508
        %v4549 = vadd.f32 %v3795, %v4513
        %v4550 = vadd.f32 %v3796, %v4516
        %v4551 = vld [vmem:[%s3410] sm:$0xe]
        %v4552 = vld [vmem:[%s3410 + $0x10] sm:$0xe]
        %v4553 = vld [vmem:[%s3410 + $0x20] sm:$0xe]
        %v4554 = vld [vmem:[%s3410 + $0x30] sm:$0xe]
        %v4555 = vld [vmem:[%s3410 + $0x40] sm:$0xe]
        %v4556 = vld [vmem:[%s3410 + $0x50] sm:$0xe]
        %v4557 = vld [vmem:[%s3410 + $0x60] sm:$0xe]
        %v4558 = vld [vmem:[%s3410 + $0x70] sm:$0xe]
        %v4559 = vld [vmem:[%s3410 + $0x80] sm:$0xe]
        %v4560 = vld [vmem:[%s3410 + $0x90] sm:$0xe]
        %v4561 = vld [vmem:[%s3410 + $0xa0] sm:$0xe]
        %v4562 = vld [vmem:[%s3410 + $0xb0] sm:$0xe]
        %v4563 = vld [vmem:[%s3410 + $0xc0] sm:$0xe]
        %v4564 = vld [vmem:[%s3410 + $0xd0] sm:$0xe]
        %v4565 = vld [vmem:[%s3410 + $0xe0] sm:$0xe]
        %v4566 = vld [vmem:[%s3410 + $0xf0] sm:$0xe]
        %v4615 = vrot.slane %v4551, 5
        %v4616 = vrot.slane %v4615, 4
        %v4617 = vrot.slane %v3798, 5
        %v4618 = vsel %vm1336, %v4616, %v4617
        %v4619 = vrot.slane %v4617, 4
        %v4620 = vrot.slane %v3799, 5
        %v4621 = vsel %vm1336, %v4619, %v4620
        %v4622 = vrot.slane %v4552, 5
        %v4623 = vrot.slane %v4622, 4
        %v4624 = vrot.slane %v3801, 5
        %v4625 = vsel %vm1336, %v4623, %v4624
        %v4626 = vrot.slane %v4624, 4
        %v4627 = vrot.slane %v3802, 5
        %v4628 = vsel %vm1336, %v4626, %v4627
        %v4629 = vrot.slane %v4553, 5
        %v4630 = vrot.slane %v4629, 4
        %v4631 = vrot.slane %v3804, 5
        %v4632 = vsel %vm1336, %v4630, %v4631
        %v4633 = vrot.slane %v4631, 4
        %v4634 = vrot.slane %v3805, 5
        %v4635 = vsel %vm1336, %v4633, %v4634
        %v4636 = vrot.slane %v4554, 5
        %v4637 = vrot.slane %v4636, 4
        %v4638 = vrot.slane %v3807, 5
        %v4639 = vsel %vm1336, %v4637, %v4638
        %v4640 = vrot.slane %v4638, 4
        %v4641 = vrot.slane %v3808, 5
        %v4642 = vsel %vm1336, %v4640, %v4641
        %v4643 = vrot.slane %v4555, 5
        %v4644 = vrot.slane %v4643, 4
        %v4645 = vrot.slane %v3810, 5
        %v4646 = vsel %vm1336, %v4644, %v4645
        %v4647 = vrot.slane %v4645, 4
        %v4648 = vrot.slane %v3811, 5
        %v4649 = vsel %vm1336, %v4647, %v4648
        %v4650 = vrot.slane %v4556, 5
        %v4651 = vrot.slane %v4650, 4
        %v4652 = vrot.slane %v3813, 5
        %v4653 = vsel %vm1336, %v4651, %v4652
        %v4654 = vrot.slane %v4652, 4
        %v4655 = vrot.slane %v3814, 5
        %v4656 = vsel %vm1336, %v4654, %v4655
        %v4657 = vrot.slane %v4557, 5
        %v4658 = vrot.slane %v4657, 4
        %v4659 = vrot.slane %v3816, 5
        %v4660 = vsel %vm1336, %v4658, %v4659
        %v4661 = vrot.slane %v4659, 4
        %v4662 = vrot.slane %v3817, 5
        %v4663 = vsel %vm1336, %v4661, %v4662
        %v4664 = vrot.slane %v4558, 5
        %v4665 = vrot.slane %v4664, 4
        %v4666 = vrot.slane %v3819, 5
        %v4667 = vsel %vm1336, %v4665, %v4666
        %v4668 = vrot.slane %v4666, 4
        %v4669 = vrot.slane %v3820, 5
        %v4670 = vsel %vm1336, %v4668, %v4669
        %v4671 = vrot.slane %v4559, 5
        %v4672 = vrot.slane %v4671, 4
        %v4673 = vrot.slane %v3822, 5
        %v4674 = vsel %vm1336, %v4672, %v4673
        %v4675 = vrot.slane %v4673, 4
        %v4676 = vrot.slane %v3823, 5
        %v4677 = vsel %vm1336, %v4675, %v4676
        %v4678 = vrot.slane %v4560, 5
        %v4679 = vrot.slane %v4678, 4
        %v4680 = vrot.slane %v3825, 5
        %v4681 = vsel %vm1336, %v4679, %v4680
        %v4682 = vrot.slane %v4680, 4
        %v4683 = vrot.slane %v3826, 5
        %v4684 = vsel %vm1336, %v4682, %v4683
        %v4685 = vrot.slane %v4561, 5
        %v4686 = vrot.slane %v4685, 4
        %v4687 = vrot.slane %v3828, 5
        %v4688 = vsel %vm1336, %v4686, %v4687
        %v4689 = vrot.slane %v4687, 4
        %v4690 = vrot.slane %v3829, 5
        %v4691 = vsel %vm1336, %v4689, %v4690
        %v4692 = vrot.slane %v4562, 5
        %v4693 = vrot.slane %v4692, 4
        %v4694 = vrot.slane %v3831, 5
        %v4695 = vsel %vm1336, %v4693, %v4694
        %v4696 = vrot.slane %v4694, 4
        %v4697 = vrot.slane %v3832, 5
        %v4698 = vsel %vm1336, %v4696, %v4697
        %v4699 = vrot.slane %v4563, 5
        %v4700 = vrot.slane %v4699, 4
        %v4701 = vrot.slane %v3834, 5
        %v4702 = vsel %vm1336, %v4700, %v4701
        %v4703 = vrot.slane %v4701, 4
        %v4704 = vrot.slane %v3835, 5
        %v4705 = vsel %vm1336, %v4703, %v4704
        %v4706 = vrot.slane %v4564, 5
        %v4707 = vrot.slane %v4706, 4
        %v4708 = vrot.slane %v3837, 5
        %v4709 = vsel %vm1336, %v4707, %v4708
        %v4710 = vrot.slane %v4708, 4
        %v4711 = vrot.slane %v3838, 5
        %v4712 = vsel %vm1336, %v4710, %v4711
        %v4713 = vrot.slane %v4565, 5
        %v4714 = vrot.slane %v4713, 4
        %v4715 = vrot.slane %v3840, 5
        %v4716 = vsel %vm1336, %v4714, %v4715
        %v4717 = vrot.slane %v4715, 4
        %v4718 = vrot.slane %v3841, 5
        %v4719 = vsel %vm1336, %v4717, %v4718
        %v4720 = vrot.slane %v4566, 5
        %v4721 = vrot.slane %v4720, 4
        %v4722 = vrot.slane %v3843, 5
        %v4723 = vsel %vm1336, %v4721, %v4722
        %v4724 = vrot.slane %v4722, 4
        %v4725 = vrot.slane %v3844, 5
        %v4726 = vsel %vm1336, %v4724, %v4725
        %s4727 = scalar_lea.vmem [#allocation5], 512
        %v4728 = vld [vmem:[%s4727] sm:$0xf]
        %v4729 = vld [vmem:[%s4727 + $0x4] sm:$0xf]
        %v4730 = vld [vmem:[%s4727 + $0x8] sm:$0xf]
        %v4731 = vld [vmem:[%s4727 + $0xc] sm:$0xf]
        %v4732 = vld [vmem:[%s4727 + $0x10] sm:$0xf]
        %v4733 = vld [vmem:[%s4727 + $0x14] sm:$0xf]
        %v4734 = vld [vmem:[%s4727 + $0x18] sm:$0xf]
        %v4735 = vld [vmem:[%s4727 + $0x1c] sm:$0xf]
        %v4736 = vld [vmem:[%s4727 + $0x20] sm:$0xf]
        %v4737 = vld [vmem:[%s4727 + $0x24] sm:$0xf]
        %v4738 = vld [vmem:[%s4727 + $0x28] sm:$0xf]
        %v4739 = vld [vmem:[%s4727 + $0x2c] sm:$0xf]
        %v4740 = vld [vmem:[%s4727 + $0x30] sm:$0xf]
        %v4741 = vld [vmem:[%s4727 + $0x34] sm:$0xf]
        %v4742 = vld [vmem:[%s4727 + $0x38] sm:$0xf]
        %v4743 = vld [vmem:[%s4727 + $0x3c] sm:$0xf]
        %v4744 = vunpack.c.l.b16 %v4618
        %v4745 = vunpack.c.l.b16 %v4621
        %v4746 = vunpack.c.l.b16 %v4625
        %v4747 = vunpack.c.l.b16 %v4628
        %v4748 = vunpack.c.l.b16 %v4632
        %v4749 = vunpack.c.l.b16 %v4635
        %v4750 = vunpack.c.l.b16 %v4639
        %v4751 = vunpack.c.l.b16 %v4642
        %v4752 = vunpack.c.l.b16 %v4646
        %v4753 = vunpack.c.l.b16 %v4649
        %v4754 = vunpack.c.l.b16 %v4653
        %v4755 = vunpack.c.l.b16 %v4656
        %v4756 = vunpack.c.l.b16 %v4660
        %v4757 = vunpack.c.l.b16 %v4663
        %v4758 = vunpack.c.l.b16 %v4667
        %v4759 = vunpack.c.l.b16 %v4670
        %v4760 = vunpack.c.l.b16 %v4674
        %v4761 = vunpack.c.l.b16 %v4677
        %v4762 = vunpack.c.l.b16 %v4681
        %v4763 = vunpack.c.l.b16 %v4684
        %v4764 = vunpack.c.l.b16 %v4688
        %v4765 = vunpack.c.l.b16 %v4691
        %v4766 = vunpack.c.l.b16 %v4695
        %v4767 = vunpack.c.l.b16 %v4698
        %v4768 = vunpack.c.l.b16 %v4702
        %v4769 = vunpack.c.l.b16 %v4705
        %v4770 = vunpack.c.l.b16 %v4709
        %v4771 = vunpack.c.l.b16 %v4712
        %v4772 = vunpack.c.l.b16 %v4716
        %v4773 = vunpack.c.l.b16 %v4719
        %v4774 = vunpack.c.l.b16 %v4723
        %v4775 = vunpack.c.l.b16 %v4726
        %v4776 = vpack.c.b16 %v4745, %v4744
        %v4777 = vpack.c.b16 %v4747, %v4746
        %v4778 = vpack.c.b16 %v4749, %v4748
        %v4779 = vpack.c.b16 %v4751, %v4750
        %v4780 = vpack.c.b16 %v4753, %v4752
        %v4781 = vpack.c.b16 %v4755, %v4754
        %v4782 = vpack.c.b16 %v4757, %v4756
        %v4783 = vpack.c.b16 %v4759, %v4758
        %v4784 = vpack.c.b16 %v4761, %v4760
        %v4785 = vpack.c.b16 %v4763, %v4762
        %v4786 = vpack.c.b16 %v4765, %v4764
        %v4787 = vpack.c.b16 %v4767, %v4766
        %v4788 = vpack.c.b16 %v4769, %v4768
        %v4789 = vpack.c.b16 %v4771, %v4770
        %v4790 = vpack.c.b16 %v4773, %v4772
        %v4791 = vpack.c.b16 %v4775, %v4774
        %v4824 = vunpack.c.l.b16 %v4728
        %v4825 = vunpack.c.l.b16 %v4729
        %v4826 = vunpack.c.l.b16 %v4730
        %v4827 = vunpack.c.l.b16 %v4731
        %v4828 = vunpack.c.l.b16 %v4732
        %v4829 = vunpack.c.l.b16 %v4733
        %v4830 = vunpack.c.l.b16 %v4734
        %v4831 = vunpack.c.l.b16 %v4735
        %v4832 = vunpack.c.l.b16 %v4736
        %v4833 = vunpack.c.l.b16 %v4737
        %v4834 = vunpack.c.l.b16 %v4738
        %v4835 = vunpack.c.l.b16 %v4739
        %v4836 = vunpack.c.l.b16 %v4740
        %v4837 = vunpack.c.l.b16 %v4741
        %v4838 = vunpack.c.l.b16 %v4742
        %v4839 = vunpack.c.l.b16 %v4743
        %v4840 = vpack.c.b16 %v4825, %v4824
        %v4841 = vpack.c.b16 %v4827, %v4826
        %v4842 = vpack.c.b16 %v4829, %v4828
        %v4843 = vpack.c.b16 %v4831, %v4830
        %v4844 = vpack.c.b16 %v4833, %v4832
        %v4845 = vpack.c.b16 %v4835, %v4834
        %v4846 = vpack.c.b16 %v4837, %v4836
        %v4847 = vpack.c.b16 %v4839, %v4838
        %4856 = vmatprep.subr.bf16.mxu0 0
        %4857 = vmatpush1.bf16.msra.mxu0 %v4840
        %4858 = vmatprep.subr.bf16.mxu0 0
        %4859 = vmatpush1.bf16.msra.mxu0 %v4841
        %4860 = vmatprep.subr.bf16.mxu0 0
        %4861 = vmatpush1.bf16.msra.mxu0 %v4842
        %4862 = vmatprep.subr.bf16.mxu0 0
        %4863 = vmatpush1.bf16.msra.mxu0 %v4843
        %4864 = vmatprep.subr.bf16.mxu0 0
        %4865 = vmatpush1.bf16.msra.mxu0 %v4844
        %4866 = vmatprep.subr.bf16.mxu0 0
        %4867 = vmatpush1.bf16.msra.mxu0 %v4845
        %4868 = vmatprep.subr.bf16.mxu0 0
        %4869 = vmatpush1.bf16.msra.mxu0 %v4846
        %4870 = vmatprep.subr.bf16.mxu0 0
        %4871 = vmatpush1.bf16.msra.mxu0 %v4847
        %4872 = vmatprep.subr.bf16.mxu0 0
        %4873 = vmatpush1.bf16.msra.mxu0 0
        %4874 = vmatprep.subr.bf16.mxu0 0
        %4875 = vmatpush1.bf16.msra.mxu0 0
        %4876 = vmatprep.subr.bf16.mxu0 0
        %4877 = vmatpush1.bf16.msra.mxu0 0
        %4878 = vmatprep.subr.bf16.mxu0 0
        %4879 = vmatpush1.bf16.msra.mxu0 0
        %4880 = vmatprep.subr.bf16.mxu0 0
        %4881 = vmatpush1.bf16.msra.mxu0 0
        %4882 = vmatprep.subr.bf16.mxu0 0
        %4883 = vmatpush1.bf16.msra.mxu0 0
        %4884 = vmatprep.subr.bf16.mxu0 0
        %4885 = vmatpush1.bf16.msra.mxu0 0
        %4886 = vmatprep.subr.bf16.mxu0 0
        %4887 = vmatpush1.bf16.msra.mxu0 0
        %4888 = vmatprep.mubr.bf16.mxu0 0
        %4889 = vmatmul.mubr.bf16.gmra.mrb[0].mxu0 %v4776
        %v4890 = vpop.f32.mrb[0].mxu0
        %v4891 = vadd.f32 0.0, %v4890
        %v4892 = vpop.f32.mrb[0].mxu0
        %v4893 = vpop.f32.mrb[0].mxu0
        %v4894 = vadd.f32 0.0, %v4893
        %v4895 = vpop.f32.mrb[0].mxu0
        %4896 = vmatprep.mubr.bf16.mxu0 0
        %4897 = vmatmul.mubr.bf16.gmra.mrb[0].mxu0 %v4777
        %v4898 = vpop.f32.mrb[0].mxu0
        %v4899 = vadd.f32 0.0, %v4898
        %v4900 = vpop.f32.mrb[0].mxu0
        %v4901 = vpop.f32.mrb[0].mxu0
        %v4902 = vadd.f32 0.0, %v4901
        %v4903 = vpop.f32.mrb[0].mxu0
        %4904 = vmatprep.mubr.bf16.mxu0 0
        %4905 = vmatmul.mubr.bf16.gmra.mrb[0].mxu0 %v4778
        %v4906 = vpop.f32.mrb[0].mxu0
        %v4907 = vadd.f32 0.0, %v4906
        %v4908 = vpop.f32.mrb[0].mxu0
        %v4909 = vpop.f32.mrb[0].mxu0
        %v4910 = vadd.f32 0.0, %v4909
        %v4911 = vpop.f32.mrb[0].mxu0
        %4912 = vmatprep.mubr.bf16.mxu0 0
        %4913 = vmatmul.mubr.bf16.gmra.mrb[0].mxu0 %v4779
        %v4914 = vpop.f32.mrb[0].mxu0
        %v4915 = vadd.f32 0.0, %v4914
        %v4916 = vpop.f32.mrb[0].mxu0
        %v4917 = vpop.f32.mrb[0].mxu0
        %v4918 = vadd.f32 0.0, %v4917
        %v4919 = vpop.f32.mrb[0].mxu0
        %4920 = vmatprep.mubr.bf16.mxu0 0
        %4921 = vmatmul.mubr.bf16.gmra.mrb[0].mxu0 %v4780
        %v4922 = vpop.f32.mrb[0].mxu0
        %v4923 = vadd.f32 0.0, %v4922
        %v4924 = vpop.f32.mrb[0].mxu0
        %v4925 = vpop.f32.mrb[0].mxu0
        %v4926 = vadd.f32 0.0, %v4925
        %v4927 = vpop.f32.mrb[0].mxu0
        %4928 = vmatprep.mubr.bf16.mxu0 0
        %4929 = vmatmul.mubr.bf16.gmra.mrb[0].mxu0 %v4781
        %v4930 = vpop.f32.mrb[0].mxu0
        %v4931 = vadd.f32 0.0, %v4930
        %v4932 = vpop.f32.mrb[0].mxu0
        %v4933 = vpop.f32.mrb[0].mxu0
        %v4934 = vadd.f32 0.0, %v4933
        %v4935 = vpop.f32.mrb[0].mxu0
        %4936 = vmatprep.mubr.bf16.mxu0 0
        %4937 = vmatmul.mubr.bf16.gmra.mrb[0].mxu0 %v4782
        %v4938 = vpop.f32.mrb[0].mxu0
        %v4939 = vadd.f32 0.0, %v4938
        %v4940 = vpop.f32.mrb[0].mxu0
        %v4941 = vpop.f32.mrb[0].mxu0
        %v4942 = vadd.f32 0.0, %v4941
        %v4943 = vpop.f32.mrb[0].mxu0
        %4944 = vmatprep.mubr.bf16.mxu0 0
        %4945 = vmatmul.mubr.bf16.gmra.mrb[0].mxu0 %v4783
        %v4946 = vpop.f32.mrb[0].mxu0
        %v4947 = vadd.f32 0.0, %v4946
        %v4948 = vpop.f32.mrb[0].mxu0
        %v4949 = vpop.f32.mrb[0].mxu0
        %v4950 = vadd.f32 0.0, %v4949
        %v4951 = vpop.f32.mrb[0].mxu0
        %4952 = vmatprep.mubr.bf16.mxu0 0
        %4953 = vmatmul.mubr.bf16.gmra.mrb[0].mxu0 %v4784
        %v4954 = vpop.f32.mrb[0].mxu0
        %v4955 = vadd.f32 0.0, %v4954
        %v4956 = vpop.f32.mrb[0].mxu0
        %v4957 = vpop.f32.mrb[0].mxu0
        %v4958 = vadd.f32 0.0, %v4957
        %v4959 = vpop.f32.mrb[0].mxu0
        %4960 = vmatprep.mubr.bf16.mxu0 0
        %4961 = vmatmul.mubr.bf16.gmra.mrb[0].mxu0 %v4785
        %v4962 = vpop.f32.mrb[0].mxu0
        %v4963 = vadd.f32 0.0, %v4962
        %v4964 = vpop.f32.mrb[0].mxu0
        %v4965 = vpop.f32.mrb[0].mxu0
        %v4966 = vadd.f32 0.0, %v4965
        %v4967 = vpop.f32.mrb[0].mxu0
        %4968 = vmatprep.mubr.bf16.mxu0 0
        %4969 = vmatmul.mubr.bf16.gmra.mrb[0].mxu0 %v4786
        %v4970 = vpop.f32.mrb[0].mxu0
        %v4971 = vadd.f32 0.0, %v4970
        %v4972 = vpop.f32.mrb[0].mxu0
        %v4973 = vpop.f32.mrb[0].mxu0
        %v4974 = vadd.f32 0.0, %v4973
        %v4975 = vpop.f32.mrb[0].mxu0
        %4976 = vmatprep.mubr.bf16.mxu0 0
        %4977 = vmatmul.mubr.bf16.gmra.mrb[0].mxu0 %v4787
        %v4978 = vpop.f32.mrb[0].mxu0
        %v4979 = vadd.f32 0.0, %v4978
        %v4980 = vpop.f32.mrb[0].mxu0
        %v4981 = vpop.f32.mrb[0].mxu0
        %v4982 = vadd.f32 0.0, %v4981
        %v4983 = vpop.f32.mrb[0].mxu0
        %4984 = vmatprep.mubr.bf16.mxu0 0
        %4985 = vmatmul.mubr.bf16.gmra.mrb[0].mxu0 %v4788
        %v4986 = vpop.f32.mrb[0].mxu0
        %v4987 = vadd.f32 0.0, %v4986
        %v4988 = vpop.f32.mrb[0].mxu0
        %v4989 = vpop.f32.mrb[0].mxu0
        %v4990 = vadd.f32 0.0, %v4989
        %v4991 = vpop.f32.mrb[0].mxu0
        %4992 = vmatprep.mubr.bf16.mxu0 0
        %4993 = vmatmul.mubr.bf16.gmra.mrb[0].mxu0 %v4789
        %v4994 = vpop.f32.mrb[0].mxu0
        %v4995 = vadd.f32 0.0, %v4994
        %v4996 = vpop.f32.mrb[0].mxu0
        %v4997 = vpop.f32.mrb[0].mxu0
        %v4998 = vadd.f32 0.0, %v4997
        %v4999 = vpop.f32.mrb[0].mxu0
        %5000 = vmatprep.mubr.bf16.mxu0 0
        %5001 = vmatmul.mubr.bf16.gmra.mrb[0].mxu0 %v4790
        %v5002 = vpop.f32.mrb[0].mxu0
        %v5003 = vadd.f32 0.0, %v5002
        %v5004 = vpop.f32.mrb[0].mxu0
        %v5005 = vpop.f32.mrb[0].mxu0
        %v5006 = vadd.f32 0.0, %v5005
        %v5007 = vpop.f32.mrb[0].mxu0
        %5008 = vmatprep.mubr.bf16.mxu0 0
        %5009 = vmatmul.mubr.bf16.gmra.mrb[0].mxu0 %v4791
        %v5010 = vpop.f32.mrb[0].mxu0
        %v5011 = vadd.f32 0.0, %v5010
        %v5012 = vpop.f32.mrb[0].mxu0
        %v5013 = vpop.f32.mrb[0].mxu0
        %v5014 = vadd.f32 0.0, %v5013
        %v5015 = vpop.f32.mrb[0].mxu0
        %5016 = vdwg.mxu0
        %v5017 = vadd.f32 %v4519, %v4891
        %v5018 = vadd.f32 %v4520, %v4894
        %v5019 = vadd.f32 %v4521, %v4899
        %v5020 = vadd.f32 %v4522, %v4902
        %v5021 = vadd.f32 %v4523, %v4907
        %v5022 = vadd.f32 %v4524, %v4910
        %v5023 = vadd.f32 %v4525, %v4915
        %v5024 = vadd.f32 %v4526, %v4918
        %v5025 = vadd.f32 %v4527, %v4923
        %v5026 = vadd.f32 %v4528, %v4926
        %v5027 = vadd.f32 %v4529, %v4931
        %v5028 = vadd.f32 %v4530, %v4934
        %v5029 = vadd.f32 %v4531, %v4939
        %v5030 = vadd.f32 %v4532, %v4942
        %v5031 = vadd.f32 %v4533, %v4947
        %v5032 = vadd.f32 %v4534, %v4950
        %v5033 = vadd.f32 %v4535, %v4955
        %v5034 = vadd.f32 %v4536, %v4958
        %v5035 = vadd.f32 %v4537, %v4963
        %v5036 = vadd.f32 %v4538, %v4966
        %v5037 = vadd.f32 %v4539, %v4971
        %v5038 = vadd.f32 %v4540, %v4974
        %v5039 = vadd.f32 %v4541, %v4979
        %v5040 = vadd.f32 %v4542, %v4982
        %v5041 = vadd.f32 %v4543, %v4987
        %v5042 = vadd.f32 %v4544, %v4990
        %v5043 = vadd.f32 %v4545, %v4995
        %v5044 = vadd.f32 %v4546, %v4998
        %v5045 = vadd.f32 %v4547, %v5003
        %v5046 = vadd.f32 %v4548, %v5006
        %v5047 = vadd.f32 %v4549, %v5011
        %v5048 = vadd.f32 %v4550, %v5014
        %v5049 = vld [vmem:[%s238] sm:$0x1]
        %v5051 = vlaneseq
        %v5052 = vshrl.u32 %v5051, 7
        %v5053 = vsub.s32 0, %v5052
        %v5054 = vrot.slane %v5049, %v5053
        %v5056 = vadd.f32 %v5017, %v5054
        %v5057 = vadd.f32 %v5018, %v5054
        %v5058 = vadd.f32 %v5019, %v5054
        %v5059 = vadd.f32 %v5020, %v5054
        %v5060 = vadd.f32 %v5021, %v5054
        %v5061 = vadd.f32 %v5022, %v5054
        %v5062 = vadd.f32 %v5023, %v5054
        %v5063 = vadd.f32 %v5024, %v5054
        %v5064 = vadd.f32 %v5025, %v5054
        %v5065 = vadd.f32 %v5026, %v5054
        %v5066 = vadd.f32 %v5027, %v5054
        %v5067 = vadd.f32 %v5028, %v5054
        %v5068 = vadd.f32 %v5029, %v5054
        %v5069 = vadd.f32 %v5030, %v5054
        %v5070 = vadd.f32 %v5031, %v5054
        %v5071 = vadd.f32 %v5032, %v5054
        %v5072 = vadd.f32 %v5033, %v5054
        %v5073 = vadd.f32 %v5034, %v5054
        %v5074 = vadd.f32 %v5035, %v5054
        %v5075 = vadd.f32 %v5036, %v5054
        %v5076 = vadd.f32 %v5037, %v5054
        %v5077 = vadd.f32 %v5038, %v5054
        %v5078 = vadd.f32 %v5039, %v5054
        %v5079 = vadd.f32 %v5040, %v5054
        %v5080 = vadd.f32 %v5041, %v5054
        %v5081 = vadd.f32 %v5042, %v5054
        %v5082 = vadd.f32 %v5043, %v5054
        %v5083 = vadd.f32 %v5044, %v5054
        %v5084 = vadd.f32 %v5045, %v5054
        %v5085 = vadd.f32 %v5046, %v5054
        %v5086 = vadd.f32 %v5047, %v5054
        %v5087 = vadd.f32 %v5048, %v5054
        %v5088 = vmax.f32 %v5056, 0.0
        %v5089 = vmax.f32 %v5057, 0.0
        %v5090 = vmax.f32 %v5058, 0.0
        %v5091 = vmax.f32 %v5059, 0.0
        %v5092 = vmax.f32 %v5060, 0.0
        %v5093 = vmax.f32 %v5061, 0.0
        %v5094 = vmax.f32 %v5062, 0.0
        %v5095 = vmax.f32 %v5063, 0.0
        %v5096 = vmax.f32 %v5064, 0.0
        %v5097 = vmax.f32 %v5065, 0.0
        %v5098 = vmax.f32 %v5066, 0.0
        %v5099 = vmax.f32 %v5067, 0.0
        %v5100 = vmax.f32 %v5068, 0.0
        %v5101 = vmax.f32 %v5069, 0.0
        %v5102 = vmax.f32 %v5070, 0.0
        %v5103 = vmax.f32 %v5071, 0.0
        %v5104 = vmax.f32 %v5072, 0.0
        %v5105 = vmax.f32 %v5073, 0.0
        %v5106 = vmax.f32 %v5074, 0.0
        %v5107 = vmax.f32 %v5075, 0.0
        %v5108 = vmax.f32 %v5076, 0.0
        %v5109 = vmax.f32 %v5077, 0.0
        %v5110 = vmax.f32 %v5078, 0.0
        %v5111 = vmax.f32 %v5079, 0.0
        %v5112 = vmax.f32 %v5080, 0.0
        %v5113 = vmax.f32 %v5081, 0.0
        %v5114 = vmax.f32 %v5082, 0.0
        %v5115 = vmax.f32 %v5083, 0.0
        %v5116 = vmax.f32 %v5084, 0.0
        %v5117 = vmax.f32 %v5085, 0.0
        %v5118 = vmax.f32 %v5086, 0.0
        %v5119 = vmax.f32 %v5087, 0.0
        %5120 = vst [vmem:[%s235] sm:$0xff] %v5088
        %5121 = vst [vmem:[%s235 + $0x8] sm:$0xff] %v5089
        %5122 = vst [vmem:[%s235 + $0x10] sm:$0xff] %v5090
        %5123 = vst [vmem:[%s235 + $0x18] sm:$0xff] %v5091
        %5124 = vst [vmem:[%s235 + $0x20] sm:$0xff] %v5092
        %5125 = vst [vmem:[%s235 + $0x28] sm:$0xff] %v5093
        %5126 = vst [vmem:[%s235 + $0x30] sm:$0xff] %v5094
        %5127 = vst [vmem:[%s235 + $0x38] sm:$0xff] %v5095
        %5128 = vst [vmem:[%s235 + $0x40] sm:$0xff] %v5096
        %5129 = vst [vmem:[%s235 + $0x48] sm:$0xff] %v5097
        %5130 = vst [vmem:[%s235 + $0x50] sm:$0xff] %v5098
        %5131 = vst [vmem:[%s235 + $0x58] sm:$0xff] %v5099
        %5132 = vst [vmem:[%s235 + $0x60] sm:$0xff] %v5100
        %5133 = vst [vmem:[%s235 + $0x68] sm:$0xff] %v5101
        %5134 = vst [vmem:[%s235 + $0x70] sm:$0xff] %v5102
        %5135 = vst [vmem:[%s235 + $0x78] sm:$0xff] %v5103
        %5136 = vst [vmem:[%s235 + $0x80] sm:$0xff] %v5104
        %5137 = vst [vmem:[%s235 + $0x88] sm:$0xff] %v5105
        %5138 = vst [vmem:[%s235 + $0x90] sm:$0xff] %v5106
        %5139 = vst [vmem:[%s235 + $0x98] sm:$0xff] %v5107
        %5140 = vst [vmem:[%s235 + $0xa0] sm:$0xff] %v5108
        %5141 = vst [vmem:[%s235 + $0xa8] sm:$0xff] %v5109
        %5142 = vst [vmem:[%s235 + $0xb0] sm:$0xff] %v5110
        %5143 = vst [vmem:[%s235 + $0xb8] sm:$0xff] %v5111
        %5144 = vst [vmem:[%s235 + $0xc0] sm:$0xff] %v5112
        %5145 = vst [vmem:[%s235 + $0xc8] sm:$0xff] %v5113
        %5146 = vst [vmem:[%s235 + $0xd0] sm:$0xff] %v5114
        %5147 = vst [vmem:[%s235 + $0xd8] sm:$0xff] %v5115
        %5148 = vst [vmem:[%s235 + $0xe0] sm:$0xff] %v5116
        %5149 = vst [vmem:[%s235 + $0xe8] sm:$0xff] %v5117
        %5150 = vst [vmem:[%s235 + $0xf0] sm:$0xff] %v5118
        %5151 = vst [vmem:[%s235 + $0xf8] sm:$0xff] %v5119
        %s5152 = sand.u32 %s121, 1
        %s5153 = scalar_lea.sflag [#allocation4], %s5152
        %s5154 = sand.u32 %s121, 1
        %s5155 = smul.addr %s5154, 256
        %s5156 = scalar_lea.vmem [#allocation7], %s5155
        // Predicated region
        $region41: #{tpu_custom_call.1} parent=31 // pred_check
          %p5157 = pneg %p131
        $region42: #{tpu_custom_call.1} parent=31 // pred_check_branch
          %5159 = sbr.rel (%p5157) target = $region44
        $region43: #{tpu_custom_call.1} parent=31 // pred_region
          %s5161 = ssub.s32 4096, 4096
          %5162 = vsyncadd %s5153, %s5161
          %s5163 = smul.addr %s26, 32
          %s5164 = sadd.s32 %s25, %s5163
          %s5165 = smul.addr %s5164, 128
          %s5166 = scalar_lea.hbm %s3, %s5165
          %s5167 = sshll.u32 %s5156, 4
          %s5168 = int_to_ptr.vmem [resolvable:$true] %s5167
          %5173 = dma.vmem_to_hbm [thread:$0]  %s5168, 4096, %s5166, %s5153, 128, 128, 8
        $region44: #{tpu_custom_call.1} parent=31 // pred_fallthru
          _
      $region32: #{tpu_custom_call.1} parent=5 // pred_fallthru
        _
      %p5174 = scmp.le.s32.totalorder 2, %s16
      // Predicated region
      $region45: #{tpu_custom_call.1} parent=5 // pred_check
        %p5175 = pneg %p5174
      $region46: #{tpu_custom_call.1} parent=5 // pred_check_branch
        %5177 = sbr.rel (%p5175) target = $region48
      $region47: #{tpu_custom_call.1} parent=5 // pred_region
        %s5178 = ssub.s32 %s16, 2
        // Predicated region
        $region49: #{tpu_custom_call.1} parent=47 // pred_check
          %p5179 = pneg %p137
        $region50: #{tpu_custom_call.1} parent=47 // pred_check_branch
          %5181 = sbr.rel (%p5179) target = $region52
        $region51: #{tpu_custom_call.1} parent=47 // pred_region
          %s5182 = sand.u32 %s122, 1
          %s5183 = scalar_lea.sflag [#allocation4], %s5182
          %s5184 = sand.u32 %s122, 1
          %s5185 = smul.addr %s5184, 256
          %s5186 = scalar_lea.vmem [#allocation7], %s5185
          %5187 = dma.done %s5183, 4096
        $region52: #{tpu_custom_call.1} parent=47 // pred_fallthru
          _
      $region48: #{tpu_custom_call.1} parent=5 // pred_fallthru
        _
    $region6: #{tpu_custom_call.1} parent=1 // loop_footer
      %s20 = sadd.s32 1, %s16
    $region7: #{tpu_custom_call.1} parent=1 // loop_footer_branch
      %15 = sbr.rel target = $region3
    $region8: #{tpu_custom_call.1} parent=1 // loop_exit
      _
    %5188 = vsyncpa [#allocation3], 1
    %s5189 = scalar_lea.sflag [#allocation3], 1
    %5190 = vsyncpa %s5189, 1
    %5191 = vsyncpa [#allocation6], 1
    %5192 = vsyncpa [#allocation4], 1
    %s5193 = scalar_lea.sflag [#allocation4], 1
    %5194 = vsyncpa %s5193, 1

</llo_original>
